<compile_context>
chip_gen: v5e
topology: v5e:2x2
jax: 0.10.0
libtpu: 0.0.40
codegen_flags: <defaults>
</compile_context>

<pallas_src>
import math
from functools import partial

import jax
import jax.numpy as jnp
from jax.experimental import pallas as pl
from jax.experimental.pallas import tpu as pltpu


def _convlstm_layer_kernel(keep_ref, x_ref, w_ref, b_ref,
                           h_seq_ref, c_ref, hpad_ref, *, kh, kw, use_reset):
    """One (batch-block, timestep) grid step of a ConvLSTM layer.

    keep_ref : (1, 1)                  f32   state keep factor (1 - reset[t-1])
    x_ref    : (Hp, Wp, Cin)           bf16  spatially pre-padded input x_t
    w_ref    : (KH*KW*(Cin+Ch), 4*Ch)  bf16  im2col conv weight (VMEM-resident)
    b_ref    : (1, 4*Ch)               f32   conv bias (VMEM-resident)
    h_seq_ref: (H, W, Ch)              f32   output block for h_t (per (b, t))
    c_ref    : (H, W, Ch)              f32   cell state, resident across T
    hpad_ref : (Hp, Wp, Ch)            bf16  scratch: zero-padded hidden state
    """
    t = pl.program_id(1)
    Hp, Wp, Cin = x_ref.shape
    H, W, Ch = h_seq_ref.shape
    N = H * W
    ph, pw = kh // 2, kw // 2

    # Initialize the recurrent state at the start of every batch block's sweep.
    @pl.when(t == 0)
    def _init():
        hpad_ref[...] = jnp.zeros_like(hpad_ref)
        c_ref[...] = jnp.zeros_like(c_ref)

    if use_reset:
        # reset AFTER step t-1  ==  multiply state by keep BEFORE step t.
        keep = keep_ref[...]                               # (1, 1) f32
        c_ref[...] = c_ref[...] * keep
        hpad_ref[...] = hpad_ref[...] * keep.astype(jnp.bfloat16)

    # im2col patch slab, built entirely in bf16.  Column order: all (dy, dx)
    # taps x input channels, then all (dy, dx) taps x hidden channels
    # (matches the wrapper's weight reshape).
    x_full = x_ref[...]                                    # bf16
    h_full = hpad_ref[...]                                 # bf16
    cols = []
    for dy in range(kh):
        for dx in range(kw):
            cols.append(x_full[dy:dy + H, dx:dx + W, :].reshape(N, Cin))
    for dy in range(kh):
        for dx in range(kw):
            cols.append(h_full[dy:dy + H, dx:dx + W, :].reshape(N, Ch))
    patches = jnp.concatenate(cols, axis=-1)               # (N, KH*KW*(Cin+Ch))

    # Single deep-K MXU matmul with f32 accumulation; bias folded with one add.
    gates = jnp.dot(patches, w_ref[...],
                    preferred_element_type=jnp.float32) + b_ref[...]

    # One lane-dense sigmoid pass over all 4*Ch gate columns (EUP).  The
    # g-gate columns of w/b were pre-scaled by 2 in the wrapper so that
    # tanh(x) == 2*sigmoid(2x) - 1 is a single cheap VPU fixup on that slice.
    s = jax.nn.sigmoid(gates).reshape(H, W, 4 * Ch)
    i = s[..., 0 * Ch:1 * Ch]
    f = s[..., 1 * Ch:2 * Ch]
    o = s[..., 2 * Ch:3 * Ch]
    g = 2.0 * s[..., 3 * Ch:4 * Ch] - 1.0

    c_next = f * c_ref[...] + i * g
    h_next = o * jnp.tanh(c_next)

    c_ref[...] = c_next
    h_seq_ref[...] = h_next
    # Stash h_t (bf16) into the interior of the padded hidden-state scratch
    # for the next timestep; the zero border from the t == 0 init is never
    # touched.
    hpad_ref[ph:ph + H, pw:pw + W, :] = h_next.astype(jnp.bfloat16)


def _convlstm_layer(x_seq, w, b, keep, kernel_size, hidden_dim, use_reset):
    """Runs one ConvLSTM layer over the full sequence with one pallas_call.

    x_seq: (B, T, H, W, Cin) f32.  Returns (h_seq (B,T,H,W,Ch) f32,
    c_last (B,H,W,Ch) f32).
    """
    B, T, H, W, Cin = x_seq.shape
    KH, KW = kernel_size
    Ch = hidden_dim
    if KH % 2 != 1 or KW % 2 != 1:
        # TODO(synk): even kernel sizes need asymmetric 'same' padding.
        raise NotImplementedError("only odd kernel sizes are supported")
    ph, pw = KH // 2, KW // 2
    Hp, Wp = H + 2 * ph, W + 2 * pw

    # Pre-pad x once for all timesteps (bf16 halves its HBM->VMEM traffic).
    x_pad = jnp.pad(x_seq.astype(jnp.bfloat16),
                    ((0, 0), (0, 0), (ph, ph), (pw, pw), (0, 0)))

    # im2col weight layout: rows ordered as [all (dy,dx) taps x Cin channels,
    # then all (dy,dx) taps x Ch channels] -- matches the in-kernel patch slab.
    # (A PyTorch OIHW Conv2d weight maps here via w.transpose(2, 3, 1, 0).)
    w = w.astype(jnp.float32)
    w_x = w[:, :, :Cin, :].reshape(KH * KW * Cin, 4 * Ch)
    w_h = w[:, :, Cin:, :].reshape(KH * KW * Ch, 4 * Ch)
    w_im2col = jnp.concatenate([w_x, w_h], axis=0)
    # Fold tanh(x) = 2*sigmoid(2x) - 1: pre-scale the g-gate columns by 2
    # (exact, power of two) so the kernel needs a single lane-dense sigmoid.
    gate_scale = jnp.concatenate(
        [jnp.ones((3 * Ch,), jnp.float32), jnp.full((Ch,), 2.0, jnp.float32)])
    w_im2col = (w_im2col * gate_scale).astype(jnp.bfloat16)
    b2 = b.reshape(1, 4 * Ch).astype(jnp.float32) * gate_scale

    kernel = partial(_convlstm_layer_kernel, kh=KH, kw=KW, use_reset=use_reset)

    h_seq, c_last = pl.pallas_call(
        kernel,
        out_shape=(jax.ShapeDtypeStruct((B, T, H, W, Ch), jnp.float32),
                   jax.ShapeDtypeStruct((B, H, W, Ch), jnp.float32)),
        grid_spec=pltpu.PrefetchScalarGridSpec(
            num_scalar_prefetch=0,
            grid=(B, T),
            in_specs=[
                # per-(b, t) keep factor
                pl.BlockSpec((None, None, 1, 1),
                             lambda bb, tt: (bb, tt, 0, 0)),
                # padded x_t for batch bb, time tt
                pl.BlockSpec((None, None, Hp, Wp, Cin),
                             lambda bb, tt: (bb, tt, 0, 0, 0)),
                # weights / bias: constant index -> resident in VMEM
                pl.BlockSpec((KH * KW * (Cin + Ch), 4 * Ch),
                             lambda bb, tt: (0, 0)),
                pl.BlockSpec((1, 4 * Ch), lambda bb, tt: (0, 0)),
            ],
            out_specs=(
                # h_t written out per (b, t)
                pl.BlockSpec((None, None, H, W, Ch),
                             lambda bb, tt: (bb, tt, 0, 0, 0)),
                # cell state: constant along T -> resident accumulator
                pl.BlockSpec((None, H, W, Ch),
                             lambda bb, tt: (bb, 0, 0, 0)),
            ),
            scratch_shapes=[pltpu.VMEM((Hp, Wp, Ch), jnp.bfloat16)],
        ),
        compiler_params=pltpu.CompilerParams(
            dimension_semantics=("parallel", "arbitrary"),
            vmem_limit_bytes=64 * 1024 * 1024,
        ),
    )(keep, x_pad, w_im2col, b2)
    return h_seq, c_last


@partial(jax.jit, static_argnames=("kernel_sizes", "hidden_dims",
                                   "use_reset", "return_all_layers"))
def _conv_lstm_forward_impl(x, params, keep, *, kernel_sizes, hidden_dims,
                            use_reset, return_all_layers):
    # (B, T, C, H, W) -> NHWC sequence for the kernel.
    cur = jnp.transpose(x, (0, 1, 3, 4, 2)).astype(jnp.float32)

    layer_outputs = []
    last_states = []
    for l, (w, b) in enumerate(params):
        h_seq, c_last = _convlstm_layer(cur, w, b, keep, kernel_sizes[l],
                                        hidden_dims[l], use_reset)
        cur = h_seq
        layer_outputs.append(h_seq)
        last_states.append((h_seq[:, -1], c_last))

    if not return_all_layers:
        layer_outputs = layer_outputs[-1:]
        last_states = last_states[-1:]

    output = jnp.concatenate(
        [jnp.transpose(h, (0, 1, 4, 2, 3)) for h in layer_outputs], axis=2)
    last_states = [[jnp.transpose(h, (0, 3, 1, 2)),
                    jnp.transpose(c, (0, 3, 1, 2))] for h, c in last_states]
    return output, last_states


def conv_lstm_forward(x, params, kernel_sizes, hidden_dims, reset=None,
                      return_all_layers=False):
    """ConvLSTM forward.

    x:      (B, T, Cin, H, W) float32 (PyTorch layout).
    params: list of (w, b) per layer; w: (KH, KW, Cin_l + Chid_l, 4*Chid_l)
            (HWIO), b: (4*Chid_l,).
    reset:  optional (B, T) float array; reset[b, t] == 1.0 clears the state
            AFTER timestep t's output (same semantics as the PyTorch module).
    Returns (output, last_state_list) with output (B, T, C_out, H, W).
    """
    B, T = x.shape[0], x.shape[1]
    use_reset = reset is not None
    if use_reset:
        keep = jnp.concatenate(
            [jnp.ones((B, 1), jnp.float32),
             1.0 - reset[:, :T - 1].astype(jnp.float32)], axis=1)
    else:
        keep = jnp.ones((B, T), jnp.float32)
    keep = keep.reshape(B, T, 1, 1)

    params = tuple((jnp.asarray(w), jnp.asarray(b)) for w, b in params)
    return _conv_lstm_forward_impl(
        x, params, keep,
        kernel_sizes=tuple((int(kh), int(kw)) for kh, kw in kernel_sizes),
        hidden_dims=tuple(int(h) for h in hidden_dims),
        use_reset=use_reset,
        return_all_layers=bool(return_all_layers))


def _conv_lstm_reference(x, params, kernel_sizes, hidden_dims, reset=None,
                         return_all_layers=False):
    """Pure-JAX f32 reference matching the PyTorch module semantics."""
    B, T = x.shape[0], x.shape[1]
    cur = jnp.transpose(x, (0, 1, 3, 4, 2)).astype(jnp.float32)   # NHWC seq
    outs, lasts = [], []
    for l, (w, b) in enumerate(params):
        Ch = hidden_dims[l]
        H, W = cur.shape[2], cur.shape[3]
        h = jnp.zeros((B, H, W, Ch), jnp.float32)
        c = jnp.zeros((B, H, W, Ch), jnp.float32)
        hs = []
        for t in range(T):
            if reset is not None and t > 0:
                keep = (1.0 - reset[:, t - 1].astype(jnp.float32)
                        ).reshape(B, 1, 1, 1)
                h = h * keep
                c = c * keep
            comb = jnp.concatenate([cur[:, t], h], axis=-1)
            gates = jax.lax.conv_general_dilated(
                comb, jnp.asarray(w, jnp.float32), (1, 1), "SAME",
                dimension_numbers=("NHWC", "HWIO", "NHWC"),
                precision=jax.lax.Precision.HIGHEST) + jnp.asarray(b)
            i = jax.nn.sigmoid(gates[..., 0 * Ch:1 * Ch])
            f = jax.nn.sigmoid(gates[..., 1 * Ch:2 * Ch])
            o = jax.nn.sigmoid(gates[..., 2 * Ch:3 * Ch])
            g = jnp.tanh(gates[..., 3 * Ch:4 * Ch])
            c = f * c + i * g
            h = o * jnp.tanh(c)
            hs.append(h)
        h_seq = jnp.stack(hs, axis=1)
        cur = h_seq
        outs.append(h_seq)
        lasts.append((h, c))
    if not return_all_layers:
        outs = outs[-1:]
        lasts = lasts[-1:]
    out = jnp.concatenate(
        [jnp.transpose(o_, (0, 1, 4, 2, 3)) for o_ in outs], axis=2)
    lasts = [[jnp.transpose(h, (0, 3, 1, 2)), jnp.transpose(c, (0, 3, 1, 2))]
             for h, c in lasts]
    return out, lasts


if __name__ == "__main__":
    key = jax.random.PRNGKey(0)

    # Small shapes consistent with the module: (batch, time, channels, H, W).
    B, T, Cin, H, W = 2, 8, 4, 16, 16
    num_layers = 2
    hidden_dims = [32, 32]       # 4*Chid = 128 -> lane-dense gate slab
    kernel_sizes = [(3, 3), (3, 3)]

    # Deterministic Conv2d-style uniform fan-in init.
    params = []
    in_dim = Cin
    for i in range(num_layers):
        KH, KW = kernel_sizes[i]
        Cl = in_dim + hidden_dims[i]
        O = 4 * hidden_dims[i]
        key, kw_key, kb_key = jax.random.split(key, 3)
        bound = 1.0 / math.sqrt(Cl * KH * KW)
        w = jax.random.uniform(kw_key, (KH, KW, Cl, O), jnp.float32, -bound, bound)
        b = jax.random.uniform(kb_key, (O,), jnp.float32, -bound, bound)
        params.append((w, b))
        in_dim = hidden_dims[i]

    key, kx = jax.random.split(key)
    x = jax.random.uniform(kx, (B, T, Cin, H, W), dtype=jnp.float32)

    # 1) no reset, last layer only.
    out, last_states = conv_lstm_forward(x, params, kernel_sizes, hidden_dims,
                                         reset=None, return_all_layers=False)
    jax.block_until_ready(out)
    jax.block_until_ready(last_states[0][1])
    assert out.shape == (B, T, hidden_dims[-1], H, W), out.shape
    assert last_states[0][0].shape == (B, hidden_dims[-1], H, W)
    assert last_states[0][1].shape == (B, hidden_dims[-1], H, W)

    out_ref, last_ref = _conv_lstm_reference(x, params, kernel_sizes,
                                             hidden_dims, reset=None,
                                             return_all_layers=False)
    err_h = float(jnp.max(jnp.abs(out - out_ref)))
    err_c = float(jnp.max(jnp.abs(last_states[0][1] - last_ref[0][1])))
    assert err_h < 5e-2 and err_c < 5e-2, (err_h, err_c)

    # 2) exercise the in-kernel reset path and return_all_layers.
    key, kr = jax.random.split(key)
    reset = (jax.random.uniform(kr, (B, T)) > 0.5).astype(jnp.float32)
    out_r, last_r = conv_lstm_forward(x, params, kernel_sizes, hidden_dims,
                                      reset=reset, return_all_layers=True)
    jax.block_until_ready(out_r)
    assert out_r.shape == (B, T, sum(hidden_dims), H, W), out_r.shape
    assert len(last_r) == num_layers

    out_r_ref, _ = _conv_lstm_reference(x, params, kernel_sizes, hidden_dims,
                                        reset=reset, return_all_layers=True)
    err_r = float(jnp.max(jnp.abs(out_r - out_r_ref)))
    assert err_r < 5e-2, err_r

    assert bool(jnp.all(jnp.isfinite(out))) and bool(jnp.all(jnp.isfinite(out_r)))
    print("KERNEL_OK")
</pallas_src>

<mosaic_0001>
module attributes {stable_mosaic.version = 11 : i64} {
  func.func @_convlstm_layer_kernel(%arg0: i32, %arg1: i32, %arg2: memref<1x1x1x1xf32, #tpu.memory_space<vmem>>, %arg3: memref<1x1x18x18x4xbf16, #tpu.memory_space<vmem>>, %arg4: memref<324x128xbf16, #tpu.memory_space<vmem>>, %arg5: memref<1x128xf32, #tpu.memory_space<vmem>>, %arg6: memref<1x1x16x16x32xf32, #tpu.memory_space<vmem>>, %arg7: memref<1x16x16x32xf32, #tpu.memory_space<vmem>>, %arg8: memref<18x18x32xbf16, #tpu.memory_space<vmem>>) attributes {dimension_semantics = [#tpu.dimension_semantics<parallel>, #tpu.dimension_semantics<arbitrary>], iteration_bounds = array<i64: 2, 8>, scalar_prefetch = 0 : i64, scratch_operands = 1 : i64, tpu.core_type = #tpu.core_type<tc>, window_params = [{transform_indices = @transform_0, window_bounds = array<i64: 1, 1, 1, 1>}, {transform_indices = @transform_1, window_bounds = array<i64: 1, 1, 18, 18, 4>}, {pipeline_mode = #tpu.pipeline_mode<synchronous>, transform_indices = @transform_2, window_bounds = array<i64: 324, 128>}, {pipeline_mode = #tpu.pipeline_mode<synchronous>, transform_indices = @transform_3, window_bounds = array<i64: 1, 128>}, {transform_indices = @transform_4, window_bounds = array<i64: 1, 1, 16, 16, 32>}, {transform_indices = @transform_5, window_bounds = array<i64: 1, 16, 16, 32>}]} {
    %c0_i32 = arith.constant 0 : i32
    %0 = arith.cmpi eq, %arg1, %c0_i32 : i32
    %1 = arith.extui %0 : i1 to i32
    %c0_i32_0 = arith.constant 0 : i32
    %2 = arith.cmpi ne, %1, %c0_i32_0 : i32
    scf.if %2 {
      %cst_30 = arith.constant 0.000000e+00 : bf16
      %79 = vector.broadcast %cst_30 : bf16 to vector<18x18x32xbf16>
      %c0_31 = arith.constant 0 : index
      %c0_32 = arith.constant 0 : index
      %c0_33 = arith.constant 0 : index
      %80 = vector.load %arg8[%c0_31, %c0_32, %c0_33] : memref<18x18x32xbf16, #tpu.memory_space<vmem>>, vector<18x18x32xbf16>
      tpu.vector_store %arg8[%c0_31, %c0_32, %c0_33], %79 {strides = array<i32>} : memref<18x18x32xbf16, #tpu.memory_space<vmem>>, vector<18x18x32xbf16>,
      %cst_34 = arith.constant 0.000000e+00 : f32
      %81 = vector.broadcast %cst_34 : f32 to vector<16x16x32xf32>
      %c0_35 = arith.constant 0 : index
      %c0_36 = arith.constant 0 : index
      %c0_37 = arith.constant 0 : index
      %c0_38 = arith.constant 0 : index
      %82 = vector.load %arg7[%c0_35, %c0_36, %c0_37, %c0_38] : memref<1x16x16x32xf32, #tpu.memory_space<vmem>>, vector<1x16x16x32xf32>
      %83 = vector.shape_cast %82 : vector<1x16x16x32xf32> to vector<16x16x32xf32>
      %84 = vector.shape_cast %81 : vector<16x16x32xf32> to vector<1x16x16x32xf32>
      tpu.vector_store %arg7[%c0_35, %c0_36, %c0_37, %c0_38], %84 {strides = array<i32>} : memref<1x16x16x32xf32, #tpu.memory_space<vmem>>, vector<1x16x16x32xf32>,
    } else {
    }
    %c0 = arith.constant 0 : index
    %c0_1 = arith.constant 0 : index
    %c0_2 = arith.constant 0 : index
    %c0_3 = arith.constant 0 : index
    %c0_4 = arith.constant 0 : index
    %3 = vector.load %arg3[%c0, %c0_1, %c0_2, %c0_3, %c0_4] : memref<1x1x18x18x4xbf16, #tpu.memory_space<vmem>>, vector<1x1x18x18x4xbf16>
    %4 = vector.shape_cast %3 : vector<1x1x18x18x4xbf16> to vector<18x18x4xbf16>
    %c0_5 = arith.constant 0 : index
    %c0_6 = arith.constant 0 : index
    %c0_7 = arith.constant 0 : index
    %5 = vector.load %arg8[%c0_5, %c0_6, %c0_7] : memref<18x18x32xbf16, #tpu.memory_space<vmem>>, vector<18x18x32xbf16>
    %6 = vector.extract_strided_slice %4 {offsets = [0, 0, 0], sizes = [16, 16, 4], strides = [1, 1, 1]} : vector<18x18x4xbf16> to vector<16x16x4xbf16>
    %7 = vector.shape_cast %6 : vector<16x16x4xbf16> to vector<256x4xbf16>
    %8 = vector.extract_strided_slice %4 {offsets = [0, 1, 0], sizes = [16, 16, 4], strides = [1, 1, 1]} : vector<18x18x4xbf16> to vector<16x16x4xbf16>
    %9 = vector.shape_cast %8 : vector<16x16x4xbf16> to vector<256x4xbf16>
    %10 = vector.extract_strided_slice %4 {offsets = [0, 2, 0], sizes = [16, 16, 4], strides = [1, 1, 1]} : vector<18x18x4xbf16> to vector<16x16x4xbf16>
    %11 = vector.shape_cast %10 : vector<16x16x4xbf16> to vector<256x4xbf16>
    %12 = vector.extract_strided_slice %4 {offsets = [1, 0, 0], sizes = [16, 16, 4], strides = [1, 1, 1]} : vector<18x18x4xbf16> to vector<16x16x4xbf16>
    %13 = vector.shape_cast %12 : vector<16x16x4xbf16> to vector<256x4xbf16>
    %14 = vector.extract_strided_slice %4 {offsets = [1, 1, 0], sizes = [16, 16, 4], strides = [1, 1, 1]} : vector<18x18x4xbf16> to vector<16x16x4xbf16>
    %15 = vector.shape_cast %14 : vector<16x16x4xbf16> to vector<256x4xbf16>
    %16 = vector.extract_strided_slice %4 {offsets = [1, 2, 0], sizes = [16, 16, 4], strides = [1, 1, 1]} : vector<18x18x4xbf16> to vector<16x16x4xbf16>
    %17 = vector.shape_cast %16 : vector<16x16x4xbf16> to vector<256x4xbf16>
    %18 = vector.extract_strided_slice %4 {offsets = [2, 0, 0], sizes = [16, 16, 4], strides = [1, 1, 1]} : vector<18x18x4xbf16> to vector<16x16x4xbf16>
    %19 = vector.shape_cast %18 : vector<16x16x4xbf16> to vector<256x4xbf16>
    %20 = vector.extract_strided_slice %4 {offsets = [2, 1, 0], sizes = [16, 16, 4], strides = [1, 1, 1]} : vector<18x18x4xbf16> to vector<16x16x4xbf16>
    %21 = vector.shape_cast %20 : vector<16x16x4xbf16> to vector<256x4xbf16>
    %22 = vector.extract_strided_slice %4 {offsets = [2, 2, 0], sizes = [16, 16, 4], strides = [1, 1, 1]} : vector<18x18x4xbf16> to vector<16x16x4xbf16>
    %23 = vector.shape_cast %22 : vector<16x16x4xbf16> to vector<256x4xbf16>
    %24 = vector.extract_strided_slice %5 {offsets = [0, 0, 0], sizes = [16, 16, 32], strides = [1, 1, 1]} : vector<18x18x32xbf16> to vector<16x16x32xbf16>
    %25 = vector.shape_cast %24 : vector<16x16x32xbf16> to vector<256x32xbf16>
    %26 = vector.extract_strided_slice %5 {offsets = [0, 1, 0], sizes = [16, 16, 32], strides = [1, 1, 1]} : vector<18x18x32xbf16> to vector<16x16x32xbf16>
    %27 = vector.shape_cast %26 : vector<16x16x32xbf16> to vector<256x32xbf16>
    %28 = vector.extract_strided_slice %5 {offsets = [0, 2, 0], sizes = [16, 16, 32], strides = [1, 1, 1]} : vector<18x18x32xbf16> to vector<16x16x32xbf16>
    %29 = vector.shape_cast %28 : vector<16x16x32xbf16> to vector<256x32xbf16>
    %30 = vector.extract_strided_slice %5 {offsets = [1, 0, 0], sizes = [16, 16, 32], strides = [1, 1, 1]} : vector<18x18x32xbf16> to vector<16x16x32xbf16>
    %31 = vector.shape_cast %30 : vector<16x16x32xbf16> to vector<256x32xbf16>
    %32 = vector.extract_strided_slice %5 {offsets = [1, 1, 0], sizes = [16, 16, 32], strides = [1, 1, 1]} : vector<18x18x32xbf16> to vector<16x16x32xbf16>
    %33 = vector.shape_cast %32 : vector<16x16x32xbf16> to vector<256x32xbf16>
    %34 = vector.extract_strided_slice %5 {offsets = [1, 2, 0], sizes = [16, 16, 32], strides = [1, 1, 1]} : vector<18x18x32xbf16> to vector<16x16x32xbf16>
    %35 = vector.shape_cast %34 : vector<16x16x32xbf16> to vector<256x32xbf16>
    %36 = vector.extract_strided_slice %5 {offsets = [2, 0, 0], sizes = [16, 16, 32], strides = [1, 1, 1]} : vector<18x18x32xbf16> to vector<16x16x32xbf16>
    %37 = vector.shape_cast %36 : vector<16x16x32xbf16> to vector<256x32xbf16>
    %38 = vector.extract_strided_slice %5 {offsets = [2, 1, 0], sizes = [16, 16, 32], strides = [1, 1, 1]} : vector<18x18x32xbf16> to vector<16x16x32xbf16>
    %39 = vector.shape_cast %38 : vector<16x16x32xbf16> to vector<256x32xbf16>
    %40 = vector.extract_strided_slice %5 {offsets = [2, 2, 0], sizes = [16, 16, 32], strides = [1, 1, 1]} : vector<18x18x32xbf16> to vector<16x16x32xbf16>
    %41 = vector.shape_cast %40 : vector<16x16x32xbf16> to vector<256x32xbf16>
    %42 = tpu.concatenate %7, %9, %11, %13, %15, %17, %19, %21, %23, %25, %27, %29, %31, %33, %35, %37 in 1 : vector<256x4xbf16>, vector<256x4xbf16>, vector<256x4xbf16>, vector<256x4xbf16>, vector<256x4xbf16>, vector<256x4xbf16>, vector<256x4xbf16>, vector<256x4xbf16>, vector<256x4xbf16>, vector<256x32xbf16>, vector<256x32xbf16>, vector<256x32xbf16>, vector<256x32xbf16>, vector<256x32xbf16>, vector<256x32xbf16>, vector<256x32xbf16> -> vector<256x260xbf16>
    %43 = tpu.concatenate %39, %41 in 1 : vector<256x32xbf16>, vector<256x32xbf16> -> vector<256x64xbf16>
    %44 = tpu.concatenate %42, %43 in 1 : vector<256x260xbf16>, vector<256x64xbf16> -> vector<256x324xbf16>
    %c0_8 = arith.constant 0 : index
    %c0_9 = arith.constant 0 : index
    %45 = vector.load %arg4[%c0_8, %c0_9] : memref<324x128xbf16, #tpu.memory_space<vmem>>, vector<324x128xbf16>
    %cst = arith.constant dense<0.000000e+00> : vector<256x128xf32>
    %46 = tpu.matmul %44, %45, %cst {dimension_numbers = #tpu.dot_dimension_numbers<[1], [0], [0], [1], [0, 0, 1, 1], [], []>} : vector<256x324xbf16>, vector<324x128xbf16>, vector<256x128xf32> -> vector<256x128xf32>
    %c0_10 = arith.constant 0 : index
    %c0_11 = arith.constant 0 : index
    %47 = vector.load %arg5[%c0_10, %c0_11] : memref<1x128xf32, #tpu.memory_space<vmem>>, vector<1x128xf32>
    %48 = vector.broadcast %47 : vector<1x128xf32> to vector<256x128xf32>
    %49 = arith.addf %46, %48 : vector<256x128xf32>
    %50 = arith.negf %49 : vector<256x128xf32>
    %51 = math.exp %50 : vector<256x128xf32>
    %cst_12 = arith.constant 1.000000e+00 : f32
    %52 = vector.broadcast %cst_12 : f32 to vector<256x128xf32>
    %53 = arith.addf %52, %51 : vector<256x128xf32>
    %54 = arith.divf %52, %53 : vector<256x128xf32>
    %55 = vector.shape_cast %54 : vector<256x128xf32> to vector<16x16x128xf32>
    %56 = vector.extract_strided_slice %55 {offsets = [0, 0, 0], sizes = [16, 16, 32], strides = [1, 1, 1]} : vector<16x16x128xf32> to vector<16x16x32xf32>
    %57 = vector.extract_strided_slice %55 {offsets = [0, 0, 32], sizes = [16, 16, 32], strides = [1, 1, 1]} : vector<16x16x128xf32> to vector<16x16x32xf32>
    %58 = vector.extract_strided_slice %55 {offsets = [0, 0, 64], sizes = [16, 16, 32], strides = [1, 1, 1]} : vector<16x16x128xf32> to vector<16x16x32xf32>
    %59 = vector.extract_strided_slice %55 {offsets = [0, 0, 96], sizes = [16, 16, 32], strides = [1, 1, 1]} : vector<16x16x128xf32> to vector<16x16x32xf32>
    %cst_13 = arith.constant 2.000000e+00 : f32
    %60 = vector.broadcast %cst_13 : f32 to vector<16x16x32xf32>
    %61 = arith.mulf %60, %59 : vector<16x16x32xf32>
    %cst_14 = arith.constant 1.000000e+00 : f32
    %62 = vector.broadcast %cst_14 : f32 to vector<16x16x32xf32>
    %63 = arith.subf %61, %62 : vector<16x16x32xf32>
    %c0_15 = arith.constant 0 : index
    %c0_16 = arith.constant 0 : index
    %c0_17 = arith.constant 0 : index
    %c0_18 = arith.constant 0 : index
    %64 = vector.load %arg7[%c0_15, %c0_16, %c0_17, %c0_18] : memref<1x16x16x32xf32, #tpu.memory_space<vmem>>, vector<1x16x16x32xf32>
    %65 = vector.shape_cast %64 : vector<1x16x16x32xf32> to vector<16x16x32xf32>
    %66 = arith.mulf %57, %65 : vector<16x16x32xf32>
    %67 = arith.mulf %56, %63 : vector<16x16x32xf32>
    %68 = arith.addf %66, %67 : vector<16x16x32xf32>
    %69 = math.tanh %68 : vector<16x16x32xf32>
    %70 = arith.mulf %58, %69 : vector<16x16x32xf32>
    %c0_19 = arith.constant 0 : index
    %c0_20 = arith.constant 0 : index
    %c0_21 = arith.constant 0 : index
    %c0_22 = arith.constant 0 : index
    %71 = vector.load %arg7[%c0_19, %c0_20, %c0_21, %c0_22] : memref<1x16x16x32xf32, #tpu.memory_space<vmem>>, vector<1x16x16x32xf32>
    %72 = vector.shape_cast %71 : vector<1x16x16x32xf32> to vector<16x16x32xf32>
    %73 = vector.shape_cast %68 : vector<16x16x32xf32> to vector<1x16x16x32xf32>
    tpu.vector_store %arg7[%c0_19, %c0_20, %c0_21, %c0_22], %73 {strides = array<i32>} : memref<1x16x16x32xf32, #tpu.memory_space<vmem>>, vector<1x16x16x32xf32>,
    %c0_23 = arith.constant 0 : index
    %c0_24 = arith.constant 0 : index
    %c0_25 = arith.constant 0 : index
    %c0_26 = arith.constant 0 : index
    %c0_27 = arith.constant 0 : index
    %74 = vector.load %arg6[%c0_23, %c0_24, %c0_25, %c0_26, %c0_27] : memref<1x1x16x16x32xf32, #tpu.memory_space<vmem>>, vector<1x1x16x16x32xf32>
    %75 = vector.shape_cast %74 : vector<1x1x16x16x32xf32> to vector<16x16x32xf32>
    %76 = vector.shape_cast %70 : vector<16x16x32xf32> to vector<1x1x16x16x32xf32>
    tpu.vector_store %arg6[%c0_23, %c0_24, %c0_25, %c0_26, %c0_27], %76 {strides = array<i32>} : memref<1x1x16x16x32xf32, #tpu.memory_space<vmem>>, vector<1x1x16x16x32xf32>,
    %77 = arith.truncf %70 : vector<16x16x32xf32> to vector<16x16x32xbf16>
    %c1 = arith.constant 1 : index
    %c1_28 = arith.constant 1 : index
    %c0_29 = arith.constant 0 : index
    %78 = vector.load %arg8[%c1, %c1_28, %c0_29] : memref<18x18x32xbf16, #tpu.memory_space<vmem>>, vector<16x16x32xbf16>
    tpu.vector_store %arg8[%c1, %c1_28, %c0_29], %77 {strides = array<i32>} : memref<18x18x32xbf16, #tpu.memory_space<vmem>>, vector<16x16x32xbf16>,
    return
  }
  func.func @transform_0(%arg0: i32, %arg1: i32) -> (i32, i32, i32, i32) {
    %c0_i32 = arith.constant 0 : i32
    %c0_i32_0 = arith.constant 0 : i32
    %c0_i32_1 = arith.constant 0 : i32
    return %arg0, %arg1, %c0_i32, %c0_i32_0 : i32, i32, i32, i32
  }
  func.func @transform_1(%arg0: i32, %arg1: i32) -> (i32, i32, i32, i32, i32) {
    %c0_i32 = arith.constant 0 : i32
    %c0_i32_0 = arith.constant 0 : i32
    %c0_i32_1 = arith.constant 0 : i32
    %c0_i32_2 = arith.constant 0 : i32
    return %arg0, %arg1, %c0_i32, %c0_i32_0, %c0_i32_1 : i32, i32, i32, i32, i32
  }
  func.func @transform_2(%arg0: i32, %arg1: i32) -> (i32, i32) {
    %c0_i32 = arith.constant 0 : i32
    %c0_i32_0 = arith.constant 0 : i32
    %c0_i32_1 = arith.constant 0 : i32
    return %c0_i32, %c0_i32_0 : i32, i32
  }
  func.func @transform_3(%arg0: i32, %arg1: i32) -> (i32, i32) {
    %c0_i32 = arith.constant 0 : i32
    %c0_i32_0 = arith.constant 0 : i32
    %c0_i32_1 = arith.constant 0 : i32
    return %c0_i32, %c0_i32_0 : i32, i32
  }
  func.func @transform_4(%arg0: i32, %arg1: i32) -> (i32, i32, i32, i32, i32) {
    %c0_i32 = arith.constant 0 : i32
    %c0_i32_0 = arith.constant 0 : i32
    %c0_i32_1 = arith.constant 0 : i32
    %c0_i32_2 = arith.constant 0 : i32
    return %arg0, %arg1, %c0_i32, %c0_i32_0, %c0_i32_1 : i32, i32, i32, i32, i32
  }
  func.func @transform_5(%arg0: i32, %arg1: i32) -> (i32, i32, i32, i32) {
    %c0_i32 = arith.constant 0 : i32
    %c0_i32_0 = arith.constant 0 : i32
    %c0_i32_1 = arith.constant 0 : i32
    %c0_i32_2 = arith.constant 0 : i32
    return %arg0, %c0_i32, %c0_i32_0, %c0_i32_1 : i32, i32, i32, i32
  }
}

module attributes {stable_mosaic.version = 11 : i64} {
  func.func @_convlstm_layer_kernel(%arg0: i32, %arg1: i32, %arg2: memref<1x1x1x1xf32, #tpu.memory_space<vmem>>, %arg3: memref<1x1x18x18x32xbf16, #tpu.memory_space<vmem>>, %arg4: memref<576x128xbf16, #tpu.memory_space<vmem>>, %arg5: memref<1x128xf32, #tpu.memory_space<vmem>>, %arg6: memref<1x1x16x16x32xf32, #tpu.memory_space<vmem>>, %arg7: memref<1x16x16x32xf32, #tpu.memory_space<vmem>>, %arg8: memref<18x18x32xbf16, #tpu.memory_space<vmem>>) attributes {dimension_semantics = [#tpu.dimension_semantics<parallel>, #tpu.dimension_semantics<arbitrary>], iteration_bounds = array<i64: 2, 8>, scalar_prefetch = 0 : i64, scratch_operands = 1 : i64, tpu.core_type = #tpu.core_type<tc>, window_params = [{transform_indices = @transform_0, window_bounds = array<i64: 1, 1, 1, 1>}, {transform_indices = @transform_1, window_bounds = array<i64: 1, 1, 18, 18, 32>}, {pipeline_mode = #tpu.pipeline_mode<synchronous>, transform_indices = @transform_2, window_bounds = array<i64: 576, 128>}, {pipeline_mode = #tpu.pipeline_mode<synchronous>, transform_indices = @transform_3, window_bounds = array<i64: 1, 128>}, {transform_indices = @transform_4, window_bounds = array<i64: 1, 1, 16, 16, 32>}, {transform_indices = @transform_5, window_bounds = array<i64: 1, 16, 16, 32>}]} {
    %c0_i32 = arith.constant 0 : i32
    %0 = arith.cmpi eq, %arg1, %c0_i32 : i32
    %1 = arith.extui %0 : i1 to i32
    %c0_i32_0 = arith.constant 0 : i32
    %2 = arith.cmpi ne, %1, %c0_i32_0 : i32
    scf.if %2 {
      %cst_30 = arith.constant 0.000000e+00 : bf16
      %79 = vector.broadcast %cst_30 : bf16 to vector<18x18x32xbf16>
      %c0_31 = arith.constant 0 : index
      %c0_32 = arith.constant 0 : index
      %c0_33 = arith.constant 0 : index
      %80 = vector.load %arg8[%c0_31, %c0_32, %c0_33] : memref<18x18x32xbf16, #tpu.memory_space<vmem>>, vector<18x18x32xbf16>
      tpu.vector_store %arg8[%c0_31, %c0_32, %c0_33], %79 {strides = array<i32>} : memref<18x18x32xbf16, #tpu.memory_space<vmem>>, vector<18x18x32xbf16>,
      %cst_34 = arith.constant 0.000000e+00 : f32
      %81 = vector.broadcast %cst_34 : f32 to vector<16x16x32xf32>
      %c0_35 = arith.constant 0 : index
      %c0_36 = arith.constant 0 : index
      %c0_37 = arith.constant 0 : index
      %c0_38 = arith.constant 0 : index
      %82 = vector.load %arg7[%c0_35, %c0_36, %c0_37, %c0_38] : memref<1x16x16x32xf32, #tpu.memory_space<vmem>>, vector<1x16x16x32xf32>
      %83 = vector.shape_cast %82 : vector<1x16x16x32xf32> to vector<16x16x32xf32>
      %84 = vector.shape_cast %81 : vector<16x16x32xf32> to vector<1x16x16x32xf32>
      tpu.vector_store %arg7[%c0_35, %c0_36, %c0_37, %c0_38], %84 {strides = array<i32>} : memref<1x16x16x32xf32, #tpu.memory_space<vmem>>, vector<1x16x16x32xf32>,
    } else {
    }
    %c0 = arith.constant 0 : index
    %c0_1 = arith.constant 0 : index
    %c0_2 = arith.constant 0 : index
    %c0_3 = arith.constant 0 : index
    %c0_4 = arith.constant 0 : index
    %3 = vector.load %arg3[%c0, %c0_1, %c0_2, %c0_3, %c0_4] : memref<1x1x18x18x32xbf16, #tpu.memory_space<vmem>>, vector<1x1x18x18x32xbf16>
    %4 = vector.shape_cast %3 : vector<1x1x18x18x32xbf16> to vector<18x18x32xbf16>
    %c0_5 = arith.constant 0 : index
    %c0_6 = arith.constant 0 : index
    %c0_7 = arith.constant 0 : index
    %5 = vector.load %arg8[%c0_5, %c0_6, %c0_7] : memref<18x18x32xbf16, #tpu.memory_space<vmem>>, vector<18x18x32xbf16>
    %6 = vector.extract_strided_slice %4 {offsets = [0, 0, 0], sizes = [16, 16, 32], strides = [1, 1, 1]} : vector<18x18x32xbf16> to vector<16x16x32xbf16>
    %7 = vector.shape_cast %6 : vector<16x16x32xbf16> to vector<256x32xbf16>
    %8 = vector.extract_strided_slice %4 {offsets = [0, 1, 0], sizes = [16, 16, 32], strides = [1, 1, 1]} : vector<18x18x32xbf16> to vector<16x16x32xbf16>
    %9 = vector.shape_cast %8 : vector<16x16x32xbf16> to vector<256x32xbf16>
    %10 = vector.extract_strided_slice %4 {offsets = [0, 2, 0], sizes = [16, 16, 32], strides = [1, 1, 1]} : vector<18x18x32xbf16> to vector<16x16x32xbf16>
    %11 = vector.shape_cast %10 : vector<16x16x32xbf16> to vector<256x32xbf16>
    %12 = vector.extract_strided_slice %4 {offsets = [1, 0, 0], sizes = [16, 16, 32], strides = [1, 1, 1]} : vector<18x18x32xbf16> to vector<16x16x32xbf16>
    %13 = vector.shape_cast %12 : vector<16x16x32xbf16> to vector<256x32xbf16>
    %14 = vector.extract_strided_slice %4 {offsets = [1, 1, 0], sizes = [16, 16, 32], strides = [1, 1, 1]} : vector<18x18x32xbf16> to vector<16x16x32xbf16>
    %15 = vector.shape_cast %14 : vector<16x16x32xbf16> to vector<256x32xbf16>
    %16 = vector.extract_strided_slice %4 {offsets = [1, 2, 0], sizes = [16, 16, 32], strides = [1, 1, 1]} : vector<18x18x32xbf16> to vector<16x16x32xbf16>
    %17 = vector.shape_cast %16 : vector<16x16x32xbf16> to vector<256x32xbf16>
    %18 = vector.extract_strided_slice %4 {offsets = [2, 0, 0], sizes = [16, 16, 32], strides = [1, 1, 1]} : vector<18x18x32xbf16> to vector<16x16x32xbf16>
    %19 = vector.shape_cast %18 : vector<16x16x32xbf16> to vector<256x32xbf16>
    %20 = vector.extract_strided_slice %4 {offsets = [2, 1, 0], sizes = [16, 16, 32], strides = [1, 1, 1]} : vector<18x18x32xbf16> to vector<16x16x32xbf16>
    %21 = vector.shape_cast %20 : vector<16x16x32xbf16> to vector<256x32xbf16>
    %22 = vector.extract_strided_slice %4 {offsets = [2, 2, 0], sizes = [16, 16, 32], strides = [1, 1, 1]} : vector<18x18x32xbf16> to vector<16x16x32xbf16>
    %23 = vector.shape_cast %22 : vector<16x16x32xbf16> to vector<256x32xbf16>
    %24 = vector.extract_strided_slice %5 {offsets = [0, 0, 0], sizes = [16, 16, 32], strides = [1, 1, 1]} : vector<18x18x32xbf16> to vector<16x16x32xbf16>
    %25 = vector.shape_cast %24 : vector<16x16x32xbf16> to vector<256x32xbf16>
    %26 = vector.extract_strided_slice %5 {offsets = [0, 1, 0], sizes = [16, 16, 32], strides = [1, 1, 1]} : vector<18x18x32xbf16> to vector<16x16x32xbf16>
    %27 = vector.shape_cast %26 : vector<16x16x32xbf16> to vector<256x32xbf16>
    %28 = vector.extract_strided_slice %5 {offsets = [0, 2, 0], sizes = [16, 16, 32], strides = [1, 1, 1]} : vector<18x18x32xbf16> to vector<16x16x32xbf16>
    %29 = vector.shape_cast %28 : vector<16x16x32xbf16> to vector<256x32xbf16>
    %30 = vector.extract_strided_slice %5 {offsets = [1, 0, 0], sizes = [16, 16, 32], strides = [1, 1, 1]} : vector<18x18x32xbf16> to vector<16x16x32xbf16>
    %31 = vector.shape_cast %30 : vector<16x16x32xbf16> to vector<256x32xbf16>
    %32 = vector.extract_strided_slice %5 {offsets = [1, 1, 0], sizes = [16, 16, 32], strides = [1, 1, 1]} : vector<18x18x32xbf16> to vector<16x16x32xbf16>
    %33 = vector.shape_cast %32 : vector<16x16x32xbf16> to vector<256x32xbf16>
    %34 = vector.extract_strided_slice %5 {offsets = [1, 2, 0], sizes = [16, 16, 32], strides = [1, 1, 1]} : vector<18x18x32xbf16> to vector<16x16x32xbf16>
    %35 = vector.shape_cast %34 : vector<16x16x32xbf16> to vector<256x32xbf16>
    %36 = vector.extract_strided_slice %5 {offsets = [2, 0, 0], sizes = [16, 16, 32], strides = [1, 1, 1]} : vector<18x18x32xbf16> to vector<16x16x32xbf16>
    %37 = vector.shape_cast %36 : vector<16x16x32xbf16> to vector<256x32xbf16>
    %38 = vector.extract_strided_slice %5 {offsets = [2, 1, 0], sizes = [16, 16, 32], strides = [1, 1, 1]} : vector<18x18x32xbf16> to vector<16x16x32xbf16>
    %39 = vector.shape_cast %38 : vector<16x16x32xbf16> to vector<256x32xbf16>
    %40 = vector.extract_strided_slice %5 {offsets = [2, 2, 0], sizes = [16, 16, 32], strides = [1, 1, 1]} : vector<18x18x32xbf16> to vector<16x16x32xbf16>
    %41 = vector.shape_cast %40 : vector<16x16x32xbf16> to vector<256x32xbf16>
    %42 = tpu.concatenate %7, %9, %11, %13, %15, %17, %19, %21, %23, %25, %27, %29, %31, %33, %35, %37 in 1 : vector<256x32xbf16>, vector<256x32xbf16>, vector<256x32xbf16>, vector<256x32xbf16>, vector<256x32xbf16>, vector<256x32xbf16>, vector<256x32xbf16>, vector<256x32xbf16>, vector<256x32xbf16>, vector<256x32xbf16>, vector<256x32xbf16>, vector<256x32xbf16>, vector<256x32xbf16>, vector<256x32xbf16>, vector<256x32xbf16>, vector<256x32xbf16> -> vector<256x512xbf16>
    %43 = tpu.concatenate %39, %41 in 1 : vector<256x32xbf16>, vector<256x32xbf16> -> vector<256x64xbf16>
    %44 = tpu.concatenate %42, %43 in 1 : vector<256x512xbf16>, vector<256x64xbf16> -> vector<256x576xbf16>
    %c0_8 = arith.constant 0 : index
    %c0_9 = arith.constant 0 : index
    %45 = vector.load %arg4[%c0_8, %c0_9] : memref<576x128xbf16, #tpu.memory_space<vmem>>, vector<576x128xbf16>
    %cst = arith.constant dense<0.000000e+00> : vector<256x128xf32>
    %46 = tpu.matmul %44, %45, %cst {dimension_numbers = #tpu.dot_dimension_numbers<[1], [0], [0], [1], [0, 0, 1, 1], [], []>} : vector<256x576xbf16>, vector<576x128xbf16>, vector<256x128xf32> -> vector<256x128xf32>
    %c0_10 = arith.constant 0 : index
    %c0_11 = arith.constant 0 : index
    %47 = vector.load %arg5[%c0_10, %c0_11] : memref<1x128xf32, #tpu.memory_space<vmem>>, vector<1x128xf32>
    %48 = vector.broadcast %47 : vector<1x128xf32> to vector<256x128xf32>
    %49 = arith.addf %46, %48 : vector<256x128xf32>
    %50 = arith.negf %49 : vector<256x128xf32>
    %51 = math.exp %50 : vector<256x128xf32>
    %cst_12 = arith.constant 1.000000e+00 : f32
    %52 = vector.broadcast %cst_12 : f32 to vector<256x128xf32>
    %53 = arith.addf %52, %51 : vector<256x128xf32>
    %54 = arith.divf %52, %53 : vector<256x128xf32>
    %55 = vector.shape_cast %54 : vector<256x128xf32> to vector<16x16x128xf32>
    %56 = vector.extract_strided_slice %55 {offsets = [0, 0, 0], sizes = [16, 16, 32], strides = [1, 1, 1]} : vector<16x16x128xf32> to vector<16x16x32xf32>
    %57 = vector.extract_strided_slice %55 {offsets = [0, 0, 32], sizes = [16, 16, 32], strides = [1, 1, 1]} : vector<16x16x128xf32> to vector<16x16x32xf32>
    %58 = vector.extract_strided_slice %55 {offsets = [0, 0, 64], sizes = [16, 16, 32], strides = [1, 1, 1]} : vector<16x16x128xf32> to vector<16x16x32xf32>
    %59 = vector.extract_strided_slice %55 {offsets = [0, 0, 96], sizes = [16, 16, 32], strides = [1, 1, 1]} : vector<16x16x128xf32> to vector<16x16x32xf32>
    %cst_13 = arith.constant 2.000000e+00 : f32
    %60 = vector.broadcast %cst_13 : f32 to vector<16x16x32xf32>
    %61 = arith.mulf %60, %59 : vector<16x16x32xf32>
    %cst_14 = arith.constant 1.000000e+00 : f32
    %62 = vector.broadcast %cst_14 : f32 to vector<16x16x32xf32>
    %63 = arith.subf %61, %62 : vector<16x16x32xf32>
    %c0_15 = arith.constant 0 : index
    %c0_16 = arith.constant 0 : index
    %c0_17 = arith.constant 0 : index
    %c0_18 = arith.constant 0 : index
    %64 = vector.load %arg7[%c0_15, %c0_16, %c0_17, %c0_18] : memref<1x16x16x32xf32, #tpu.memory_space<vmem>>, vector<1x16x16x32xf32>
    %65 = vector.shape_cast %64 : vector<1x16x16x32xf32> to vector<16x16x32xf32>
    %66 = arith.mulf %57, %65 : vector<16x16x32xf32>
    %67 = arith.mulf %56, %63 : vector<16x16x32xf32>
    %68 = arith.addf %66, %67 : vector<16x16x32xf32>
    %69 = math.tanh %68 : vector<16x16x32xf32>
    %70 = arith.mulf %58, %69 : vector<16x16x32xf32>
    %c0_19 = arith.constant 0 : index
    %c0_20 = arith.constant 0 : index
    %c0_21 = arith.constant 0 : index
    %c0_22 = arith.constant 0 : index
    %71 = vector.load %arg7[%c0_19, %c0_20, %c0_21, %c0_22] : memref<1x16x16x32xf32, #tpu.memory_space<vmem>>, vector<1x16x16x32xf32>
    %72 = vector.shape_cast %71 : vector<1x16x16x32xf32> to vector<16x16x32xf32>
    %73 = vector.shape_cast %68 : vector<16x16x32xf32> to vector<1x16x16x32xf32>
    tpu.vector_store %arg7[%c0_19, %c0_20, %c0_21, %c0_22], %73 {strides = array<i32>} : memref<1x16x16x32xf32, #tpu.memory_space<vmem>>, vector<1x16x16x32xf32>,
    %c0_23 = arith.constant 0 : index
    %c0_24 = arith.constant 0 : index
    %c0_25 = arith.constant 0 : index
    %c0_26 = arith.constant 0 : index
    %c0_27 = arith.constant 0 : index
    %74 = vector.load %arg6[%c0_23, %c0_24, %c0_25, %c0_26, %c0_27] : memref<1x1x16x16x32xf32, #tpu.memory_space<vmem>>, vector<1x1x16x16x32xf32>
    %75 = vector.shape_cast %74 : vector<1x1x16x16x32xf32> to vector<16x16x32xf32>
    %76 = vector.shape_cast %70 : vector<16x16x32xf32> to vector<1x1x16x16x32xf32>
    tpu.vector_store %arg6[%c0_23, %c0_24, %c0_25, %c0_26, %c0_27], %76 {strides = array<i32>} : memref<1x1x16x16x32xf32, #tpu.memory_space<vmem>>, vector<1x1x16x16x32xf32>,
    %77 = arith.truncf %70 : vector<16x16x32xf32> to vector<16x16x32xbf16>
    %c1 = arith.constant 1 : index
    %c1_28 = arith.constant 1 : index
    %c0_29 = arith.constant 0 : index
    %78 = vector.load %arg8[%c1, %c1_28, %c0_29] : memref<18x18x32xbf16, #tpu.memory_space<vmem>>, vector<16x16x32xbf16>
    tpu.vector_store %arg8[%c1, %c1_28, %c0_29], %77 {strides = array<i32>} : memref<18x18x32xbf16, #tpu.memory_space<vmem>>, vector<16x16x32xbf16>,
    return
  }
  func.func @transform_0(%arg0: i32, %arg1: i32) -> (i32, i32, i32, i32) {
    %c0_i32 = arith.constant 0 : i32
    %c0_i32_0 = arith.constant 0 : i32
    %c0_i32_1 = arith.constant 0 : i32
    return %arg0, %arg1, %c0_i32, %c0_i32_0 : i32, i32, i32, i32
  }
  func.func @transform_1(%arg0: i32, %arg1: i32) -> (i32, i32, i32, i32, i32) {
    %c0_i32 = arith.constant 0 : i32
    %c0_i32_0 = arith.constant 0 : i32
    %c0_i32_1 = arith.constant 0 : i32
    %c0_i32_2 = arith.constant 0 : i32
    return %arg0, %arg1, %c0_i32, %c0_i32_0, %c0_i32_1 : i32, i32, i32, i32, i32
  }
  func.func @transform_2(%arg0: i32, %arg1: i32) -> (i32, i32) {
    %c0_i32 = arith.constant 0 : i32
    %c0_i32_0 = arith.constant 0 : i32
    %c0_i32_1 = arith.constant 0 : i32
    return %c0_i32, %c0_i32_0 : i32, i32
  }
  func.func @transform_3(%arg0: i32, %arg1: i32) -> (i32, i32) {
    %c0_i32 = arith.constant 0 : i32
    %c0_i32_0 = arith.constant 0 : i32
    %c0_i32_1 = arith.constant 0 : i32
    return %c0_i32, %c0_i32_0 : i32, i32
  }
  func.func @transform_4(%arg0: i32, %arg1: i32) -> (i32, i32, i32, i32, i32) {
    %c0_i32 = arith.constant 0 : i32
    %c0_i32_0 = arith.constant 0 : i32
    %c0_i32_1 = arith.constant 0 : i32
    %c0_i32_2 = arith.constant 0 : i32
    return %arg0, %arg1, %c0_i32, %c0_i32_0, %c0_i32_1 : i32, i32, i32, i32, i32
  }
  func.func @transform_5(%arg0: i32, %arg1: i32) -> (i32, i32, i32, i32) {
    %c0_i32 = arith.constant 0 : i32
    %c0_i32_0 = arith.constant 0 : i32
    %c0_i32_1 = arith.constant 0 : i32
    %c0_i32_2 = arith.constant 0 : i32
    return %arg0, %c0_i32, %c0_i32_0, %c0_i32_1 : i32, i32, i32, i32
  }
}

</mosaic_0001>

<llo_original>
// kernel: _conv_lstm_forward_impl.2
$region0: #{_conv_lstm_forward_impl.2}
  #allocation0 [shape = 'u32[]', space=smem, size = 0x4, offset = 0x4, fixed_abs, tag = 'smem constant byte address 0x4 - core index']
  #allocation1 [shape = 'u32[72,128]{1,0:T(1,128)}', space=vmem, size = 0x9000, scoped, tag = 'internal scratch']
  #allocation2 [shape = 'bf16[18,18,32]{2,1,0:T(8,128)(2,1)}', space=vmem, size = 0x1b000, scoped, tag = 'scratch operand']
  %s0 = inlined_call_operand.vmem [shape: f32[2,8,1,1], index: 0, kind: input, shape index: {}]
  %s1 = inlined_call_operand.vmem [shape: bf16[2,8,18,18,4], index: 1, kind: input, shape index: {}]
  %s2 = inlined_call_operand.vmem [shape: bf16[324,128], index: 2, kind: input, shape index: {}]
  %s3 = inlined_call_operand.vmem [shape: f32[1,128], index: 3, kind: input, shape index: {}]
  %s4 = inlined_call_operand.vmem [shape: f32[2,8,16,16,32], index: 4, kind: output, shape index: {0}]
  %s5 = inlined_call_operand.hbm [shape: f32[2,16,16,32], index: 5, kind: output, shape index: {1}]
  %6 = xla_tuple %s4, %s5
  %s7 = sld [smem:[#allocation0]]
  $region61: #{_conv_lstm_forward_impl.2} parent=0
    _
  %s9 = ssub.s32 1, %s7
  %s10 = scalar_select 0, %s9, %s7
  $region1: #{_conv_lstm_forward_impl.2} parent=0
    #allocation3 [shape = 'u8[262144]{0}', space=vmem, size = 0x40000, scoped, tag = 'output window, operand 1']
    #allocation4 [shape = 's32[2]{0}', space=sflag, size = 0x8, scoped, tag = 'scoped memory for _conv_lstm_forward_impl.2']
    %11 = vsyncpa [#allocation4], 0
    %s12 = scalar_lea.sflag [#allocation4], 1
    %13 = vsyncpa %s12, 0
    loop: start=0, step=1, limit=18
    $region2: #{_conv_lstm_forward_impl.2} parent=1 // loop_pre_header
      _
    $region3: #{_conv_lstm_forward_impl.2} parent=1 // loop_header
      %s15 = sphi 0, %s19
      %p16 = scmp.ge.s32.totalorder %s15, 18
      %s22 = sphi 0, %s34
      %s23 = sphi 0, %s30
      %s24 = sphi 0, %s22
      %s25 = sphi 0, %s23
      %s26 = sphi 0, %s24
      %s27 = sphi 0, %s25
      %s39 = sphi 0, %s41
      %s42 = sphi 0, %s39
      %s43 = sphi 0, %s42
      %s59 = sphi 0, %s43
      %s67 = sphi 0, %s69
      %s70 = sphi 0, %s67
      %s71 = sphi 0, %s70
      %s87 = sphi 0, %s71
      %s91 = sphi 0, %s91
      %s93 = sphi 0, %s91
      %s94 = sphi 0, %s93
      %s108 = sphi 0, %s94
      %s112 = sphi 0, %s112
      %s114 = sphi 0, %s112
      %s115 = sphi 0, %s114
      %s129 = sphi 0, %s115
      %s137 = sphi 0, %s139
      %s140 = sphi 0, %s137
      %s141 = sphi 0, %s140
      %s157 = sphi 0, %s141
      %s163 = sphi 0, %s165
      %s166 = sphi 0, %s163
      %s167 = sphi 0, %s166
      %s183 = sphi 0, %s167
    $region4: #{_conv_lstm_forward_impl.2} parent=1 // loop_header_branch
      %18 = sbr.rel (%p16) target = $region8
    $region5: #{_conv_lstm_forward_impl.2} parent=1 // loop_body
      %s20 = ssub.s32 %s15, 1
      %s21 = ssub.s32 %s15, 2
      %s28 = sadd.s32 1, %s23
      %p29 = scmp.ge.s32.totalorder %s28, 8
      %s30 = scalar_select %p29, 0, %s28
      %s31 = sadd.s32 1, %s22
      %s32 = scalar_select %p29, %s31, %s22
      %p33 = scmp.ge.s32.totalorder %s32, 2
      %s34 = scalar_select %p33, 0, %s32
      %s35 = ssub.s32 %s22, %s34
      %s36 = ssub.s32 %s23, %s30
      %s37 = sor.u32 %s35, %s36
      %p38 = scmp.eq.s32.totalorder %s37, 0
      %s40 = sadd.s32 %s39, 1
      %s41 = scalar_select %p38, %s39, %s40
      %p44 = pneg %p38
      %p45 = scmp.eq.s32.totalorder %s15, 15
      %p46 = por %p44, %p45
      %p47 = scmp.ne.s32.totalorder %s39, %s42
      %p48 = scmp.eq.s32.totalorder %s15, 0
      %p49 = por %p47, %p48
      %p50 = scmp.ne.s32.totalorder %s39, %s42
      %p51 = scmp.eq.s32.totalorder %s20, 15
      %p52 = por %p50, %p51
      %p53 = scmp.ne.s32.totalorder %s42, %s43
      %p54 = scmp.eq.s32.totalorder %s20, 0
      %p55 = por %p53, %p54
      %p56 = scmp.ne.s32.totalorder %s42, %s43
      %p57 = scmp.eq.s32.totalorder %s21, 15
      %p58 = por %p56, %p57
      %p60 = scmp.ne.s32.totalorder %s43, %s59
      %p61 = scmp.eq.s32.totalorder %s21, 0
      %p62 = por %p60, %p61
      %s63 = ssub.s32 %s22, %s34
      %s64 = ssub.s32 %s23, %s30
      %s65 = sor.u32 %s63, %s64
      %p66 = scmp.eq.s32.totalorder %s65, 0
      %s68 = sadd.s32 %s67, 1
      %s69 = scalar_select %p66, %s67, %s68
      %p72 = pneg %p66
      %p73 = scmp.eq.s32.totalorder %s15, 15
      %p74 = por %p72, %p73
      %p75 = scmp.ne.s32.totalorder %s67, %s70
      %p76 = scmp.eq.s32.totalorder %s15, 0
      %p77 = por %p75, %p76
      %p78 = scmp.ne.s32.totalorder %s67, %s70
      %p79 = scmp.eq.s32.totalorder %s20, 15
      %p80 = por %p78, %p79
      %p81 = scmp.ne.s32.totalorder %s70, %s71
      %p82 = scmp.eq.s32.totalorder %s20, 0
      %p83 = por %p81, %p82
      %p84 = scmp.ne.s32.totalorder %s70, %s71
      %p85 = scmp.eq.s32.totalorder %s21, 15
      %p86 = por %p84, %p85
      %p88 = scmp.ne.s32.totalorder %s71, %s87
      %p89 = scmp.eq.s32.totalorder %s21, 0
      %p90 = por %p88, %p89
      %s92 = sadd.s32 %s91, 1
      %p95 = scmp.eq.s32.totalorder %s15, 15
      %p96 = scmp.ne.s32.totalorder %s91, %s93
      %p97 = scmp.eq.s32.totalorder %s15, 0
      %p98 = por %p96, %p97
      %p99 = scmp.ne.s32.totalorder %s91, %s93
      %p100 = scmp.eq.s32.totalorder %s20, 15
      %p101 = por %p99, %p100
      %p102 = scmp.ne.s32.totalorder %s93, %s94
      %p103 = scmp.eq.s32.totalorder %s20, 0
      %p104 = por %p102, %p103
      %p105 = scmp.ne.s32.totalorder %s93, %s94
      %p106 = scmp.eq.s32.totalorder %s21, 15
      %p107 = por %p105, %p106
      %p109 = scmp.ne.s32.totalorder %s94, %s108
      %p110 = scmp.eq.s32.totalorder %s21, 0
      %p111 = por %p109, %p110
      %s113 = sadd.s32 %s112, 1
      %p116 = scmp.eq.s32.totalorder %s15, 15
      %p117 = scmp.ne.s32.totalorder %s112, %s114
      %p118 = scmp.eq.s32.totalorder %s15, 0
      %p119 = por %p117, %p118
      %p120 = scmp.ne.s32.totalorder %s112, %s114
      %p121 = scmp.eq.s32.totalorder %s20, 15
      %p122 = por %p120, %p121
      %p123 = scmp.ne.s32.totalorder %s114, %s115
      %p124 = scmp.eq.s32.totalorder %s20, 0
      %p125 = por %p123, %p124
      %p126 = scmp.ne.s32.totalorder %s114, %s115
      %p127 = scmp.eq.s32.totalorder %s21, 15
      %p128 = por %p126, %p127
      %p130 = scmp.ne.s32.totalorder %s115, %s129
      %p131 = scmp.eq.s32.totalorder %s21, 0
      %p132 = por %p130, %p131
      %s133 = ssub.s32 %s22, %s34
      %s134 = ssub.s32 %s23, %s30
      %s135 = sor.u32 %s133, %s134
      %p136 = scmp.eq.s32.totalorder %s135, 0
      %s138 = sadd.s32 %s137, 1
      %s139 = scalar_select %p136, %s137, %s138
      %p142 = pneg %p136
      %p143 = scmp.eq.s32.totalorder %s15, 15
      %p144 = por %p142, %p143
      %p145 = scmp.ne.s32.totalorder %s137, %s140
      %p146 = scmp.eq.s32.totalorder %s15, 0
      %p147 = por %p145, %p146
      %p148 = scmp.ne.s32.totalorder %s137, %s140
      %p149 = scmp.eq.s32.totalorder %s20, 15
      %p150 = por %p148, %p149
      %p151 = scmp.ne.s32.totalorder %s140, %s141
      %p152 = scmp.eq.s32.totalorder %s20, 0
      %p153 = por %p151, %p152
      %p154 = scmp.ne.s32.totalorder %s140, %s141
      %p155 = scmp.eq.s32.totalorder %s21, 15
      %p156 = por %p154, %p155
      %p158 = scmp.ne.s32.totalorder %s141, %s157
      %p159 = scmp.eq.s32.totalorder %s21, 0
      %p160 = por %p158, %p159
      %s161 = ssub.s32 %s22, %s34
      %p162 = scmp.eq.s32.totalorder %s161, 0
      %s164 = sadd.s32 %s163, 1
      %s165 = scalar_select %p162, %s163, %s164
      %p168 = pneg %p162
      %p169 = scmp.eq.s32.totalorder %s15, 15
      %p170 = por %p168, %p169
      %p171 = scmp.ne.s32.totalorder %s163, %s166
      %p172 = scmp.eq.s32.totalorder %s15, 0
      %p173 = por %p171, %p172
      %p174 = scmp.ne.s32.totalorder %s163, %s166
      %p175 = scmp.eq.s32.totalorder %s20, 15
      %p176 = por %p174, %p175
      %p177 = scmp.ne.s32.totalorder %s166, %s167
      %p178 = scmp.eq.s32.totalorder %s20, 0
      %p179 = por %p177, %p178
      %p180 = scmp.ne.s32.totalorder %s166, %s167
      %p181 = scmp.eq.s32.totalorder %s21, 15
      %p182 = por %p180, %p181
      %p184 = scmp.ne.s32.totalorder %s167, %s183
      %p185 = scmp.eq.s32.totalorder %s21, 0
      %p186 = por %p184, %p185
      %p187 = scmp.le.s32.totalorder 1, %s15
      %p188 = scmp.lt.s32.totalorder %s15, 17
      %p189 = pnand %p187, %p188
      %p190 = pneg %p189
      // Predicated region
      $region9: #{_conv_lstm_forward_impl.2} parent=5 // pred_check
        _
      $region10: #{_conv_lstm_forward_impl.2} parent=5 // pred_check_branch
        %192 = sbr.rel (%p189) target = $region12
      $region11: #{_conv_lstm_forward_impl.2} parent=5 // pred_region
        %s193 = ssub.s32 %s15, 1
        // Predicated region
        $region13: #{_conv_lstm_forward_impl.2} parent=11 // pred_check
          %p194 = pneg %p104
        $region14: #{_conv_lstm_forward_impl.2} parent=11 // pred_check_branch
          %196 = sbr.rel (%p194) target = $region16
        $region15: #{_conv_lstm_forward_impl.2} parent=11 // pred_region
          _
        $region16: #{_conv_lstm_forward_impl.2} parent=11 // pred_fallthru
          _
        // Predicated region
        $region17: #{_conv_lstm_forward_impl.2} parent=11 // pred_check
          %p197 = pneg %p125
        $region18: #{_conv_lstm_forward_impl.2} parent=11 // pred_check_branch
          %199 = sbr.rel (%p197) target = $region20
        $region19: #{_conv_lstm_forward_impl.2} parent=11 // pred_region
          _
        $region20: #{_conv_lstm_forward_impl.2} parent=11 // pred_fallthru
          _
      $region12: #{_conv_lstm_forward_impl.2} parent=5 // pred_fallthru
        _
      %p200 = scmp.lt.s32.totalorder %s15, 16
      // Predicated region
      $region21: #{_conv_lstm_forward_impl.2} parent=5 // pred_check
        %p201 = pneg %p200
      $region22: #{_conv_lstm_forward_impl.2} parent=5 // pred_check_branch
        %203 = sbr.rel (%p201) target = $region24
      $region23: #{_conv_lstm_forward_impl.2} parent=5 // pred_region
        // Predicated region
        $region25: #{_conv_lstm_forward_impl.2} parent=23 // pred_check
          %p204 = pneg %p49
        $region26: #{_conv_lstm_forward_impl.2} parent=23 // pred_check_branch
          %206 = sbr.rel (%p204) target = $region28
        $region27: #{_conv_lstm_forward_impl.2} parent=23 // pred_region
          %p207 = scmp.lt.s32.totalorder %s22, 1
          %s208 = scalar_select %p207, %s22, 1
          %p209 = scmp.lt.s32.totalorder %s23, 7
          %s210 = scalar_select %p209, %s23, 7
          %s211 = smul.addr %s208, 8
          %s212 = sadd.s32 %s210, %s211
          %s213 = scalar_lea.vmem %s0, %s212
        $region28: #{_conv_lstm_forward_impl.2} parent=23 // pred_fallthru
          _
        // Predicated region
        $region29: #{_conv_lstm_forward_impl.2} parent=23 // pred_check
          %p214 = pneg %p77
        $region30: #{_conv_lstm_forward_impl.2} parent=23 // pred_check_branch
          %216 = sbr.rel (%p214) target = $region32
        $region31: #{_conv_lstm_forward_impl.2} parent=23 // pred_region
          %p217 = scmp.lt.s32.totalorder %s22, 1
          %s218 = scalar_select %p217, %s22, 1
          %p219 = scmp.lt.s32.totalorder %s23, 7
          %s220 = scalar_select %p219, %s23, 7
          %s221 = smul.addr %s220, 54
          %s222 = smul.addr %s218, 432
          %s223 = sadd.s32 %s221, %s222
          %s224 = smul.addr %s223, 4
          %s225 = scalar_lea.vmem %s1, %s224
        $region32: #{_conv_lstm_forward_impl.2} parent=23 // pred_fallthru
          _
      $region24: #{_conv_lstm_forward_impl.2} parent=5 // pred_fallthru
        _
      %p226 = scmp.le.s32.totalorder 1, %s15
      %p227 = scmp.lt.s32.totalorder %s15, 17
      %p228 = pnand %p226, %p227
      %p229 = pneg %p228
      // Predicated region
      $region33: #{_conv_lstm_forward_impl.2} parent=5 // pred_check
        _
      $region34: #{_conv_lstm_forward_impl.2} parent=5 // pred_check_branch
        %231 = sbr.rel (%p228) target = $region36
      $region35: #{_conv_lstm_forward_impl.2} parent=5 // pred_region
        %s232 = ssub.s32 %s15, 1
        %p233 = scmp.lt.s32.totalorder %s24, 1
        %s234 = scalar_select %p233, %s24, 1
        %p235 = scmp.lt.s32.totalorder %s25, 7
        %s236 = scalar_select %p235, %s25, 7
        %s237 = smul.addr %s234, 8
        %s238 = sadd.s32 %s236, %s237
        %s239 = scalar_lea.vmem %s0, %s238
        %p240 = pneg %p55
        %p241 = pneg %p52
        %p242 = scmp.lt.s32.totalorder %s24, 1
        %s243 = scalar_select %p242, %s24, 1
        %p244 = scmp.lt.s32.totalorder %s25, 7
        %s245 = scalar_select %p244, %s25, 7
        %s246 = smul.addr %s245, 54
        %s247 = smul.addr %s243, 432
        %s248 = sadd.s32 %s246, %s247
        %s249 = smul.addr %s248, 4
        %s250 = scalar_lea.vmem %s1, %s249
        %p251 = pneg %p83
        %p252 = pneg %p80
        %p253 = pneg %p104
        %p254 = pneg %p101
        %p255 = pneg %p125
        %p256 = pneg %p122
        %p257 = pneg %p153
        %p258 = pneg %p150
        %p259 = scmp.lt.s32.totalorder %s24, 1
        %s260 = scalar_select %p259, %s24, 1
        %p261 = scmp.lt.s32.totalorder %s25, 7
        %s262 = scalar_select %p261, %s25, 7
        %s263 = smul.addr %s262, 32
        %s264 = smul.addr %s260, 256
        %s265 = sadd.s32 %s263, %s264
        %s266 = smul.addr %s265, 8
        %s267 = scalar_lea.vmem %s4, %s266
        %p268 = pneg %p179
        %p269 = pneg %p176
        %s270 = sand.u32 %s166, 1
        %s271 = scalar_lea.sflag [#allocation4], %s270
        %s272 = sand.u32 %s166, 1
        %s273 = smul.addr %s272, 256
        %s274 = scalar_lea.vmem [#allocation3], %s273
        %p275 = scmp.lt.s32.totalorder %s24, 1
        %s276 = scalar_select %p275, %s24, 1
        %p277 = scmp.lt.s32.totalorder %s25, 7
        %s278 = scalar_select %p277, %s25, 7
        %s279 = smul.addr %s276, 8
        %s280 = sadd.s32 %s278, %s279
        %s281 = scalar_lea.vmem %s0, %s280
        %p282 = scmp.lt.s32.totalorder %s24, 1
        %s283 = scalar_select %p282, %s24, 1
        %p284 = scmp.lt.s32.totalorder %s25, 7
        %s285 = scalar_select %p284, %s25, 7
        %s286 = smul.addr %s285, 54
        %s287 = smul.addr %s283, 432
        %s288 = sadd.s32 %s286, %s287
        %s289 = smul.addr %s288, 4
        %s290 = scalar_lea.vmem %s1, %s289
        %p291 = scmp.lt.s32.totalorder %s24, 1
        %s292 = scalar_select %p291, %s24, 1
        %p293 = scmp.lt.s32.totalorder %s25, 7
        %s294 = scalar_select %p293, %s25, 7
        %s295 = smul.addr %s294, 32
        %s296 = smul.addr %s292, 256
        %s297 = sadd.s32 %s295, %s296
        %s298 = smul.addr %s297, 8
        %s299 = scalar_lea.vmem %s4, %s298
        %p301 = scmp.eq.s32.totalorder %s25, 0
        // Predicated region
        $region37: #{_conv_lstm_forward_impl.2} parent=35 // pred_check
          %p302 = pneg %p301
        $region38: #{_conv_lstm_forward_impl.2} parent=35 // pred_check_branch
          %304 = sbr.rel (%p302) target = $region40
        $region39: #{_conv_lstm_forward_impl.2} parent=35 // pred_region
          %vm305 = vcmask 257024
          %306 = vst.msk [vmem:[#allocation2] sm:$0xf] %vm305, 0
          %307 = vst.msk [vmem:[#allocation2 + $0x4] sm:$0xf] %vm305, 0
          %vm308 = vcmask 253952
          %309 = vst.msk [vmem:[#allocation2 + $0x8] sm:$0x1] %vm308, 0
          %310 = vst.msk [vmem:[#allocation2 + $0xc] sm:$0xf] %vm305, 0
          %311 = vst.msk [vmem:[#allocation2 + $0x10] sm:$0xf] %vm305, 0
          %312 = vst.msk [vmem:[#allocation2 + $0x14] sm:$0x1] %vm308, 0
          %313 = vst.msk [vmem:[#allocation2 + $0x18] sm:$0xf] %vm305, 0
          %314 = vst.msk [vmem:[#allocation2 + $0x1c] sm:$0xf] %vm305, 0
          %315 = vst.msk [vmem:[#allocation2 + $0x20] sm:$0x1] %vm308, 0
          %316 = vst.msk [vmem:[#allocation2 + $0x24] sm:$0xf] %vm305, 0
          %317 = vst.msk [vmem:[#allocation2 + $0x28] sm:$0xf] %vm305, 0
          %318 = vst.msk [vmem:[#allocation2 + $0x2c] sm:$0x1] %vm308, 0
          %319 = vst.msk [vmem:[#allocation2 + $0x30] sm:$0xf] %vm305, 0
          %320 = vst.msk [vmem:[#allocation2 + $0x34] sm:$0xf] %vm305, 0
          %321 = vst.msk [vmem:[#allocation2 + $0x38] sm:$0x1] %vm308, 0
          %322 = vst.msk [vmem:[#allocation2 + $0x3c] sm:$0xf] %vm305, 0
          %323 = vst.msk [vmem:[#allocation2 + $0x40] sm:$0xf] %vm305, 0
          %324 = vst.msk [vmem:[#allocation2 + $0x44] sm:$0x1] %vm308, 0
          %325 = vst.msk [vmem:[#allocation2 + $0x48] sm:$0xf] %vm305, 0
          %326 = vst.msk [vmem:[#allocation2 + $0x4c] sm:$0xf] %vm305, 0
          %327 = vst.msk [vmem:[#allocation2 + $0x50] sm:$0x1] %vm308, 0
          %328 = vst.msk [vmem:[#allocation2 + $0x54] sm:$0xf] %vm305, 0
          %329 = vst.msk [vmem:[#allocation2 + $0x58] sm:$0xf] %vm305, 0
          %330 = vst.msk [vmem:[#allocation2 + $0x5c] sm:$0x1] %vm308, 0
          %331 = vst.msk [vmem:[#allocation2 + $0x60] sm:$0xf] %vm305, 0
          %332 = vst.msk [vmem:[#allocation2 + $0x64] sm:$0xf] %vm305, 0
          %333 = vst.msk [vmem:[#allocation2 + $0x68] sm:$0x1] %vm308, 0
          %334 = vst.msk [vmem:[#allocation2 + $0x6c] sm:$0xf] %vm305, 0
          %335 = vst.msk [vmem:[#allocation2 + $0x70] sm:$0xf] %vm305, 0
          %336 = vst.msk [vmem:[#allocation2 + $0x74] sm:$0x1] %vm308, 0
          %337 = vst.msk [vmem:[#allocation2 + $0x78] sm:$0xf] %vm305, 0
          %338 = vst.msk [vmem:[#allocation2 + $0x7c] sm:$0xf] %vm305, 0
          %339 = vst.msk [vmem:[#allocation2 + $0x80] sm:$0x1] %vm308, 0
          %340 = vst.msk [vmem:[#allocation2 + $0x84] sm:$0xf] %vm305, 0
          %341 = vst.msk [vmem:[#allocation2 + $0x88] sm:$0xf] %vm305, 0
          %342 = vst.msk [vmem:[#allocation2 + $0x8c] sm:$0x1] %vm308, 0
          %343 = vst.msk [vmem:[#allocation2 + $0x90] sm:$0xf] %vm305, 0
          %344 = vst.msk [vmem:[#allocation2 + $0x94] sm:$0xf] %vm305, 0
          %345 = vst.msk [vmem:[#allocation2 + $0x98] sm:$0x1] %vm308, 0
          %346 = vst.msk [vmem:[#allocation2 + $0x9c] sm:$0xf] %vm305, 0
          %347 = vst.msk [vmem:[#allocation2 + $0xa0] sm:$0xf] %vm305, 0
          %348 = vst.msk [vmem:[#allocation2 + $0xa4] sm:$0x1] %vm308, 0
          %349 = vst.msk [vmem:[#allocation2 + $0xa8] sm:$0xf] %vm305, 0
          %350 = vst.msk [vmem:[#allocation2 + $0xac] sm:$0xf] %vm305, 0
          %351 = vst.msk [vmem:[#allocation2 + $0xb0] sm:$0x1] %vm308, 0
          %352 = vst.msk [vmem:[#allocation2 + $0xb4] sm:$0xf] %vm305, 0
          %353 = vst.msk [vmem:[#allocation2 + $0xb8] sm:$0xf] %vm305, 0
          %354 = vst.msk [vmem:[#allocation2 + $0xbc] sm:$0x1] %vm308, 0
          %355 = vst.msk [vmem:[#allocation2 + $0xc0] sm:$0xf] %vm305, 0
          %356 = vst.msk [vmem:[#allocation2 + $0xc4] sm:$0xf] %vm305, 0
          %357 = vst.msk [vmem:[#allocation2 + $0xc8] sm:$0x1] %vm308, 0
          %358 = vst.msk [vmem:[#allocation2 + $0xcc] sm:$0xf] %vm305, 0
          %359 = vst.msk [vmem:[#allocation2 + $0xd0] sm:$0xf] %vm305, 0
          %360 = vst.msk [vmem:[#allocation2 + $0xd4] sm:$0x1] %vm308, 0
          %vm361 = vcmask 261120
          %362 = vst.msk [vmem:[%s274] sm:$0xff] %vm361, 0.0
          %363 = vst.msk [vmem:[%s274 + $0x8] sm:$0xff] %vm361, 0.0
          %364 = vst.msk [vmem:[%s274 + $0x10] sm:$0xff] %vm361, 0.0
          %365 = vst.msk [vmem:[%s274 + $0x18] sm:$0xff] %vm361, 0.0
          %366 = vst.msk [vmem:[%s274 + $0x20] sm:$0xff] %vm361, 0.0
          %367 = vst.msk [vmem:[%s274 + $0x28] sm:$0xff] %vm361, 0.0
          %368 = vst.msk [vmem:[%s274 + $0x30] sm:$0xff] %vm361, 0.0
          %369 = vst.msk [vmem:[%s274 + $0x38] sm:$0xff] %vm361, 0.0
          %370 = vst.msk [vmem:[%s274 + $0x40] sm:$0xff] %vm361, 0.0
          %371 = vst.msk [vmem:[%s274 + $0x48] sm:$0xff] %vm361, 0.0
          %372 = vst.msk [vmem:[%s274 + $0x50] sm:$0xff] %vm361, 0.0
          %373 = vst.msk [vmem:[%s274 + $0x58] sm:$0xff] %vm361, 0.0
          %374 = vst.msk [vmem:[%s274 + $0x60] sm:$0xff] %vm361, 0.0
          %375 = vst.msk [vmem:[%s274 + $0x68] sm:$0xff] %vm361, 0.0
          %376 = vst.msk [vmem:[%s274 + $0x70] sm:$0xff] %vm361, 0.0
          %377 = vst.msk [vmem:[%s274 + $0x78] sm:$0xff] %vm361, 0.0
          %378 = vst.msk [vmem:[%s274 + $0x80] sm:$0xff] %vm361, 0.0
          %379 = vst.msk [vmem:[%s274 + $0x88] sm:$0xff] %vm361, 0.0
          %380 = vst.msk [vmem:[%s274 + $0x90] sm:$0xff] %vm361, 0.0
          %381 = vst.msk [vmem:[%s274 + $0x98] sm:$0xff] %vm361, 0.0
          %382 = vst.msk [vmem:[%s274 + $0xa0] sm:$0xff] %vm361, 0.0
          %383 = vst.msk [vmem:[%s274 + $0xa8] sm:$0xff] %vm361, 0.0
          %384 = vst.msk [vmem:[%s274 + $0xb0] sm:$0xff] %vm361, 0.0
          %385 = vst.msk [vmem:[%s274 + $0xb8] sm:$0xff] %vm361, 0.0
          %386 = vst.msk [vmem:[%s274 + $0xc0] sm:$0xff] %vm361, 0.0
          %387 = vst.msk [vmem:[%s274 + $0xc8] sm:$0xff] %vm361, 0.0
          %388 = vst.msk [vmem:[%s274 + $0xd0] sm:$0xff] %vm361, 0.0
          %389 = vst.msk [vmem:[%s274 + $0xd8] sm:$0xff] %vm361, 0.0
          %390 = vst.msk [vmem:[%s274 + $0xe0] sm:$0xff] %vm361, 0.0
          %391 = vst.msk [vmem:[%s274 + $0xe8] sm:$0xff] %vm361, 0.0
          %392 = vst.msk [vmem:[%s274 + $0xf0] sm:$0xff] %vm361, 0.0
          %393 = vst.msk [vmem:[%s274 + $0xf8] sm:$0xff] %vm361, 0.0
        $region40: #{_conv_lstm_forward_impl.2} parent=35 // pred_fallthru
          _
        %v394 = vld [vmem:[%s290] sm:$0xf]
        %v395 = vld [vmem:[%s290 + $0x4] sm:$0xf]
        %v396 = vld [vmem:[%s290 + $0x8] sm:$0x1]
        %v397 = vld [vmem:[%s290 + $0xc] sm:$0xf]
        %v398 = vld [vmem:[%s290 + $0x10] sm:$0xf]
        %v399 = vld [vmem:[%s290 + $0x14] sm:$0x1]
        %v400 = vld [vmem:[%s290 + $0x18] sm:$0xf]
        %v401 = vld [vmem:[%s290 + $0x1c] sm:$0xf]
        %v402 = vld [vmem:[%s290 + $0x20] sm:$0x1]
        %v403 = vld [vmem:[%s290 + $0x24] sm:$0xf]
        %v404 = vld [vmem:[%s290 + $0x28] sm:$0xf]
        %v405 = vld [vmem:[%s290 + $0x2c] sm:$0x1]
        %v406 = vld [vmem:[%s290 + $0x30] sm:$0xf]
        %v407 = vld [vmem:[%s290 + $0x34] sm:$0xf]
        %v408 = vld [vmem:[%s290 + $0x38] sm:$0x1]
        %v409 = vld [vmem:[%s290 + $0x3c] sm:$0xf]
        %v410 = vld [vmem:[%s290 + $0x40] sm:$0xf]
        %v411 = vld [vmem:[%s290 + $0x44] sm:$0x1]
        %v412 = vld [vmem:[%s290 + $0x48] sm:$0xf]
        %v413 = vld [vmem:[%s290 + $0x4c] sm:$0xf]
        %v414 = vld [vmem:[%s290 + $0x50] sm:$0x1]
        %v415 = vld [vmem:[%s290 + $0x54] sm:$0xf]
        %v416 = vld [vmem:[%s290 + $0x58] sm:$0xf]
        %v417 = vld [vmem:[%s290 + $0x5c] sm:$0x1]
        %v418 = vld [vmem:[%s290 + $0x60] sm:$0xf]
        %v419 = vld [vmem:[%s290 + $0x64] sm:$0xf]
        %v420 = vld [vmem:[%s290 + $0x68] sm:$0x1]
        %v421 = vld [vmem:[%s290 + $0x6c] sm:$0xf]
        %v422 = vld [vmem:[%s290 + $0x70] sm:$0xf]
        %v423 = vld [vmem:[%s290 + $0x74] sm:$0x1]
        %v424 = vld [vmem:[%s290 + $0x78] sm:$0xf]
        %v425 = vld [vmem:[%s290 + $0x7c] sm:$0xf]
        %v426 = vld [vmem:[%s290 + $0x80] sm:$0x1]
        %v427 = vld [vmem:[%s290 + $0x84] sm:$0xf]
        %v428 = vld [vmem:[%s290 + $0x88] sm:$0xf]
        %v429 = vld [vmem:[%s290 + $0x8c] sm:$0x1]
        %v430 = vld [vmem:[%s290 + $0x90] sm:$0xf]
        %v431 = vld [vmem:[%s290 + $0x94] sm:$0xf]
        %v432 = vld [vmem:[%s290 + $0x98] sm:$0x1]
        %v433 = vld [vmem:[%s290 + $0x9c] sm:$0xf]
        %v434 = vld [vmem:[%s290 + $0xa0] sm:$0xf]
        %v435 = vld [vmem:[%s290 + $0xa4] sm:$0x1]
        %v436 = vld [vmem:[%s290 + $0xa8] sm:$0xf]
        %v437 = vld [vmem:[%s290 + $0xac] sm:$0xf]
        %v438 = vld [vmem:[%s290 + $0xb0] sm:$0x1]
        %v439 = vld [vmem:[%s290 + $0xb4] sm:$0xf]
        %v440 = vld [vmem:[%s290 + $0xb8] sm:$0xf]
        %v441 = vld [vmem:[%s290 + $0xbc] sm:$0x1]
        %v442 = vld [vmem:[%s290 + $0xc0] sm:$0xf]
        %v443 = vld [vmem:[%s290 + $0xc4] sm:$0xf]
        %v444 = vld [vmem:[%s290 + $0xc8] sm:$0x1]
        %v445 = vld [vmem:[%s290 + $0xcc] sm:$0xf]
        %v446 = vld [vmem:[%s290 + $0xd0] sm:$0xf]
        %v447 = vld [vmem:[%s290 + $0xd4] sm:$0x1]
        %v448 = vld [vmem:[#allocation2] sm:$0xf]
        %v449 = vld [vmem:[#allocation2 + $0x4] sm:$0xf]
        %v450 = vld [vmem:[#allocation2 + $0x8] sm:$0x1]
        %v451 = vld [vmem:[#allocation2 + $0xc] sm:$0xf]
        %v452 = vld [vmem:[#allocation2 + $0x10] sm:$0xf]
        %v453 = vld [vmem:[#allocation2 + $0x14] sm:$0x1]
        %v454 = vld [vmem:[#allocation2 + $0x18] sm:$0xf]
        %v455 = vld [vmem:[#allocation2 + $0x1c] sm:$0xf]
        %v456 = vld [vmem:[#allocation2 + $0x20] sm:$0x1]
        %v457 = vld [vmem:[#allocation2 + $0x24] sm:$0xf]
        %v458 = vld [vmem:[#allocation2 + $0x28] sm:$0xf]
        %v459 = vld [vmem:[#allocation2 + $0x2c] sm:$0x1]
        %v460 = vld [vmem:[#allocation2 + $0x30] sm:$0xf]
        %v461 = vld [vmem:[#allocation2 + $0x34] sm:$0xf]
        %v462 = vld [vmem:[#allocation2 + $0x38] sm:$0x1]
        %v463 = vld [vmem:[#allocation2 + $0x3c] sm:$0xf]
        %v464 = vld [vmem:[#allocation2 + $0x40] sm:$0xf]
        %v465 = vld [vmem:[#allocation2 + $0x44] sm:$0x1]
        %v466 = vld [vmem:[#allocation2 + $0x48] sm:$0xf]
        %v467 = vld [vmem:[#allocation2 + $0x4c] sm:$0xf]
        %v468 = vld [vmem:[#allocation2 + $0x50] sm:$0x1]
        %v469 = vld [vmem:[#allocation2 + $0x54] sm:$0xf]
        %v470 = vld [vmem:[#allocation2 + $0x58] sm:$0xf]
        %v471 = vld [vmem:[#allocation2 + $0x5c] sm:$0x1]
        %v472 = vld [vmem:[#allocation2 + $0x60] sm:$0xf]
        %v473 = vld [vmem:[#allocation2 + $0x64] sm:$0xf]
        %v474 = vld [vmem:[#allocation2 + $0x68] sm:$0x1]
        %v475 = vld [vmem:[#allocation2 + $0x6c] sm:$0xf]
        %v476 = vld [vmem:[#allocation2 + $0x70] sm:$0xf]
        %v477 = vld [vmem:[#allocation2 + $0x74] sm:$0x1]
        %v478 = vld [vmem:[#allocation2 + $0x78] sm:$0xf]
        %v479 = vld [vmem:[#allocation2 + $0x7c] sm:$0xf]
        %v480 = vld [vmem:[#allocation2 + $0x80] sm:$0x1]
        %v481 = vld [vmem:[#allocation2 + $0x84] sm:$0xf]
        %v482 = vld [vmem:[#allocation2 + $0x88] sm:$0xf]
        %v483 = vld [vmem:[#allocation2 + $0x8c] sm:$0x1]
        %v484 = vld [vmem:[#allocation2 + $0x90] sm:$0xf]
        %v485 = vld [vmem:[#allocation2 + $0x94] sm:$0xf]
        %v486 = vld [vmem:[#allocation2 + $0x98] sm:$0x1]
        %v487 = vld [vmem:[#allocation2 + $0x9c] sm:$0xf]
        %v488 = vld [vmem:[#allocation2 + $0xa0] sm:$0xf]
        %v489 = vld [vmem:[#allocation2 + $0xa4] sm:$0x1]
        %v490 = vld [vmem:[#allocation2 + $0xa8] sm:$0xf]
        %v491 = vld [vmem:[#allocation2 + $0xac] sm:$0xf]
        %v492 = vld [vmem:[#allocation2 + $0xb0] sm:$0x1]
        %v493 = vld [vmem:[#allocation2 + $0xb4] sm:$0xf]
        %v494 = vld [vmem:[#allocation2 + $0xb8] sm:$0xf]
        %v495 = vld [vmem:[#allocation2 + $0xbc] sm:$0x1]
        %v496 = vld [vmem:[#allocation2 + $0xc0] sm:$0xf]
        %v497 = vld [vmem:[#allocation2 + $0xc4] sm:$0xf]
        %v498 = vld [vmem:[#allocation2 + $0xc8] sm:$0x1]
        %v499 = vld [vmem:[#allocation2 + $0xcc] sm:$0xf]
        %v500 = vld [vmem:[#allocation2 + $0xd0] sm:$0xf]
        %v501 = vld [vmem:[#allocation2 + $0xd4] sm:$0x1]
        %vm502 = vsmask.f32 3328
        %vm503 = vsmask.f32 7440
        %vm504 = vmor %vm502, %vm503
        %v506 = vshrl.u32 %v394, 16
        %v508 = vrot.slane %v506, 4
        %v509 = vshll.u32 %v394, 16
        %v511 = vrot.slane %v509, 5
        %v512 = vor.u32 %v508, %v511
        %v513 = vrot.slane %v512, 4
        %v515 = vshll.u32 %v395, 16
        %v517 = vrot.slane %v515, 5
        %v518 = vsel %vm504, %v513, %v517
        %v519 = vshrl.u32 %v395, 16
        %v521 = vrot.slane %v519, 4
        %v522 = vor.u32 %v521, %v517
        %v523 = vrot.slane %v522, 4
        %v525 = vshll.u32 %v396, 16
        %v527 = vrot.slane %v525, 5
        %v528 = vsel %vm504, %v523, %v527
        %v530 = vshrl.u32 %v397, 16
        %v532 = vrot.slane %v530, 4
        %v533 = vshll.u32 %v397, 16
        %v535 = vrot.slane %v533, 5
        %v536 = vor.u32 %v532, %v535
        %v537 = vrot.slane %v536, 4
        %v539 = vshll.u32 %v398, 16
        %v541 = vrot.slane %v539, 5
        %v542 = vsel %vm504, %v537, %v541
        %v543 = vshrl.u32 %v398, 16
        %v545 = vrot.slane %v543, 4
        %v546 = vor.u32 %v545, %v541
        %v547 = vrot.slane %v546, 4
        %v549 = vshll.u32 %v399, 16
        %v551 = vrot.slane %v549, 5
        %v552 = vsel %vm504, %v547, %v551
        %v554 = vshrl.u32 %v400, 16
        %v556 = vrot.slane %v554, 4
        %v557 = vshll.u32 %v400, 16
        %v559 = vrot.slane %v557, 5
        %v560 = vor.u32 %v556, %v559
        %v561 = vrot.slane %v560, 4
        %v563 = vshll.u32 %v401, 16
        %v565 = vrot.slane %v563, 5
        %v566 = vsel %vm504, %v561, %v565
        %v567 = vshrl.u32 %v401, 16
        %v569 = vrot.slane %v567, 4
        %v570 = vor.u32 %v569, %v565
        %v571 = vrot.slane %v570, 4
        %v573 = vshll.u32 %v402, 16
        %v575 = vrot.slane %v573, 5
        %v576 = vsel %vm504, %v571, %v575
        %v578 = vshrl.u32 %v403, 16
        %v580 = vrot.slane %v578, 4
        %v581 = vshll.u32 %v403, 16
        %v583 = vrot.slane %v581, 5
        %v584 = vor.u32 %v580, %v583
        %v585 = vrot.slane %v584, 4
        %v587 = vshll.u32 %v404, 16
        %v589 = vrot.slane %v587, 5
        %v590 = vsel %vm504, %v585, %v589
        %v591 = vshrl.u32 %v404, 16
        %v593 = vrot.slane %v591, 4
        %v594 = vor.u32 %v593, %v589
        %v595 = vrot.slane %v594, 4
        %v597 = vshll.u32 %v405, 16
        %v599 = vrot.slane %v597, 5
        %v600 = vsel %vm504, %v595, %v599
        %v602 = vshrl.u32 %v406, 16
        %v604 = vrot.slane %v602, 4
        %v605 = vshll.u32 %v406, 16
        %v607 = vrot.slane %v605, 5
        %v608 = vor.u32 %v604, %v607
        %v609 = vrot.slane %v608, 4
        %v611 = vshll.u32 %v407, 16
        %v613 = vrot.slane %v611, 5
        %v614 = vsel %vm504, %v609, %v613
        %v615 = vshrl.u32 %v407, 16
        %v617 = vrot.slane %v615, 4
        %v618 = vor.u32 %v617, %v613
        %v619 = vrot.slane %v618, 4
        %v621 = vshll.u32 %v408, 16
        %v623 = vrot.slane %v621, 5
        %v624 = vsel %vm504, %v619, %v623
        %v626 = vshrl.u32 %v409, 16
        %v628 = vrot.slane %v626, 4
        %v629 = vshll.u32 %v409, 16
        %v631 = vrot.slane %v629, 5
        %v632 = vor.u32 %v628, %v631
        %v633 = vrot.slane %v632, 4
        %v635 = vshll.u32 %v410, 16
        %v637 = vrot.slane %v635, 5
        %v638 = vsel %vm504, %v633, %v637
        %v639 = vshrl.u32 %v410, 16
        %v641 = vrot.slane %v639, 4
        %v642 = vor.u32 %v641, %v637
        %v643 = vrot.slane %v642, 4
        %v645 = vshll.u32 %v411, 16
        %v647 = vrot.slane %v645, 5
        %v648 = vsel %vm504, %v643, %v647
        %v650 = vshrl.u32 %v412, 16
        %v652 = vrot.slane %v650, 4
        %v653 = vshll.u32 %v412, 16
        %v655 = vrot.slane %v653, 5
        %v656 = vor.u32 %v652, %v655
        %v657 = vrot.slane %v656, 4
        %v659 = vshll.u32 %v413, 16
        %v661 = vrot.slane %v659, 5
        %v662 = vsel %vm504, %v657, %v661
        %v663 = vshrl.u32 %v413, 16
        %v665 = vrot.slane %v663, 4
        %v666 = vor.u32 %v665, %v661
        %v667 = vrot.slane %v666, 4
        %v669 = vshll.u32 %v414, 16
        %v671 = vrot.slane %v669, 5
        %v672 = vsel %vm504, %v667, %v671
        %v674 = vshrl.u32 %v415, 16
        %v676 = vrot.slane %v674, 4
        %v677 = vshll.u32 %v415, 16
        %v679 = vrot.slane %v677, 5
        %v680 = vor.u32 %v676, %v679
        %v681 = vrot.slane %v680, 4
        %v683 = vshll.u32 %v416, 16
        %v685 = vrot.slane %v683, 5
        %v686 = vsel %vm504, %v681, %v685
        %v687 = vshrl.u32 %v416, 16
        %v689 = vrot.slane %v687, 4
        %v690 = vor.u32 %v689, %v685
        %v691 = vrot.slane %v690, 4
        %v693 = vshll.u32 %v417, 16
        %v695 = vrot.slane %v693, 5
        %v696 = vsel %vm504, %v691, %v695
        %v698 = vshrl.u32 %v418, 16
        %v700 = vrot.slane %v698, 4
        %v701 = vshll.u32 %v418, 16
        %v703 = vrot.slane %v701, 5
        %v704 = vor.u32 %v700, %v703
        %v705 = vrot.slane %v704, 4
        %v707 = vshll.u32 %v419, 16
        %v709 = vrot.slane %v707, 5
        %v710 = vsel %vm504, %v705, %v709
        %v711 = vshrl.u32 %v419, 16
        %v713 = vrot.slane %v711, 4
        %v714 = vor.u32 %v713, %v709
        %v715 = vrot.slane %v714, 4
        %v717 = vshll.u32 %v420, 16
        %v719 = vrot.slane %v717, 5
        %v720 = vsel %vm504, %v715, %v719
        %v722 = vshrl.u32 %v421, 16
        %v724 = vrot.slane %v722, 4
        %v725 = vshll.u32 %v421, 16
        %v727 = vrot.slane %v725, 5
        %v728 = vor.u32 %v724, %v727
        %v729 = vrot.slane %v728, 4
        %v731 = vshll.u32 %v422, 16
        %v733 = vrot.slane %v731, 5
        %v734 = vsel %vm504, %v729, %v733
        %v735 = vshrl.u32 %v422, 16
        %v737 = vrot.slane %v735, 4
        %v738 = vor.u32 %v737, %v733
        %v739 = vrot.slane %v738, 4
        %v741 = vshll.u32 %v423, 16
        %v743 = vrot.slane %v741, 5
        %v744 = vsel %vm504, %v739, %v743
        %v746 = vshrl.u32 %v424, 16
        %v748 = vrot.slane %v746, 4
        %v749 = vshll.u32 %v424, 16
        %v751 = vrot.slane %v749, 5
        %v752 = vor.u32 %v748, %v751
        %v753 = vrot.slane %v752, 4
        %v755 = vshll.u32 %v425, 16
        %v757 = vrot.slane %v755, 5
        %v758 = vsel %vm504, %v753, %v757
        %v759 = vshrl.u32 %v425, 16
        %v761 = vrot.slane %v759, 4
        %v762 = vor.u32 %v761, %v757
        %v763 = vrot.slane %v762, 4
        %v765 = vshll.u32 %v426, 16
        %v767 = vrot.slane %v765, 5
        %v768 = vsel %vm504, %v763, %v767
        %v770 = vshrl.u32 %v427, 16
        %v772 = vrot.slane %v770, 4
        %v773 = vshll.u32 %v427, 16
        %v775 = vrot.slane %v773, 5
        %v776 = vor.u32 %v772, %v775
        %v777 = vrot.slane %v776, 4
        %v779 = vshll.u32 %v428, 16
        %v781 = vrot.slane %v779, 5
        %v782 = vsel %vm504, %v777, %v781
        %v783 = vshrl.u32 %v428, 16
        %v785 = vrot.slane %v783, 4
        %v786 = vor.u32 %v785, %v781
        %v787 = vrot.slane %v786, 4
        %v789 = vshll.u32 %v429, 16
        %v791 = vrot.slane %v789, 5
        %v792 = vsel %vm504, %v787, %v791
        %v794 = vshrl.u32 %v430, 16
        %v796 = vrot.slane %v794, 4
        %v797 = vshll.u32 %v430, 16
        %v799 = vrot.slane %v797, 5
        %v800 = vor.u32 %v796, %v799
        %v801 = vrot.slane %v800, 4
        %v803 = vshll.u32 %v431, 16
        %v805 = vrot.slane %v803, 5
        %v806 = vsel %vm504, %v801, %v805
        %v807 = vshrl.u32 %v431, 16
        %v809 = vrot.slane %v807, 4
        %v810 = vor.u32 %v809, %v805
        %v811 = vrot.slane %v810, 4
        %v813 = vshll.u32 %v432, 16
        %v815 = vrot.slane %v813, 5
        %v816 = vsel %vm504, %v811, %v815
        %v818 = vshrl.u32 %v433, 16
        %v820 = vrot.slane %v818, 4
        %v821 = vshll.u32 %v433, 16
        %v823 = vrot.slane %v821, 5
        %v824 = vor.u32 %v820, %v823
        %v825 = vrot.slane %v824, 4
        %v827 = vshll.u32 %v434, 16
        %v829 = vrot.slane %v827, 5
        %v830 = vsel %vm504, %v825, %v829
        %v831 = vshrl.u32 %v434, 16
        %v833 = vrot.slane %v831, 4
        %v834 = vor.u32 %v833, %v829
        %v835 = vrot.slane %v834, 4
        %v837 = vshll.u32 %v435, 16
        %v839 = vrot.slane %v837, 5
        %v840 = vsel %vm504, %v835, %v839
        %v842 = vshrl.u32 %v436, 16
        %v844 = vrot.slane %v842, 4
        %v845 = vshll.u32 %v436, 16
        %v847 = vrot.slane %v845, 5
        %v848 = vor.u32 %v844, %v847
        %v849 = vrot.slane %v848, 4
        %v851 = vshll.u32 %v437, 16
        %v853 = vrot.slane %v851, 5
        %v854 = vsel %vm504, %v849, %v853
        %v855 = vshrl.u32 %v437, 16
        %v857 = vrot.slane %v855, 4
        %v858 = vor.u32 %v857, %v853
        %v859 = vrot.slane %v858, 4
        %v861 = vshll.u32 %v438, 16
        %v863 = vrot.slane %v861, 5
        %v864 = vsel %vm504, %v859, %v863
        %v866 = vshrl.u32 %v439, 16
        %v868 = vrot.slane %v866, 4
        %v869 = vshll.u32 %v439, 16
        %v871 = vrot.slane %v869, 5
        %v872 = vor.u32 %v868, %v871
        %v873 = vrot.slane %v872, 4
        %v875 = vshll.u32 %v440, 16
        %v877 = vrot.slane %v875, 5
        %v878 = vsel %vm504, %v873, %v877
        %v879 = vshrl.u32 %v440, 16
        %v881 = vrot.slane %v879, 4
        %v882 = vor.u32 %v881, %v877
        %v883 = vrot.slane %v882, 4
        %v885 = vshll.u32 %v441, 16
        %v887 = vrot.slane %v885, 5
        %v888 = vsel %vm504, %v883, %v887
        %vm937 = vcmask 1042432
        %vm938 = vcmask 1046532
        %vm939 = vmor %vm937, %vm938
        %v940 = vrot.slane %v394, 5
        %v941 = vrot.slane %v940, 4
        %v942 = vrot.slane %v395, 5
        %v943 = vsel %vm939, %v941, %v942
        %v944 = vrot.slane %v942, 4
        %v945 = vrot.slane %v396, 5
        %v946 = vsel %vm939, %v944, %v945
        %v947 = vrot.slane %v397, 5
        %v948 = vrot.slane %v947, 4
        %v949 = vrot.slane %v398, 5
        %v950 = vsel %vm939, %v948, %v949
        %v951 = vrot.slane %v949, 4
        %v952 = vrot.slane %v399, 5
        %v953 = vsel %vm939, %v951, %v952
        %v954 = vrot.slane %v400, 5
        %v955 = vrot.slane %v954, 4
        %v956 = vrot.slane %v401, 5
        %v957 = vsel %vm939, %v955, %v956
        %v958 = vrot.slane %v956, 4
        %v959 = vrot.slane %v402, 5
        %v960 = vsel %vm939, %v958, %v959
        %v961 = vrot.slane %v403, 5
        %v962 = vrot.slane %v961, 4
        %v963 = vrot.slane %v404, 5
        %v964 = vsel %vm939, %v962, %v963
        %v965 = vrot.slane %v963, 4
        %v966 = vrot.slane %v405, 5
        %v967 = vsel %vm939, %v965, %v966
        %v968 = vrot.slane %v406, 5
        %v969 = vrot.slane %v968, 4
        %v970 = vrot.slane %v407, 5
        %v971 = vsel %vm939, %v969, %v970
        %v972 = vrot.slane %v970, 4
        %v973 = vrot.slane %v408, 5
        %v974 = vsel %vm939, %v972, %v973
        %v975 = vrot.slane %v409, 5
        %v976 = vrot.slane %v975, 4
        %v977 = vrot.slane %v410, 5
        %v978 = vsel %vm939, %v976, %v977
        %v979 = vrot.slane %v977, 4
        %v980 = vrot.slane %v411, 5
        %v981 = vsel %vm939, %v979, %v980
        %v982 = vrot.slane %v412, 5
        %v983 = vrot.slane %v982, 4
        %v984 = vrot.slane %v413, 5
        %v985 = vsel %vm939, %v983, %v984
        %v986 = vrot.slane %v984, 4
        %v987 = vrot.slane %v414, 5
        %v988 = vsel %vm939, %v986, %v987
        %v989 = vrot.slane %v415, 5
        %v990 = vrot.slane %v989, 4
        %v991 = vrot.slane %v416, 5
        %v992 = vsel %vm939, %v990, %v991
        %v993 = vrot.slane %v991, 4
        %v994 = vrot.slane %v417, 5
        %v995 = vsel %vm939, %v993, %v994
        %v996 = vrot.slane %v418, 5
        %v997 = vrot.slane %v996, 4
        %v998 = vrot.slane %v419, 5
        %v999 = vsel %vm939, %v997, %v998
        %v1000 = vrot.slane %v998, 4
        %v1001 = vrot.slane %v420, 5
        %v1002 = vsel %vm939, %v1000, %v1001
        %v1003 = vrot.slane %v421, 5
        %v1004 = vrot.slane %v1003, 4
        %v1005 = vrot.slane %v422, 5
        %v1006 = vsel %vm939, %v1004, %v1005
        %v1007 = vrot.slane %v1005, 4
        %v1008 = vrot.slane %v423, 5
        %v1009 = vsel %vm939, %v1007, %v1008
        %v1010 = vrot.slane %v424, 5
        %v1011 = vrot.slane %v1010, 4
        %v1012 = vrot.slane %v425, 5
        %v1013 = vsel %vm939, %v1011, %v1012
        %v1014 = vrot.slane %v1012, 4
        %v1015 = vrot.slane %v426, 5
        %v1016 = vsel %vm939, %v1014, %v1015
        %v1017 = vrot.slane %v427, 5
        %v1018 = vrot.slane %v1017, 4
        %v1019 = vrot.slane %v428, 5
        %v1020 = vsel %vm939, %v1018, %v1019
        %v1021 = vrot.slane %v1019, 4
        %v1022 = vrot.slane %v429, 5
        %v1023 = vsel %vm939, %v1021, %v1022
        %v1024 = vrot.slane %v430, 5
        %v1025 = vrot.slane %v1024, 4
        %v1026 = vrot.slane %v431, 5
        %v1027 = vsel %vm939, %v1025, %v1026
        %v1028 = vrot.slane %v1026, 4
        %v1029 = vrot.slane %v432, 5
        %v1030 = vsel %vm939, %v1028, %v1029
        %v1031 = vrot.slane %v433, 5
        %v1032 = vrot.slane %v1031, 4
        %v1033 = vrot.slane %v434, 5
        %v1034 = vsel %vm939, %v1032, %v1033
        %v1035 = vrot.slane %v1033, 4
        %v1036 = vrot.slane %v435, 5
        %v1037 = vsel %vm939, %v1035, %v1036
        %v1038 = vrot.slane %v436, 5
        %v1039 = vrot.slane %v1038, 4
        %v1040 = vrot.slane %v437, 5
        %v1041 = vsel %vm939, %v1039, %v1040
        %v1042 = vrot.slane %v1040, 4
        %v1043 = vrot.slane %v438, 5
        %v1044 = vsel %vm939, %v1042, %v1043
        %v1045 = vrot.slane %v439, 5
        %v1046 = vrot.slane %v1045, 4
        %v1047 = vrot.slane %v440, 5
        %v1048 = vsel %vm939, %v1046, %v1047
        %v1049 = vrot.slane %v1047, 4
        %v1050 = vrot.slane %v441, 5
        %v1051 = vsel %vm939, %v1049, %v1050
        %v1053 = vshrl.u32 %v442, 16
        %v1055 = vrot.slane %v1053, 4
        %v1056 = vshll.u32 %v442, 16
        %v1058 = vrot.slane %v1056, 5
        %v1059 = vor.u32 %v1055, %v1058
        %v1060 = vrot.slane %v1059, 4
        %v1062 = vshll.u32 %v443, 16
        %v1064 = vrot.slane %v1062, 5
        %v1065 = vsel %vm504, %v1060, %v1064
        %v1066 = vshrl.u32 %v443, 16
        %v1068 = vrot.slane %v1066, 4
        %v1069 = vor.u32 %v1068, %v1064
        %v1070 = vrot.slane %v1069, 4
        %v1072 = vshll.u32 %v444, 16
        %v1074 = vrot.slane %v1072, 5
        %v1075 = vsel %vm504, %v1070, %v1074
        %v1079 = vrot.slane %v442, 5
        %v1080 = vrot.slane %v1079, 4
        %v1081 = vrot.slane %v443, 5
        %v1082 = vsel %vm939, %v1080, %v1081
        %v1083 = vrot.slane %v1081, 4
        %v1084 = vrot.slane %v444, 5
        %v1085 = vsel %vm939, %v1083, %v1084
        %v1087 = vshrl.u32 %v445, 16
        %v1089 = vrot.slane %v1087, 4
        %v1090 = vshll.u32 %v445, 16
        %v1092 = vrot.slane %v1090, 5
        %v1093 = vor.u32 %v1089, %v1092
        %v1094 = vrot.slane %v1093, 4
        %v1096 = vshll.u32 %v446, 16
        %v1098 = vrot.slane %v1096, 5
        %v1099 = vsel %vm504, %v1094, %v1098
        %v1100 = vshrl.u32 %v446, 16
        %v1102 = vrot.slane %v1100, 4
        %v1103 = vor.u32 %v1102, %v1098
        %v1104 = vrot.slane %v1103, 4
        %v1106 = vshll.u32 %v447, 16
        %v1108 = vrot.slane %v1106, 5
        %v1109 = vsel %vm504, %v1104, %v1108
        %v1113 = vrot.slane %v445, 5
        %v1114 = vrot.slane %v1113, 4
        %v1115 = vrot.slane %v446, 5
        %v1116 = vsel %vm939, %v1114, %v1115
        %v1117 = vrot.slane %v1115, 4
        %v1118 = vrot.slane %v447, 5
        %v1119 = vsel %vm939, %v1117, %v1118
        %v1121 = vshrl.u32 %v448, 16
        %v1123 = vrot.slane %v1121, 4
        %v1124 = vshll.u32 %v448, 16
        %v1126 = vrot.slane %v1124, 5
        %v1127 = vor.u32 %v1123, %v1126
        %v1128 = vrot.slane %v1127, 4
        %v1130 = vshll.u32 %v449, 16
        %v1132 = vrot.slane %v1130, 5
        %v1133 = vsel %vm504, %v1128, %v1132
        %v1134 = vshrl.u32 %v449, 16
        %v1136 = vrot.slane %v1134, 4
        %v1137 = vor.u32 %v1136, %v1132
        %v1138 = vrot.slane %v1137, 4
        %v1140 = vshll.u32 %v450, 16
        %v1142 = vrot.slane %v1140, 5
        %v1143 = vsel %vm504, %v1138, %v1142
        %v1145 = vshrl.u32 %v451, 16
        %v1147 = vrot.slane %v1145, 4
        %v1148 = vshll.u32 %v451, 16
        %v1150 = vrot.slane %v1148, 5
        %v1151 = vor.u32 %v1147, %v1150
        %v1152 = vrot.slane %v1151, 4
        %v1154 = vshll.u32 %v452, 16
        %v1156 = vrot.slane %v1154, 5
        %v1157 = vsel %vm504, %v1152, %v1156
        %v1158 = vshrl.u32 %v452, 16
        %v1160 = vrot.slane %v1158, 4
        %v1161 = vor.u32 %v1160, %v1156
        %v1162 = vrot.slane %v1161, 4
        %v1164 = vshll.u32 %v453, 16
        %v1166 = vrot.slane %v1164, 5
        %v1167 = vsel %vm504, %v1162, %v1166
        %v1169 = vshrl.u32 %v454, 16
        %v1171 = vrot.slane %v1169, 4
        %v1172 = vshll.u32 %v454, 16
        %v1174 = vrot.slane %v1172, 5
        %v1175 = vor.u32 %v1171, %v1174
        %v1176 = vrot.slane %v1175, 4
        %v1178 = vshll.u32 %v455, 16
        %v1180 = vrot.slane %v1178, 5
        %v1181 = vsel %vm504, %v1176, %v1180
        %v1182 = vshrl.u32 %v455, 16
        %v1184 = vrot.slane %v1182, 4
        %v1185 = vor.u32 %v1184, %v1180
        %v1186 = vrot.slane %v1185, 4
        %v1188 = vshll.u32 %v456, 16
        %v1190 = vrot.slane %v1188, 5
        %v1191 = vsel %vm504, %v1186, %v1190
        %v1193 = vshrl.u32 %v457, 16
        %v1195 = vrot.slane %v1193, 4
        %v1196 = vshll.u32 %v457, 16
        %v1198 = vrot.slane %v1196, 5
        %v1199 = vor.u32 %v1195, %v1198
        %v1200 = vrot.slane %v1199, 4
        %v1202 = vshll.u32 %v458, 16
        %v1204 = vrot.slane %v1202, 5
        %v1205 = vsel %vm504, %v1200, %v1204
        %v1206 = vshrl.u32 %v458, 16
        %v1208 = vrot.slane %v1206, 4
        %v1209 = vor.u32 %v1208, %v1204
        %v1210 = vrot.slane %v1209, 4
        %v1212 = vshll.u32 %v459, 16
        %v1214 = vrot.slane %v1212, 5
        %v1215 = vsel %vm504, %v1210, %v1214
        %v1217 = vshrl.u32 %v460, 16
        %v1219 = vrot.slane %v1217, 4
        %v1220 = vshll.u32 %v460, 16
        %v1222 = vrot.slane %v1220, 5
        %v1223 = vor.u32 %v1219, %v1222
        %v1224 = vrot.slane %v1223, 4
        %v1226 = vshll.u32 %v461, 16
        %v1228 = vrot.slane %v1226, 5
        %v1229 = vsel %vm504, %v1224, %v1228
        %v1230 = vshrl.u32 %v461, 16
        %v1232 = vrot.slane %v1230, 4
        %v1233 = vor.u32 %v1232, %v1228
        %v1234 = vrot.slane %v1233, 4
        %v1236 = vshll.u32 %v462, 16
        %v1238 = vrot.slane %v1236, 5
        %v1239 = vsel %vm504, %v1234, %v1238
        %v1241 = vshrl.u32 %v463, 16
        %v1243 = vrot.slane %v1241, 4
        %v1244 = vshll.u32 %v463, 16
        %v1246 = vrot.slane %v1244, 5
        %v1247 = vor.u32 %v1243, %v1246
        %v1248 = vrot.slane %v1247, 4
        %v1250 = vshll.u32 %v464, 16
        %v1252 = vrot.slane %v1250, 5
        %v1253 = vsel %vm504, %v1248, %v1252
        %v1254 = vshrl.u32 %v464, 16
        %v1256 = vrot.slane %v1254, 4
        %v1257 = vor.u32 %v1256, %v1252
        %v1258 = vrot.slane %v1257, 4
        %v1260 = vshll.u32 %v465, 16
        %v1262 = vrot.slane %v1260, 5
        %v1263 = vsel %vm504, %v1258, %v1262
        %v1265 = vshrl.u32 %v466, 16
        %v1267 = vrot.slane %v1265, 4
        %v1268 = vshll.u32 %v466, 16
        %v1270 = vrot.slane %v1268, 5
        %v1271 = vor.u32 %v1267, %v1270
        %v1272 = vrot.slane %v1271, 4
        %v1274 = vshll.u32 %v467, 16
        %v1276 = vrot.slane %v1274, 5
        %v1277 = vsel %vm504, %v1272, %v1276
        %v1278 = vshrl.u32 %v467, 16
        %v1280 = vrot.slane %v1278, 4
        %v1281 = vor.u32 %v1280, %v1276
        %v1282 = vrot.slane %v1281, 4
        %v1284 = vshll.u32 %v468, 16
        %v1286 = vrot.slane %v1284, 5
        %v1287 = vsel %vm504, %v1282, %v1286
        %v1289 = vshrl.u32 %v469, 16
        %v1291 = vrot.slane %v1289, 4
        %v1292 = vshll.u32 %v469, 16
        %v1294 = vrot.slane %v1292, 5
        %v1295 = vor.u32 %v1291, %v1294
        %v1296 = vrot.slane %v1295, 4
        %v1298 = vshll.u32 %v470, 16
        %v1300 = vrot.slane %v1298, 5
        %v1301 = vsel %vm504, %v1296, %v1300
        %v1302 = vshrl.u32 %v470, 16
        %v1304 = vrot.slane %v1302, 4
        %v1305 = vor.u32 %v1304, %v1300
        %v1306 = vrot.slane %v1305, 4
        %v1308 = vshll.u32 %v471, 16
        %v1310 = vrot.slane %v1308, 5
        %v1311 = vsel %vm504, %v1306, %v1310
        %v1313 = vshrl.u32 %v472, 16
        %v1315 = vrot.slane %v1313, 4
        %v1316 = vshll.u32 %v472, 16
        %v1318 = vrot.slane %v1316, 5
        %v1319 = vor.u32 %v1315, %v1318
        %v1320 = vrot.slane %v1319, 4
        %v1322 = vshll.u32 %v473, 16
        %v1324 = vrot.slane %v1322, 5
        %v1325 = vsel %vm504, %v1320, %v1324
        %v1326 = vshrl.u32 %v473, 16
        %v1328 = vrot.slane %v1326, 4
        %v1329 = vor.u32 %v1328, %v1324
        %v1330 = vrot.slane %v1329, 4
        %v1332 = vshll.u32 %v474, 16
        %v1334 = vrot.slane %v1332, 5
        %v1335 = vsel %vm504, %v1330, %v1334
        %v1337 = vshrl.u32 %v475, 16
        %v1339 = vrot.slane %v1337, 4
        %v1340 = vshll.u32 %v475, 16
        %v1342 = vrot.slane %v1340, 5
        %v1343 = vor.u32 %v1339, %v1342
        %v1344 = vrot.slane %v1343, 4
        %v1346 = vshll.u32 %v476, 16
        %v1348 = vrot.slane %v1346, 5
        %v1349 = vsel %vm504, %v1344, %v1348
        %v1350 = vshrl.u32 %v476, 16
        %v1352 = vrot.slane %v1350, 4
        %v1353 = vor.u32 %v1352, %v1348
        %v1354 = vrot.slane %v1353, 4
        %v1356 = vshll.u32 %v477, 16
        %v1358 = vrot.slane %v1356, 5
        %v1359 = vsel %vm504, %v1354, %v1358
        %v1361 = vshrl.u32 %v478, 16
        %v1363 = vrot.slane %v1361, 4
        %v1364 = vshll.u32 %v478, 16
        %v1366 = vrot.slane %v1364, 5
        %v1367 = vor.u32 %v1363, %v1366
        %v1368 = vrot.slane %v1367, 4
        %v1370 = vshll.u32 %v479, 16
        %v1372 = vrot.slane %v1370, 5
        %v1373 = vsel %vm504, %v1368, %v1372
        %v1374 = vshrl.u32 %v479, 16
        %v1376 = vrot.slane %v1374, 4
        %v1377 = vor.u32 %v1376, %v1372
        %v1378 = vrot.slane %v1377, 4
        %v1380 = vshll.u32 %v480, 16
        %v1382 = vrot.slane %v1380, 5
        %v1383 = vsel %vm504, %v1378, %v1382
        %v1385 = vshrl.u32 %v481, 16
        %v1387 = vrot.slane %v1385, 4
        %v1388 = vshll.u32 %v481, 16
        %v1390 = vrot.slane %v1388, 5
        %v1391 = vor.u32 %v1387, %v1390
        %v1392 = vrot.slane %v1391, 4
        %v1394 = vshll.u32 %v482, 16
        %v1396 = vrot.slane %v1394, 5
        %v1397 = vsel %vm504, %v1392, %v1396
        %v1398 = vshrl.u32 %v482, 16
        %v1400 = vrot.slane %v1398, 4
        %v1401 = vor.u32 %v1400, %v1396
        %v1402 = vrot.slane %v1401, 4
        %v1404 = vshll.u32 %v483, 16
        %v1406 = vrot.slane %v1404, 5
        %v1407 = vsel %vm504, %v1402, %v1406
        %v1409 = vshrl.u32 %v484, 16
        %v1411 = vrot.slane %v1409, 4
        %v1412 = vshll.u32 %v484, 16
        %v1414 = vrot.slane %v1412, 5
        %v1415 = vor.u32 %v1411, %v1414
        %v1416 = vrot.slane %v1415, 4
        %v1418 = vshll.u32 %v485, 16
        %v1420 = vrot.slane %v1418, 5
        %v1421 = vsel %vm504, %v1416, %v1420
        %v1422 = vshrl.u32 %v485, 16
        %v1424 = vrot.slane %v1422, 4
        %v1425 = vor.u32 %v1424, %v1420
        %v1426 = vrot.slane %v1425, 4
        %v1428 = vshll.u32 %v486, 16
        %v1430 = vrot.slane %v1428, 5
        %v1431 = vsel %vm504, %v1426, %v1430
        %v1433 = vshrl.u32 %v487, 16
        %v1435 = vrot.slane %v1433, 4
        %v1436 = vshll.u32 %v487, 16
        %v1438 = vrot.slane %v1436, 5
        %v1439 = vor.u32 %v1435, %v1438
        %v1440 = vrot.slane %v1439, 4
        %v1442 = vshll.u32 %v488, 16
        %v1444 = vrot.slane %v1442, 5
        %v1445 = vsel %vm504, %v1440, %v1444
        %v1446 = vshrl.u32 %v488, 16
        %v1448 = vrot.slane %v1446, 4
        %v1449 = vor.u32 %v1448, %v1444
        %v1450 = vrot.slane %v1449, 4
        %v1452 = vshll.u32 %v489, 16
        %v1454 = vrot.slane %v1452, 5
        %v1455 = vsel %vm504, %v1450, %v1454
        %v1457 = vshrl.u32 %v490, 16
        %v1459 = vrot.slane %v1457, 4
        %v1460 = vshll.u32 %v490, 16
        %v1462 = vrot.slane %v1460, 5
        %v1463 = vor.u32 %v1459, %v1462
        %v1464 = vrot.slane %v1463, 4
        %v1466 = vshll.u32 %v491, 16
        %v1468 = vrot.slane %v1466, 5
        %v1469 = vsel %vm504, %v1464, %v1468
        %v1470 = vshrl.u32 %v491, 16
        %v1472 = vrot.slane %v1470, 4
        %v1473 = vor.u32 %v1472, %v1468
        %v1474 = vrot.slane %v1473, 4
        %v1476 = vshll.u32 %v492, 16
        %v1478 = vrot.slane %v1476, 5
        %v1479 = vsel %vm504, %v1474, %v1478
        %v1481 = vshrl.u32 %v493, 16
        %v1483 = vrot.slane %v1481, 4
        %v1484 = vshll.u32 %v493, 16
        %v1486 = vrot.slane %v1484, 5
        %v1487 = vor.u32 %v1483, %v1486
        %v1488 = vrot.slane %v1487, 4
        %v1490 = vshll.u32 %v494, 16
        %v1492 = vrot.slane %v1490, 5
        %v1493 = vsel %vm504, %v1488, %v1492
        %v1494 = vshrl.u32 %v494, 16
        %v1496 = vrot.slane %v1494, 4
        %v1497 = vor.u32 %v1496, %v1492
        %v1498 = vrot.slane %v1497, 4
        %v1500 = vshll.u32 %v495, 16
        %v1502 = vrot.slane %v1500, 5
        %v1503 = vsel %vm504, %v1498, %v1502
        %v1552 = vrot.slane %v448, 5
        %v1553 = vrot.slane %v1552, 4
        %v1554 = vrot.slane %v449, 5
        %v1555 = vsel %vm939, %v1553, %v1554
        %v1556 = vrot.slane %v1554, 4
        %v1557 = vrot.slane %v450, 5
        %v1558 = vsel %vm939, %v1556, %v1557
        %v1559 = vrot.slane %v451, 5
        %v1560 = vrot.slane %v1559, 4
        %v1561 = vrot.slane %v452, 5
        %v1562 = vsel %vm939, %v1560, %v1561
        %v1563 = vrot.slane %v1561, 4
        %v1564 = vrot.slane %v453, 5
        %v1565 = vsel %vm939, %v1563, %v1564
        %v1566 = vrot.slane %v454, 5
        %v1567 = vrot.slane %v1566, 4
        %v1568 = vrot.slane %v455, 5
        %v1569 = vsel %vm939, %v1567, %v1568
        %v1570 = vrot.slane %v1568, 4
        %v1571 = vrot.slane %v456, 5
        %v1572 = vsel %vm939, %v1570, %v1571
        %v1573 = vrot.slane %v457, 5
        %v1574 = vrot.slane %v1573, 4
        %v1575 = vrot.slane %v458, 5
        %v1576 = vsel %vm939, %v1574, %v1575
        %v1577 = vrot.slane %v1575, 4
        %v1578 = vrot.slane %v459, 5
        %v1579 = vsel %vm939, %v1577, %v1578
        %v1580 = vrot.slane %v460, 5
        %v1581 = vrot.slane %v1580, 4
        %v1582 = vrot.slane %v461, 5
        %v1583 = vsel %vm939, %v1581, %v1582
        %v1584 = vrot.slane %v1582, 4
        %v1585 = vrot.slane %v462, 5
        %v1586 = vsel %vm939, %v1584, %v1585
        %v1587 = vrot.slane %v463, 5
        %v1588 = vrot.slane %v1587, 4
        %v1589 = vrot.slane %v464, 5
        %v1590 = vsel %vm939, %v1588, %v1589
        %v1591 = vrot.slane %v1589, 4
        %v1592 = vrot.slane %v465, 5
        %v1593 = vsel %vm939, %v1591, %v1592
        %v1594 = vrot.slane %v466, 5
        %v1595 = vrot.slane %v1594, 4
        %v1596 = vrot.slane %v467, 5
        %v1597 = vsel %vm939, %v1595, %v1596
        %v1598 = vrot.slane %v1596, 4
        %v1599 = vrot.slane %v468, 5
        %v1600 = vsel %vm939, %v1598, %v1599
        %v1601 = vrot.slane %v469, 5
        %v1602 = vrot.slane %v1601, 4
        %v1603 = vrot.slane %v470, 5
        %v1604 = vsel %vm939, %v1602, %v1603
        %v1605 = vrot.slane %v1603, 4
        %v1606 = vrot.slane %v471, 5
        %v1607 = vsel %vm939, %v1605, %v1606
        %v1608 = vrot.slane %v472, 5
        %v1609 = vrot.slane %v1608, 4
        %v1610 = vrot.slane %v473, 5
        %v1611 = vsel %vm939, %v1609, %v1610
        %v1612 = vrot.slane %v1610, 4
        %v1613 = vrot.slane %v474, 5
        %v1614 = vsel %vm939, %v1612, %v1613
        %v1615 = vrot.slane %v475, 5
        %v1616 = vrot.slane %v1615, 4
        %v1617 = vrot.slane %v476, 5
        %v1618 = vsel %vm939, %v1616, %v1617
        %v1619 = vrot.slane %v1617, 4
        %v1620 = vrot.slane %v477, 5
        %v1621 = vsel %vm939, %v1619, %v1620
        %v1622 = vrot.slane %v478, 5
        %v1623 = vrot.slane %v1622, 4
        %v1624 = vrot.slane %v479, 5
        %v1625 = vsel %vm939, %v1623, %v1624
        %v1626 = vrot.slane %v1624, 4
        %v1627 = vrot.slane %v480, 5
        %v1628 = vsel %vm939, %v1626, %v1627
        %v1629 = vrot.slane %v481, 5
        %v1630 = vrot.slane %v1629, 4
        %v1631 = vrot.slane %v482, 5
        %v1632 = vsel %vm939, %v1630, %v1631
        %v1633 = vrot.slane %v1631, 4
        %v1634 = vrot.slane %v483, 5
        %v1635 = vsel %vm939, %v1633, %v1634
        %v1636 = vrot.slane %v484, 5
        %v1637 = vrot.slane %v1636, 4
        %v1638 = vrot.slane %v485, 5
        %v1639 = vsel %vm939, %v1637, %v1638
        %v1640 = vrot.slane %v1638, 4
        %v1641 = vrot.slane %v486, 5
        %v1642 = vsel %vm939, %v1640, %v1641
        %v1643 = vrot.slane %v487, 5
        %v1644 = vrot.slane %v1643, 4
        %v1645 = vrot.slane %v488, 5
        %v1646 = vsel %vm939, %v1644, %v1645
        %v1647 = vrot.slane %v1645, 4
        %v1648 = vrot.slane %v489, 5
        %v1649 = vsel %vm939, %v1647, %v1648
        %v1650 = vrot.slane %v490, 5
        %v1651 = vrot.slane %v1650, 4
        %v1652 = vrot.slane %v491, 5
        %v1653 = vsel %vm939, %v1651, %v1652
        %v1654 = vrot.slane %v1652, 4
        %v1655 = vrot.slane %v492, 5
        %v1656 = vsel %vm939, %v1654, %v1655
        %v1657 = vrot.slane %v493, 5
        %v1658 = vrot.slane %v1657, 4
        %v1659 = vrot.slane %v494, 5
        %v1660 = vsel %vm939, %v1658, %v1659
        %v1661 = vrot.slane %v1659, 4
        %v1662 = vrot.slane %v495, 5
        %v1663 = vsel %vm939, %v1661, %v1662
        %v1665 = vshrl.u32 %v496, 16
        %v1667 = vrot.slane %v1665, 4
        %v1668 = vshll.u32 %v496, 16
        %v1670 = vrot.slane %v1668, 5
        %v1671 = vor.u32 %v1667, %v1670
        %v1672 = vrot.slane %v1671, 4
        %v1674 = vshll.u32 %v497, 16
        %v1676 = vrot.slane %v1674, 5
        %v1677 = vsel %vm504, %v1672, %v1676
        %v1678 = vshrl.u32 %v497, 16
        %v1680 = vrot.slane %v1678, 4
        %v1681 = vor.u32 %v1680, %v1676
        %v1682 = vrot.slane %v1681, 4
        %v1684 = vshll.u32 %v498, 16
        %v1686 = vrot.slane %v1684, 5
        %v1687 = vsel %vm504, %v1682, %v1686
        %v1691 = vrot.slane %v496, 5
        %v1692 = vrot.slane %v1691, 4
        %v1693 = vrot.slane %v497, 5
        %v1694 = vsel %vm939, %v1692, %v1693
        %v1695 = vrot.slane %v1693, 4
        %v1696 = vrot.slane %v498, 5
        %v1697 = vsel %vm939, %v1695, %v1696
        %v1699 = vshrl.u32 %v499, 16
        %v1701 = vrot.slane %v1699, 4
        %v1702 = vshll.u32 %v499, 16
        %v1704 = vrot.slane %v1702, 5
        %v1705 = vor.u32 %v1701, %v1704
        %v1706 = vrot.slane %v1705, 4
        %v1708 = vshll.u32 %v500, 16
        %v1710 = vrot.slane %v1708, 5
        %v1711 = vsel %vm504, %v1706, %v1710
        %v1712 = vshrl.u32 %v500, 16
        %v1714 = vrot.slane %v1712, 4
        %v1715 = vor.u32 %v1714, %v1710
        %v1716 = vrot.slane %v1715, 4
        %v1718 = vshll.u32 %v501, 16
        %v1720 = vrot.slane %v1718, 5
        %v1721 = vsel %vm504, %v1716, %v1720
        %v1725 = vrot.slane %v499, 5
        %v1726 = vrot.slane %v1725, 4
        %v1727 = vrot.slane %v500, 5
        %v1728 = vsel %vm939, %v1726, %v1727
        %v1729 = vrot.slane %v1727, 4
        %v1730 = vrot.slane %v501, 5
        %v1731 = vsel %vm939, %v1729, %v1730
        %v1732 = vunpack.c.l.b16 %v394
        %v1733 = vunpack.c.l.b16 %v395
        %v1734 = vunpack.c.l.b16 %v397
        %v1735 = vunpack.c.l.b16 %v398
        %v1736 = vunpack.c.l.b16 %v400
        %v1737 = vunpack.c.l.b16 %v401
        %v1738 = vunpack.c.l.b16 %v403
        %v1739 = vunpack.c.l.b16 %v404
        %v1740 = vunpack.c.l.b16 %v406
        %v1741 = vunpack.c.l.b16 %v407
        %v1742 = vunpack.c.l.b16 %v409
        %v1743 = vunpack.c.l.b16 %v410
        %v1744 = vunpack.c.l.b16 %v412
        %v1745 = vunpack.c.l.b16 %v413
        %v1746 = vunpack.c.l.b16 %v415
        %v1747 = vunpack.c.l.b16 %v416
        %v1748 = vunpack.c.l.b16 %v418
        %v1749 = vunpack.c.l.b16 %v419
        %v1750 = vunpack.c.l.b16 %v421
        %v1751 = vunpack.c.l.b16 %v422
        %v1752 = vunpack.c.l.b16 %v424
        %v1753 = vunpack.c.l.b16 %v425
        %v1754 = vunpack.c.l.b16 %v427
        %v1755 = vunpack.c.l.b16 %v428
        %v1756 = vunpack.c.l.b16 %v430
        %v1757 = vunpack.c.l.b16 %v431
        %v1758 = vunpack.c.l.b16 %v433
        %v1759 = vunpack.c.l.b16 %v434
        %v1760 = vunpack.c.l.b16 %v436
        %v1761 = vunpack.c.l.b16 %v437
        %v1762 = vunpack.c.l.b16 %v439
        %v1763 = vunpack.c.l.b16 %v440
        %v1764 = vpack.c.b16 %v1733, %v1732
        %v1765 = vpack.c.b16 %v1735, %v1734
        %v1766 = vpack.c.b16 %v1737, %v1736
        %v1767 = vpack.c.b16 %v1739, %v1738
        %v1768 = vpack.c.b16 %v1741, %v1740
        %v1769 = vpack.c.b16 %v1743, %v1742
        %v1770 = vpack.c.b16 %v1745, %v1744
        %v1771 = vpack.c.b16 %v1747, %v1746
        %v1772 = vpack.c.b16 %v1749, %v1748
        %v1773 = vpack.c.b16 %v1751, %v1750
        %v1774 = vpack.c.b16 %v1753, %v1752
        %v1775 = vpack.c.b16 %v1755, %v1754
        %v1776 = vpack.c.b16 %v1757, %v1756
        %v1777 = vpack.c.b16 %v1759, %v1758
        %v1778 = vpack.c.b16 %v1761, %v1760
        %v1779 = vpack.c.b16 %v1763, %v1762
        %v1780 = vunpack.c.l.b16 %v518
        %v1781 = vunpack.c.l.b16 %v528
        %v1782 = vunpack.c.l.b16 %v542
        %v1783 = vunpack.c.l.b16 %v552
        %v1784 = vunpack.c.l.b16 %v566
        %v1785 = vunpack.c.l.b16 %v576
        %v1786 = vunpack.c.l.b16 %v590
        %v1787 = vunpack.c.l.b16 %v600
        %v1788 = vunpack.c.l.b16 %v614
        %v1789 = vunpack.c.l.b16 %v624
        %v1790 = vunpack.c.l.b16 %v638
        %v1791 = vunpack.c.l.b16 %v648
        %v1792 = vunpack.c.l.b16 %v662
        %v1793 = vunpack.c.l.b16 %v672
        %v1794 = vunpack.c.l.b16 %v686
        %v1795 = vunpack.c.l.b16 %v696
        %v1796 = vunpack.c.l.b16 %v710
        %v1797 = vunpack.c.l.b16 %v720
        %v1798 = vunpack.c.l.b16 %v734
        %v1799 = vunpack.c.l.b16 %v744
        %v1800 = vunpack.c.l.b16 %v758
        %v1801 = vunpack.c.l.b16 %v768
        %v1802 = vunpack.c.l.b16 %v782
        %v1803 = vunpack.c.l.b16 %v792
        %v1804 = vunpack.c.l.b16 %v806
        %v1805 = vunpack.c.l.b16 %v816
        %v1806 = vunpack.c.l.b16 %v830
        %v1807 = vunpack.c.l.b16 %v840
        %v1808 = vunpack.c.l.b16 %v854
        %v1809 = vunpack.c.l.b16 %v864
        %v1810 = vunpack.c.l.b16 %v878
        %v1811 = vunpack.c.l.b16 %v888
        %v1812 = vpack.c.b16 %v1781, %v1780
        %v1813 = vpack.c.b16 %v1783, %v1782
        %v1814 = vpack.c.b16 %v1785, %v1784
        %v1815 = vpack.c.b16 %v1787, %v1786
        %v1816 = vpack.c.b16 %v1789, %v1788
        %v1817 = vpack.c.b16 %v1791, %v1790
        %v1818 = vpack.c.b16 %v1793, %v1792
        %v1819 = vpack.c.b16 %v1795, %v1794
        %v1820 = vpack.c.b16 %v1797, %v1796
        %v1821 = vpack.c.b16 %v1799, %v1798
        %v1822 = vpack.c.b16 %v1801, %v1800
        %v1823 = vpack.c.b16 %v1803, %v1802
        %v1824 = vpack.c.b16 %v1805, %v1804
        %v1825 = vpack.c.b16 %v1807, %v1806
        %v1826 = vpack.c.b16 %v1809, %v1808
        %v1827 = vpack.c.b16 %v1811, %v1810
        %1828 = vrot.lane.b32.xlu0 %v1812, 4
        %v1829 = vpop.permute.xlu0 %1828
        %1830 = vrot.lane.b32.xlu0 %v1813, 4
        %v1831 = vpop.permute.xlu0 %1830
        %1832 = vrot.lane.b32.xlu0 %v1814, 4
        %v1833 = vpop.permute.xlu0 %1832
        %1834 = vrot.lane.b32.xlu0 %v1815, 4
        %v1835 = vpop.permute.xlu0 %1834
        %1836 = vrot.lane.b32.xlu0 %v1816, 4
        %v1837 = vpop.permute.xlu0 %1836
        %1838 = vrot.lane.b32.xlu0 %v1817, 4
        %v1839 = vpop.permute.xlu0 %1838
        %1840 = vrot.lane.b32.xlu0 %v1818, 4
        %v1841 = vpop.permute.xlu0 %1840
        %1842 = vrot.lane.b32.xlu0 %v1819, 4
        %v1843 = vpop.permute.xlu0 %1842
        %1844 = vrot.lane.b32.xlu0 %v1820, 4
        %v1845 = vpop.permute.xlu0 %1844
        %1846 = vrot.lane.b32.xlu0 %v1821, 4
        %v1847 = vpop.permute.xlu0 %1846
        %1848 = vrot.lane.b32.xlu0 %v1822, 4
        %v1849 = vpop.permute.xlu0 %1848
        %1850 = vrot.lane.b32.xlu0 %v1823, 4
        %v1851 = vpop.permute.xlu0 %1850
        %1852 = vrot.lane.b32.xlu0 %v1824, 4
        %v1853 = vpop.permute.xlu0 %1852
        %1854 = vrot.lane.b32.xlu0 %v1825, 4
        %v1855 = vpop.permute.xlu0 %1854
        %1856 = vrot.lane.b32.xlu0 %v1826, 4
        %v1857 = vpop.permute.xlu0 %1856
        %1858 = vrot.lane.b32.xlu0 %v1827, 4
        %v1859 = vpop.permute.xlu0 %1858
        %v1860 = vunpack.c.l.b16 %v943
        %v1861 = vunpack.c.l.b16 %v946
        %v1862 = vunpack.c.l.b16 %v950
        %v1863 = vunpack.c.l.b16 %v953
        %v1864 = vunpack.c.l.b16 %v957
        %v1865 = vunpack.c.l.b16 %v960
        %v1866 = vunpack.c.l.b16 %v964
        %v1867 = vunpack.c.l.b16 %v967
        %v1868 = vunpack.c.l.b16 %v971
        %v1869 = vunpack.c.l.b16 %v974
        %v1870 = vunpack.c.l.b16 %v978
        %v1871 = vunpack.c.l.b16 %v981
        %v1872 = vunpack.c.l.b16 %v985
        %v1873 = vunpack.c.l.b16 %v988
        %v1874 = vunpack.c.l.b16 %v992
        %v1875 = vunpack.c.l.b16 %v995
        %v1876 = vunpack.c.l.b16 %v999
        %v1877 = vunpack.c.l.b16 %v1002
        %v1878 = vunpack.c.l.b16 %v1006
        %v1879 = vunpack.c.l.b16 %v1009
        %v1880 = vunpack.c.l.b16 %v1013
        %v1881 = vunpack.c.l.b16 %v1016
        %v1882 = vunpack.c.l.b16 %v1020
        %v1883 = vunpack.c.l.b16 %v1023
        %v1884 = vunpack.c.l.b16 %v1027
        %v1885 = vunpack.c.l.b16 %v1030
        %v1886 = vunpack.c.l.b16 %v1034
        %v1887 = vunpack.c.l.b16 %v1037
        %v1888 = vunpack.c.l.b16 %v1041
        %v1889 = vunpack.c.l.b16 %v1044
        %v1890 = vunpack.c.l.b16 %v1048
        %v1891 = vunpack.c.l.b16 %v1051
        %v1892 = vpack.c.b16 %v1861, %v1860
        %v1893 = vpack.c.b16 %v1863, %v1862
        %v1894 = vpack.c.b16 %v1865, %v1864
        %v1895 = vpack.c.b16 %v1867, %v1866
        %v1896 = vpack.c.b16 %v1869, %v1868
        %v1897 = vpack.c.b16 %v1871, %v1870
        %v1898 = vpack.c.b16 %v1873, %v1872
        %v1899 = vpack.c.b16 %v1875, %v1874
        %v1900 = vpack.c.b16 %v1877, %v1876
        %v1901 = vpack.c.b16 %v1879, %v1878
        %v1902 = vpack.c.b16 %v1881, %v1880
        %v1903 = vpack.c.b16 %v1883, %v1882
        %v1904 = vpack.c.b16 %v1885, %v1884
        %v1905 = vpack.c.b16 %v1887, %v1886
        %v1906 = vpack.c.b16 %v1889, %v1888
        %v1907 = vpack.c.b16 %v1891, %v1890
        %1908 = vrot.lane.b32.xlu0 %v1892, 8
        %v1909 = vpop.permute.xlu0 %1908
        %1910 = vrot.lane.b32.xlu0 %v1893, 8
        %v1911 = vpop.permute.xlu0 %1910
        %1912 = vrot.lane.b32.xlu0 %v1894, 8
        %v1913 = vpop.permute.xlu0 %1912
        %1914 = vrot.lane.b32.xlu0 %v1895, 8
        %v1915 = vpop.permute.xlu0 %1914
        %1916 = vrot.lane.b32.xlu0 %v1896, 8
        %v1917 = vpop.permute.xlu0 %1916
        %1918 = vrot.lane.b32.xlu0 %v1897, 8
        %v1919 = vpop.permute.xlu0 %1918
        %1920 = vrot.lane.b32.xlu0 %v1898, 8
        %v1921 = vpop.permute.xlu0 %1920
        %1922 = vrot.lane.b32.xlu0 %v1899, 8
        %v1923 = vpop.permute.xlu0 %1922
        %1924 = vrot.lane.b32.xlu0 %v1900, 8
        %v1925 = vpop.permute.xlu0 %1924
        %1926 = vrot.lane.b32.xlu0 %v1901, 8
        %v1927 = vpop.permute.xlu0 %1926
        %1928 = vrot.lane.b32.xlu0 %v1902, 8
        %v1929 = vpop.permute.xlu0 %1928
        %1930 = vrot.lane.b32.xlu0 %v1903, 8
        %v1931 = vpop.permute.xlu0 %1930
        %1932 = vrot.lane.b32.xlu0 %v1904, 8
        %v1933 = vpop.permute.xlu0 %1932
        %1934 = vrot.lane.b32.xlu0 %v1905, 8
        %v1935 = vpop.permute.xlu0 %1934
        %1936 = vrot.lane.b32.xlu0 %v1906, 8
        %v1937 = vpop.permute.xlu0 %1936
        %1938 = vrot.lane.b32.xlu0 %v1907, 8
        %v1939 = vpop.permute.xlu0 %1938
        %v1940 = vunpack.c.l.b16 %v442
        %v1941 = vunpack.c.l.b16 %v443
        %v1942 = vpack.c.b16 %v1941, %v1940
        %1943 = vrot.lane.b32.xlu0 %v1765, 12
        %v1944 = vpop.permute.xlu0 %1943
        %1945 = vrot.lane.b32.xlu0 %v1766, 12
        %v1946 = vpop.permute.xlu0 %1945
        %1947 = vrot.lane.b32.xlu0 %v1767, 12
        %v1948 = vpop.permute.xlu0 %1947
        %1949 = vrot.lane.b32.xlu0 %v1768, 12
        %v1950 = vpop.permute.xlu0 %1949
        %1951 = vrot.lane.b32.xlu0 %v1769, 12
        %v1952 = vpop.permute.xlu0 %1951
        %1953 = vrot.lane.b32.xlu0 %v1770, 12
        %v1954 = vpop.permute.xlu0 %1953
        %1955 = vrot.lane.b32.xlu0 %v1771, 12
        %v1956 = vpop.permute.xlu0 %1955
        %1957 = vrot.lane.b32.xlu0 %v1772, 12
        %v1958 = vpop.permute.xlu0 %1957
        %1959 = vrot.lane.b32.xlu0 %v1773, 12
        %v1960 = vpop.permute.xlu0 %1959
        %1961 = vrot.lane.b32.xlu0 %v1774, 12
        %v1962 = vpop.permute.xlu0 %1961
        %1963 = vrot.lane.b32.xlu0 %v1775, 12
        %v1964 = vpop.permute.xlu0 %1963
        %1965 = vrot.lane.b32.xlu0 %v1776, 12
        %v1966 = vpop.permute.xlu0 %1965
        %1967 = vrot.lane.b32.xlu0 %v1777, 12
        %v1968 = vpop.permute.xlu0 %1967
        %1969 = vrot.lane.b32.xlu0 %v1778, 12
        %v1970 = vpop.permute.xlu0 %1969
        %1971 = vrot.lane.b32.xlu0 %v1779, 12
        %v1972 = vpop.permute.xlu0 %1971
        %1973 = vrot.lane.b32.xlu0 %v1942, 12
        %v1974 = vpop.permute.xlu0 %1973
        %v1975 = vunpack.c.l.b16 %v1065
        %v1976 = vunpack.c.l.b16 %v1075
        %v1977 = vpack.c.b16 %v1976, %v1975
        %1978 = vrot.lane.b32.xlu0 %v1813, 16
        %v1979 = vpop.permute.xlu0 %1978
        %1980 = vrot.lane.b32.xlu0 %v1814, 16
        %v1981 = vpop.permute.xlu0 %1980
        %1982 = vrot.lane.b32.xlu0 %v1815, 16
        %v1983 = vpop.permute.xlu0 %1982
        %1984 = vrot.lane.b32.xlu0 %v1816, 16
        %v1985 = vpop.permute.xlu0 %1984
        %1986 = vrot.lane.b32.xlu0 %v1817, 16
        %v1987 = vpop.permute.xlu0 %1986
        %1988 = vrot.lane.b32.xlu0 %v1818, 16
        %v1989 = vpop.permute.xlu0 %1988
        %1990 = vrot.lane.b32.xlu0 %v1819, 16
        %v1991 = vpop.permute.xlu0 %1990
        %1992 = vrot.lane.b32.xlu0 %v1820, 16
        %v1993 = vpop.permute.xlu0 %1992
        %1994 = vrot.lane.b32.xlu0 %v1821, 16
        %v1995 = vpop.permute.xlu0 %1994
        %1996 = vrot.lane.b32.xlu0 %v1822, 16
        %v1997 = vpop.permute.xlu0 %1996
        %1998 = vrot.lane.b32.xlu0 %v1823, 16
        %v1999 = vpop.permute.xlu0 %1998
        %2000 = vrot.lane.b32.xlu0 %v1824, 16
        %v2001 = vpop.permute.xlu0 %2000
        %2002 = vrot.lane.b32.xlu0 %v1825, 16
        %v2003 = vpop.permute.xlu0 %2002
        %2004 = vrot.lane.b32.xlu0 %v1826, 16
        %v2005 = vpop.permute.xlu0 %2004
        %2006 = vrot.lane.b32.xlu0 %v1827, 16
        %v2007 = vpop.permute.xlu0 %2006
        %2008 = vrot.lane.b32.xlu0 %v1977, 16
        %v2009 = vpop.permute.xlu0 %2008
        %v2010 = vunpack.c.l.b16 %v1082
        %v2011 = vunpack.c.l.b16 %v1085
        %v2012 = vpack.c.b16 %v2011, %v2010
        %2013 = vrot.lane.b32.xlu0 %v1893, 20
        %v2014 = vpop.permute.xlu0 %2013
        %2015 = vrot.lane.b32.xlu0 %v1894, 20
        %v2016 = vpop.permute.xlu0 %2015
        %2017 = vrot.lane.b32.xlu0 %v1895, 20
        %v2018 = vpop.permute.xlu0 %2017
        %2019 = vrot.lane.b32.xlu0 %v1896, 20
        %v2020 = vpop.permute.xlu0 %2019
        %2021 = vrot.lane.b32.xlu0 %v1897, 20
        %v2022 = vpop.permute.xlu0 %2021
        %2023 = vrot.lane.b32.xlu0 %v1898, 20
        %v2024 = vpop.permute.xlu0 %2023
        %2025 = vrot.lane.b32.xlu0 %v1899, 20
        %v2026 = vpop.permute.xlu0 %2025
        %2027 = vrot.lane.b32.xlu0 %v1900, 20
        %v2028 = vpop.permute.xlu0 %2027
        %2029 = vrot.lane.b32.xlu0 %v1901, 20
        %v2030 = vpop.permute.xlu0 %2029
        %2031 = vrot.lane.b32.xlu0 %v1902, 20
        %v2032 = vpop.permute.xlu0 %2031
        %2033 = vrot.lane.b32.xlu0 %v1903, 20
        %v2034 = vpop.permute.xlu0 %2033
        %2035 = vrot.lane.b32.xlu0 %v1904, 20
        %v2036 = vpop.permute.xlu0 %2035
        %2037 = vrot.lane.b32.xlu0 %v1905, 20
        %v2038 = vpop.permute.xlu0 %2037
        %2039 = vrot.lane.b32.xlu0 %v1906, 20
        %v2040 = vpop.permute.xlu0 %2039
        %2041 = vrot.lane.b32.xlu0 %v1907, 20
        %v2042 = vpop.permute.xlu0 %2041
        %2043 = vrot.lane.b32.xlu0 %v2012, 20
        %v2044 = vpop.permute.xlu0 %2043
        %v2045 = vunpack.c.l.b16 %v445
        %v2046 = vunpack.c.l.b16 %v446
        %v2047 = vpack.c.b16 %v2046, %v2045
        %2048 = vrot.lane.b32.xlu0 %v1766, 24
        %v2049 = vpop.permute.xlu0 %2048
        %2050 = vrot.lane.b32.xlu0 %v1767, 24
        %v2051 = vpop.permute.xlu0 %2050
        %2052 = vrot.lane.b32.xlu0 %v1768, 24
        %v2053 = vpop.permute.xlu0 %2052
        %2054 = vrot.lane.b32.xlu0 %v1769, 24
        %v2055 = vpop.permute.xlu0 %2054
        %2056 = vrot.lane.b32.xlu0 %v1770, 24
        %v2057 = vpop.permute.xlu0 %2056
        %2058 = vrot.lane.b32.xlu0 %v1771, 24
        %v2059 = vpop.permute.xlu0 %2058
        %2060 = vrot.lane.b32.xlu0 %v1772, 24
        %v2061 = vpop.permute.xlu0 %2060
        %2062 = vrot.lane.b32.xlu0 %v1773, 24
        %v2063 = vpop.permute.xlu0 %2062
        %2064 = vrot.lane.b32.xlu0 %v1774, 24
        %v2065 = vpop.permute.xlu0 %2064
        %2066 = vrot.lane.b32.xlu0 %v1775, 24
        %v2067 = vpop.permute.xlu0 %2066
        %2068 = vrot.lane.b32.xlu0 %v1776, 24
        %v2069 = vpop.permute.xlu0 %2068
        %2070 = vrot.lane.b32.xlu0 %v1777, 24
        %v2071 = vpop.permute.xlu0 %2070
        %2072 = vrot.lane.b32.xlu0 %v1778, 24
        %v2073 = vpop.permute.xlu0 %2072
        %2074 = vrot.lane.b32.xlu0 %v1779, 24
        %v2075 = vpop.permute.xlu0 %2074
        %2076 = vrot.lane.b32.xlu0 %v1942, 24
        %v2077 = vpop.permute.xlu0 %2076
        %2078 = vrot.lane.b32.xlu0 %v2047, 24
        %v2079 = vpop.permute.xlu0 %2078
        %v2080 = vunpack.c.l.b16 %v1099
        %v2081 = vunpack.c.l.b16 %v1109
        %v2082 = vpack.c.b16 %v2081, %v2080
        %2083 = vrot.lane.b32.xlu0 %v1814, 28
        %v2084 = vpop.permute.xlu0 %2083
        %2085 = vrot.lane.b32.xlu0 %v1815, 28
        %v2086 = vpop.permute.xlu0 %2085
        %2087 = vrot.lane.b32.xlu0 %v1816, 28
        %v2088 = vpop.permute.xlu0 %2087
        %2089 = vrot.lane.b32.xlu0 %v1817, 28
        %v2090 = vpop.permute.xlu0 %2089
        %2091 = vrot.lane.b32.xlu0 %v1818, 28
        %v2092 = vpop.permute.xlu0 %2091
        %2093 = vrot.lane.b32.xlu0 %v1819, 28
        %v2094 = vpop.permute.xlu0 %2093
        %2095 = vrot.lane.b32.xlu0 %v1820, 28
        %v2096 = vpop.permute.xlu0 %2095
        %2097 = vrot.lane.b32.xlu0 %v1821, 28
        %v2098 = vpop.permute.xlu0 %2097
        %2099 = vrot.lane.b32.xlu0 %v1822, 28
        %v2100 = vpop.permute.xlu0 %2099
        %2101 = vrot.lane.b32.xlu0 %v1823, 28
        %v2102 = vpop.permute.xlu0 %2101
        %2103 = vrot.lane.b32.xlu0 %v1824, 28
        %v2104 = vpop.permute.xlu0 %2103
        %2105 = vrot.lane.b32.xlu0 %v1825, 28
        %v2106 = vpop.permute.xlu0 %2105
        %2107 = vrot.lane.b32.xlu0 %v1826, 28
        %v2108 = vpop.permute.xlu0 %2107
        %2109 = vrot.lane.b32.xlu0 %v1827, 28
        %v2110 = vpop.permute.xlu0 %2109
        %2111 = vrot.lane.b32.xlu0 %v1977, 28
        %v2112 = vpop.permute.xlu0 %2111
        %2113 = vrot.lane.b32.xlu0 %v2082, 28
        %v2114 = vpop.permute.xlu0 %2113
        %v2115 = vunpack.c.l.b16 %v1116
        %v2116 = vunpack.c.l.b16 %v1119
        %v2117 = vpack.c.b16 %v2116, %v2115
        %2118 = vrot.lane.b32.xlu0 %v1894, 32
        %v2119 = vpop.permute.xlu0 %2118
        %2120 = vrot.lane.b32.xlu0 %v1895, 32
        %v2121 = vpop.permute.xlu0 %2120
        %2122 = vrot.lane.b32.xlu0 %v1896, 32
        %v2123 = vpop.permute.xlu0 %2122
        %2124 = vrot.lane.b32.xlu0 %v1897, 32
        %v2125 = vpop.permute.xlu0 %2124
        %2126 = vrot.lane.b32.xlu0 %v1898, 32
        %v2127 = vpop.permute.xlu0 %2126
        %2128 = vrot.lane.b32.xlu0 %v1899, 32
        %v2129 = vpop.permute.xlu0 %2128
        %2130 = vrot.lane.b32.xlu0 %v1900, 32
        %v2131 = vpop.permute.xlu0 %2130
        %2132 = vrot.lane.b32.xlu0 %v1901, 32
        %v2133 = vpop.permute.xlu0 %2132
        %2134 = vrot.lane.b32.xlu0 %v1902, 32
        %v2135 = vpop.permute.xlu0 %2134
        %2136 = vrot.lane.b32.xlu0 %v1903, 32
        %v2137 = vpop.permute.xlu0 %2136
        %2138 = vrot.lane.b32.xlu0 %v1904, 32
        %v2139 = vpop.permute.xlu0 %2138
        %2140 = vrot.lane.b32.xlu0 %v1905, 32
        %v2141 = vpop.permute.xlu0 %2140
        %2142 = vrot.lane.b32.xlu0 %v1906, 32
        %v2143 = vpop.permute.xlu0 %2142
        %2144 = vrot.lane.b32.xlu0 %v1907, 32
        %v2145 = vpop.permute.xlu0 %2144
        %2146 = vrot.lane.b32.xlu0 %v2012, 32
        %v2147 = vpop.permute.xlu0 %2146
        %2148 = vrot.lane.b32.xlu0 %v2117, 32
        %v2149 = vpop.permute.xlu0 %2148
        %v2150 = vunpack.c.l.b16 %v448
        %v2151 = vunpack.c.l.b16 %v449
        %v2152 = vunpack.c.l.b16 %v451
        %v2153 = vunpack.c.l.b16 %v452
        %v2154 = vunpack.c.l.b16 %v454
        %v2155 = vunpack.c.l.b16 %v455
        %v2156 = vunpack.c.l.b16 %v457
        %v2157 = vunpack.c.l.b16 %v458
        %v2158 = vunpack.c.l.b16 %v460
        %v2159 = vunpack.c.l.b16 %v461
        %v2160 = vunpack.c.l.b16 %v463
        %v2161 = vunpack.c.l.b16 %v464
        %v2162 = vunpack.c.l.b16 %v466
        %v2163 = vunpack.c.l.b16 %v467
        %v2164 = vunpack.c.l.b16 %v469
        %v2165 = vunpack.c.l.b16 %v470
        %v2166 = vunpack.c.l.b16 %v472
        %v2167 = vunpack.c.l.b16 %v473
        %v2168 = vunpack.c.l.b16 %v475
        %v2169 = vunpack.c.l.b16 %v476
        %v2170 = vunpack.c.l.b16 %v478
        %v2171 = vunpack.c.l.b16 %v479
        %v2172 = vunpack.c.l.b16 %v481
        %v2173 = vunpack.c.l.b16 %v482
        %v2174 = vunpack.c.l.b16 %v484
        %v2175 = vunpack.c.l.b16 %v485
        %v2176 = vunpack.c.l.b16 %v487
        %v2177 = vunpack.c.l.b16 %v488
        %v2178 = vunpack.c.l.b16 %v490
        %v2179 = vunpack.c.l.b16 %v491
        %v2180 = vunpack.c.l.b16 %v493
        %v2181 = vunpack.c.l.b16 %v494
        %v2182 = vpack.c.b16 %v2151, %v2150
        %v2183 = vpack.c.b16 %v2153, %v2152
        %v2184 = vpack.c.b16 %v2155, %v2154
        %v2185 = vpack.c.b16 %v2157, %v2156
        %v2186 = vpack.c.b16 %v2159, %v2158
        %v2187 = vpack.c.b16 %v2161, %v2160
        %v2188 = vpack.c.b16 %v2163, %v2162
        %v2189 = vpack.c.b16 %v2165, %v2164
        %v2190 = vpack.c.b16 %v2167, %v2166
        %v2191 = vpack.c.b16 %v2169, %v2168
        %v2192 = vpack.c.b16 %v2171, %v2170
        %v2193 = vpack.c.b16 %v2173, %v2172
        %v2194 = vpack.c.b16 %v2175, %v2174
        %v2195 = vpack.c.b16 %v2177, %v2176
        %v2196 = vpack.c.b16 %v2179, %v2178
        %v2197 = vpack.c.b16 %v2181, %v2180
        %2198 = vrot.lane.b32.xlu0 %v2182, 36
        %v2199 = vpop.permute.xlu0 %2198
        %2200 = vrot.lane.b32.xlu0 %v2183, 36
        %v2201 = vpop.permute.xlu0 %2200
        %2202 = vrot.lane.b32.xlu0 %v2184, 36
        %v2203 = vpop.permute.xlu0 %2202
        %2204 = vrot.lane.b32.xlu0 %v2185, 36
        %v2205 = vpop.permute.xlu0 %2204
        %2206 = vrot.lane.b32.xlu0 %v2186, 36
        %v2207 = vpop.permute.xlu0 %2206
        %2208 = vrot.lane.b32.xlu0 %v2187, 36
        %v2209 = vpop.permute.xlu0 %2208
        %2210 = vrot.lane.b32.xlu0 %v2188, 36
        %v2211 = vpop.permute.xlu0 %2210
        %2212 = vrot.lane.b32.xlu0 %v2189, 36
        %v2213 = vpop.permute.xlu0 %2212
        %2214 = vrot.lane.b32.xlu0 %v2190, 36
        %v2215 = vpop.permute.xlu0 %2214
        %2216 = vrot.lane.b32.xlu0 %v2191, 36
        %v2217 = vpop.permute.xlu0 %2216
        %2218 = vrot.lane.b32.xlu0 %v2192, 36
        %v2219 = vpop.permute.xlu0 %2218
        %2220 = vrot.lane.b32.xlu0 %v2193, 36
        %v2221 = vpop.permute.xlu0 %2220
        %2222 = vrot.lane.b32.xlu0 %v2194, 36
        %v2223 = vpop.permute.xlu0 %2222
        %2224 = vrot.lane.b32.xlu0 %v2195, 36
        %v2225 = vpop.permute.xlu0 %2224
        %2226 = vrot.lane.b32.xlu0 %v2196, 36
        %v2227 = vpop.permute.xlu0 %2226
        %2228 = vrot.lane.b32.xlu0 %v2197, 36
        %v2229 = vpop.permute.xlu0 %2228
        %v2230 = vunpack.c.l.b16 %v1133
        %v2231 = vunpack.c.l.b16 %v1143
        %v2232 = vunpack.c.l.b16 %v1157
        %v2233 = vunpack.c.l.b16 %v1167
        %v2234 = vunpack.c.l.b16 %v1181
        %v2235 = vunpack.c.l.b16 %v1191
        %v2236 = vunpack.c.l.b16 %v1205
        %v2237 = vunpack.c.l.b16 %v1215
        %v2238 = vunpack.c.l.b16 %v1229
        %v2239 = vunpack.c.l.b16 %v1239
        %v2240 = vunpack.c.l.b16 %v1253
        %v2241 = vunpack.c.l.b16 %v1263
        %v2242 = vunpack.c.l.b16 %v1277
        %v2243 = vunpack.c.l.b16 %v1287
        %v2244 = vunpack.c.l.b16 %v1301
        %v2245 = vunpack.c.l.b16 %v1311
        %v2246 = vunpack.c.l.b16 %v1325
        %v2247 = vunpack.c.l.b16 %v1335
        %v2248 = vunpack.c.l.b16 %v1349
        %v2249 = vunpack.c.l.b16 %v1359
        %v2250 = vunpack.c.l.b16 %v1373
        %v2251 = vunpack.c.l.b16 %v1383
        %v2252 = vunpack.c.l.b16 %v1397
        %v2253 = vunpack.c.l.b16 %v1407
        %v2254 = vunpack.c.l.b16 %v1421
        %v2255 = vunpack.c.l.b16 %v1431
        %v2256 = vunpack.c.l.b16 %v1445
        %v2257 = vunpack.c.l.b16 %v1455
        %v2258 = vunpack.c.l.b16 %v1469
        %v2259 = vunpack.c.l.b16 %v1479
        %v2260 = vunpack.c.l.b16 %v1493
        %v2261 = vunpack.c.l.b16 %v1503
        %v2262 = vpack.c.b16 %v2231, %v2230
        %v2263 = vpack.c.b16 %v2233, %v2232
        %v2264 = vpack.c.b16 %v2235, %v2234
        %v2265 = vpack.c.b16 %v2237, %v2236
        %v2266 = vpack.c.b16 %v2239, %v2238
        %v2267 = vpack.c.b16 %v2241, %v2240
        %v2268 = vpack.c.b16 %v2243, %v2242
        %v2269 = vpack.c.b16 %v2245, %v2244
        %v2270 = vpack.c.b16 %v2247, %v2246
        %v2271 = vpack.c.b16 %v2249, %v2248
        %v2272 = vpack.c.b16 %v2251, %v2250
        %v2273 = vpack.c.b16 %v2253, %v2252
        %v2274 = vpack.c.b16 %v2255, %v2254
        %v2275 = vpack.c.b16 %v2257, %v2256
        %v2276 = vpack.c.b16 %v2259, %v2258
        %v2277 = vpack.c.b16 %v2261, %v2260
        %2278 = vrot.lane.b32.xlu0 %v2262, 68
        %v2279 = vpop.permute.xlu0 %2278
        %2280 = vrot.lane.b32.xlu0 %v2263, 68
        %v2281 = vpop.permute.xlu0 %2280
        %2282 = vrot.lane.b32.xlu0 %v2264, 68
        %v2283 = vpop.permute.xlu0 %2282
        %2284 = vrot.lane.b32.xlu0 %v2265, 68
        %v2285 = vpop.permute.xlu0 %2284
        %2286 = vrot.lane.b32.xlu0 %v2266, 68
        %v2287 = vpop.permute.xlu0 %2286
        %2288 = vrot.lane.b32.xlu0 %v2267, 68
        %v2289 = vpop.permute.xlu0 %2288
        %2290 = vrot.lane.b32.xlu0 %v2268, 68
        %v2291 = vpop.permute.xlu0 %2290
        %2292 = vrot.lane.b32.xlu0 %v2269, 68
        %v2293 = vpop.permute.xlu0 %2292
        %2294 = vrot.lane.b32.xlu0 %v2270, 68
        %v2295 = vpop.permute.xlu0 %2294
        %2296 = vrot.lane.b32.xlu0 %v2271, 68
        %v2297 = vpop.permute.xlu0 %2296
        %2298 = vrot.lane.b32.xlu0 %v2272, 68
        %v2299 = vpop.permute.xlu0 %2298
        %2300 = vrot.lane.b32.xlu0 %v2273, 68
        %v2301 = vpop.permute.xlu0 %2300
        %2302 = vrot.lane.b32.xlu0 %v2274, 68
        %v2303 = vpop.permute.xlu0 %2302
        %2304 = vrot.lane.b32.xlu0 %v2275, 68
        %v2305 = vpop.permute.xlu0 %2304
        %2306 = vrot.lane.b32.xlu0 %v2276, 68
        %v2307 = vpop.permute.xlu0 %2306
        %2308 = vrot.lane.b32.xlu0 %v2277, 68
        %v2309 = vpop.permute.xlu0 %2308
        %v2310 = vunpack.c.l.b16 %v1555
        %v2311 = vunpack.c.l.b16 %v1558
        %v2312 = vunpack.c.l.b16 %v1562
        %v2313 = vunpack.c.l.b16 %v1565
        %v2314 = vunpack.c.l.b16 %v1569
        %v2315 = vunpack.c.l.b16 %v1572
        %v2316 = vunpack.c.l.b16 %v1576
        %v2317 = vunpack.c.l.b16 %v1579
        %v2318 = vunpack.c.l.b16 %v1583
        %v2319 = vunpack.c.l.b16 %v1586
        %v2320 = vunpack.c.l.b16 %v1590
        %v2321 = vunpack.c.l.b16 %v1593
        %v2322 = vunpack.c.l.b16 %v1597
        %v2323 = vunpack.c.l.b16 %v1600
        %v2324 = vunpack.c.l.b16 %v1604
        %v2325 = vunpack.c.l.b16 %v1607
        %v2326 = vunpack.c.l.b16 %v1611
        %v2327 = vunpack.c.l.b16 %v1614
        %v2328 = vunpack.c.l.b16 %v1618
        %v2329 = vunpack.c.l.b16 %v1621
        %v2330 = vunpack.c.l.b16 %v1625
        %v2331 = vunpack.c.l.b16 %v1628
        %v2332 = vunpack.c.l.b16 %v1632
        %v2333 = vunpack.c.l.b16 %v1635
        %v2334 = vunpack.c.l.b16 %v1639
        %v2335 = vunpack.c.l.b16 %v1642
        %v2336 = vunpack.c.l.b16 %v1646
        %v2337 = vunpack.c.l.b16 %v1649
        %v2338 = vunpack.c.l.b16 %v1653
        %v2339 = vunpack.c.l.b16 %v1656
        %v2340 = vunpack.c.l.b16 %v1660
        %v2341 = vunpack.c.l.b16 %v1663
        %v2342 = vpack.c.b16 %v2311, %v2310
        %v2343 = vpack.c.b16 %v2313, %v2312
        %v2344 = vpack.c.b16 %v2315, %v2314
        %v2345 = vpack.c.b16 %v2317, %v2316
        %v2346 = vpack.c.b16 %v2319, %v2318
        %v2347 = vpack.c.b16 %v2321, %v2320
        %v2348 = vpack.c.b16 %v2323, %v2322
        %v2349 = vpack.c.b16 %v2325, %v2324
        %v2350 = vpack.c.b16 %v2327, %v2326
        %v2351 = vpack.c.b16 %v2329, %v2328
        %v2352 = vpack.c.b16 %v2331, %v2330
        %v2353 = vpack.c.b16 %v2333, %v2332
        %v2354 = vpack.c.b16 %v2335, %v2334
        %v2355 = vpack.c.b16 %v2337, %v2336
        %v2356 = vpack.c.b16 %v2339, %v2338
        %v2357 = vpack.c.b16 %v2341, %v2340
        %2358 = vrot.lane.b32.xlu0 %v2342, 100
        %v2359 = vpop.permute.xlu0 %2358
        %2360 = vrot.lane.b32.xlu0 %v2343, 100
        %v2361 = vpop.permute.xlu0 %2360
        %2362 = vrot.lane.b32.xlu0 %v2344, 100
        %v2363 = vpop.permute.xlu0 %2362
        %2364 = vrot.lane.b32.xlu0 %v2345, 100
        %v2365 = vpop.permute.xlu0 %2364
        %2366 = vrot.lane.b32.xlu0 %v2346, 100
        %v2367 = vpop.permute.xlu0 %2366
        %2368 = vrot.lane.b32.xlu0 %v2347, 100
        %v2369 = vpop.permute.xlu0 %2368
        %2370 = vrot.lane.b32.xlu0 %v2348, 100
        %v2371 = vpop.permute.xlu0 %2370
        %2372 = vrot.lane.b32.xlu0 %v2349, 100
        %v2373 = vpop.permute.xlu0 %2372
        %2374 = vrot.lane.b32.xlu0 %v2350, 100
        %v2375 = vpop.permute.xlu0 %2374
        %2376 = vrot.lane.b32.xlu0 %v2351, 100
        %v2377 = vpop.permute.xlu0 %2376
        %2378 = vrot.lane.b32.xlu0 %v2352, 100
        %v2379 = vpop.permute.xlu0 %2378
        %2380 = vrot.lane.b32.xlu0 %v2353, 100
        %v2381 = vpop.permute.xlu0 %2380
        %2382 = vrot.lane.b32.xlu0 %v2354, 100
        %v2383 = vpop.permute.xlu0 %2382
        %2384 = vrot.lane.b32.xlu0 %v2355, 100
        %v2385 = vpop.permute.xlu0 %2384
        %2386 = vrot.lane.b32.xlu0 %v2356, 100
        %v2387 = vpop.permute.xlu0 %2386
        %2388 = vrot.lane.b32.xlu0 %v2357, 100
        %v2389 = vpop.permute.xlu0 %2388
        %v2390 = vunpack.c.l.b16 %v496
        %v2391 = vunpack.c.l.b16 %v497
        %v2392 = vpack.c.b16 %v2391, %v2390
        %2393 = vrot.lane.b32.xlu0 %v2183, 4
        %v2394 = vpop.permute.xlu0 %2393
        %2395 = vrot.lane.b32.xlu0 %v2184, 4
        %v2396 = vpop.permute.xlu0 %2395
        %2397 = vrot.lane.b32.xlu0 %v2185, 4
        %v2398 = vpop.permute.xlu0 %2397
        %2399 = vrot.lane.b32.xlu0 %v2186, 4
        %v2400 = vpop.permute.xlu0 %2399
        %2401 = vrot.lane.b32.xlu0 %v2187, 4
        %v2402 = vpop.permute.xlu0 %2401
        %2403 = vrot.lane.b32.xlu0 %v2188, 4
        %v2404 = vpop.permute.xlu0 %2403
        %2405 = vrot.lane.b32.xlu0 %v2189, 4
        %v2406 = vpop.permute.xlu0 %2405
        %2407 = vrot.lane.b32.xlu0 %v2190, 4
        %v2408 = vpop.permute.xlu0 %2407
        %2409 = vrot.lane.b32.xlu0 %v2191, 4
        %v2410 = vpop.permute.xlu0 %2409
        %2411 = vrot.lane.b32.xlu0 %v2192, 4
        %v2412 = vpop.permute.xlu0 %2411
        %2413 = vrot.lane.b32.xlu0 %v2193, 4
        %v2414 = vpop.permute.xlu0 %2413
        %2415 = vrot.lane.b32.xlu0 %v2194, 4
        %v2416 = vpop.permute.xlu0 %2415
        %2417 = vrot.lane.b32.xlu0 %v2195, 4
        %v2418 = vpop.permute.xlu0 %2417
        %2419 = vrot.lane.b32.xlu0 %v2196, 4
        %v2420 = vpop.permute.xlu0 %2419
        %2421 = vrot.lane.b32.xlu0 %v2197, 4
        %v2422 = vpop.permute.xlu0 %2421
        %2423 = vrot.lane.b32.xlu0 %v2392, 4
        %v2424 = vpop.permute.xlu0 %2423
        %v2425 = vunpack.c.l.b16 %v1677
        %v2426 = vunpack.c.l.b16 %v1687
        %v2427 = vpack.c.b16 %v2426, %v2425
        %2428 = vrot.lane.b32.xlu0 %v2263, 36
        %v2429 = vpop.permute.xlu0 %2428
        %2430 = vrot.lane.b32.xlu0 %v2264, 36
        %v2431 = vpop.permute.xlu0 %2430
        %2432 = vrot.lane.b32.xlu0 %v2265, 36
        %v2433 = vpop.permute.xlu0 %2432
        %2434 = vrot.lane.b32.xlu0 %v2266, 36
        %v2435 = vpop.permute.xlu0 %2434
        %2436 = vrot.lane.b32.xlu0 %v2267, 36
        %v2437 = vpop.permute.xlu0 %2436
        %2438 = vrot.lane.b32.xlu0 %v2268, 36
        %v2439 = vpop.permute.xlu0 %2438
        %2440 = vrot.lane.b32.xlu0 %v2269, 36
        %v2441 = vpop.permute.xlu0 %2440
        %2442 = vrot.lane.b32.xlu0 %v2270, 36
        %v2443 = vpop.permute.xlu0 %2442
        %2444 = vrot.lane.b32.xlu0 %v2271, 36
        %v2445 = vpop.permute.xlu0 %2444
        %2446 = vrot.lane.b32.xlu0 %v2272, 36
        %v2447 = vpop.permute.xlu0 %2446
        %2448 = vrot.lane.b32.xlu0 %v2273, 36
        %v2449 = vpop.permute.xlu0 %2448
        %2450 = vrot.lane.b32.xlu0 %v2274, 36
        %v2451 = vpop.permute.xlu0 %2450
        %2452 = vrot.lane.b32.xlu0 %v2275, 36
        %v2453 = vpop.permute.xlu0 %2452
        %2454 = vrot.lane.b32.xlu0 %v2276, 36
        %v2455 = vpop.permute.xlu0 %2454
        %2456 = vrot.lane.b32.xlu0 %v2277, 36
        %v2457 = vpop.permute.xlu0 %2456
        %2458 = vrot.lane.b32.xlu0 %v2427, 36
        %v2459 = vpop.permute.xlu0 %2458
        %v2460 = vunpack.c.l.b16 %v1694
        %v2461 = vunpack.c.l.b16 %v1697
        %v2462 = vpack.c.b16 %v2461, %v2460
        %2463 = vrot.lane.b32.xlu0 %v2343, 68
        %v2464 = vpop.permute.xlu0 %2463
        %2465 = vrot.lane.b32.xlu0 %v2344, 68
        %v2466 = vpop.permute.xlu0 %2465
        %2467 = vrot.lane.b32.xlu0 %v2345, 68
        %v2468 = vpop.permute.xlu0 %2467
        %2469 = vrot.lane.b32.xlu0 %v2346, 68
        %v2470 = vpop.permute.xlu0 %2469
        %2471 = vrot.lane.b32.xlu0 %v2347, 68
        %v2472 = vpop.permute.xlu0 %2471
        %2473 = vrot.lane.b32.xlu0 %v2348, 68
        %v2474 = vpop.permute.xlu0 %2473
        %2475 = vrot.lane.b32.xlu0 %v2349, 68
        %v2476 = vpop.permute.xlu0 %2475
        %2477 = vrot.lane.b32.xlu0 %v2350, 68
        %v2478 = vpop.permute.xlu0 %2477
        %2479 = vrot.lane.b32.xlu0 %v2351, 68
        %v2480 = vpop.permute.xlu0 %2479
        %2481 = vrot.lane.b32.xlu0 %v2352, 68
        %v2482 = vpop.permute.xlu0 %2481
        %2483 = vrot.lane.b32.xlu0 %v2353, 68
        %v2484 = vpop.permute.xlu0 %2483
        %2485 = vrot.lane.b32.xlu0 %v2354, 68
        %v2486 = vpop.permute.xlu0 %2485
        %2487 = vrot.lane.b32.xlu0 %v2355, 68
        %v2488 = vpop.permute.xlu0 %2487
        %2489 = vrot.lane.b32.xlu0 %v2356, 68
        %v2490 = vpop.permute.xlu0 %2489
        %2491 = vrot.lane.b32.xlu0 %v2357, 68
        %v2492 = vpop.permute.xlu0 %2491
        %2493 = vrot.lane.b32.xlu0 %v2462, 68
        %v2494 = vpop.permute.xlu0 %2493
        %v2495 = vunpack.c.l.b16 %v499
        %v2496 = vunpack.c.l.b16 %v500
        %v2497 = vpack.c.b16 %v2496, %v2495
        %2498 = vrot.lane.b32.xlu0 %v2184, 100
        %v2499 = vpop.permute.xlu0 %2498
        %2500 = vrot.lane.b32.xlu0 %v2185, 100
        %v2501 = vpop.permute.xlu0 %2500
        %2502 = vrot.lane.b32.xlu0 %v2186, 100
        %v2503 = vpop.permute.xlu0 %2502
        %2504 = vrot.lane.b32.xlu0 %v2187, 100
        %v2505 = vpop.permute.xlu0 %2504
        %2506 = vrot.lane.b32.xlu0 %v2188, 100
        %v2507 = vpop.permute.xlu0 %2506
        %2508 = vrot.lane.b32.xlu0 %v2189, 100
        %v2509 = vpop.permute.xlu0 %2508
        %2510 = vrot.lane.b32.xlu0 %v2190, 100
        %v2511 = vpop.permute.xlu0 %2510
        %2512 = vrot.lane.b32.xlu0 %v2191, 100
        %v2513 = vpop.permute.xlu0 %2512
        %2514 = vrot.lane.b32.xlu0 %v2192, 100
        %v2515 = vpop.permute.xlu0 %2514
        %2516 = vrot.lane.b32.xlu0 %v2193, 100
        %v2517 = vpop.permute.xlu0 %2516
        %2518 = vrot.lane.b32.xlu0 %v2194, 100
        %v2519 = vpop.permute.xlu0 %2518
        %2520 = vrot.lane.b32.xlu0 %v2195, 100
        %v2521 = vpop.permute.xlu0 %2520
        %2522 = vrot.lane.b32.xlu0 %v2196, 100
        %v2523 = vpop.permute.xlu0 %2522
        %2524 = vrot.lane.b32.xlu0 %v2197, 100
        %v2525 = vpop.permute.xlu0 %2524
        %2526 = vrot.lane.b32.xlu0 %v2392, 100
        %v2527 = vpop.permute.xlu0 %2526
        %2528 = vrot.lane.b32.xlu0 %v2497, 100
        %v2529 = vpop.permute.xlu0 %2528
        %vm2530 = vcmask 31744
        %v2533 = vsel %vm2530, %v1764, %v1829
        %v2536 = vsel %vm2530, %v1765, %v1831
        %v2539 = vsel %vm2530, %v1766, %v1833
        %v2542 = vsel %vm2530, %v1767, %v1835
        %v2545 = vsel %vm2530, %v1768, %v1837
        %v2548 = vsel %vm2530, %v1769, %v1839
        %v2551 = vsel %vm2530, %v1770, %v1841
        %v2554 = vsel %vm2530, %v1771, %v1843
        %v2557 = vsel %vm2530, %v1772, %v1845
        %v2560 = vsel %vm2530, %v1773, %v1847
        %v2563 = vsel %vm2530, %v1774, %v1849
        %v2566 = vsel %vm2530, %v1775, %v1851
        %v2569 = vsel %vm2530, %v1776, %v1853
        %v2572 = vsel %vm2530, %v1777, %v1855
        %v2575 = vsel %vm2530, %v1778, %v1857
        %v2578 = vsel %vm2530, %v1779, %v1859
        %vm2579 = vcmask 64512
        %v2581 = vsel %vm2579, %v2533, %v1909
        %v2583 = vsel %vm2579, %v2536, %v1911
        %v2585 = vsel %vm2579, %v2539, %v1913
        %v2587 = vsel %vm2579, %v2542, %v1915
        %v2589 = vsel %vm2579, %v2545, %v1917
        %v2591 = vsel %vm2579, %v2548, %v1919
        %v2593 = vsel %vm2579, %v2551, %v1921
        %v2595 = vsel %vm2579, %v2554, %v1923
        %v2597 = vsel %vm2579, %v2557, %v1925
        %v2599 = vsel %vm2579, %v2560, %v1927
        %v2601 = vsel %vm2579, %v2563, %v1929
        %v2603 = vsel %vm2579, %v2566, %v1931
        %v2605 = vsel %vm2579, %v2569, %v1933
        %v2607 = vsel %vm2579, %v2572, %v1935
        %v2609 = vsel %vm2579, %v2575, %v1937
        %v2611 = vsel %vm2579, %v2578, %v1939
        %vm2612 = vcmask 97280
        %v2614 = vsel %vm2612, %v2581, %v1944
        %v2616 = vsel %vm2612, %v2583, %v1946
        %v2618 = vsel %vm2612, %v2585, %v1948
        %v2620 = vsel %vm2612, %v2587, %v1950
        %v2622 = vsel %vm2612, %v2589, %v1952
        %v2624 = vsel %vm2612, %v2591, %v1954
        %v2626 = vsel %vm2612, %v2593, %v1956
        %v2628 = vsel %vm2612, %v2595, %v1958
        %v2630 = vsel %vm2612, %v2597, %v1960
        %v2632 = vsel %vm2612, %v2599, %v1962
        %v2634 = vsel %vm2612, %v2601, %v1964
        %v2636 = vsel %vm2612, %v2603, %v1966
        %v2638 = vsel %vm2612, %v2605, %v1968
        %v2640 = vsel %vm2612, %v2607, %v1970
        %v2642 = vsel %vm2612, %v2609, %v1972
        %v2644 = vsel %vm2612, %v2611, %v1974
        %vm2645 = vcmask 130048
        %v2647 = vsel %vm2645, %v2614, %v1979
        %v2649 = vsel %vm2645, %v2616, %v1981
        %v2651 = vsel %vm2645, %v2618, %v1983
        %v2653 = vsel %vm2645, %v2620, %v1985
        %v2655 = vsel %vm2645, %v2622, %v1987
        %v2657 = vsel %vm2645, %v2624, %v1989
        %v2659 = vsel %vm2645, %v2626, %v1991
        %v2661 = vsel %vm2645, %v2628, %v1993
        %v2663 = vsel %vm2645, %v2630, %v1995
        %v2665 = vsel %vm2645, %v2632, %v1997
        %v2667 = vsel %vm2645, %v2634, %v1999
        %v2669 = vsel %vm2645, %v2636, %v2001
        %v2671 = vsel %vm2645, %v2638, %v2003
        %v2673 = vsel %vm2645, %v2640, %v2005
        %v2675 = vsel %vm2645, %v2642, %v2007
        %v2677 = vsel %vm2645, %v2644, %v2009
        %vm2678 = vcmask 162816
        %v2680 = vsel %vm2678, %v2647, %v2014
        %v2682 = vsel %vm2678, %v2649, %v2016
        %v2684 = vsel %vm2678, %v2651, %v2018
        %v2686 = vsel %vm2678, %v2653, %v2020
        %v2688 = vsel %vm2678, %v2655, %v2022
        %v2690 = vsel %vm2678, %v2657, %v2024
        %v2692 = vsel %vm2678, %v2659, %v2026
        %v2694 = vsel %vm2678, %v2661, %v2028
        %v2696 = vsel %vm2678, %v2663, %v2030
        %v2698 = vsel %vm2678, %v2665, %v2032
        %v2700 = vsel %vm2678, %v2667, %v2034
        %v2702 = vsel %vm2678, %v2669, %v2036
        %v2704 = vsel %vm2678, %v2671, %v2038
        %v2706 = vsel %vm2678, %v2673, %v2040
        %v2708 = vsel %vm2678, %v2675, %v2042
        %v2710 = vsel %vm2678, %v2677, %v2044
        %vm2711 = vcmask 195584
        %v2713 = vsel %vm2711, %v2680, %v2049
        %v2715 = vsel %vm2711, %v2682, %v2051
        %v2717 = vsel %vm2711, %v2684, %v2053
        %v2719 = vsel %vm2711, %v2686, %v2055
        %v2721 = vsel %vm2711, %v2688, %v2057
        %v2723 = vsel %vm2711, %v2690, %v2059
        %v2725 = vsel %vm2711, %v2692, %v2061
        %v2727 = vsel %vm2711, %v2694, %v2063
        %v2729 = vsel %vm2711, %v2696, %v2065
        %v2731 = vsel %vm2711, %v2698, %v2067
        %v2733 = vsel %vm2711, %v2700, %v2069
        %v2735 = vsel %vm2711, %v2702, %v2071
        %v2737 = vsel %vm2711, %v2704, %v2073
        %v2739 = vsel %vm2711, %v2706, %v2075
        %v2741 = vsel %vm2711, %v2708, %v2077
        %v2743 = vsel %vm2711, %v2710, %v2079
        %vm2744 = vcmask 228352
        %v2746 = vsel %vm2744, %v2713, %v2084
        %v2748 = vsel %vm2744, %v2715, %v2086
        %v2750 = vsel %vm2744, %v2717, %v2088
        %v2752 = vsel %vm2744, %v2719, %v2090
        %v2754 = vsel %vm2744, %v2721, %v2092
        %v2756 = vsel %vm2744, %v2723, %v2094
        %v2758 = vsel %vm2744, %v2725, %v2096
        %v2760 = vsel %vm2744, %v2727, %v2098
        %v2762 = vsel %vm2744, %v2729, %v2100
        %v2764 = vsel %vm2744, %v2731, %v2102
        %v2766 = vsel %vm2744, %v2733, %v2104
        %v2768 = vsel %vm2744, %v2735, %v2106
        %v2770 = vsel %vm2744, %v2737, %v2108
        %v2772 = vsel %vm2744, %v2739, %v2110
        %v2774 = vsel %vm2744, %v2741, %v2112
        %v2776 = vsel %vm2744, %v2743, %v2114
        %vm2777 = vcmask 261120
        %v2779 = vsel %vm2777, %v2746, %v2119
        %v2781 = vsel %vm2777, %v2748, %v2121
        %v2783 = vsel %vm2777, %v2750, %v2123
        %v2785 = vsel %vm2777, %v2752, %v2125
        %v2787 = vsel %vm2777, %v2754, %v2127
        %v2789 = vsel %vm2777, %v2756, %v2129
        %v2791 = vsel %vm2777, %v2758, %v2131
        %v2793 = vsel %vm2777, %v2760, %v2133
        %v2795 = vsel %vm2777, %v2762, %v2135
        %v2797 = vsel %vm2777, %v2764, %v2137
        %v2799 = vsel %vm2777, %v2766, %v2139
        %v2801 = vsel %vm2777, %v2768, %v2141
        %v2803 = vsel %vm2777, %v2770, %v2143
        %v2805 = vsel %vm2777, %v2772, %v2145
        %v2807 = vsel %vm2777, %v2774, %v2147
        %v2809 = vsel %vm2777, %v2776, %v2149
        %vm2810 = vcmask 293888
        %v2812 = vsel %vm2810, %v2779, %v2199
        %v2814 = vsel %vm2810, %v2781, %v2201
        %v2816 = vsel %vm2810, %v2783, %v2203
        %v2818 = vsel %vm2810, %v2785, %v2205
        %v2820 = vsel %vm2810, %v2787, %v2207
        %v2822 = vsel %vm2810, %v2789, %v2209
        %v2824 = vsel %vm2810, %v2791, %v2211
        %v2826 = vsel %vm2810, %v2793, %v2213
        %v2828 = vsel %vm2810, %v2795, %v2215
        %v2830 = vsel %vm2810, %v2797, %v2217
        %v2832 = vsel %vm2810, %v2799, %v2219
        %v2834 = vsel %vm2810, %v2801, %v2221
        %v2836 = vsel %vm2810, %v2803, %v2223
        %v2838 = vsel %vm2810, %v2805, %v2225
        %v2840 = vsel %vm2810, %v2807, %v2227
        %v2842 = vsel %vm2810, %v2809, %v2229
        %vm2843 = vcmask 556032
        %v2845 = vsel %vm2843, %v2812, %v2279
        %v2847 = vsel %vm2843, %v2814, %v2281
        %v2849 = vsel %vm2843, %v2816, %v2283
        %v2851 = vsel %vm2843, %v2818, %v2285
        %v2853 = vsel %vm2843, %v2820, %v2287
        %v2855 = vsel %vm2843, %v2822, %v2289
        %v2857 = vsel %vm2843, %v2824, %v2291
        %v2859 = vsel %vm2843, %v2826, %v2293
        %v2861 = vsel %vm2843, %v2828, %v2295
        %v2863 = vsel %vm2843, %v2830, %v2297
        %v2865 = vsel %vm2843, %v2832, %v2299
        %v2867 = vsel %vm2843, %v2834, %v2301
        %v2869 = vsel %vm2843, %v2836, %v2303
        %v2871 = vsel %vm2843, %v2838, %v2305
        %v2873 = vsel %vm2843, %v2840, %v2307
        %v2875 = vsel %vm2843, %v2842, %v2309
        %vm2876 = vcmask 818176
        %v2878 = vsel %vm2876, %v2845, %v2359
        %v2881 = vsel %vm2876, %v2847, %v2361
        %v2884 = vsel %vm2876, %v2849, %v2363
        %v2887 = vsel %vm2876, %v2851, %v2365
        %v2890 = vsel %vm2876, %v2853, %v2367
        %v2893 = vsel %vm2876, %v2855, %v2369
        %v2896 = vsel %vm2876, %v2857, %v2371
        %v2899 = vsel %vm2876, %v2859, %v2373
        %v2902 = vsel %vm2876, %v2861, %v2375
        %v2905 = vsel %vm2876, %v2863, %v2377
        %v2908 = vsel %vm2876, %v2865, %v2379
        %v2911 = vsel %vm2876, %v2867, %v2381
        %v2914 = vsel %vm2876, %v2869, %v2383
        %v2917 = vsel %vm2876, %v2871, %v2385
        %v2920 = vsel %vm2876, %v2873, %v2387
        %v2923 = vsel %vm2876, %v2875, %v2389
        %v2926 = vsel %vm2530, %v2359, %v2394
        %v2928 = vsel %vm2530, %v2361, %v2396
        %v2930 = vsel %vm2530, %v2363, %v2398
        %v2932 = vsel %vm2530, %v2365, %v2400
        %v2934 = vsel %vm2530, %v2367, %v2402
        %v2936 = vsel %vm2530, %v2369, %v2404
        %v2938 = vsel %vm2530, %v2371, %v2406
        %v2940 = vsel %vm2530, %v2373, %v2408
        %v2942 = vsel %vm2530, %v2375, %v2410
        %v2944 = vsel %vm2530, %v2377, %v2412
        %v2946 = vsel %vm2530, %v2379, %v2414
        %v2948 = vsel %vm2530, %v2381, %v2416
        %v2950 = vsel %vm2530, %v2383, %v2418
        %v2952 = vsel %vm2530, %v2385, %v2420
        %v2954 = vsel %vm2530, %v2387, %v2422
        %v2956 = vsel %vm2530, %v2389, %v2424
        %v2958 = vsel %vm2810, %v2926, %v2429
        %v2960 = vsel %vm2810, %v2928, %v2431
        %v2962 = vsel %vm2810, %v2930, %v2433
        %v2964 = vsel %vm2810, %v2932, %v2435
        %v2966 = vsel %vm2810, %v2934, %v2437
        %v2968 = vsel %vm2810, %v2936, %v2439
        %v2970 = vsel %vm2810, %v2938, %v2441
        %v2972 = vsel %vm2810, %v2940, %v2443
        %v2974 = vsel %vm2810, %v2942, %v2445
        %v2976 = vsel %vm2810, %v2944, %v2447
        %v2978 = vsel %vm2810, %v2946, %v2449
        %v2980 = vsel %vm2810, %v2948, %v2451
        %v2982 = vsel %vm2810, %v2950, %v2453
        %v2984 = vsel %vm2810, %v2952, %v2455
        %v2986 = vsel %vm2810, %v2954, %v2457
        %v2988 = vsel %vm2810, %v2956, %v2459
        %v2990 = vsel %vm2843, %v2958, %v2464
        %v2992 = vsel %vm2843, %v2960, %v2466
        %v2994 = vsel %vm2843, %v2962, %v2468
        %v2996 = vsel %vm2843, %v2964, %v2470
        %v2998 = vsel %vm2843, %v2966, %v2472
        %v3000 = vsel %vm2843, %v2968, %v2474
        %v3002 = vsel %vm2843, %v2970, %v2476
        %v3004 = vsel %vm2843, %v2972, %v2478
        %v3006 = vsel %vm2843, %v2974, %v2480
        %v3008 = vsel %vm2843, %v2976, %v2482
        %v3010 = vsel %vm2843, %v2978, %v2484
        %v3012 = vsel %vm2843, %v2980, %v2486
        %v3014 = vsel %vm2843, %v2982, %v2488
        %v3016 = vsel %vm2843, %v2984, %v2490
        %v3018 = vsel %vm2843, %v2986, %v2492
        %v3020 = vsel %vm2843, %v2988, %v2494
        %v3022 = vsel %vm2876, %v2990, %v2499
        %v3025 = vsel %vm2876, %v2992, %v2501
        %v3028 = vsel %vm2876, %v2994, %v2503
        %v3031 = vsel %vm2876, %v2996, %v2505
        %v3034 = vsel %vm2876, %v2998, %v2507
        %v3037 = vsel %vm2876, %v3000, %v2509
        %v3040 = vsel %vm2876, %v3002, %v2511
        %v3043 = vsel %vm2876, %v3004, %v2513
        %v3046 = vsel %vm2876, %v3006, %v2515
        %v3049 = vsel %vm2876, %v3008, %v2517
        %v3052 = vsel %vm2876, %v3010, %v2519
        %v3055 = vsel %vm2876, %v3012, %v2521
        %v3058 = vsel %vm2876, %v3014, %v2523
        %v3061 = vsel %vm2876, %v3016, %v2525
        %v3064 = vsel %vm2876, %v3018, %v2527
        %v3067 = vsel %vm2876, %v3020, %v2529
        %v3069 = vunpack.c.l.b16 %v1711
        %v3070 = vunpack.c.l.b16 %v1721
        %v3071 = vpack.c.b16 %v3070, %v3069
        %v3072 = vunpack.c.l.b16 %v1728
        %v3073 = vunpack.c.l.b16 %v1731
        %v3074 = vpack.c.b16 %v3073, %v3072
        %3075 = vrot.lane.b32.xlu0 %v2344, 32
        %v3076 = vpop.permute.xlu0 %3075
        %3077 = vrot.lane.b32.xlu0 %v2345, 32
        %v3078 = vpop.permute.xlu0 %3077
        %3079 = vrot.lane.b32.xlu0 %v2346, 32
        %v3080 = vpop.permute.xlu0 %3079
        %3081 = vrot.lane.b32.xlu0 %v2347, 32
        %v3082 = vpop.permute.xlu0 %3081
        %3083 = vrot.lane.b32.xlu0 %v2348, 32
        %v3084 = vpop.permute.xlu0 %3083
        %3085 = vrot.lane.b32.xlu0 %v2349, 32
        %v3086 = vpop.permute.xlu0 %3085
        %3087 = vrot.lane.b32.xlu0 %v2350, 32
        %v3088 = vpop.permute.xlu0 %3087
        %3089 = vrot.lane.b32.xlu0 %v2351, 32
        %v3090 = vpop.permute.xlu0 %3089
        %3091 = vrot.lane.b32.xlu0 %v2352, 32
        %v3092 = vpop.permute.xlu0 %3091
        %3093 = vrot.lane.b32.xlu0 %v2353, 32
        %v3094 = vpop.permute.xlu0 %3093
        %3095 = vrot.lane.b32.xlu0 %v2354, 32
        %v3096 = vpop.permute.xlu0 %3095
        %3097 = vrot.lane.b32.xlu0 %v2355, 32
        %v3098 = vpop.permute.xlu0 %3097
        %3099 = vrot.lane.b32.xlu0 %v2356, 32
        %v3100 = vpop.permute.xlu0 %3099
        %3101 = vrot.lane.b32.xlu0 %v2357, 32
        %v3102 = vpop.permute.xlu0 %3101
        %3103 = vrot.lane.b32.xlu0 %v2462, 32
        %v3104 = vpop.permute.xlu0 %3103
        %3105 = vrot.lane.b32.xlu0 %v3074, 32
        %v3106 = vpop.permute.xlu0 %3105
        %v3109 = vsel %vm2777, %v2264, %v3076
        %v3112 = vsel %vm2777, %v2265, %v3078
        %v3115 = vsel %vm2777, %v2266, %v3080
        %v3118 = vsel %vm2777, %v2267, %v3082
        %v3121 = vsel %vm2777, %v2268, %v3084
        %v3124 = vsel %vm2777, %v2269, %v3086
        %v3127 = vsel %vm2777, %v2270, %v3088
        %v3130 = vsel %vm2777, %v2271, %v3090
        %v3133 = vsel %vm2777, %v2272, %v3092
        %v3136 = vsel %vm2777, %v2273, %v3094
        %v3139 = vsel %vm2777, %v2274, %v3096
        %v3142 = vsel %vm2777, %v2275, %v3098
        %v3145 = vsel %vm2777, %v2276, %v3100
        %v3148 = vsel %vm2777, %v2277, %v3102
        %v3151 = vsel %vm2777, %v2427, %v3104
        %v3154 = vsel %vm2777, %v3071, %v3106
        %3171 = vrot.lane.b32.xlu0 %v3109, 4
        %v3172 = vpop.permute.xlu0 %3171
        %3173 = vrot.lane.b32.xlu0 %v3112, 4
        %v3174 = vpop.permute.xlu0 %3173
        %3175 = vrot.lane.b32.xlu0 %v3115, 4
        %v3176 = vpop.permute.xlu0 %3175
        %3177 = vrot.lane.b32.xlu0 %v3118, 4
        %v3178 = vpop.permute.xlu0 %3177
        %3179 = vrot.lane.b32.xlu0 %v3121, 4
        %v3180 = vpop.permute.xlu0 %3179
        %3181 = vrot.lane.b32.xlu0 %v3124, 4
        %v3182 = vpop.permute.xlu0 %3181
        %3183 = vrot.lane.b32.xlu0 %v3127, 4
        %v3184 = vpop.permute.xlu0 %3183
        %3185 = vrot.lane.b32.xlu0 %v3130, 4
        %v3186 = vpop.permute.xlu0 %3185
        %3187 = vrot.lane.b32.xlu0 %v3133, 4
        %v3188 = vpop.permute.xlu0 %3187
        %3189 = vrot.lane.b32.xlu0 %v3136, 4
        %v3190 = vpop.permute.xlu0 %3189
        %3191 = vrot.lane.b32.xlu0 %v3139, 4
        %v3192 = vpop.permute.xlu0 %3191
        %3193 = vrot.lane.b32.xlu0 %v3142, 4
        %v3194 = vpop.permute.xlu0 %3193
        %3195 = vrot.lane.b32.xlu0 %v3145, 4
        %v3196 = vpop.permute.xlu0 %3195
        %3197 = vrot.lane.b32.xlu0 %v3148, 4
        %v3198 = vpop.permute.xlu0 %3197
        %3199 = vrot.lane.b32.xlu0 %v3151, 4
        %v3200 = vpop.permute.xlu0 %3199
        %3201 = vrot.lane.b32.xlu0 %v3154, 4
        %v3202 = vpop.permute.xlu0 %3201
        %v3204 = vsel %vm2530, %v2499, %v3172
        %v3206 = vsel %vm2530, %v2501, %v3174
        %v3208 = vsel %vm2530, %v2503, %v3176
        %v3210 = vsel %vm2530, %v2505, %v3178
        %v3212 = vsel %vm2530, %v2507, %v3180
        %v3214 = vsel %vm2530, %v2509, %v3182
        %v3216 = vsel %vm2530, %v2511, %v3184
        %v3218 = vsel %vm2530, %v2513, %v3186
        %v3220 = vsel %vm2530, %v2515, %v3188
        %v3222 = vsel %vm2530, %v2517, %v3190
        %v3224 = vsel %vm2530, %v2519, %v3192
        %v3226 = vsel %vm2530, %v2521, %v3194
        %v3228 = vsel %vm2530, %v2523, %v3196
        %v3230 = vsel %vm2530, %v2525, %v3198
        %v3232 = vsel %vm2530, %v2527, %v3200
        %v3234 = vsel %vm2530, %v2529, %v3202
        %v3235 = vld [vmem:[%s2] sm:$0xf]
        %v3236 = vld [vmem:[%s2 + $0x4] sm:$0xf]
        %v3237 = vld [vmem:[%s2 + $0x8] sm:$0xf]
        %v3238 = vld [vmem:[%s2 + $0xc] sm:$0xf]
        %v3239 = vld [vmem:[%s2 + $0x10] sm:$0xf]
        %v3240 = vld [vmem:[%s2 + $0x14] sm:$0xf]
        %v3241 = vld [vmem:[%s2 + $0x18] sm:$0xf]
        %v3242 = vld [vmem:[%s2 + $0x1c] sm:$0xf]
        %v3243 = vld [vmem:[%s2 + $0x20] sm:$0xf]
        %v3244 = vld [vmem:[%s2 + $0x24] sm:$0xf]
        %v3245 = vld [vmem:[%s2 + $0x28] sm:$0xf]
        %v3246 = vld [vmem:[%s2 + $0x2c] sm:$0xf]
        %v3247 = vld [vmem:[%s2 + $0x30] sm:$0xf]
        %v3248 = vld [vmem:[%s2 + $0x34] sm:$0xf]
        %v3249 = vld [vmem:[%s2 + $0x38] sm:$0xf]
        %v3250 = vld [vmem:[%s2 + $0x3c] sm:$0xf]
        %v3251 = vld [vmem:[%s2 + $0x40] sm:$0xf]
        %v3252 = vld [vmem:[%s2 + $0x44] sm:$0xf]
        %v3253 = vld [vmem:[%s2 + $0x48] sm:$0xf]
        %v3254 = vld [vmem:[%s2 + $0x4c] sm:$0xf]
        %v3255 = vld [vmem:[%s2 + $0x50] sm:$0xf]
        %v3256 = vld [vmem:[%s2 + $0x54] sm:$0xf]
        %v3257 = vld [vmem:[%s2 + $0x58] sm:$0xf]
        %v3258 = vld [vmem:[%s2 + $0x5c] sm:$0xf]
        %v3259 = vld [vmem:[%s2 + $0x60] sm:$0xf]
        %v3260 = vld [vmem:[%s2 + $0x64] sm:$0xf]
        %v3261 = vld [vmem:[%s2 + $0x68] sm:$0xf]
        %v3262 = vld [vmem:[%s2 + $0x6c] sm:$0xf]
        %v3263 = vld [vmem:[%s2 + $0x70] sm:$0xf]
        %v3264 = vld [vmem:[%s2 + $0x74] sm:$0xf]
        %v3265 = vld [vmem:[%s2 + $0x78] sm:$0xf]
        %v3266 = vld [vmem:[%s2 + $0x7c] sm:$0xf]
        %v3267 = vld [vmem:[%s2 + $0x80] sm:$0xf]
        %v3268 = vld [vmem:[%s2 + $0x84] sm:$0xf]
        %v3269 = vld [vmem:[%s2 + $0x88] sm:$0xf]
        %v3270 = vld [vmem:[%s2 + $0x8c] sm:$0xf]
        %v3271 = vld [vmem:[%s2 + $0x90] sm:$0xf]
        %v3272 = vld [vmem:[%s2 + $0x94] sm:$0xf]
        %v3273 = vld [vmem:[%s2 + $0x98] sm:$0xf]
        %v3274 = vld [vmem:[%s2 + $0x9c] sm:$0xf]
        %v3275 = vld [vmem:[%s2 + $0xa0] sm:$0x3]
        %v3276 = vld [vmem:[%s3] sm:$0x1]
        %v3278 = vperm.slane %v3276, 0
        %v3321 = vunpack.c.l.b16 %v3235
        %v3322 = vunpack.c.l.b16 %v3236
        %v3323 = vunpack.c.l.b16 %v3237
        %v3324 = vunpack.c.l.b16 %v3238
        %v3325 = vunpack.c.l.b16 %v3239
        %v3326 = vunpack.c.l.b16 %v3240
        %v3327 = vunpack.c.l.b16 %v3241
        %v3328 = vunpack.c.l.b16 %v3242
        %v3329 = vunpack.c.l.b16 %v3243
        %v3330 = vunpack.c.l.b16 %v3244
        %v3331 = vunpack.c.l.b16 %v3245
        %v3332 = vunpack.c.l.b16 %v3246
        %v3333 = vunpack.c.l.b16 %v3247
        %v3334 = vunpack.c.l.b16 %v3248
        %v3335 = vunpack.c.l.b16 %v3249
        %v3336 = vunpack.c.l.b16 %v3250
        %v3337 = vunpack.c.l.b16 %v3251
        %v3338 = vunpack.c.l.b16 %v3252
        %v3339 = vunpack.c.l.b16 %v3253
        %v3340 = vunpack.c.l.b16 %v3254
        %v3341 = vunpack.c.l.b16 %v3255
        %v3342 = vunpack.c.l.b16 %v3256
        %v3343 = vunpack.c.l.b16 %v3257
        %v3344 = vunpack.c.l.b16 %v3258
        %v3345 = vunpack.c.l.b16 %v3259
        %v3346 = vunpack.c.l.b16 %v3260
        %v3347 = vunpack.c.l.b16 %v3261
        %v3348 = vunpack.c.l.b16 %v3262
        %v3349 = vunpack.c.l.b16 %v3263
        %v3350 = vunpack.c.l.b16 %v3264
        %v3351 = vunpack.c.l.b16 %v3265
        %v3352 = vunpack.c.l.b16 %v3266
        %v3353 = vunpack.c.l.b16 %v3267
        %v3354 = vunpack.c.l.b16 %v3268
        %v3355 = vunpack.c.l.b16 %v3269
        %v3356 = vunpack.c.l.b16 %v3270
        %v3357 = vunpack.c.l.b16 %v3271
        %v3358 = vunpack.c.l.b16 %v3272
        %v3359 = vunpack.c.l.b16 %v3273
        %v3360 = vunpack.c.l.b16 %v3274
        %v3361 = vunpack.c.l.b16 %v3275
        %v3362 = vpack.c.b16 %v3322, %v3321
        %v3363 = vpack.c.b16 %v3324, %v3323
        %v3364 = vpack.c.b16 %v3326, %v3325
        %v3365 = vpack.c.b16 %v3328, %v3327
        %v3366 = vpack.c.b16 %v3330, %v3329
        %v3367 = vpack.c.b16 %v3332, %v3331
        %v3368 = vpack.c.b16 %v3334, %v3333
        %v3369 = vpack.c.b16 %v3336, %v3335
        %v3370 = vpack.c.b16 %v3338, %v3337
        %v3371 = vpack.c.b16 %v3340, %v3339
        %v3372 = vpack.c.b16 %v3342, %v3341
        %v3373 = vpack.c.b16 %v3344, %v3343
        %v3374 = vpack.c.b16 %v3346, %v3345
        %v3375 = vpack.c.b16 %v3348, %v3347
        %v3376 = vpack.c.b16 %v3350, %v3349
        %v3377 = vpack.c.b16 %v3352, %v3351
        %v3378 = vpack.c.b16 %v3354, %v3353
        %v3379 = vpack.c.b16 %v3356, %v3355
        %v3380 = vpack.c.b16 %v3358, %v3357
        %v3381 = vpack.c.b16 %v3360, %v3359
        %v3382 = vpack.c.b16 %v3361, %v3361
        %v3403 = vsel %vm2843, %v3204, 0
        %v3405 = vsel %vm2843, %v3206, 0
        %v3407 = vsel %vm2843, %v3208, 0
        %v3409 = vsel %vm2843, %v3210, 0
        %v3411 = vsel %vm2843, %v3212, 0
        %v3413 = vsel %vm2843, %v3214, 0
        %v3415 = vsel %vm2843, %v3216, 0
        %v3417 = vsel %vm2843, %v3218, 0
        %v3419 = vsel %vm2843, %v3220, 0
        %v3421 = vsel %vm2843, %v3222, 0
        %v3423 = vsel %vm2843, %v3224, 0
        %v3425 = vsel %vm2843, %v3226, 0
        %v3427 = vsel %vm2843, %v3228, 0
        %v3429 = vsel %vm2843, %v3230, 0
        %v3431 = vsel %vm2843, %v3232, 0
        %v3433 = vsel %vm2843, %v3234, 0
        %vm3435 = vcmask 1041408
        %v3437 = vsel %vm3435, %v3382, 0
        %3439 = vmatpush.bf16.msra.mxu0 %v3369
        %3440 = vmatpush.bf16.msra.mxu0 %v3368
        %3441 = vmatpush.bf16.msra.mxu0 %v3367
        %3442 = vmatpush.bf16.msra.mxu0 %v3366
        %3443 = vmatpush.bf16.msra.mxu0 %v3365
        %3444 = vmatpush.bf16.msra.mxu0 %v3364
        %3445 = vmatpush.bf16.msra.mxu0 %v3363
        %3446 = vmatpush.bf16.msra.mxu0 %v3362
        %3447 = vmatmul.bf16.gmra.mxu0 %v2878
        %v3448 = vpop.f32.mrf.mxu0
        %v3449 = vadd.f32 %v3278, %v3448
        %v3450 = vpop.f32.mrf.mxu0
        %v3451 = vadd.f32 %v3278, %v3450
        %3452 = vmatmul.bf16.gmra.mxu0 %v2881
        %v3453 = vpop.f32.mrf.mxu0
        %v3454 = vadd.f32 %v3278, %v3453
        %v3455 = vpop.f32.mrf.mxu0
        %v3456 = vadd.f32 %v3278, %v3455
        %3457 = vmatmul.bf16.gmra.mxu0 %v2884
        %v3458 = vpop.f32.mrf.mxu0
        %v3459 = vadd.f32 %v3278, %v3458
        %v3460 = vpop.f32.mrf.mxu0
        %v3461 = vadd.f32 %v3278, %v3460
        %3462 = vmatmul.bf16.gmra.mxu0 %v2887
        %v3463 = vpop.f32.mrf.mxu0
        %v3464 = vadd.f32 %v3278, %v3463
        %v3465 = vpop.f32.mrf.mxu0
        %v3466 = vadd.f32 %v3278, %v3465
        %3467 = vmatmul.bf16.gmra.mxu0 %v2890
        %v3468 = vpop.f32.mrf.mxu0
        %v3469 = vadd.f32 %v3278, %v3468
        %v3470 = vpop.f32.mrf.mxu0
        %v3471 = vadd.f32 %v3278, %v3470
        %3472 = vmatmul.bf16.gmra.mxu0 %v2893
        %v3473 = vpop.f32.mrf.mxu0
        %v3474 = vadd.f32 %v3278, %v3473
        %v3475 = vpop.f32.mrf.mxu0
        %v3476 = vadd.f32 %v3278, %v3475
        %3477 = vmatmul.bf16.gmra.mxu0 %v2896
        %v3478 = vpop.f32.mrf.mxu0
        %v3479 = vadd.f32 %v3278, %v3478
        %v3480 = vpop.f32.mrf.mxu0
        %v3481 = vadd.f32 %v3278, %v3480
        %3482 = vmatmul.bf16.gmra.mxu0 %v2899
        %v3483 = vpop.f32.mrf.mxu0
        %v3484 = vadd.f32 %v3278, %v3483
        %v3485 = vpop.f32.mrf.mxu0
        %v3486 = vadd.f32 %v3278, %v3485
        %3487 = vmatmul.bf16.gmra.mxu0 %v2902
        %v3488 = vpop.f32.mrf.mxu0
        %v3489 = vadd.f32 %v3278, %v3488
        %v3490 = vpop.f32.mrf.mxu0
        %v3491 = vadd.f32 %v3278, %v3490
        %3492 = vmatmul.bf16.gmra.mxu0 %v2905
        %v3493 = vpop.f32.mrf.mxu0
        %v3494 = vadd.f32 %v3278, %v3493
        %v3495 = vpop.f32.mrf.mxu0
        %v3496 = vadd.f32 %v3278, %v3495
        %3497 = vmatmul.bf16.gmra.mxu0 %v2908
        %v3498 = vpop.f32.mrf.mxu0
        %v3499 = vadd.f32 %v3278, %v3498
        %v3500 = vpop.f32.mrf.mxu0
        %v3501 = vadd.f32 %v3278, %v3500
        %3502 = vmatmul.bf16.gmra.mxu0 %v2911
        %v3503 = vpop.f32.mrf.mxu0
        %v3504 = vadd.f32 %v3278, %v3503
        %v3505 = vpop.f32.mrf.mxu0
        %v3506 = vadd.f32 %v3278, %v3505
        %3507 = vmatmul.bf16.gmra.mxu0 %v2914
        %v3508 = vpop.f32.mrf.mxu0
        %v3509 = vadd.f32 %v3278, %v3508
        %v3510 = vpop.f32.mrf.mxu0
        %v3511 = vadd.f32 %v3278, %v3510
        %3512 = vmatmul.bf16.gmra.mxu0 %v2917
        %v3513 = vpop.f32.mrf.mxu0
        %v3514 = vadd.f32 %v3278, %v3513
        %v3515 = vpop.f32.mrf.mxu0
        %v3516 = vadd.f32 %v3278, %v3515
        %3517 = vmatmul.bf16.gmra.mxu0 %v2920
        %v3518 = vpop.f32.mrf.mxu0
        %v3519 = vadd.f32 %v3278, %v3518
        %v3520 = vpop.f32.mrf.mxu0
        %v3521 = vadd.f32 %v3278, %v3520
        %3522 = vmatmul.bf16.gmra.mxu0 %v2923
        %v3523 = vpop.f32.mrf.mxu0
        %v3524 = vadd.f32 %v3278, %v3523
        %v3525 = vpop.f32.mrf.mxu0
        %v3526 = vadd.f32 %v3278, %v3525
        %3527 = vdwg.mxu0
        %3528 = vmatpush.bf16.msra.mxu0 %v3377
        %3529 = vmatpush.bf16.msra.mxu0 %v3376
        %3530 = vmatpush.bf16.msra.mxu0 %v3375
        %3531 = vmatpush.bf16.msra.mxu0 %v3374
        %3532 = vmatpush.bf16.msra.mxu0 %v3373
        %3533 = vmatpush.bf16.msra.mxu0 %v3372
        %3534 = vmatpush.bf16.msra.mxu0 %v3371
        %3535 = vmatpush.bf16.msra.mxu0 %v3370
        %3536 = vmatmul.bf16.gmra.mxu0 %v3022
        %v3537 = vpop.f32.mrf.mxu0
        %v3538 = vadd.f32 %v3449, %v3537
        %v3539 = vpop.f32.mrf.mxu0
        %v3540 = vadd.f32 %v3451, %v3539
        %3541 = vmatmul.bf16.gmra.mxu0 %v3025
        %v3542 = vpop.f32.mrf.mxu0
        %v3543 = vadd.f32 %v3454, %v3542
        %v3544 = vpop.f32.mrf.mxu0
        %v3545 = vadd.f32 %v3456, %v3544
        %3546 = vmatmul.bf16.gmra.mxu0 %v3028
        %v3547 = vpop.f32.mrf.mxu0
        %v3548 = vadd.f32 %v3459, %v3547
        %v3549 = vpop.f32.mrf.mxu0
        %v3550 = vadd.f32 %v3461, %v3549
        %3551 = vmatmul.bf16.gmra.mxu0 %v3031
        %v3552 = vpop.f32.mrf.mxu0
        %v3553 = vadd.f32 %v3464, %v3552
        %v3554 = vpop.f32.mrf.mxu0
        %v3555 = vadd.f32 %v3466, %v3554
        %3556 = vmatmul.bf16.gmra.mxu0 %v3034
        %v3557 = vpop.f32.mrf.mxu0
        %v3558 = vadd.f32 %v3469, %v3557
        %v3559 = vpop.f32.mrf.mxu0
        %v3560 = vadd.f32 %v3471, %v3559
        %3561 = vmatmul.bf16.gmra.mxu0 %v3037
        %v3562 = vpop.f32.mrf.mxu0
        %v3563 = vadd.f32 %v3474, %v3562
        %v3564 = vpop.f32.mrf.mxu0
        %v3565 = vadd.f32 %v3476, %v3564
        %3566 = vmatmul.bf16.gmra.mxu0 %v3040
        %v3567 = vpop.f32.mrf.mxu0
        %v3568 = vadd.f32 %v3479, %v3567
        %v3569 = vpop.f32.mrf.mxu0
        %v3570 = vadd.f32 %v3481, %v3569
        %3571 = vmatmul.bf16.gmra.mxu0 %v3043
        %v3572 = vpop.f32.mrf.mxu0
        %v3573 = vadd.f32 %v3484, %v3572
        %v3574 = vpop.f32.mrf.mxu0
        %v3575 = vadd.f32 %v3486, %v3574
        %3576 = vmatmul.bf16.gmra.mxu0 %v3046
        %v3577 = vpop.f32.mrf.mxu0
        %v3578 = vadd.f32 %v3489, %v3577
        %v3579 = vpop.f32.mrf.mxu0
        %v3580 = vadd.f32 %v3491, %v3579
        %3581 = vmatmul.bf16.gmra.mxu0 %v3049
        %v3582 = vpop.f32.mrf.mxu0
        %v3583 = vadd.f32 %v3494, %v3582
        %v3584 = vpop.f32.mrf.mxu0
        %v3585 = vadd.f32 %v3496, %v3584
        %3586 = vmatmul.bf16.gmra.mxu0 %v3052
        %v3587 = vpop.f32.mrf.mxu0
        %v3588 = vadd.f32 %v3499, %v3587
        %v3589 = vpop.f32.mrf.mxu0
        %v3590 = vadd.f32 %v3501, %v3589
        %3591 = vmatmul.bf16.gmra.mxu0 %v3055
        %v3592 = vpop.f32.mrf.mxu0
        %v3593 = vadd.f32 %v3504, %v3592
        %v3594 = vpop.f32.mrf.mxu0
        %v3595 = vadd.f32 %v3506, %v3594
        %3596 = vmatmul.bf16.gmra.mxu0 %v3058
        %v3597 = vpop.f32.mrf.mxu0
        %v3598 = vadd.f32 %v3509, %v3597
        %v3599 = vpop.f32.mrf.mxu0
        %v3600 = vadd.f32 %v3511, %v3599
        %3601 = vmatmul.bf16.gmra.mxu0 %v3061
        %v3602 = vpop.f32.mrf.mxu0
        %v3603 = vadd.f32 %v3514, %v3602
        %v3604 = vpop.f32.mrf.mxu0
        %v3605 = vadd.f32 %v3516, %v3604
        %3606 = vmatmul.bf16.gmra.mxu0 %v3064
        %v3607 = vpop.f32.mrf.mxu0
        %v3608 = vadd.f32 %v3519, %v3607
        %v3609 = vpop.f32.mrf.mxu0
        %v3610 = vadd.f32 %v3521, %v3609
        %3611 = vmatmul.bf16.gmra.mxu0 %v3067
        %v3612 = vpop.f32.mrf.mxu0
        %v3613 = vadd.f32 %v3524, %v3612
        %v3614 = vpop.f32.mrf.mxu0
        %v3615 = vadd.f32 %v3526, %v3614
        %3616 = vdwg.mxu0
        %3617 = vmatpush.bf16.msra.mxu0 0
        %3618 = vmatpush.bf16.msra.mxu0 0
        %3619 = vmatpush.bf16.msra.mxu0 0
        %3620 = vmatpush.bf16.msra.mxu0 %v3437
        %3621 = vmatpush.bf16.msra.mxu0 %v3381
        %3622 = vmatpush.bf16.msra.mxu0 %v3380
        %3623 = vmatpush.bf16.msra.mxu0 %v3379
        %3624 = vmatpush.bf16.msra.mxu0 %v3378
        %3625 = vmatmul.bf16.gmra.mxu0 %v3403
        %v3626 = vpop.f32.mrf.mxu0
        %v3627 = vadd.f32 %v3538, %v3626
        %v3628 = vpop.f32.mrf.mxu0
        %v3629 = vadd.f32 %v3540, %v3628
        %3630 = vmatmul.bf16.gmra.mxu0 %v3405
        %v3631 = vpop.f32.mrf.mxu0
        %v3632 = vadd.f32 %v3543, %v3631
        %v3633 = vpop.f32.mrf.mxu0
        %v3634 = vadd.f32 %v3545, %v3633
        %3635 = vmatmul.bf16.gmra.mxu0 %v3407
        %v3636 = vpop.f32.mrf.mxu0
        %v3637 = vadd.f32 %v3548, %v3636
        %v3638 = vpop.f32.mrf.mxu0
        %v3639 = vadd.f32 %v3550, %v3638
        %3640 = vmatmul.bf16.gmra.mxu0 %v3409
        %v3641 = vpop.f32.mrf.mxu0
        %v3642 = vadd.f32 %v3553, %v3641
        %v3643 = vpop.f32.mrf.mxu0
        %v3644 = vadd.f32 %v3555, %v3643
        %3645 = vmatmul.bf16.gmra.mxu0 %v3411
        %v3646 = vpop.f32.mrf.mxu0
        %v3647 = vadd.f32 %v3558, %v3646
        %v3648 = vpop.f32.mrf.mxu0
        %v3649 = vadd.f32 %v3560, %v3648
        %3650 = vmatmul.bf16.gmra.mxu0 %v3413
        %v3651 = vpop.f32.mrf.mxu0
        %v3652 = vadd.f32 %v3563, %v3651
        %v3653 = vpop.f32.mrf.mxu0
        %v3654 = vadd.f32 %v3565, %v3653
        %3655 = vmatmul.bf16.gmra.mxu0 %v3415
        %v3656 = vpop.f32.mrf.mxu0
        %v3657 = vadd.f32 %v3568, %v3656
        %v3658 = vpop.f32.mrf.mxu0
        %v3659 = vadd.f32 %v3570, %v3658
        %3660 = vmatmul.bf16.gmra.mxu0 %v3417
        %v3661 = vpop.f32.mrf.mxu0
        %v3662 = vadd.f32 %v3573, %v3661
        %v3663 = vpop.f32.mrf.mxu0
        %v3664 = vadd.f32 %v3575, %v3663
        %3665 = vmatmul.bf16.gmra.mxu0 %v3419
        %v3666 = vpop.f32.mrf.mxu0
        %v3667 = vadd.f32 %v3578, %v3666
        %v3668 = vpop.f32.mrf.mxu0
        %v3669 = vadd.f32 %v3580, %v3668
        %3670 = vmatmul.bf16.gmra.mxu0 %v3421
        %v3671 = vpop.f32.mrf.mxu0
        %v3672 = vadd.f32 %v3583, %v3671
        %v3673 = vpop.f32.mrf.mxu0
        %v3674 = vadd.f32 %v3585, %v3673
        %3675 = vmatmul.bf16.gmra.mxu0 %v3423
        %v3676 = vpop.f32.mrf.mxu0
        %v3677 = vadd.f32 %v3588, %v3676
        %v3678 = vpop.f32.mrf.mxu0
        %v3679 = vadd.f32 %v3590, %v3678
        %3680 = vmatmul.bf16.gmra.mxu0 %v3425
        %v3681 = vpop.f32.mrf.mxu0
        %v3682 = vadd.f32 %v3593, %v3681
        %v3683 = vpop.f32.mrf.mxu0
        %v3684 = vadd.f32 %v3595, %v3683
        %3685 = vmatmul.bf16.gmra.mxu0 %v3427
        %v3686 = vpop.f32.mrf.mxu0
        %v3687 = vadd.f32 %v3598, %v3686
        %v3688 = vpop.f32.mrf.mxu0
        %v3689 = vadd.f32 %v3600, %v3688
        %3690 = vmatmul.bf16.gmra.mxu0 %v3429
        %v3691 = vpop.f32.mrf.mxu0
        %v3692 = vadd.f32 %v3603, %v3691
        %v3693 = vpop.f32.mrf.mxu0
        %v3694 = vadd.f32 %v3605, %v3693
        %3695 = vmatmul.bf16.gmra.mxu0 %v3431
        %v3696 = vpop.f32.mrf.mxu0
        %v3697 = vadd.f32 %v3608, %v3696
        %v3698 = vpop.f32.mrf.mxu0
        %v3699 = vadd.f32 %v3610, %v3698
        %3700 = vmatmul.bf16.gmra.mxu0 %v3433
        %v3701 = vpop.f32.mrf.mxu0
        %v3702 = vadd.f32 %v3613, %v3701
        %v3703 = vpop.f32.mrf.mxu0
        %v3704 = vadd.f32 %v3615, %v3703
        %3705 = vdwg.mxu0
        %v3706 = vxor.u32 %v3627, 2147483648
        %v3707 = vxor.u32 %v3629, 2147483648
        %v3708 = vxor.u32 %v3632, 2147483648
        %v3709 = vxor.u32 %v3634, 2147483648
        %v3710 = vxor.u32 %v3637, 2147483648
        %v3711 = vxor.u32 %v3639, 2147483648
        %v3712 = vxor.u32 %v3642, 2147483648
        %v3713 = vxor.u32 %v3644, 2147483648
        %v3714 = vxor.u32 %v3647, 2147483648
        %v3715 = vxor.u32 %v3649, 2147483648
        %v3716 = vxor.u32 %v3652, 2147483648
        %v3717 = vxor.u32 %v3654, 2147483648
        %v3718 = vxor.u32 %v3657, 2147483648
        %v3719 = vxor.u32 %v3659, 2147483648
        %v3720 = vxor.u32 %v3662, 2147483648
        %v3721 = vxor.u32 %v3664, 2147483648
        %v3722 = vxor.u32 %v3667, 2147483648
        %v3723 = vxor.u32 %v3669, 2147483648
        %v3724 = vxor.u32 %v3672, 2147483648
        %v3725 = vxor.u32 %v3674, 2147483648
        %v3726 = vxor.u32 %v3677, 2147483648
        %v3727 = vxor.u32 %v3679, 2147483648
        %v3728 = vxor.u32 %v3682, 2147483648
        %v3729 = vxor.u32 %v3684, 2147483648
        %v3730 = vxor.u32 %v3687, 2147483648
        %v3731 = vxor.u32 %v3689, 2147483648
        %v3732 = vxor.u32 %v3692, 2147483648
        %v3733 = vxor.u32 %v3694, 2147483648
        %v3734 = vxor.u32 %v3697, 2147483648
        %v3735 = vxor.u32 %v3699, 2147483648
        %v3736 = vxor.u32 %v3702, 2147483648
        %v3737 = vxor.u32 %v3704, 2147483648
        %v3738 = vmul.f32 %v3706, 1.442695
        %v3739 = vpow.pop %v3738
        %v3740 = vmul.f32 %v3707, 1.442695
        %v3741 = vpow.pop %v3740
        %v3742 = vmul.f32 %v3708, 1.442695
        %v3743 = vpow.pop %v3742
        %v3744 = vmul.f32 %v3709, 1.442695
        %v3745 = vpow.pop %v3744
        %v3746 = vmul.f32 %v3710, 1.442695
        %v3747 = vpow.pop %v3746
        %v3748 = vmul.f32 %v3711, 1.442695
        %v3749 = vpow.pop %v3748
        %v3750 = vmul.f32 %v3712, 1.442695
        %v3751 = vpow.pop %v3750
        %v3752 = vmul.f32 %v3713, 1.442695
        %v3753 = vpow.pop %v3752
        %v3754 = vmul.f32 %v3714, 1.442695
        %v3755 = vpow.pop %v3754
        %v3756 = vmul.f32 %v3715, 1.442695
        %v3757 = vpow.pop %v3756
        %v3758 = vmul.f32 %v3716, 1.442695
        %v3759 = vpow.pop %v3758
        %v3760 = vmul.f32 %v3717, 1.442695
        %v3761 = vpow.pop %v3760
        %v3762 = vmul.f32 %v3718, 1.442695
        %v3763 = vpow.pop %v3762
        %v3764 = vmul.f32 %v3719, 1.442695
        %v3765 = vpow.pop %v3764
        %v3766 = vmul.f32 %v3720, 1.442695
        %v3767 = vpow.pop %v3766
        %v3768 = vmul.f32 %v3721, 1.442695
        %v3769 = vpow.pop %v3768
        %v3770 = vmul.f32 %v3722, 1.442695
        %v3771 = vpow.pop %v3770
        %v3772 = vmul.f32 %v3723, 1.442695
        %v3773 = vpow.pop %v3772
        %v3774 = vmul.f32 %v3724, 1.442695
        %v3775 = vpow.pop %v3774
        %v3776 = vmul.f32 %v3725, 1.442695
        %v3777 = vpow.pop %v3776
        %v3778 = vmul.f32 %v3726, 1.442695
        %v3779 = vpow.pop %v3778
        %v3780 = vmul.f32 %v3727, 1.442695
        %v3781 = vpow.pop %v3780
        %v3782 = vmul.f32 %v3728, 1.442695
        %v3783 = vpow.pop %v3782
        %v3784 = vmul.f32 %v3729, 1.442695
        %v3785 = vpow.pop %v3784
        %v3786 = vmul.f32 %v3730, 1.442695
        %v3787 = vpow.pop %v3786
        %v3788 = vmul.f32 %v3731, 1.442695
        %v3789 = vpow.pop %v3788
        %v3790 = vmul.f32 %v3732, 1.442695
        %v3791 = vpow.pop %v3790
        %v3792 = vmul.f32 %v3733, 1.442695
        %v3793 = vpow.pop %v3792
        %v3794 = vmul.f32 %v3734, 1.442695
        %v3795 = vpow.pop %v3794
        %v3796 = vmul.f32 %v3735, 1.442695
        %v3797 = vpow.pop %v3796
        %v3798 = vmul.f32 %v3736, 1.442695
        %v3799 = vpow.pop %v3798
        %v3800 = vmul.f32 %v3737, 1.442695
        %v3801 = vpow.pop %v3800
        %v3802 = vadd.f32 %v3739, 1.0
        %v3803 = vadd.f32 %v3741, 1.0
        %v3804 = vadd.f32 %v3743, 1.0
        %v3805 = vadd.f32 %v3745, 1.0
        %v3806 = vadd.f32 %v3747, 1.0
        %v3807 = vadd.f32 %v3749, 1.0
        %v3808 = vadd.f32 %v3751, 1.0
        %v3809 = vadd.f32 %v3753, 1.0
        %v3810 = vadd.f32 %v3755, 1.0
        %v3811 = vadd.f32 %v3757, 1.0
        %v3812 = vadd.f32 %v3759, 1.0
        %v3813 = vadd.f32 %v3761, 1.0
        %v3814 = vadd.f32 %v3763, 1.0
        %v3815 = vadd.f32 %v3765, 1.0
        %v3816 = vadd.f32 %v3767, 1.0
        %v3817 = vadd.f32 %v3769, 1.0
        %v3818 = vadd.f32 %v3771, 1.0
        %v3819 = vadd.f32 %v3773, 1.0
        %v3820 = vadd.f32 %v3775, 1.0
        %v3821 = vadd.f32 %v3777, 1.0
        %v3822 = vadd.f32 %v3779, 1.0
        %v3823 = vadd.f32 %v3781, 1.0
        %v3824 = vadd.f32 %v3783, 1.0
        %v3825 = vadd.f32 %v3785, 1.0
        %v3826 = vadd.f32 %v3787, 1.0
        %v3827 = vadd.f32 %v3789, 1.0
        %v3828 = vadd.f32 %v3791, 1.0
        %v3829 = vadd.f32 %v3793, 1.0
        %v3830 = vadd.f32 %v3795, 1.0
        %v3831 = vadd.f32 %v3797, 1.0
        %v3832 = vadd.f32 %v3799, 1.0
        %v3833 = vadd.f32 %v3801, 1.0
        %v3834 = vrcp.pop %v3802
        %v3835 = vmul.f32 %v3802, %v3834
        %v3836 = vsub.f32 1.0, %v3835
        %v3837 = vmul.f32 %v3834, %v3836
        %v3838 = vadd.f32 %v3834, %v3837
        %vm3839 = vweird.f32 %v3802
        %vm3840 = vweird.f32 %v3834
        %vm3841 = vmor %vm3839, %vm3840
        %v3842 = vsel %vm3841, %v3834, %v3838
        %v3843 = vand.u32 2147483647, %v3802
        %vm3844 = vcmp.eq.f32.partialorder %v3843, 8.507059e+37
        %v3845 = vand.u32 %v3802, 2147483648
        %v3846 = vor.u32 1.1754944e-38, %v3845
        %v3847 = vsel %vm3844, %v3846, %v3842
        %v3848 = vmul.f32 1.0, %v3847
        %v3849 = vrcp.pop %v3803
        %v3850 = vmul.f32 %v3803, %v3849
        %v3851 = vsub.f32 1.0, %v3850
        %v3852 = vmul.f32 %v3849, %v3851
        %v3853 = vadd.f32 %v3849, %v3852
        %vm3854 = vweird.f32 %v3803
        %vm3855 = vweird.f32 %v3849
        %vm3856 = vmor %vm3854, %vm3855
        %v3857 = vsel %vm3856, %v3849, %v3853
        %v3858 = vand.u32 2147483647, %v3803
        %vm3859 = vcmp.eq.f32.partialorder %v3858, 8.507059e+37
        %v3860 = vand.u32 %v3803, 2147483648
        %v3861 = vor.u32 1.1754944e-38, %v3860
        %v3862 = vsel %vm3859, %v3861, %v3857
        %v3863 = vmul.f32 1.0, %v3862
        %v3864 = vrcp.pop %v3804
        %v3865 = vmul.f32 %v3804, %v3864
        %v3866 = vsub.f32 1.0, %v3865
        %v3867 = vmul.f32 %v3864, %v3866
        %v3868 = vadd.f32 %v3864, %v3867
        %vm3869 = vweird.f32 %v3804
        %vm3870 = vweird.f32 %v3864
        %vm3871 = vmor %vm3869, %vm3870
        %v3872 = vsel %vm3871, %v3864, %v3868
        %v3873 = vand.u32 2147483647, %v3804
        %vm3874 = vcmp.eq.f32.partialorder %v3873, 8.507059e+37
        %v3875 = vand.u32 %v3804, 2147483648
        %v3876 = vor.u32 1.1754944e-38, %v3875
        %v3877 = vsel %vm3874, %v3876, %v3872
        %v3878 = vmul.f32 1.0, %v3877
        %v3879 = vrcp.pop %v3805
        %v3880 = vmul.f32 %v3805, %v3879
        %v3881 = vsub.f32 1.0, %v3880
        %v3882 = vmul.f32 %v3879, %v3881
        %v3883 = vadd.f32 %v3879, %v3882
        %vm3884 = vweird.f32 %v3805
        %vm3885 = vweird.f32 %v3879
        %vm3886 = vmor %vm3884, %vm3885
        %v3887 = vsel %vm3886, %v3879, %v3883
        %v3888 = vand.u32 2147483647, %v3805
        %vm3889 = vcmp.eq.f32.partialorder %v3888, 8.507059e+37
        %v3890 = vand.u32 %v3805, 2147483648
        %v3891 = vor.u32 1.1754944e-38, %v3890
        %v3892 = vsel %vm3889, %v3891, %v3887
        %v3893 = vmul.f32 1.0, %v3892
        %v3894 = vrcp.pop %v3806
        %v3895 = vmul.f32 %v3806, %v3894
        %v3896 = vsub.f32 1.0, %v3895
        %v3897 = vmul.f32 %v3894, %v3896
        %v3898 = vadd.f32 %v3894, %v3897
        %vm3899 = vweird.f32 %v3806
        %vm3900 = vweird.f32 %v3894
        %vm3901 = vmor %vm3899, %vm3900
        %v3902 = vsel %vm3901, %v3894, %v3898
        %v3903 = vand.u32 2147483647, %v3806
        %vm3904 = vcmp.eq.f32.partialorder %v3903, 8.507059e+37
        %v3905 = vand.u32 %v3806, 2147483648
        %v3906 = vor.u32 1.1754944e-38, %v3905
        %v3907 = vsel %vm3904, %v3906, %v3902
        %v3908 = vmul.f32 1.0, %v3907
        %v3909 = vrcp.pop %v3807
        %v3910 = vmul.f32 %v3807, %v3909
        %v3911 = vsub.f32 1.0, %v3910
        %v3912 = vmul.f32 %v3909, %v3911
        %v3913 = vadd.f32 %v3909, %v3912
        %vm3914 = vweird.f32 %v3807
        %vm3915 = vweird.f32 %v3909
        %vm3916 = vmor %vm3914, %vm3915
        %v3917 = vsel %vm3916, %v3909, %v3913
        %v3918 = vand.u32 2147483647, %v3807
        %vm3919 = vcmp.eq.f32.partialorder %v3918, 8.507059e+37
        %v3920 = vand.u32 %v3807, 2147483648
        %v3921 = vor.u32 1.1754944e-38, %v3920
        %v3922 = vsel %vm3919, %v3921, %v3917
        %v3923 = vmul.f32 1.0, %v3922
        %v3924 = vrcp.pop %v3808
        %v3925 = vmul.f32 %v3808, %v3924
        %v3926 = vsub.f32 1.0, %v3925
        %v3927 = vmul.f32 %v3924, %v3926
        %v3928 = vadd.f32 %v3924, %v3927
        %vm3929 = vweird.f32 %v3808
        %vm3930 = vweird.f32 %v3924
        %vm3931 = vmor %vm3929, %vm3930
        %v3932 = vsel %vm3931, %v3924, %v3928
        %v3933 = vand.u32 2147483647, %v3808
        %vm3934 = vcmp.eq.f32.partialorder %v3933, 8.507059e+37
        %v3935 = vand.u32 %v3808, 2147483648
        %v3936 = vor.u32 1.1754944e-38, %v3935
        %v3937 = vsel %vm3934, %v3936, %v3932
        %v3938 = vmul.f32 1.0, %v3937
        %v3939 = vrcp.pop %v3809
        %v3940 = vmul.f32 %v3809, %v3939
        %v3941 = vsub.f32 1.0, %v3940
        %v3942 = vmul.f32 %v3939, %v3941
        %v3943 = vadd.f32 %v3939, %v3942
        %vm3944 = vweird.f32 %v3809
        %vm3945 = vweird.f32 %v3939
        %vm3946 = vmor %vm3944, %vm3945
        %v3947 = vsel %vm3946, %v3939, %v3943
        %v3948 = vand.u32 2147483647, %v3809
        %vm3949 = vcmp.eq.f32.partialorder %v3948, 8.507059e+37
        %v3950 = vand.u32 %v3809, 2147483648
        %v3951 = vor.u32 1.1754944e-38, %v3950
        %v3952 = vsel %vm3949, %v3951, %v3947
        %v3953 = vmul.f32 1.0, %v3952
        %v3954 = vrcp.pop %v3810
        %v3955 = vmul.f32 %v3810, %v3954
        %v3956 = vsub.f32 1.0, %v3955
        %v3957 = vmul.f32 %v3954, %v3956
        %v3958 = vadd.f32 %v3954, %v3957
        %vm3959 = vweird.f32 %v3810
        %vm3960 = vweird.f32 %v3954
        %vm3961 = vmor %vm3959, %vm3960
        %v3962 = vsel %vm3961, %v3954, %v3958
        %v3963 = vand.u32 2147483647, %v3810
        %vm3964 = vcmp.eq.f32.partialorder %v3963, 8.507059e+37
        %v3965 = vand.u32 %v3810, 2147483648
        %v3966 = vor.u32 1.1754944e-38, %v3965
        %v3967 = vsel %vm3964, %v3966, %v3962
        %v3968 = vmul.f32 1.0, %v3967
        %v3969 = vrcp.pop %v3811
        %v3970 = vmul.f32 %v3811, %v3969
        %v3971 = vsub.f32 1.0, %v3970
        %v3972 = vmul.f32 %v3969, %v3971
        %v3973 = vadd.f32 %v3969, %v3972
        %vm3974 = vweird.f32 %v3811
        %vm3975 = vweird.f32 %v3969
        %vm3976 = vmor %vm3974, %vm3975
        %v3977 = vsel %vm3976, %v3969, %v3973
        %v3978 = vand.u32 2147483647, %v3811
        %vm3979 = vcmp.eq.f32.partialorder %v3978, 8.507059e+37
        %v3980 = vand.u32 %v3811, 2147483648
        %v3981 = vor.u32 1.1754944e-38, %v3980
        %v3982 = vsel %vm3979, %v3981, %v3977
        %v3983 = vmul.f32 1.0, %v3982
        %v3984 = vrcp.pop %v3812
        %v3985 = vmul.f32 %v3812, %v3984
        %v3986 = vsub.f32 1.0, %v3985
        %v3987 = vmul.f32 %v3984, %v3986
        %v3988 = vadd.f32 %v3984, %v3987
        %vm3989 = vweird.f32 %v3812
        %vm3990 = vweird.f32 %v3984
        %vm3991 = vmor %vm3989, %vm3990
        %v3992 = vsel %vm3991, %v3984, %v3988
        %v3993 = vand.u32 2147483647, %v3812
        %vm3994 = vcmp.eq.f32.partialorder %v3993, 8.507059e+37
        %v3995 = vand.u32 %v3812, 2147483648
        %v3996 = vor.u32 1.1754944e-38, %v3995
        %v3997 = vsel %vm3994, %v3996, %v3992
        %v3998 = vmul.f32 1.0, %v3997
        %v3999 = vrcp.pop %v3813
        %v4000 = vmul.f32 %v3813, %v3999
        %v4001 = vsub.f32 1.0, %v4000
        %v4002 = vmul.f32 %v3999, %v4001
        %v4003 = vadd.f32 %v3999, %v4002
        %vm4004 = vweird.f32 %v3813
        %vm4005 = vweird.f32 %v3999
        %vm4006 = vmor %vm4004, %vm4005
        %v4007 = vsel %vm4006, %v3999, %v4003
        %v4008 = vand.u32 2147483647, %v3813
        %vm4009 = vcmp.eq.f32.partialorder %v4008, 8.507059e+37
        %v4010 = vand.u32 %v3813, 2147483648
        %v4011 = vor.u32 1.1754944e-38, %v4010
        %v4012 = vsel %vm4009, %v4011, %v4007
        %v4013 = vmul.f32 1.0, %v4012
        %v4014 = vrcp.pop %v3814
        %v4015 = vmul.f32 %v3814, %v4014
        %v4016 = vsub.f32 1.0, %v4015
        %v4017 = vmul.f32 %v4014, %v4016
        %v4018 = vadd.f32 %v4014, %v4017
        %vm4019 = vweird.f32 %v3814
        %vm4020 = vweird.f32 %v4014
        %vm4021 = vmor %vm4019, %vm4020
        %v4022 = vsel %vm4021, %v4014, %v4018
        %v4023 = vand.u32 2147483647, %v3814
        %vm4024 = vcmp.eq.f32.partialorder %v4023, 8.507059e+37
        %v4025 = vand.u32 %v3814, 2147483648
        %v4026 = vor.u32 1.1754944e-38, %v4025
        %v4027 = vsel %vm4024, %v4026, %v4022
        %v4028 = vmul.f32 1.0, %v4027
        %v4029 = vrcp.pop %v3815
        %v4030 = vmul.f32 %v3815, %v4029
        %v4031 = vsub.f32 1.0, %v4030
        %v4032 = vmul.f32 %v4029, %v4031
        %v4033 = vadd.f32 %v4029, %v4032
        %vm4034 = vweird.f32 %v3815
        %vm4035 = vweird.f32 %v4029
        %vm4036 = vmor %vm4034, %vm4035
        %v4037 = vsel %vm4036, %v4029, %v4033
        %v4038 = vand.u32 2147483647, %v3815
        %vm4039 = vcmp.eq.f32.partialorder %v4038, 8.507059e+37
        %v4040 = vand.u32 %v3815, 2147483648
        %v4041 = vor.u32 1.1754944e-38, %v4040
        %v4042 = vsel %vm4039, %v4041, %v4037
        %v4043 = vmul.f32 1.0, %v4042
        %v4044 = vrcp.pop %v3816
        %v4045 = vmul.f32 %v3816, %v4044
        %v4046 = vsub.f32 1.0, %v4045
        %v4047 = vmul.f32 %v4044, %v4046
        %v4048 = vadd.f32 %v4044, %v4047
        %vm4049 = vweird.f32 %v3816
        %vm4050 = vweird.f32 %v4044
        %vm4051 = vmor %vm4049, %vm4050
        %v4052 = vsel %vm4051, %v4044, %v4048
        %v4053 = vand.u32 2147483647, %v3816
        %vm4054 = vcmp.eq.f32.partialorder %v4053, 8.507059e+37
        %v4055 = vand.u32 %v3816, 2147483648
        %v4056 = vor.u32 1.1754944e-38, %v4055
        %v4057 = vsel %vm4054, %v4056, %v4052
        %v4058 = vmul.f32 1.0, %v4057
        %v4059 = vrcp.pop %v3817
        %v4060 = vmul.f32 %v3817, %v4059
        %v4061 = vsub.f32 1.0, %v4060
        %v4062 = vmul.f32 %v4059, %v4061
        %v4063 = vadd.f32 %v4059, %v4062
        %vm4064 = vweird.f32 %v3817
        %vm4065 = vweird.f32 %v4059
        %vm4066 = vmor %vm4064, %vm4065
        %v4067 = vsel %vm4066, %v4059, %v4063
        %v4068 = vand.u32 2147483647, %v3817
        %vm4069 = vcmp.eq.f32.partialorder %v4068, 8.507059e+37
        %v4070 = vand.u32 %v3817, 2147483648
        %v4071 = vor.u32 1.1754944e-38, %v4070
        %v4072 = vsel %vm4069, %v4071, %v4067
        %v4073 = vmul.f32 1.0, %v4072
        %v4074 = vrcp.pop %v3818
        %v4075 = vmul.f32 %v3818, %v4074
        %v4076 = vsub.f32 1.0, %v4075
        %v4077 = vmul.f32 %v4074, %v4076
        %v4078 = vadd.f32 %v4074, %v4077
        %vm4079 = vweird.f32 %v3818
        %vm4080 = vweird.f32 %v4074
        %vm4081 = vmor %vm4079, %vm4080
        %v4082 = vsel %vm4081, %v4074, %v4078
        %v4083 = vand.u32 2147483647, %v3818
        %vm4084 = vcmp.eq.f32.partialorder %v4083, 8.507059e+37
        %v4085 = vand.u32 %v3818, 2147483648
        %v4086 = vor.u32 1.1754944e-38, %v4085
        %v4087 = vsel %vm4084, %v4086, %v4082
        %v4088 = vmul.f32 1.0, %v4087
        %v4089 = vrcp.pop %v3819
        %v4090 = vmul.f32 %v3819, %v4089
        %v4091 = vsub.f32 1.0, %v4090
        %v4092 = vmul.f32 %v4089, %v4091
        %v4093 = vadd.f32 %v4089, %v4092
        %vm4094 = vweird.f32 %v3819
        %vm4095 = vweird.f32 %v4089
        %vm4096 = vmor %vm4094, %vm4095
        %v4097 = vsel %vm4096, %v4089, %v4093
        %v4098 = vand.u32 2147483647, %v3819
        %vm4099 = vcmp.eq.f32.partialorder %v4098, 8.507059e+37
        %v4100 = vand.u32 %v3819, 2147483648
        %v4101 = vor.u32 1.1754944e-38, %v4100
        %v4102 = vsel %vm4099, %v4101, %v4097
        %v4103 = vmul.f32 1.0, %v4102
        %v4104 = vrcp.pop %v3820
        %v4105 = vmul.f32 %v3820, %v4104
        %v4106 = vsub.f32 1.0, %v4105
        %v4107 = vmul.f32 %v4104, %v4106
        %v4108 = vadd.f32 %v4104, %v4107
        %vm4109 = vweird.f32 %v3820
        %vm4110 = vweird.f32 %v4104
        %vm4111 = vmor %vm4109, %vm4110
        %v4112 = vsel %vm4111, %v4104, %v4108
        %v4113 = vand.u32 2147483647, %v3820
        %vm4114 = vcmp.eq.f32.partialorder %v4113, 8.507059e+37
        %v4115 = vand.u32 %v3820, 2147483648
        %v4116 = vor.u32 1.1754944e-38, %v4115
        %v4117 = vsel %vm4114, %v4116, %v4112
        %v4118 = vmul.f32 1.0, %v4117
        %v4119 = vrcp.pop %v3821
        %v4120 = vmul.f32 %v3821, %v4119
        %v4121 = vsub.f32 1.0, %v4120
        %v4122 = vmul.f32 %v4119, %v4121
        %v4123 = vadd.f32 %v4119, %v4122
        %vm4124 = vweird.f32 %v3821
        %vm4125 = vweird.f32 %v4119
        %vm4126 = vmor %vm4124, %vm4125
        %v4127 = vsel %vm4126, %v4119, %v4123
        %v4128 = vand.u32 2147483647, %v3821
        %vm4129 = vcmp.eq.f32.partialorder %v4128, 8.507059e+37
        %v4130 = vand.u32 %v3821, 2147483648
        %v4131 = vor.u32 1.1754944e-38, %v4130
        %v4132 = vsel %vm4129, %v4131, %v4127
        %v4133 = vmul.f32 1.0, %v4132
        %v4134 = vrcp.pop %v3822
        %v4135 = vmul.f32 %v3822, %v4134
        %v4136 = vsub.f32 1.0, %v4135
        %v4137 = vmul.f32 %v4134, %v4136
        %v4138 = vadd.f32 %v4134, %v4137
        %vm4139 = vweird.f32 %v3822
        %vm4140 = vweird.f32 %v4134
        %vm4141 = vmor %vm4139, %vm4140
        %v4142 = vsel %vm4141, %v4134, %v4138
        %v4143 = vand.u32 2147483647, %v3822
        %vm4144 = vcmp.eq.f32.partialorder %v4143, 8.507059e+37
        %v4145 = vand.u32 %v3822, 2147483648
        %v4146 = vor.u32 1.1754944e-38, %v4145
        %v4147 = vsel %vm4144, %v4146, %v4142
        %v4148 = vmul.f32 1.0, %v4147
        %v4149 = vrcp.pop %v3823
        %v4150 = vmul.f32 %v3823, %v4149
        %v4151 = vsub.f32 1.0, %v4150
        %v4152 = vmul.f32 %v4149, %v4151
        %v4153 = vadd.f32 %v4149, %v4152
        %vm4154 = vweird.f32 %v3823
        %vm4155 = vweird.f32 %v4149
        %vm4156 = vmor %vm4154, %vm4155
        %v4157 = vsel %vm4156, %v4149, %v4153
        %v4158 = vand.u32 2147483647, %v3823
        %vm4159 = vcmp.eq.f32.partialorder %v4158, 8.507059e+37
        %v4160 = vand.u32 %v3823, 2147483648
        %v4161 = vor.u32 1.1754944e-38, %v4160
        %v4162 = vsel %vm4159, %v4161, %v4157
        %v4163 = vmul.f32 1.0, %v4162
        %v4164 = vrcp.pop %v3824
        %v4165 = vmul.f32 %v3824, %v4164
        %v4166 = vsub.f32 1.0, %v4165
        %v4167 = vmul.f32 %v4164, %v4166
        %v4168 = vadd.f32 %v4164, %v4167
        %vm4169 = vweird.f32 %v3824
        %vm4170 = vweird.f32 %v4164
        %vm4171 = vmor %vm4169, %vm4170
        %v4172 = vsel %vm4171, %v4164, %v4168
        %v4173 = vand.u32 2147483647, %v3824
        %vm4174 = vcmp.eq.f32.partialorder %v4173, 8.507059e+37
        %v4175 = vand.u32 %v3824, 2147483648
        %v4176 = vor.u32 1.1754944e-38, %v4175
        %v4177 = vsel %vm4174, %v4176, %v4172
        %v4178 = vmul.f32 1.0, %v4177
        %v4179 = vrcp.pop %v3825
        %v4180 = vmul.f32 %v3825, %v4179
        %v4181 = vsub.f32 1.0, %v4180
        %v4182 = vmul.f32 %v4179, %v4181
        %v4183 = vadd.f32 %v4179, %v4182
        %vm4184 = vweird.f32 %v3825
        %vm4185 = vweird.f32 %v4179
        %vm4186 = vmor %vm4184, %vm4185
        %v4187 = vsel %vm4186, %v4179, %v4183
        %v4188 = vand.u32 2147483647, %v3825
        %vm4189 = vcmp.eq.f32.partialorder %v4188, 8.507059e+37
        %v4190 = vand.u32 %v3825, 2147483648
        %v4191 = vor.u32 1.1754944e-38, %v4190
        %v4192 = vsel %vm4189, %v4191, %v4187
        %v4193 = vmul.f32 1.0, %v4192
        %v4194 = vrcp.pop %v3826
        %v4195 = vmul.f32 %v3826, %v4194
        %v4196 = vsub.f32 1.0, %v4195
        %v4197 = vmul.f32 %v4194, %v4196
        %v4198 = vadd.f32 %v4194, %v4197
        %vm4199 = vweird.f32 %v3826
        %vm4200 = vweird.f32 %v4194
        %vm4201 = vmor %vm4199, %vm4200
        %v4202 = vsel %vm4201, %v4194, %v4198
        %v4203 = vand.u32 2147483647, %v3826
        %vm4204 = vcmp.eq.f32.partialorder %v4203, 8.507059e+37
        %v4205 = vand.u32 %v3826, 2147483648
        %v4206 = vor.u32 1.1754944e-38, %v4205
        %v4207 = vsel %vm4204, %v4206, %v4202
        %v4208 = vmul.f32 1.0, %v4207
        %v4209 = vrcp.pop %v3827
        %v4210 = vmul.f32 %v3827, %v4209
        %v4211 = vsub.f32 1.0, %v4210
        %v4212 = vmul.f32 %v4209, %v4211
        %v4213 = vadd.f32 %v4209, %v4212
        %vm4214 = vweird.f32 %v3827
        %vm4215 = vweird.f32 %v4209
        %vm4216 = vmor %vm4214, %vm4215
        %v4217 = vsel %vm4216, %v4209, %v4213
        %v4218 = vand.u32 2147483647, %v3827
        %vm4219 = vcmp.eq.f32.partialorder %v4218, 8.507059e+37
        %v4220 = vand.u32 %v3827, 2147483648
        %v4221 = vor.u32 1.1754944e-38, %v4220
        %v4222 = vsel %vm4219, %v4221, %v4217
        %v4223 = vmul.f32 1.0, %v4222
        %v4224 = vrcp.pop %v3828
        %v4225 = vmul.f32 %v3828, %v4224
        %v4226 = vsub.f32 1.0, %v4225
        %v4227 = vmul.f32 %v4224, %v4226
        %v4228 = vadd.f32 %v4224, %v4227
        %vm4229 = vweird.f32 %v3828
        %vm4230 = vweird.f32 %v4224
        %vm4231 = vmor %vm4229, %vm4230
        %v4232 = vsel %vm4231, %v4224, %v4228
        %v4233 = vand.u32 2147483647, %v3828
        %vm4234 = vcmp.eq.f32.partialorder %v4233, 8.507059e+37
        %v4235 = vand.u32 %v3828, 2147483648
        %v4236 = vor.u32 1.1754944e-38, %v4235
        %v4237 = vsel %vm4234, %v4236, %v4232
        %v4238 = vmul.f32 1.0, %v4237
        %v4239 = vrcp.pop %v3829
        %v4240 = vmul.f32 %v3829, %v4239
        %v4241 = vsub.f32 1.0, %v4240
        %v4242 = vmul.f32 %v4239, %v4241
        %v4243 = vadd.f32 %v4239, %v4242
        %vm4244 = vweird.f32 %v3829
        %vm4245 = vweird.f32 %v4239
        %vm4246 = vmor %vm4244, %vm4245
        %v4247 = vsel %vm4246, %v4239, %v4243
        %v4248 = vand.u32 2147483647, %v3829
        %vm4249 = vcmp.eq.f32.partialorder %v4248, 8.507059e+37
        %v4250 = vand.u32 %v3829, 2147483648
        %v4251 = vor.u32 1.1754944e-38, %v4250
        %v4252 = vsel %vm4249, %v4251, %v4247
        %v4253 = vmul.f32 1.0, %v4252
        %v4254 = vrcp.pop %v3830
        %v4255 = vmul.f32 %v3830, %v4254
        %v4256 = vsub.f32 1.0, %v4255
        %v4257 = vmul.f32 %v4254, %v4256
        %v4258 = vadd.f32 %v4254, %v4257
        %vm4259 = vweird.f32 %v3830
        %vm4260 = vweird.f32 %v4254
        %vm4261 = vmor %vm4259, %vm4260
        %v4262 = vsel %vm4261, %v4254, %v4258
        %v4263 = vand.u32 2147483647, %v3830
        %vm4264 = vcmp.eq.f32.partialorder %v4263, 8.507059e+37
        %v4265 = vand.u32 %v3830, 2147483648
        %v4266 = vor.u32 1.1754944e-38, %v4265
        %v4267 = vsel %vm4264, %v4266, %v4262
        %v4268 = vmul.f32 1.0, %v4267
        %v4269 = vrcp.pop %v3831
        %v4270 = vmul.f32 %v3831, %v4269
        %v4271 = vsub.f32 1.0, %v4270
        %v4272 = vmul.f32 %v4269, %v4271
        %v4273 = vadd.f32 %v4269, %v4272
        %vm4274 = vweird.f32 %v3831
        %vm4275 = vweird.f32 %v4269
        %vm4276 = vmor %vm4274, %vm4275
        %v4277 = vsel %vm4276, %v4269, %v4273
        %v4278 = vand.u32 2147483647, %v3831
        %vm4279 = vcmp.eq.f32.partialorder %v4278, 8.507059e+37
        %v4280 = vand.u32 %v3831, 2147483648
        %v4281 = vor.u32 1.1754944e-38, %v4280
        %v4282 = vsel %vm4279, %v4281, %v4277
        %v4283 = vmul.f32 1.0, %v4282
        %v4284 = vrcp.pop %v3832
        %v4285 = vmul.f32 %v3832, %v4284
        %v4286 = vsub.f32 1.0, %v4285
        %v4287 = vmul.f32 %v4284, %v4286
        %v4288 = vadd.f32 %v4284, %v4287
        %vm4289 = vweird.f32 %v3832
        %vm4290 = vweird.f32 %v4284
        %vm4291 = vmor %vm4289, %vm4290
        %v4292 = vsel %vm4291, %v4284, %v4288
        %v4293 = vand.u32 2147483647, %v3832
        %vm4294 = vcmp.eq.f32.partialorder %v4293, 8.507059e+37
        %v4295 = vand.u32 %v3832, 2147483648
        %v4296 = vor.u32 1.1754944e-38, %v4295
        %v4297 = vsel %vm4294, %v4296, %v4292
        %v4298 = vmul.f32 1.0, %v4297
        %v4299 = vrcp.pop %v3833
        %v4300 = vmul.f32 %v3833, %v4299
        %v4301 = vsub.f32 1.0, %v4300
        %v4302 = vmul.f32 %v4299, %v4301
        %v4303 = vadd.f32 %v4299, %v4302
        %vm4304 = vweird.f32 %v3833
        %vm4305 = vweird.f32 %v4299
        %vm4306 = vmor %vm4304, %vm4305
        %v4307 = vsel %vm4306, %v4299, %v4303
        %v4308 = vand.u32 2147483647, %v3833
        %vm4309 = vcmp.eq.f32.partialorder %v4308, 8.507059e+37
        %v4310 = vand.u32 %v3833, 2147483648
        %v4311 = vor.u32 1.1754944e-38, %v4310
        %v4312 = vsel %vm4309, %v4311, %v4307
        %v4313 = vmul.f32 1.0, %v4312
        %v4314 = vmul.f32 %v3848, 2.0
        %v4315 = vmul.f32 %v3863, 2.0
        %v4316 = vmul.f32 %v3878, 2.0
        %v4317 = vmul.f32 %v3893, 2.0
        %v4318 = vmul.f32 %v3908, 2.0
        %v4319 = vmul.f32 %v3923, 2.0
        %v4320 = vmul.f32 %v3938, 2.0
        %v4321 = vmul.f32 %v3953, 2.0
        %v4322 = vmul.f32 %v3968, 2.0
        %v4323 = vmul.f32 %v3983, 2.0
        %v4324 = vmul.f32 %v3998, 2.0
        %v4325 = vmul.f32 %v4013, 2.0
        %v4326 = vmul.f32 %v4028, 2.0
        %v4327 = vmul.f32 %v4043, 2.0
        %v4328 = vmul.f32 %v4058, 2.0
        %v4329 = vmul.f32 %v4073, 2.0
        %v4330 = vmul.f32 %v4088, 2.0
        %v4331 = vmul.f32 %v4103, 2.0
        %v4332 = vmul.f32 %v4118, 2.0
        %v4333 = vmul.f32 %v4133, 2.0
        %v4334 = vmul.f32 %v4148, 2.0
        %v4335 = vmul.f32 %v4163, 2.0
        %v4336 = vmul.f32 %v4178, 2.0
        %v4337 = vmul.f32 %v4193, 2.0
        %v4338 = vmul.f32 %v4208, 2.0
        %v4339 = vmul.f32 %v4223, 2.0
        %v4340 = vmul.f32 %v4238, 2.0
        %v4341 = vmul.f32 %v4253, 2.0
        %v4342 = vmul.f32 %v4268, 2.0
        %v4343 = vmul.f32 %v4283, 2.0
        %v4344 = vmul.f32 %v4298, 2.0
        %v4345 = vmul.f32 %v4313, 2.0
        %v4346 = vsub.f32 %v4314, 1.0
        %v4347 = vsub.f32 %v4315, 1.0
        %v4348 = vsub.f32 %v4316, 1.0
        %v4349 = vsub.f32 %v4317, 1.0
        %v4350 = vsub.f32 %v4318, 1.0
        %v4351 = vsub.f32 %v4319, 1.0
        %v4352 = vsub.f32 %v4320, 1.0
        %v4353 = vsub.f32 %v4321, 1.0
        %v4354 = vsub.f32 %v4322, 1.0
        %v4355 = vsub.f32 %v4323, 1.0
        %v4356 = vsub.f32 %v4324, 1.0
        %v4357 = vsub.f32 %v4325, 1.0
        %v4358 = vsub.f32 %v4326, 1.0
        %v4359 = vsub.f32 %v4327, 1.0
        %v4360 = vsub.f32 %v4328, 1.0
        %v4361 = vsub.f32 %v4329, 1.0
        %v4362 = vsub.f32 %v4330, 1.0
        %v4363 = vsub.f32 %v4331, 1.0
        %v4364 = vsub.f32 %v4332, 1.0
        %v4365 = vsub.f32 %v4333, 1.0
        %v4366 = vsub.f32 %v4334, 1.0
        %v4367 = vsub.f32 %v4335, 1.0
        %v4368 = vsub.f32 %v4336, 1.0
        %v4369 = vsub.f32 %v4337, 1.0
        %v4370 = vsub.f32 %v4338, 1.0
        %v4371 = vsub.f32 %v4339, 1.0
        %v4372 = vsub.f32 %v4340, 1.0
        %v4373 = vsub.f32 %v4341, 1.0
        %v4374 = vsub.f32 %v4342, 1.0
        %v4375 = vsub.f32 %v4343, 1.0
        %v4376 = vsub.f32 %v4344, 1.0
        %v4377 = vsub.f32 %v4345, 1.0
        %v4378 = vld [vmem:[%s274] sm:$0xff]
        %v4379 = vld [vmem:[%s274 + $0x8] sm:$0xff]
        %v4380 = vld [vmem:[%s274 + $0x10] sm:$0xff]
        %v4381 = vld [vmem:[%s274 + $0x18] sm:$0xff]
        %v4382 = vld [vmem:[%s274 + $0x20] sm:$0xff]
        %v4383 = vld [vmem:[%s274 + $0x28] sm:$0xff]
        %v4384 = vld [vmem:[%s274 + $0x30] sm:$0xff]
        %v4385 = vld [vmem:[%s274 + $0x38] sm:$0xff]
        %v4386 = vld [vmem:[%s274 + $0x40] sm:$0xff]
        %v4387 = vld [vmem:[%s274 + $0x48] sm:$0xff]
        %v4388 = vld [vmem:[%s274 + $0x50] sm:$0xff]
        %v4389 = vld [vmem:[%s274 + $0x58] sm:$0xff]
        %v4390 = vld [vmem:[%s274 + $0x60] sm:$0xff]
        %v4391 = vld [vmem:[%s274 + $0x68] sm:$0xff]
        %v4392 = vld [vmem:[%s274 + $0x70] sm:$0xff]
        %v4393 = vld [vmem:[%s274 + $0x78] sm:$0xff]
        %v4394 = vld [vmem:[%s274 + $0x80] sm:$0xff]
        %v4395 = vld [vmem:[%s274 + $0x88] sm:$0xff]
        %v4396 = vld [vmem:[%s274 + $0x90] sm:$0xff]
        %v4397 = vld [vmem:[%s274 + $0x98] sm:$0xff]
        %v4398 = vld [vmem:[%s274 + $0xa0] sm:$0xff]
        %v4399 = vld [vmem:[%s274 + $0xa8] sm:$0xff]
        %v4400 = vld [vmem:[%s274 + $0xb0] sm:$0xff]
        %v4401 = vld [vmem:[%s274 + $0xb8] sm:$0xff]
        %v4402 = vld [vmem:[%s274 + $0xc0] sm:$0xff]
        %v4403 = vld [vmem:[%s274 + $0xc8] sm:$0xff]
        %v4404 = vld [vmem:[%s274 + $0xd0] sm:$0xff]
        %v4405 = vld [vmem:[%s274 + $0xd8] sm:$0xff]
        %v4406 = vld [vmem:[%s274 + $0xe0] sm:$0xff]
        %v4407 = vld [vmem:[%s274 + $0xe8] sm:$0xff]
        %v4408 = vld [vmem:[%s274 + $0xf0] sm:$0xff]
        %v4409 = vld [vmem:[%s274 + $0xf8] sm:$0xff]
        %4442 = vrot.lane.b32.xlu0 %v4378, 32
        %v4443 = vpop.permute.xlu0 %4442
        %4444 = vrot.lane.b32.xlu0 %v4379, 32
        %v4445 = vpop.permute.xlu0 %4444
        %4446 = vrot.lane.b32.xlu0 %v4380, 32
        %v4447 = vpop.permute.xlu0 %4446
        %4448 = vrot.lane.b32.xlu0 %v4381, 32
        %v4449 = vpop.permute.xlu0 %4448
        %4450 = vrot.lane.b32.xlu0 %v4382, 32
        %v4451 = vpop.permute.xlu0 %4450
        %4452 = vrot.lane.b32.xlu0 %v4383, 32
        %v4453 = vpop.permute.xlu0 %4452
        %4454 = vrot.lane.b32.xlu0 %v4384, 32
        %v4455 = vpop.permute.xlu0 %4454
        %4456 = vrot.lane.b32.xlu0 %v4385, 32
        %v4457 = vpop.permute.xlu0 %4456
        %4458 = vrot.lane.b32.xlu0 %v4386, 32
        %v4459 = vpop.permute.xlu0 %4458
        %4460 = vrot.lane.b32.xlu0 %v4387, 32
        %v4461 = vpop.permute.xlu0 %4460
        %4462 = vrot.lane.b32.xlu0 %v4388, 32
        %v4463 = vpop.permute.xlu0 %4462
        %4464 = vrot.lane.b32.xlu0 %v4389, 32
        %v4465 = vpop.permute.xlu0 %4464
        %4466 = vrot.lane.b32.xlu0 %v4390, 32
        %v4467 = vpop.permute.xlu0 %4466
        %4468 = vrot.lane.b32.xlu0 %v4391, 32
        %v4469 = vpop.permute.xlu0 %4468
        %4470 = vrot.lane.b32.xlu0 %v4392, 32
        %v4471 = vpop.permute.xlu0 %4470
        %4472 = vrot.lane.b32.xlu0 %v4393, 32
        %v4473 = vpop.permute.xlu0 %4472
        %4474 = vrot.lane.b32.xlu0 %v4394, 32
        %v4475 = vpop.permute.xlu0 %4474
        %4476 = vrot.lane.b32.xlu0 %v4395, 32
        %v4477 = vpop.permute.xlu0 %4476
        %4478 = vrot.lane.b32.xlu0 %v4396, 32
        %v4479 = vpop.permute.xlu0 %4478
        %4480 = vrot.lane.b32.xlu0 %v4397, 32
        %v4481 = vpop.permute.xlu0 %4480
        %4482 = vrot.lane.b32.xlu0 %v4398, 32
        %v4483 = vpop.permute.xlu0 %4482
        %4484 = vrot.lane.b32.xlu0 %v4399, 32
        %v4485 = vpop.permute.xlu0 %4484
        %4486 = vrot.lane.b32.xlu0 %v4400, 32
        %v4487 = vpop.permute.xlu0 %4486
        %4488 = vrot.lane.b32.xlu0 %v4401, 32
        %v4489 = vpop.permute.xlu0 %4488
        %4490 = vrot.lane.b32.xlu0 %v4402, 32
        %v4491 = vpop.permute.xlu0 %4490
        %4492 = vrot.lane.b32.xlu0 %v4403, 32
        %v4493 = vpop.permute.xlu0 %4492
        %4494 = vrot.lane.b32.xlu0 %v4404, 32
        %v4495 = vpop.permute.xlu0 %4494
        %4496 = vrot.lane.b32.xlu0 %v4405, 32
        %v4497 = vpop.permute.xlu0 %4496
        %4498 = vrot.lane.b32.xlu0 %v4406, 32
        %v4499 = vpop.permute.xlu0 %4498
        %4500 = vrot.lane.b32.xlu0 %v4407, 32
        %v4501 = vpop.permute.xlu0 %4500
        %4502 = vrot.lane.b32.xlu0 %v4408, 32
        %v4503 = vpop.permute.xlu0 %4502
        %4504 = vrot.lane.b32.xlu0 %v4409, 32
        %v4505 = vpop.permute.xlu0 %4504
        %v4538 = vmul.f32 %v3848, %v4443
        %v4539 = vmul.f32 %v3863, %v4445
        %v4540 = vmul.f32 %v3878, %v4447
        %v4541 = vmul.f32 %v3893, %v4449
        %v4542 = vmul.f32 %v3908, %v4451
        %v4543 = vmul.f32 %v3923, %v4453
        %v4544 = vmul.f32 %v3938, %v4455
        %v4545 = vmul.f32 %v3953, %v4457
        %v4546 = vmul.f32 %v3968, %v4459
        %v4547 = vmul.f32 %v3983, %v4461
        %v4548 = vmul.f32 %v3998, %v4463
        %v4549 = vmul.f32 %v4013, %v4465
        %v4550 = vmul.f32 %v4028, %v4467
        %v4551 = vmul.f32 %v4043, %v4469
        %v4552 = vmul.f32 %v4058, %v4471
        %v4553 = vmul.f32 %v4073, %v4473
        %v4554 = vmul.f32 %v4088, %v4475
        %v4555 = vmul.f32 %v4103, %v4477
        %v4556 = vmul.f32 %v4118, %v4479
        %v4557 = vmul.f32 %v4133, %v4481
        %v4558 = vmul.f32 %v4148, %v4483
        %v4559 = vmul.f32 %v4163, %v4485
        %v4560 = vmul.f32 %v4178, %v4487
        %v4561 = vmul.f32 %v4193, %v4489
        %v4562 = vmul.f32 %v4208, %v4491
        %v4563 = vmul.f32 %v4223, %v4493
        %v4564 = vmul.f32 %v4238, %v4495
        %v4565 = vmul.f32 %v4253, %v4497
        %v4566 = vmul.f32 %v4268, %v4499
        %v4567 = vmul.f32 %v4283, %v4501
        %v4568 = vmul.f32 %v4298, %v4503
        %v4569 = vmul.f32 %v4313, %v4505
        %4602 = vrot.lane.b32.xlu0 %v4346, 32
        %v4603 = vpop.permute.xlu0 %4602
        %4604 = vrot.lane.b32.xlu0 %v4347, 32
        %v4605 = vpop.permute.xlu0 %4604
        %4606 = vrot.lane.b32.xlu0 %v4348, 32
        %v4607 = vpop.permute.xlu0 %4606
        %4608 = vrot.lane.b32.xlu0 %v4349, 32
        %v4609 = vpop.permute.xlu0 %4608
        %4610 = vrot.lane.b32.xlu0 %v4350, 32
        %v4611 = vpop.permute.xlu0 %4610
        %4612 = vrot.lane.b32.xlu0 %v4351, 32
        %v4613 = vpop.permute.xlu0 %4612
        %4614 = vrot.lane.b32.xlu0 %v4352, 32
        %v4615 = vpop.permute.xlu0 %4614
        %4616 = vrot.lane.b32.xlu0 %v4353, 32
        %v4617 = vpop.permute.xlu0 %4616
        %4618 = vrot.lane.b32.xlu0 %v4354, 32
        %v4619 = vpop.permute.xlu0 %4618
        %4620 = vrot.lane.b32.xlu0 %v4355, 32
        %v4621 = vpop.permute.xlu0 %4620
        %4622 = vrot.lane.b32.xlu0 %v4356, 32
        %v4623 = vpop.permute.xlu0 %4622
        %4624 = vrot.lane.b32.xlu0 %v4357, 32
        %v4625 = vpop.permute.xlu0 %4624
        %4626 = vrot.lane.b32.xlu0 %v4358, 32
        %v4627 = vpop.permute.xlu0 %4626
        %4628 = vrot.lane.b32.xlu0 %v4359, 32
        %v4629 = vpop.permute.xlu0 %4628
        %4630 = vrot.lane.b32.xlu0 %v4360, 32
        %v4631 = vpop.permute.xlu0 %4630
        %4632 = vrot.lane.b32.xlu0 %v4361, 32
        %v4633 = vpop.permute.xlu0 %4632
        %4634 = vrot.lane.b32.xlu0 %v4362, 32
        %v4635 = vpop.permute.xlu0 %4634
        %4636 = vrot.lane.b32.xlu0 %v4363, 32
        %v4637 = vpop.permute.xlu0 %4636
        %4638 = vrot.lane.b32.xlu0 %v4364, 32
        %v4639 = vpop.permute.xlu0 %4638
        %4640 = vrot.lane.b32.xlu0 %v4365, 32
        %v4641 = vpop.permute.xlu0 %4640
        %4642 = vrot.lane.b32.xlu0 %v4366, 32
        %v4643 = vpop.permute.xlu0 %4642
        %4644 = vrot.lane.b32.xlu0 %v4367, 32
        %v4645 = vpop.permute.xlu0 %4644
        %4646 = vrot.lane.b32.xlu0 %v4368, 32
        %v4647 = vpop.permute.xlu0 %4646
        %4648 = vrot.lane.b32.xlu0 %v4369, 32
        %v4649 = vpop.permute.xlu0 %4648
        %4650 = vrot.lane.b32.xlu0 %v4370, 32
        %v4651 = vpop.permute.xlu0 %4650
        %4652 = vrot.lane.b32.xlu0 %v4371, 32
        %v4653 = vpop.permute.xlu0 %4652
        %4654 = vrot.lane.b32.xlu0 %v4372, 32
        %v4655 = vpop.permute.xlu0 %4654
        %4656 = vrot.lane.b32.xlu0 %v4373, 32
        %v4657 = vpop.permute.xlu0 %4656
        %4658 = vrot.lane.b32.xlu0 %v4374, 32
        %v4659 = vpop.permute.xlu0 %4658
        %4660 = vrot.lane.b32.xlu0 %v4375, 32
        %v4661 = vpop.permute.xlu0 %4660
        %4662 = vrot.lane.b32.xlu0 %v4376, 32
        %v4663 = vpop.permute.xlu0 %4662
        %4664 = vrot.lane.b32.xlu0 %v4377, 32
        %v4665 = vpop.permute.xlu0 %4664
        %v4698 = vmul.f32 %v3848, %v4603
        %v4699 = vmul.f32 %v3863, %v4605
        %v4700 = vmul.f32 %v3878, %v4607
        %v4701 = vmul.f32 %v3893, %v4609
        %v4702 = vmul.f32 %v3908, %v4611
        %v4703 = vmul.f32 %v3923, %v4613
        %v4704 = vmul.f32 %v3938, %v4615
        %v4705 = vmul.f32 %v3953, %v4617
        %v4706 = vmul.f32 %v3968, %v4619
        %v4707 = vmul.f32 %v3983, %v4621
        %v4708 = vmul.f32 %v3998, %v4623
        %v4709 = vmul.f32 %v4013, %v4625
        %v4710 = vmul.f32 %v4028, %v4627
        %v4711 = vmul.f32 %v4043, %v4629
        %v4712 = vmul.f32 %v4058, %v4631
        %v4713 = vmul.f32 %v4073, %v4633
        %v4714 = vmul.f32 %v4088, %v4635
        %v4715 = vmul.f32 %v4103, %v4637
        %v4716 = vmul.f32 %v4118, %v4639
        %v4717 = vmul.f32 %v4133, %v4641
        %v4718 = vmul.f32 %v4148, %v4643
        %v4719 = vmul.f32 %v4163, %v4645
        %v4720 = vmul.f32 %v4178, %v4647
        %v4721 = vmul.f32 %v4193, %v4649
        %v4722 = vmul.f32 %v4208, %v4651
        %v4723 = vmul.f32 %v4223, %v4653
        %v4724 = vmul.f32 %v4238, %v4655
        %v4725 = vmul.f32 %v4253, %v4657
        %v4726 = vmul.f32 %v4268, %v4659
        %v4727 = vmul.f32 %v4283, %v4661
        %v4728 = vmul.f32 %v4298, %v4663
        %v4729 = vmul.f32 %v4313, %v4665
        %4762 = vrot.lane.b32.xlu0 %v4698, 32
        %v4763 = vpop.permute.xlu0 %4762
        %4764 = vrot.lane.b32.xlu0 %v4699, 32
        %v4765 = vpop.permute.xlu0 %4764
        %4766 = vrot.lane.b32.xlu0 %v4700, 32
        %v4767 = vpop.permute.xlu0 %4766
        %4768 = vrot.lane.b32.xlu0 %v4701, 32
        %v4769 = vpop.permute.xlu0 %4768
        %4770 = vrot.lane.b32.xlu0 %v4702, 32
        %v4771 = vpop.permute.xlu0 %4770
        %4772 = vrot.lane.b32.xlu0 %v4703, 32
        %v4773 = vpop.permute.xlu0 %4772
        %4774 = vrot.lane.b32.xlu0 %v4704, 32
        %v4775 = vpop.permute.xlu0 %4774
        %4776 = vrot.lane.b32.xlu0 %v4705, 32
        %v4777 = vpop.permute.xlu0 %4776
        %4778 = vrot.lane.b32.xlu0 %v4706, 32
        %v4779 = vpop.permute.xlu0 %4778
        %4780 = vrot.lane.b32.xlu0 %v4707, 32
        %v4781 = vpop.permute.xlu0 %4780
        %4782 = vrot.lane.b32.xlu0 %v4708, 32
        %v4783 = vpop.permute.xlu0 %4782
        %4784 = vrot.lane.b32.xlu0 %v4709, 32
        %v4785 = vpop.permute.xlu0 %4784
        %4786 = vrot.lane.b32.xlu0 %v4710, 32
        %v4787 = vpop.permute.xlu0 %4786
        %4788 = vrot.lane.b32.xlu0 %v4711, 32
        %v4789 = vpop.permute.xlu0 %4788
        %4790 = vrot.lane.b32.xlu0 %v4712, 32
        %v4791 = vpop.permute.xlu0 %4790
        %4792 = vrot.lane.b32.xlu0 %v4713, 32
        %v4793 = vpop.permute.xlu0 %4792
        %4794 = vrot.lane.b32.xlu0 %v4714, 32
        %v4795 = vpop.permute.xlu0 %4794
        %4796 = vrot.lane.b32.xlu0 %v4715, 32
        %v4797 = vpop.permute.xlu0 %4796
        %4798 = vrot.lane.b32.xlu0 %v4716, 32
        %v4799 = vpop.permute.xlu0 %4798
        %4800 = vrot.lane.b32.xlu0 %v4717, 32
        %v4801 = vpop.permute.xlu0 %4800
        %4802 = vrot.lane.b32.xlu0 %v4718, 32
        %v4803 = vpop.permute.xlu0 %4802
        %4804 = vrot.lane.b32.xlu0 %v4719, 32
        %v4805 = vpop.permute.xlu0 %4804
        %4806 = vrot.lane.b32.xlu0 %v4720, 32
        %v4807 = vpop.permute.xlu0 %4806
        %4808 = vrot.lane.b32.xlu0 %v4721, 32
        %v4809 = vpop.permute.xlu0 %4808
        %4810 = vrot.lane.b32.xlu0 %v4722, 32
        %v4811 = vpop.permute.xlu0 %4810
        %4812 = vrot.lane.b32.xlu0 %v4723, 32
        %v4813 = vpop.permute.xlu0 %4812
        %4814 = vrot.lane.b32.xlu0 %v4724, 32
        %v4815 = vpop.permute.xlu0 %4814
        %4816 = vrot.lane.b32.xlu0 %v4725, 32
        %v4817 = vpop.permute.xlu0 %4816
        %4818 = vrot.lane.b32.xlu0 %v4726, 32
        %v4819 = vpop.permute.xlu0 %4818
        %4820 = vrot.lane.b32.xlu0 %v4727, 32
        %v4821 = vpop.permute.xlu0 %4820
        %4822 = vrot.lane.b32.xlu0 %v4728, 32
        %v4823 = vpop.permute.xlu0 %4822
        %4824 = vrot.lane.b32.xlu0 %v4729, 32
        %v4825 = vpop.permute.xlu0 %4824
        %v4858 = vadd.f32 %v4538, %v4763
        %v4859 = vadd.f32 %v4539, %v4765
        %v4860 = vadd.f32 %v4540, %v4767
        %v4861 = vadd.f32 %v4541, %v4769
        %v4862 = vadd.f32 %v4542, %v4771
        %v4863 = vadd.f32 %v4543, %v4773
        %v4864 = vadd.f32 %v4544, %v4775
        %v4865 = vadd.f32 %v4545, %v4777
        %v4866 = vadd.f32 %v4546, %v4779
        %v4867 = vadd.f32 %v4547, %v4781
        %v4868 = vadd.f32 %v4548, %v4783
        %v4869 = vadd.f32 %v4549, %v4785
        %v4870 = vadd.f32 %v4550, %v4787
        %v4871 = vadd.f32 %v4551, %v4789
        %v4872 = vadd.f32 %v4552, %v4791
        %v4873 = vadd.f32 %v4553, %v4793
        %v4874 = vadd.f32 %v4554, %v4795
        %v4875 = vadd.f32 %v4555, %v4797
        %v4876 = vadd.f32 %v4556, %v4799
        %v4877 = vadd.f32 %v4557, %v4801
        %v4878 = vadd.f32 %v4558, %v4803
        %v4879 = vadd.f32 %v4559, %v4805
        %v4880 = vadd.f32 %v4560, %v4807
        %v4881 = vadd.f32 %v4561, %v4809
        %v4882 = vadd.f32 %v4562, %v4811
        %v4883 = vadd.f32 %v4563, %v4813
        %v4884 = vadd.f32 %v4564, %v4815
        %v4885 = vadd.f32 %v4565, %v4817
        %v4886 = vadd.f32 %v4566, %v4819
        %v4887 = vadd.f32 %v4567, %v4821
        %v4888 = vadd.f32 %v4568, %v4823
        %v4889 = vadd.f32 %v4569, %v4825
        %v4890 = vtanh.pop %v4858
        %v4891 = vtanh.pop %v4859
        %v4892 = vtanh.pop %v4860
        %v4893 = vtanh.pop %v4861
        %v4894 = vtanh.pop %v4862
        %v4895 = vtanh.pop %v4863
        %v4896 = vtanh.pop %v4864
        %v4897 = vtanh.pop %v4865
        %v4898 = vtanh.pop %v4866
        %v4899 = vtanh.pop %v4867
        %v4900 = vtanh.pop %v4868
        %v4901 = vtanh.pop %v4869
        %v4902 = vtanh.pop %v4870
        %v4903 = vtanh.pop %v4871
        %v4904 = vtanh.pop %v4872
        %v4905 = vtanh.pop %v4873
        %v4906 = vtanh.pop %v4874
        %v4907 = vtanh.pop %v4875
        %v4908 = vtanh.pop %v4876
        %v4909 = vtanh.pop %v4877
        %v4910 = vtanh.pop %v4878
        %v4911 = vtanh.pop %v4879
        %v4912 = vtanh.pop %v4880
        %v4913 = vtanh.pop %v4881
        %v4914 = vtanh.pop %v4882
        %v4915 = vtanh.pop %v4883
        %v4916 = vtanh.pop %v4884
        %v4917 = vtanh.pop %v4885
        %v4918 = vtanh.pop %v4886
        %v4919 = vtanh.pop %v4887
        %v4920 = vtanh.pop %v4888
        %v4921 = vtanh.pop %v4889
        %4954 = vrot.lane.b32.xlu0 %v4890, 32
        %v4955 = vpop.permute.xlu0 %4954
        %4956 = vrot.lane.b32.xlu0 %v4891, 32
        %v4957 = vpop.permute.xlu0 %4956
        %4958 = vrot.lane.b32.xlu0 %v4892, 32
        %v4959 = vpop.permute.xlu0 %4958
        %4960 = vrot.lane.b32.xlu0 %v4893, 32
        %v4961 = vpop.permute.xlu0 %4960
        %4962 = vrot.lane.b32.xlu0 %v4894, 32
        %v4963 = vpop.permute.xlu0 %4962
        %4964 = vrot.lane.b32.xlu0 %v4895, 32
        %v4965 = vpop.permute.xlu0 %4964
        %4966 = vrot.lane.b32.xlu0 %v4896, 32
        %v4967 = vpop.permute.xlu0 %4966
        %4968 = vrot.lane.b32.xlu0 %v4897, 32
        %v4969 = vpop.permute.xlu0 %4968
        %4970 = vrot.lane.b32.xlu0 %v4898, 32
        %v4971 = vpop.permute.xlu0 %4970
        %4972 = vrot.lane.b32.xlu0 %v4899, 32
        %v4973 = vpop.permute.xlu0 %4972
        %4974 = vrot.lane.b32.xlu0 %v4900, 32
        %v4975 = vpop.permute.xlu0 %4974
        %4976 = vrot.lane.b32.xlu0 %v4901, 32
        %v4977 = vpop.permute.xlu0 %4976
        %4978 = vrot.lane.b32.xlu0 %v4902, 32
        %v4979 = vpop.permute.xlu0 %4978
        %4980 = vrot.lane.b32.xlu0 %v4903, 32
        %v4981 = vpop.permute.xlu0 %4980
        %4982 = vrot.lane.b32.xlu0 %v4904, 32
        %v4983 = vpop.permute.xlu0 %4982
        %4984 = vrot.lane.b32.xlu0 %v4905, 32
        %v4985 = vpop.permute.xlu0 %4984
        %4986 = vrot.lane.b32.xlu0 %v4906, 32
        %v4987 = vpop.permute.xlu0 %4986
        %4988 = vrot.lane.b32.xlu0 %v4907, 32
        %v4989 = vpop.permute.xlu0 %4988
        %4990 = vrot.lane.b32.xlu0 %v4908, 32
        %v4991 = vpop.permute.xlu0 %4990
        %4992 = vrot.lane.b32.xlu0 %v4909, 32
        %v4993 = vpop.permute.xlu0 %4992
        %4994 = vrot.lane.b32.xlu0 %v4910, 32
        %v4995 = vpop.permute.xlu0 %4994
        %4996 = vrot.lane.b32.xlu0 %v4911, 32
        %v4997 = vpop.permute.xlu0 %4996
        %4998 = vrot.lane.b32.xlu0 %v4912, 32
        %v4999 = vpop.permute.xlu0 %4998
        %5000 = vrot.lane.b32.xlu0 %v4913, 32
        %v5001 = vpop.permute.xlu0 %5000
        %5002 = vrot.lane.b32.xlu0 %v4914, 32
        %v5003 = vpop.permute.xlu0 %5002
        %5004 = vrot.lane.b32.xlu0 %v4915, 32
        %v5005 = vpop.permute.xlu0 %5004
        %5006 = vrot.lane.b32.xlu0 %v4916, 32
        %v5007 = vpop.permute.xlu0 %5006
        %5008 = vrot.lane.b32.xlu0 %v4917, 32
        %v5009 = vpop.permute.xlu0 %5008
        %5010 = vrot.lane.b32.xlu0 %v4918, 32
        %v5011 = vpop.permute.xlu0 %5010
        %5012 = vrot.lane.b32.xlu0 %v4919, 32
        %v5013 = vpop.permute.xlu0 %5012
        %5014 = vrot.lane.b32.xlu0 %v4920, 32
        %v5015 = vpop.permute.xlu0 %5014
        %5016 = vrot.lane.b32.xlu0 %v4921, 32
        %v5017 = vpop.permute.xlu0 %5016
        %v5050 = vmul.f32 %v3848, %v4955
        %v5051 = vmul.f32 %v3863, %v4957
        %v5052 = vmul.f32 %v3878, %v4959
        %v5053 = vmul.f32 %v3893, %v4961
        %v5054 = vmul.f32 %v3908, %v4963
        %v5055 = vmul.f32 %v3923, %v4965
        %v5056 = vmul.f32 %v3938, %v4967
        %v5057 = vmul.f32 %v3953, %v4969
        %v5058 = vmul.f32 %v3968, %v4971
        %v5059 = vmul.f32 %v3983, %v4973
        %v5060 = vmul.f32 %v3998, %v4975
        %v5061 = vmul.f32 %v4013, %v4977
        %v5062 = vmul.f32 %v4028, %v4979
        %v5063 = vmul.f32 %v4043, %v4981
        %v5064 = vmul.f32 %v4058, %v4983
        %v5065 = vmul.f32 %v4073, %v4985
        %v5066 = vmul.f32 %v4088, %v4987
        %v5067 = vmul.f32 %v4103, %v4989
        %v5068 = vmul.f32 %v4118, %v4991
        %v5069 = vmul.f32 %v4133, %v4993
        %v5070 = vmul.f32 %v4148, %v4995
        %v5071 = vmul.f32 %v4163, %v4997
        %v5072 = vmul.f32 %v4178, %v4999
        %v5073 = vmul.f32 %v4193, %v5001
        %v5074 = vmul.f32 %v4208, %v5003
        %v5075 = vmul.f32 %v4223, %v5005
        %v5076 = vmul.f32 %v4238, %v5007
        %v5077 = vmul.f32 %v4253, %v5009
        %v5078 = vmul.f32 %v4268, %v5011
        %v5079 = vmul.f32 %v4283, %v5013
        %v5080 = vmul.f32 %v4298, %v5015
        %v5081 = vmul.f32 %v4313, %v5017
        %5114 = vrot.lane.b32.xlu0 %v4858, 96
        %v5115 = vpop.permute.xlu0 %5114
        %5116 = vrot.lane.b32.xlu0 %v4859, 96
        %v5117 = vpop.permute.xlu0 %5116
        %5118 = vrot.lane.b32.xlu0 %v4860, 96
        %v5119 = vpop.permute.xlu0 %5118
        %5120 = vrot.lane.b32.xlu0 %v4861, 96
        %v5121 = vpop.permute.xlu0 %5120
        %5122 = vrot.lane.b32.xlu0 %v4862, 96
        %v5123 = vpop.permute.xlu0 %5122
        %5124 = vrot.lane.b32.xlu0 %v4863, 96
        %v5125 = vpop.permute.xlu0 %5124
        %5126 = vrot.lane.b32.xlu0 %v4864, 96
        %v5127 = vpop.permute.xlu0 %5126
        %5128 = vrot.lane.b32.xlu0 %v4865, 96
        %v5129 = vpop.permute.xlu0 %5128
        %5130 = vrot.lane.b32.xlu0 %v4866, 96
        %v5131 = vpop.permute.xlu0 %5130
        %5132 = vrot.lane.b32.xlu0 %v4867, 96
        %v5133 = vpop.permute.xlu0 %5132
        %5134 = vrot.lane.b32.xlu0 %v4868, 96
        %v5135 = vpop.permute.xlu0 %5134
        %5136 = vrot.lane.b32.xlu0 %v4869, 96
        %v5137 = vpop.permute.xlu0 %5136
        %5138 = vrot.lane.b32.xlu0 %v4870, 96
        %v5139 = vpop.permute.xlu0 %5138
        %5140 = vrot.lane.b32.xlu0 %v4871, 96
        %v5141 = vpop.permute.xlu0 %5140
        %5142 = vrot.lane.b32.xlu0 %v4872, 96
        %v5143 = vpop.permute.xlu0 %5142
        %5144 = vrot.lane.b32.xlu0 %v4873, 96
        %v5145 = vpop.permute.xlu0 %5144
        %5146 = vrot.lane.b32.xlu0 %v4874, 96
        %v5147 = vpop.permute.xlu0 %5146
        %5148 = vrot.lane.b32.xlu0 %v4875, 96
        %v5149 = vpop.permute.xlu0 %5148
        %5150 = vrot.lane.b32.xlu0 %v4876, 96
        %v5151 = vpop.permute.xlu0 %5150
        %5152 = vrot.lane.b32.xlu0 %v4877, 96
        %v5153 = vpop.permute.xlu0 %5152
        %5154 = vrot.lane.b32.xlu0 %v4878, 96
        %v5155 = vpop.permute.xlu0 %5154
        %5156 = vrot.lane.b32.xlu0 %v4879, 96
        %v5157 = vpop.permute.xlu0 %5156
        %5158 = vrot.lane.b32.xlu0 %v4880, 96
        %v5159 = vpop.permute.xlu0 %5158
        %5160 = vrot.lane.b32.xlu0 %v4881, 96
        %v5161 = vpop.permute.xlu0 %5160
        %5162 = vrot.lane.b32.xlu0 %v4882, 96
        %v5163 = vpop.permute.xlu0 %5162
        %5164 = vrot.lane.b32.xlu0 %v4883, 96
        %v5165 = vpop.permute.xlu0 %5164
        %5166 = vrot.lane.b32.xlu0 %v4884, 96
        %v5167 = vpop.permute.xlu0 %5166
        %5168 = vrot.lane.b32.xlu0 %v4885, 96
        %v5169 = vpop.permute.xlu0 %5168
        %5170 = vrot.lane.b32.xlu0 %v4886, 96
        %v5171 = vpop.permute.xlu0 %5170
        %5172 = vrot.lane.b32.xlu0 %v4887, 96
        %v5173 = vpop.permute.xlu0 %5172
        %5174 = vrot.lane.b32.xlu0 %v4888, 96
        %v5175 = vpop.permute.xlu0 %5174
        %5176 = vrot.lane.b32.xlu0 %v4889, 96
        %v5177 = vpop.permute.xlu0 %5176
        %5210 = vst.msk [vmem:[%s274] sm:$0xff] %vm2777, %v5115
        %5211 = vst.msk [vmem:[%s274 + $0x8] sm:$0xff] %vm2777, %v5117
        %5212 = vst.msk [vmem:[%s274 + $0x10] sm:$0xff] %vm2777, %v5119
        %5213 = vst.msk [vmem:[%s274 + $0x18] sm:$0xff] %vm2777, %v5121
        %5214 = vst.msk [vmem:[%s274 + $0x20] sm:$0xff] %vm2777, %v5123
        %5215 = vst.msk [vmem:[%s274 + $0x28] sm:$0xff] %vm2777, %v5125
        %5216 = vst.msk [vmem:[%s274 + $0x30] sm:$0xff] %vm2777, %v5127
        %5217 = vst.msk [vmem:[%s274 + $0x38] sm:$0xff] %vm2777, %v5129
        %5218 = vst.msk [vmem:[%s274 + $0x40] sm:$0xff] %vm2777, %v5131
        %5219 = vst.msk [vmem:[%s274 + $0x48] sm:$0xff] %vm2777, %v5133
        %5220 = vst.msk [vmem:[%s274 + $0x50] sm:$0xff] %vm2777, %v5135
        %5221 = vst.msk [vmem:[%s274 + $0x58] sm:$0xff] %vm2777, %v5137
        %5222 = vst.msk [vmem:[%s274 + $0x60] sm:$0xff] %vm2777, %v5139
        %5223 = vst.msk [vmem:[%s274 + $0x68] sm:$0xff] %vm2777, %v5141
        %5224 = vst.msk [vmem:[%s274 + $0x70] sm:$0xff] %vm2777, %v5143
        %5225 = vst.msk [vmem:[%s274 + $0x78] sm:$0xff] %vm2777, %v5145
        %5226 = vst.msk [vmem:[%s274 + $0x80] sm:$0xff] %vm2777, %v5147
        %5227 = vst.msk [vmem:[%s274 + $0x88] sm:$0xff] %vm2777, %v5149
        %5228 = vst.msk [vmem:[%s274 + $0x90] sm:$0xff] %vm2777, %v5151
        %5229 = vst.msk [vmem:[%s274 + $0x98] sm:$0xff] %vm2777, %v5153
        %5230 = vst.msk [vmem:[%s274 + $0xa0] sm:$0xff] %vm2777, %v5155
        %5231 = vst.msk [vmem:[%s274 + $0xa8] sm:$0xff] %vm2777, %v5157
        %5232 = vst.msk [vmem:[%s274 + $0xb0] sm:$0xff] %vm2777, %v5159
        %5233 = vst.msk [vmem:[%s274 + $0xb8] sm:$0xff] %vm2777, %v5161
        %5234 = vst.msk [vmem:[%s274 + $0xc0] sm:$0xff] %vm2777, %v5163
        %5235 = vst.msk [vmem:[%s274 + $0xc8] sm:$0xff] %vm2777, %v5165
        %5236 = vst.msk [vmem:[%s274 + $0xd0] sm:$0xff] %vm2777, %v5167
        %5237 = vst.msk [vmem:[%s274 + $0xd8] sm:$0xff] %vm2777, %v5169
        %5238 = vst.msk [vmem:[%s274 + $0xe0] sm:$0xff] %vm2777, %v5171
        %5239 = vst.msk [vmem:[%s274 + $0xe8] sm:$0xff] %vm2777, %v5173
        %5240 = vst.msk [vmem:[%s274 + $0xf0] sm:$0xff] %vm2777, %v5175
        %5241 = vst.msk [vmem:[%s274 + $0xf8] sm:$0xff] %vm2777, %v5177
        %5274 = vrot.lane.b32.xlu0 %v5050, 64
        %v5275 = vpop.permute.xlu0 %5274
        %5276 = vrot.lane.b32.xlu0 %v5051, 64
        %v5277 = vpop.permute.xlu0 %5276
        %5278 = vrot.lane.b32.xlu0 %v5052, 64
        %v5279 = vpop.permute.xlu0 %5278
        %5280 = vrot.lane.b32.xlu0 %v5053, 64
        %v5281 = vpop.permute.xlu0 %5280
        %5282 = vrot.lane.b32.xlu0 %v5054, 64
        %v5283 = vpop.permute.xlu0 %5282
        %5284 = vrot.lane.b32.xlu0 %v5055, 64
        %v5285 = vpop.permute.xlu0 %5284
        %5286 = vrot.lane.b32.xlu0 %v5056, 64
        %v5287 = vpop.permute.xlu0 %5286
        %5288 = vrot.lane.b32.xlu0 %v5057, 64
        %v5289 = vpop.permute.xlu0 %5288
        %5290 = vrot.lane.b32.xlu0 %v5058, 64
        %v5291 = vpop.permute.xlu0 %5290
        %5292 = vrot.lane.b32.xlu0 %v5059, 64
        %v5293 = vpop.permute.xlu0 %5292
        %5294 = vrot.lane.b32.xlu0 %v5060, 64
        %v5295 = vpop.permute.xlu0 %5294
        %5296 = vrot.lane.b32.xlu0 %v5061, 64
        %v5297 = vpop.permute.xlu0 %5296
        %5298 = vrot.lane.b32.xlu0 %v5062, 64
        %v5299 = vpop.permute.xlu0 %5298
        %5300 = vrot.lane.b32.xlu0 %v5063, 64
        %v5301 = vpop.permute.xlu0 %5300
        %5302 = vrot.lane.b32.xlu0 %v5064, 64
        %v5303 = vpop.permute.xlu0 %5302
        %5304 = vrot.lane.b32.xlu0 %v5065, 64
        %v5305 = vpop.permute.xlu0 %5304
        %5306 = vrot.lane.b32.xlu0 %v5066, 64
        %v5307 = vpop.permute.xlu0 %5306
        %5308 = vrot.lane.b32.xlu0 %v5067, 64
        %v5309 = vpop.permute.xlu0 %5308
        %5310 = vrot.lane.b32.xlu0 %v5068, 64
        %v5311 = vpop.permute.xlu0 %5310
        %5312 = vrot.lane.b32.xlu0 %v5069, 64
        %v5313 = vpop.permute.xlu0 %5312
        %5314 = vrot.lane.b32.xlu0 %v5070, 64
        %v5315 = vpop.permute.xlu0 %5314
        %5316 = vrot.lane.b32.xlu0 %v5071, 64
        %v5317 = vpop.permute.xlu0 %5316
        %5318 = vrot.lane.b32.xlu0 %v5072, 64
        %v5319 = vpop.permute.xlu0 %5318
        %5320 = vrot.lane.b32.xlu0 %v5073, 64
        %v5321 = vpop.permute.xlu0 %5320
        %5322 = vrot.lane.b32.xlu0 %v5074, 64
        %v5323 = vpop.permute.xlu0 %5322
        %5324 = vrot.lane.b32.xlu0 %v5075, 64
        %v5325 = vpop.permute.xlu0 %5324
        %5326 = vrot.lane.b32.xlu0 %v5076, 64
        %v5327 = vpop.permute.xlu0 %5326
        %5328 = vrot.lane.b32.xlu0 %v5077, 64
        %v5329 = vpop.permute.xlu0 %5328
        %5330 = vrot.lane.b32.xlu0 %v5078, 64
        %v5331 = vpop.permute.xlu0 %5330
        %5332 = vrot.lane.b32.xlu0 %v5079, 64
        %v5333 = vpop.permute.xlu0 %5332
        %5334 = vrot.lane.b32.xlu0 %v5080, 64
        %v5335 = vpop.permute.xlu0 %5334
        %5336 = vrot.lane.b32.xlu0 %v5081, 64
        %v5337 = vpop.permute.xlu0 %5336
        %5370 = vst.msk [vmem:[%s299] sm:$0xff] %vm2777, %v5275
        %5371 = vst.msk [vmem:[%s299 + $0x8] sm:$0xff] %vm2777, %v5277
        %5372 = vst.msk [vmem:[%s299 + $0x10] sm:$0xff] %vm2777, %v5279
        %5373 = vst.msk [vmem:[%s299 + $0x18] sm:$0xff] %vm2777, %v5281
        %5374 = vst.msk [vmem:[%s299 + $0x20] sm:$0xff] %vm2777, %v5283
        %5375 = vst.msk [vmem:[%s299 + $0x28] sm:$0xff] %vm2777, %v5285
        %5376 = vst.msk [vmem:[%s299 + $0x30] sm:$0xff] %vm2777, %v5287
        %5377 = vst.msk [vmem:[%s299 + $0x38] sm:$0xff] %vm2777, %v5289
        %5378 = vst.msk [vmem:[%s299 + $0x40] sm:$0xff] %vm2777, %v5291
        %5379 = vst.msk [vmem:[%s299 + $0x48] sm:$0xff] %vm2777, %v5293
        %5380 = vst.msk [vmem:[%s299 + $0x50] sm:$0xff] %vm2777, %v5295
        %5381 = vst.msk [vmem:[%s299 + $0x58] sm:$0xff] %vm2777, %v5297
        %5382 = vst.msk [vmem:[%s299 + $0x60] sm:$0xff] %vm2777, %v5299
        %5383 = vst.msk [vmem:[%s299 + $0x68] sm:$0xff] %vm2777, %v5301
        %5384 = vst.msk [vmem:[%s299 + $0x70] sm:$0xff] %vm2777, %v5303
        %5385 = vst.msk [vmem:[%s299 + $0x78] sm:$0xff] %vm2777, %v5305
        %5386 = vst.msk [vmem:[%s299 + $0x80] sm:$0xff] %vm2777, %v5307
        %5387 = vst.msk [vmem:[%s299 + $0x88] sm:$0xff] %vm2777, %v5309
        %5388 = vst.msk [vmem:[%s299 + $0x90] sm:$0xff] %vm2777, %v5311
        %5389 = vst.msk [vmem:[%s299 + $0x98] sm:$0xff] %vm2777, %v5313
        %5390 = vst.msk [vmem:[%s299 + $0xa0] sm:$0xff] %vm2777, %v5315
        %5391 = vst.msk [vmem:[%s299 + $0xa8] sm:$0xff] %vm2777, %v5317
        %5392 = vst.msk [vmem:[%s299 + $0xb0] sm:$0xff] %vm2777, %v5319
        %5393 = vst.msk [vmem:[%s299 + $0xb8] sm:$0xff] %vm2777, %v5321
        %5394 = vst.msk [vmem:[%s299 + $0xc0] sm:$0xff] %vm2777, %v5323
        %5395 = vst.msk [vmem:[%s299 + $0xc8] sm:$0xff] %vm2777, %v5325
        %5396 = vst.msk [vmem:[%s299 + $0xd0] sm:$0xff] %vm2777, %v5327
        %5397 = vst.msk [vmem:[%s299 + $0xd8] sm:$0xff] %vm2777, %v5329
        %5398 = vst.msk [vmem:[%s299 + $0xe0] sm:$0xff] %vm2777, %v5331
        %5399 = vst.msk [vmem:[%s299 + $0xe8] sm:$0xff] %vm2777, %v5333
        %5400 = vst.msk [vmem:[%s299 + $0xf0] sm:$0xff] %vm2777, %v5335
        %5401 = vst.msk [vmem:[%s299 + $0xf8] sm:$0xff] %vm2777, %v5337
        %v5402 = vpack.c.bf16 %v5050, %v5050
        %v5403 = vpack.c.bf16 %v5051, %v5051
        %v5404 = vpack.c.bf16 %v5052, %v5052
        %v5405 = vpack.c.bf16 %v5053, %v5053
        %v5406 = vpack.c.bf16 %v5054, %v5054
        %v5407 = vpack.c.bf16 %v5055, %v5055
        %v5408 = vpack.c.bf16 %v5056, %v5056
        %v5409 = vpack.c.bf16 %v5057, %v5057
        %v5410 = vpack.c.bf16 %v5058, %v5058
        %v5411 = vpack.c.bf16 %v5059, %v5059
        %v5412 = vpack.c.bf16 %v5060, %v5060
        %v5413 = vpack.c.bf16 %v5061, %v5061
        %v5414 = vpack.c.bf16 %v5062, %v5062
        %v5415 = vpack.c.bf16 %v5063, %v5063
        %v5416 = vpack.c.bf16 %v5064, %v5064
        %v5417 = vpack.c.bf16 %v5065, %v5065
        %v5418 = vpack.c.bf16 %v5066, %v5066
        %v5419 = vpack.c.bf16 %v5067, %v5067
        %v5420 = vpack.c.bf16 %v5068, %v5068
        %v5421 = vpack.c.bf16 %v5069, %v5069
        %v5422 = vpack.c.bf16 %v5070, %v5070
        %v5423 = vpack.c.bf16 %v5071, %v5071
        %v5424 = vpack.c.bf16 %v5072, %v5072
        %v5425 = vpack.c.bf16 %v5073, %v5073
        %v5426 = vpack.c.bf16 %v5074, %v5074
        %v5427 = vpack.c.bf16 %v5075, %v5075
        %v5428 = vpack.c.bf16 %v5076, %v5076
        %v5429 = vpack.c.bf16 %v5077, %v5077
        %v5430 = vpack.c.bf16 %v5078, %v5078
        %v5431 = vpack.c.bf16 %v5079, %v5079
        %v5432 = vpack.c.bf16 %v5080, %v5080
        %v5433 = vpack.c.bf16 %v5081, %v5081
        %vm5434 = vsmask.f32 256
        %vm5435 = vsmask.f32 4368
        %vm5436 = vmor %vm5434, %vm5435
        %v5438 = vshrl.u32 %v5402, 16
        %v5440 = vrot.slane %v5438, 7
        %v5441 = vshll.u32 %v5402, 16
        %v5443 = vor.u32 %v5440, %v5441
        %v5444 = vrot.slane %v5440, 4
        %v5446 = vshrl.u32 %v5403, 16
        %v5448 = vrot.slane %v5446, 7
        %v5449 = vshll.u32 %v5403, 16
        %v5451 = vor.u32 %v5448, %v5449
        %v5452 = vsel %vm5436, %v5444, %v5451
        %v5453 = vrot.slane %v5448, 4
        %v5455 = vshrl.u32 %v5404, 16
        %v5457 = vrot.slane %v5455, 7
        %v5458 = vshll.u32 %v5404, 16
        %v5460 = vor.u32 %v5457, %v5458
        %v5461 = vrot.slane %v5457, 4
        %v5463 = vshrl.u32 %v5405, 16
        %v5465 = vrot.slane %v5463, 7
        %v5466 = vshll.u32 %v5405, 16
        %v5468 = vor.u32 %v5465, %v5466
        %v5469 = vsel %vm5436, %v5461, %v5468
        %v5470 = vrot.slane %v5465, 4
        %v5472 = vshrl.u32 %v5406, 16
        %v5474 = vrot.slane %v5472, 7
        %v5475 = vshll.u32 %v5406, 16
        %v5477 = vor.u32 %v5474, %v5475
        %v5478 = vrot.slane %v5474, 4
        %v5480 = vshrl.u32 %v5407, 16
        %v5482 = vrot.slane %v5480, 7
        %v5483 = vshll.u32 %v5407, 16
        %v5485 = vor.u32 %v5482, %v5483
        %v5486 = vsel %vm5436, %v5478, %v5485
        %v5487 = vrot.slane %v5482, 4
        %v5489 = vshrl.u32 %v5408, 16
        %v5491 = vrot.slane %v5489, 7
        %v5492 = vshll.u32 %v5408, 16
        %v5494 = vor.u32 %v5491, %v5492
        %v5495 = vrot.slane %v5491, 4
        %v5497 = vshrl.u32 %v5409, 16
        %v5499 = vrot.slane %v5497, 7
        %v5500 = vshll.u32 %v5409, 16
        %v5502 = vor.u32 %v5499, %v5500
        %v5503 = vsel %vm5436, %v5495, %v5502
        %v5504 = vrot.slane %v5499, 4
        %v5506 = vshrl.u32 %v5410, 16
        %v5508 = vrot.slane %v5506, 7
        %v5509 = vshll.u32 %v5410, 16
        %v5511 = vor.u32 %v5508, %v5509
        %v5512 = vrot.slane %v5508, 4
        %v5514 = vshrl.u32 %v5411, 16
        %v5516 = vrot.slane %v5514, 7
        %v5517 = vshll.u32 %v5411, 16
        %v5519 = vor.u32 %v5516, %v5517
        %v5520 = vsel %vm5436, %v5512, %v5519
        %v5521 = vrot.slane %v5516, 4
        %v5523 = vshrl.u32 %v5412, 16
        %v5525 = vrot.slane %v5523, 7
        %v5526 = vshll.u32 %v5412, 16
        %v5528 = vor.u32 %v5525, %v5526
        %v5529 = vrot.slane %v5525, 4
        %v5531 = vshrl.u32 %v5413, 16
        %v5533 = vrot.slane %v5531, 7
        %v5534 = vshll.u32 %v5413, 16
        %v5536 = vor.u32 %v5533, %v5534
        %v5537 = vsel %vm5436, %v5529, %v5536
        %v5538 = vrot.slane %v5533, 4
        %v5540 = vshrl.u32 %v5414, 16
        %v5542 = vrot.slane %v5540, 7
        %v5543 = vshll.u32 %v5414, 16
        %v5545 = vor.u32 %v5542, %v5543
        %v5546 = vrot.slane %v5542, 4
        %v5548 = vshrl.u32 %v5415, 16
        %v5550 = vrot.slane %v5548, 7
        %v5551 = vshll.u32 %v5415, 16
        %v5553 = vor.u32 %v5550, %v5551
        %v5554 = vsel %vm5436, %v5546, %v5553
        %v5555 = vrot.slane %v5550, 4
        %v5557 = vshrl.u32 %v5416, 16
        %v5559 = vrot.slane %v5557, 7
        %v5560 = vshll.u32 %v5416, 16
        %v5562 = vor.u32 %v5559, %v5560
        %v5563 = vrot.slane %v5559, 4
        %v5565 = vshrl.u32 %v5417, 16
        %v5567 = vrot.slane %v5565, 7
        %v5568 = vshll.u32 %v5417, 16
        %v5570 = vor.u32 %v5567, %v5568
        %v5571 = vsel %vm5436, %v5563, %v5570
        %v5572 = vrot.slane %v5567, 4
        %v5574 = vshrl.u32 %v5418, 16
        %v5576 = vrot.slane %v5574, 7
        %v5577 = vshll.u32 %v5418, 16
        %v5579 = vor.u32 %v5576, %v5577
        %v5580 = vrot.slane %v5576, 4
        %v5582 = vshrl.u32 %v5419, 16
        %v5584 = vrot.slane %v5582, 7
        %v5585 = vshll.u32 %v5419, 16
        %v5587 = vor.u32 %v5584, %v5585
        %v5588 = vsel %vm5436, %v5580, %v5587
        %v5589 = vrot.slane %v5584, 4
        %v5591 = vshrl.u32 %v5420, 16
        %v5593 = vrot.slane %v5591, 7
        %v5594 = vshll.u32 %v5420, 16
        %v5596 = vor.u32 %v5593, %v5594
        %v5597 = vrot.slane %v5593, 4
        %v5599 = vshrl.u32 %v5421, 16
        %v5601 = vrot.slane %v5599, 7
        %v5602 = vshll.u32 %v5421, 16
        %v5604 = vor.u32 %v5601, %v5602
        %v5605 = vsel %vm5436, %v5597, %v5604
        %v5606 = vrot.slane %v5601, 4
        %v5608 = vshrl.u32 %v5422, 16
        %v5610 = vrot.slane %v5608, 7
        %v5611 = vshll.u32 %v5422, 16
        %v5613 = vor.u32 %v5610, %v5611
        %v5614 = vrot.slane %v5610, 4
        %v5616 = vshrl.u32 %v5423, 16
        %v5618 = vrot.slane %v5616, 7
        %v5619 = vshll.u32 %v5423, 16
        %v5621 = vor.u32 %v5618, %v5619
        %v5622 = vsel %vm5436, %v5614, %v5621
        %v5623 = vrot.slane %v5618, 4
        %v5625 = vshrl.u32 %v5424, 16
        %v5627 = vrot.slane %v5625, 7
        %v5628 = vshll.u32 %v5424, 16
        %v5630 = vor.u32 %v5627, %v5628
        %v5631 = vrot.slane %v5627, 4
        %v5633 = vshrl.u32 %v5425, 16
        %v5635 = vrot.slane %v5633, 7
        %v5636 = vshll.u32 %v5425, 16
        %v5638 = vor.u32 %v5635, %v5636
        %v5639 = vsel %vm5436, %v5631, %v5638
        %v5640 = vrot.slane %v5635, 4
        %v5642 = vshrl.u32 %v5426, 16
        %v5644 = vrot.slane %v5642, 7
        %v5645 = vshll.u32 %v5426, 16
        %v5647 = vor.u32 %v5644, %v5645
        %v5648 = vrot.slane %v5644, 4
        %v5650 = vshrl.u32 %v5427, 16
        %v5652 = vrot.slane %v5650, 7
        %v5653 = vshll.u32 %v5427, 16
        %v5655 = vor.u32 %v5652, %v5653
        %v5656 = vsel %vm5436, %v5648, %v5655
        %v5657 = vrot.slane %v5652, 4
        %v5659 = vshrl.u32 %v5428, 16
        %v5661 = vrot.slane %v5659, 7
        %v5662 = vshll.u32 %v5428, 16
        %v5664 = vor.u32 %v5661, %v5662
        %v5665 = vrot.slane %v5661, 4
        %v5667 = vshrl.u32 %v5429, 16
        %v5669 = vrot.slane %v5667, 7
        %v5670 = vshll.u32 %v5429, 16
        %v5672 = vor.u32 %v5669, %v5670
        %v5673 = vsel %vm5436, %v5665, %v5672
        %v5674 = vrot.slane %v5669, 4
        %v5676 = vshrl.u32 %v5430, 16
        %v5678 = vrot.slane %v5676, 7
        %v5679 = vshll.u32 %v5430, 16
        %v5681 = vor.u32 %v5678, %v5679
        %v5682 = vrot.slane %v5678, 4
        %v5684 = vshrl.u32 %v5431, 16
        %v5686 = vrot.slane %v5684, 7
        %v5687 = vshll.u32 %v5431, 16
        %v5689 = vor.u32 %v5686, %v5687
        %v5690 = vsel %vm5436, %v5682, %v5689
        %v5691 = vrot.slane %v5686, 4
        %v5693 = vshrl.u32 %v5432, 16
        %v5695 = vrot.slane %v5693, 7
        %v5696 = vshll.u32 %v5432, 16
        %v5698 = vor.u32 %v5695, %v5696
        %v5699 = vrot.slane %v5695, 4
        %v5701 = vshrl.u32 %v5433, 16
        %v5703 = vrot.slane %v5701, 7
        %v5704 = vshll.u32 %v5433, 16
        %v5706 = vor.u32 %v5703, %v5704
        %v5707 = vsel %vm5436, %v5699, %v5706
        %v5708 = vrot.slane %v5703, 4
        %5709 = vrot.lane.b32.xlu0 %v5443, 64
        %v5710 = vpop.permute.xlu0 %5709
        %5711 = vrot.lane.b32.xlu0 %v5452, 64
        %v5712 = vpop.permute.xlu0 %5711
        %5713 = vrot.lane.b32.xlu0 %v5453, 64
        %v5714 = vpop.permute.xlu0 %5713
        %5715 = vrot.lane.b32.xlu0 %v5460, 64
        %v5716 = vpop.permute.xlu0 %5715
        %5717 = vrot.lane.b32.xlu0 %v5469, 64
        %v5718 = vpop.permute.xlu0 %5717
        %5719 = vrot.lane.b32.xlu0 %v5470, 64
        %v5720 = vpop.permute.xlu0 %5719
        %5721 = vrot.lane.b32.xlu0 %v5477, 64
        %v5722 = vpop.permute.xlu0 %5721
        %5723 = vrot.lane.b32.xlu0 %v5486, 64
        %v5724 = vpop.permute.xlu0 %5723
        %5725 = vrot.lane.b32.xlu0 %v5487, 64
        %v5726 = vpop.permute.xlu0 %5725
        %5727 = vrot.lane.b32.xlu0 %v5494, 64
        %v5728 = vpop.permute.xlu0 %5727
        %5729 = vrot.lane.b32.xlu0 %v5503, 64
        %v5730 = vpop.permute.xlu0 %5729
        %5731 = vrot.lane.b32.xlu0 %v5504, 64
        %v5732 = vpop.permute.xlu0 %5731
        %5733 = vrot.lane.b32.xlu0 %v5511, 64
        %v5734 = vpop.permute.xlu0 %5733
        %5735 = vrot.lane.b32.xlu0 %v5520, 64
        %v5736 = vpop.permute.xlu0 %5735
        %5737 = vrot.lane.b32.xlu0 %v5521, 64
        %v5738 = vpop.permute.xlu0 %5737
        %5739 = vrot.lane.b32.xlu0 %v5528, 64
        %v5740 = vpop.permute.xlu0 %5739
        %5741 = vrot.lane.b32.xlu0 %v5537, 64
        %v5742 = vpop.permute.xlu0 %5741
        %5743 = vrot.lane.b32.xlu0 %v5538, 64
        %v5744 = vpop.permute.xlu0 %5743
        %5745 = vrot.lane.b32.xlu0 %v5545, 64
        %v5746 = vpop.permute.xlu0 %5745
        %5747 = vrot.lane.b32.xlu0 %v5554, 64
        %v5748 = vpop.permute.xlu0 %5747
        %5749 = vrot.lane.b32.xlu0 %v5555, 64
        %v5750 = vpop.permute.xlu0 %5749
        %5751 = vrot.lane.b32.xlu0 %v5562, 64
        %v5752 = vpop.permute.xlu0 %5751
        %5753 = vrot.lane.b32.xlu0 %v5571, 64
        %v5754 = vpop.permute.xlu0 %5753
        %5755 = vrot.lane.b32.xlu0 %v5572, 64
        %v5756 = vpop.permute.xlu0 %5755
        %5757 = vrot.lane.b32.xlu0 %v5579, 64
        %v5758 = vpop.permute.xlu0 %5757
        %5759 = vrot.lane.b32.xlu0 %v5588, 64
        %v5760 = vpop.permute.xlu0 %5759
        %5761 = vrot.lane.b32.xlu0 %v5589, 64
        %v5762 = vpop.permute.xlu0 %5761
        %5763 = vrot.lane.b32.xlu0 %v5596, 64
        %v5764 = vpop.permute.xlu0 %5763
        %5765 = vrot.lane.b32.xlu0 %v5605, 64
        %v5766 = vpop.permute.xlu0 %5765
        %5767 = vrot.lane.b32.xlu0 %v5606, 64
        %v5768 = vpop.permute.xlu0 %5767
        %5769 = vrot.lane.b32.xlu0 %v5613, 64
        %v5770 = vpop.permute.xlu0 %5769
        %5771 = vrot.lane.b32.xlu0 %v5622, 64
        %v5772 = vpop.permute.xlu0 %5771
        %5773 = vrot.lane.b32.xlu0 %v5623, 64
        %v5774 = vpop.permute.xlu0 %5773
        %5775 = vrot.lane.b32.xlu0 %v5630, 64
        %v5776 = vpop.permute.xlu0 %5775
        %5777 = vrot.lane.b32.xlu0 %v5639, 64
        %v5778 = vpop.permute.xlu0 %5777
        %5779 = vrot.lane.b32.xlu0 %v5640, 64
        %v5780 = vpop.permute.xlu0 %5779
        %5781 = vrot.lane.b32.xlu0 %v5647, 64
        %v5782 = vpop.permute.xlu0 %5781
        %5783 = vrot.lane.b32.xlu0 %v5656, 64
        %v5784 = vpop.permute.xlu0 %5783
        %5785 = vrot.lane.b32.xlu0 %v5657, 64
        %v5786 = vpop.permute.xlu0 %5785
        %5787 = vrot.lane.b32.xlu0 %v5664, 64
        %v5788 = vpop.permute.xlu0 %5787
        %5789 = vrot.lane.b32.xlu0 %v5673, 64
        %v5790 = vpop.permute.xlu0 %5789
        %5791 = vrot.lane.b32.xlu0 %v5674, 64
        %v5792 = vpop.permute.xlu0 %5791
        %5793 = vrot.lane.b32.xlu0 %v5681, 64
        %v5794 = vpop.permute.xlu0 %5793
        %5795 = vrot.lane.b32.xlu0 %v5690, 64
        %v5796 = vpop.permute.xlu0 %5795
        %5797 = vrot.lane.b32.xlu0 %v5691, 64
        %v5798 = vpop.permute.xlu0 %5797
        %5799 = vrot.lane.b32.xlu0 %v5698, 64
        %v5800 = vpop.permute.xlu0 %5799
        %5801 = vrot.lane.b32.xlu0 %v5707, 64
        %v5802 = vpop.permute.xlu0 %5801
        %5803 = vrot.lane.b32.xlu0 %v5708, 64
        %v5804 = vpop.permute.xlu0 %5803
        %s5853 = scalar_lea.vmem [#allocation2], 12
        %vm5854 = vcmask 257024
        %vm5855 = vsmask.f32 7938
        %vm5856 = vmand %vm5854, %vm5855
        %v5857 = vld [vmem:[%s5853] sm:$0xf]
        %v5858 = vsel %vm5856, %v5710, %v5857
        %5859 = vst [vmem:[%s5853] sm:$0xf] %v5858
        %vm5860 = vcmask 257024
        %5861 = vst.msk [vmem:[%s5853 + $0x4] sm:$0xf] %vm5860, %v5712
        %vm5862 = vcmask 253952
        %vm5863 = vmand %vm5862, %vm5434
        %v5864 = vld [vmem:[%s5853 + $0x8] sm:$0x1]
        %v5865 = vsel %vm5863, %v5714, %v5864
        %5866 = vst [vmem:[%s5853 + $0x8] sm:$0x1] %v5865
        %v5867 = vld [vmem:[%s5853 + $0xc] sm:$0xf]
        %v5868 = vsel %vm5856, %v5716, %v5867
        %5869 = vst [vmem:[%s5853 + $0xc] sm:$0xf] %v5868
        %5870 = vst.msk [vmem:[%s5853 + $0x10] sm:$0xf] %vm5860, %v5718
        %v5871 = vld [vmem:[%s5853 + $0x14] sm:$0x1]
        %v5872 = vsel %vm5863, %v5720, %v5871
        %5873 = vst [vmem:[%s5853 + $0x14] sm:$0x1] %v5872
        %v5874 = vld [vmem:[%s5853 + $0x18] sm:$0xf]
        %v5875 = vsel %vm5856, %v5722, %v5874
        %5876 = vst [vmem:[%s5853 + $0x18] sm:$0xf] %v5875
        %5877 = vst.msk [vmem:[%s5853 + $0x1c] sm:$0xf] %vm5860, %v5724
        %v5878 = vld [vmem:[%s5853 + $0x20] sm:$0x1]
        %v5879 = vsel %vm5863, %v5726, %v5878
        %5880 = vst [vmem:[%s5853 + $0x20] sm:$0x1] %v5879
        %v5881 = vld [vmem:[%s5853 + $0x24] sm:$0xf]
        %v5882 = vsel %vm5856, %v5728, %v5881
        %5883 = vst [vmem:[%s5853 + $0x24] sm:$0xf] %v5882
        %5884 = vst.msk [vmem:[%s5853 + $0x28] sm:$0xf] %vm5860, %v5730
        %v5885 = vld [vmem:[%s5853 + $0x2c] sm:$0x1]
        %v5886 = vsel %vm5863, %v5732, %v5885
        %5887 = vst [vmem:[%s5853 + $0x2c] sm:$0x1] %v5886
        %v5888 = vld [vmem:[%s5853 + $0x30] sm:$0xf]
        %v5889 = vsel %vm5856, %v5734, %v5888
        %5890 = vst [vmem:[%s5853 + $0x30] sm:$0xf] %v5889
        %5891 = vst.msk [vmem:[%s5853 + $0x34] sm:$0xf] %vm5860, %v5736
        %v5892 = vld [vmem:[%s5853 + $0x38] sm:$0x1]
        %v5893 = vsel %vm5863, %v5738, %v5892
        %5894 = vst [vmem:[%s5853 + $0x38] sm:$0x1] %v5893
        %v5895 = vld [vmem:[%s5853 + $0x3c] sm:$0xf]
        %v5896 = vsel %vm5856, %v5740, %v5895
        %5897 = vst [vmem:[%s5853 + $0x3c] sm:$0xf] %v5896
        %5898 = vst.msk [vmem:[%s5853 + $0x40] sm:$0xf] %vm5860, %v5742
        %v5899 = vld [vmem:[%s5853 + $0x44] sm:$0x1]
        %v5900 = vsel %vm5863, %v5744, %v5899
        %5901 = vst [vmem:[%s5853 + $0x44] sm:$0x1] %v5900
        %v5902 = vld [vmem:[%s5853 + $0x48] sm:$0xf]
        %v5903 = vsel %vm5856, %v5746, %v5902
        %5904 = vst [vmem:[%s5853 + $0x48] sm:$0xf] %v5903
        %5905 = vst.msk [vmem:[%s5853 + $0x4c] sm:$0xf] %vm5860, %v5748
        %v5906 = vld [vmem:[%s5853 + $0x50] sm:$0x1]
        %v5907 = vsel %vm5863, %v5750, %v5906
        %5908 = vst [vmem:[%s5853 + $0x50] sm:$0x1] %v5907
        %v5909 = vld [vmem:[%s5853 + $0x54] sm:$0xf]
        %v5910 = vsel %vm5856, %v5752, %v5909
        %5911 = vst [vmem:[%s5853 + $0x54] sm:$0xf] %v5910
        %5912 = vst.msk [vmem:[%s5853 + $0x58] sm:$0xf] %vm5860, %v5754
        %v5913 = vld [vmem:[%s5853 + $0x5c] sm:$0x1]
        %v5914 = vsel %vm5863, %v5756, %v5913
        %5915 = vst [vmem:[%s5853 + $0x5c] sm:$0x1] %v5914
        %v5916 = vld [vmem:[%s5853 + $0x60] sm:$0xf]
        %v5917 = vsel %vm5856, %v5758, %v5916
        %5918 = vst [vmem:[%s5853 + $0x60] sm:$0xf] %v5917
        %5919 = vst.msk [vmem:[%s5853 + $0x64] sm:$0xf] %vm5860, %v5760
        %v5920 = vld [vmem:[%s5853 + $0x68] sm:$0x1]
        %v5921 = vsel %vm5863, %v5762, %v5920
        %5922 = vst [vmem:[%s5853 + $0x68] sm:$0x1] %v5921
        %v5923 = vld [vmem:[%s5853 + $0x6c] sm:$0xf]
        %v5924 = vsel %vm5856, %v5764, %v5923
        %5925 = vst [vmem:[%s5853 + $0x6c] sm:$0xf] %v5924
        %5926 = vst.msk [vmem:[%s5853 + $0x70] sm:$0xf] %vm5860, %v5766
        %v5927 = vld [vmem:[%s5853 + $0x74] sm:$0x1]
        %v5928 = vsel %vm5863, %v5768, %v5927
        %5929 = vst [vmem:[%s5853 + $0x74] sm:$0x1] %v5928
        %v5930 = vld [vmem:[%s5853 + $0x78] sm:$0xf]
        %v5931 = vsel %vm5856, %v5770, %v5930
        %5932 = vst [vmem:[%s5853 + $0x78] sm:$0xf] %v5931
        %5933 = vst.msk [vmem:[%s5853 + $0x7c] sm:$0xf] %vm5860, %v5772
        %v5934 = vld [vmem:[%s5853 + $0x80] sm:$0x1]
        %v5935 = vsel %vm5863, %v5774, %v5934
        %5936 = vst [vmem:[%s5853 + $0x80] sm:$0x1] %v5935
        %v5937 = vld [vmem:[%s5853 + $0x84] sm:$0xf]
        %v5938 = vsel %vm5856, %v5776, %v5937
        %5939 = vst [vmem:[%s5853 + $0x84] sm:$0xf] %v5938
        %5940 = vst.msk [vmem:[%s5853 + $0x88] sm:$0xf] %vm5860, %v5778
        %v5941 = vld [vmem:[%s5853 + $0x8c] sm:$0x1]
        %v5942 = vsel %vm5863, %v5780, %v5941
        %5943 = vst [vmem:[%s5853 + $0x8c] sm:$0x1] %v5942
        %v5944 = vld [vmem:[%s5853 + $0x90] sm:$0xf]
        %v5945 = vsel %vm5856, %v5782, %v5944
        %5946 = vst [vmem:[%s5853 + $0x90] sm:$0xf] %v5945
        %5947 = vst.msk [vmem:[%s5853 + $0x94] sm:$0xf] %vm5860, %v5784
        %v5948 = vld [vmem:[%s5853 + $0x98] sm:$0x1]
        %v5949 = vsel %vm5863, %v5786, %v5948
        %5950 = vst [vmem:[%s5853 + $0x98] sm:$0x1] %v5949
        %v5951 = vld [vmem:[%s5853 + $0x9c] sm:$0xf]
        %v5952 = vsel %vm5856, %v5788, %v5951
        %5953 = vst [vmem:[%s5853 + $0x9c] sm:$0xf] %v5952
        %5954 = vst.msk [vmem:[%s5853 + $0xa0] sm:$0xf] %vm5860, %v5790
        %v5955 = vld [vmem:[%s5853 + $0xa4] sm:$0x1]
        %v5956 = vsel %vm5863, %v5792, %v5955
        %5957 = vst [vmem:[%s5853 + $0xa4] sm:$0x1] %v5956
        %v5958 = vld [vmem:[%s5853 + $0xa8] sm:$0xf]
        %v5959 = vsel %vm5856, %v5794, %v5958
        %5960 = vst [vmem:[%s5853 + $0xa8] sm:$0xf] %v5959
        %5961 = vst.msk [vmem:[%s5853 + $0xac] sm:$0xf] %vm5860, %v5796
        %v5962 = vld [vmem:[%s5853 + $0xb0] sm:$0x1]
        %v5963 = vsel %vm5863, %v5798, %v5962
        %5964 = vst [vmem:[%s5853 + $0xb0] sm:$0x1] %v5963
        %v5965 = vld [vmem:[%s5853 + $0xb4] sm:$0xf]
        %v5966 = vsel %vm5856, %v5800, %v5965
        %5967 = vst [vmem:[%s5853 + $0xb4] sm:$0xf] %v5966
        %5968 = vst.msk [vmem:[%s5853 + $0xb8] sm:$0xf] %vm5860, %v5802
        %v5969 = vld [vmem:[%s5853 + $0xbc] sm:$0x1]
        %v5970 = vsel %vm5863, %v5804, %v5969
        %5971 = vst [vmem:[%s5853 + $0xbc] sm:$0x1] %v5970
        %p5972 = scmp.lt.s32.totalorder %s24, 1
        %s5973 = scalar_select %p5972, %s24, 1
        %p5974 = scmp.lt.s32.totalorder %s25, 7
        %s5975 = scalar_select %p5974, %s25, 7
        %s5976 = smul.addr %s5975, 32
        %s5977 = smul.addr %s5973, 256
        %s5978 = sadd.s32 %s5976, %s5977
        %s5979 = smul.addr %s5978, 8
        %s5980 = scalar_lea.vmem %s4, %s5979
        %s5981 = sand.u32 %s166, 1
        %s5982 = scalar_lea.sflag [#allocation4], %s5981
        %s5983 = sand.u32 %s166, 1
        %s5984 = smul.addr %s5983, 256
        %s5985 = scalar_lea.vmem [#allocation3], %s5984
        // Predicated region
        $region41: #{_conv_lstm_forward_impl.2} parent=35 // pred_check
          %p5986 = pneg %p150
        $region42: #{_conv_lstm_forward_impl.2} parent=35 // pred_check_branch
          %5988 = sbr.rel (%p5986) target = $region44
        $region43: #{_conv_lstm_forward_impl.2} parent=35 // pred_region
          _
        $region44: #{_conv_lstm_forward_impl.2} parent=35 // pred_fallthru
          _
        // Predicated region
        $region45: #{_conv_lstm_forward_impl.2} parent=35 // pred_check
          %p5989 = pneg %p176
        $region46: #{_conv_lstm_forward_impl.2} parent=35 // pred_check_branch
          %5991 = sbr.rel (%p5989) target = $region48
        $region47: #{_conv_lstm_forward_impl.2} parent=35 // pred_region
          %5993 = vsyncadd %s5982, 0
          %s5994 = smul.addr %s24, 32
          %s5995 = smul.addr %s5994, 8
          %s5996 = scalar_lea.hbm %s5, %s5995
          %s5997 = sshll.u32 %s5985, 4
          %s5998 = int_to_ptr.vmem [resolvable:$true] %s5997
          %s5999 = sshll.u32 %s5996, 4
          %s6000 = int_to_ptr.hbm [resolvable:$true] %s5999
          %6005 = dma.vmem_to_hbm [thread:$0]  %s5998, 4096, %s6000, %s5982, 128, 128, 8
        $region48: #{_conv_lstm_forward_impl.2} parent=35 // pred_fallthru
          _
      $region36: #{_conv_lstm_forward_impl.2} parent=5 // pred_fallthru
        _
      %p6006 = scmp.le.s32.totalorder 2, %s15
      // Predicated region
      $region49: #{_conv_lstm_forward_impl.2} parent=5 // pred_check
        %p6007 = pneg %p6006
      $region50: #{_conv_lstm_forward_impl.2} parent=5 // pred_check_branch
        %6009 = sbr.rel (%p6007) target = $region52
      $region51: #{_conv_lstm_forward_impl.2} parent=5 // pred_region
        %s6010 = ssub.s32 %s15, 2
        // Predicated region
        $region53: #{_conv_lstm_forward_impl.2} parent=51 // pred_check
          %p6011 = pneg %p156
        $region54: #{_conv_lstm_forward_impl.2} parent=51 // pred_check_branch
          %6013 = sbr.rel (%p6011) target = $region56
        $region55: #{_conv_lstm_forward_impl.2} parent=51 // pred_region
          %p6014 = scmp.lt.s32.totalorder %s26, 1
          %s6015 = scalar_select %p6014, %s26, 1
          %p6016 = scmp.lt.s32.totalorder %s27, 7
          %s6017 = scalar_select %p6016, %s27, 7
          %s6018 = smul.addr %s6017, 32
          %s6019 = smul.addr %s6015, 256
          %s6020 = sadd.s32 %s6018, %s6019
          %s6021 = smul.addr %s6020, 8
          %s6022 = scalar_lea.vmem %s4, %s6021
        $region56: #{_conv_lstm_forward_impl.2} parent=51 // pred_fallthru
          _
        // Predicated region
        $region57: #{_conv_lstm_forward_impl.2} parent=51 // pred_check
          %p6023 = pneg %p182
        $region58: #{_conv_lstm_forward_impl.2} parent=51 // pred_check_branch
          %6025 = sbr.rel (%p6023) target = $region60
        $region59: #{_conv_lstm_forward_impl.2} parent=51 // pred_region
          %s6026 = sand.u32 %s167, 1
          %s6027 = scalar_lea.sflag [#allocation4], %s6026
          %s6028 = sand.u32 %s167, 1
          %s6029 = smul.addr %s6028, 256
          %s6030 = scalar_lea.vmem [#allocation3], %s6029
          %6032 = dma.done %s6027, 4096
        $region60: #{_conv_lstm_forward_impl.2} parent=51 // pred_fallthru
          _
      $region52: #{_conv_lstm_forward_impl.2} parent=5 // pred_fallthru
        _
    $region6: #{_conv_lstm_forward_impl.2} parent=1 // loop_footer
      %s19 = sadd.s32 1, %s15
    $region7: #{_conv_lstm_forward_impl.2} parent=1 // loop_footer_branch
      %14 = sbr.rel target = $region3
    $region8: #{_conv_lstm_forward_impl.2} parent=1 // loop_exit
      _
    %6033 = vsyncpa [#allocation4], 1
    %s6034 = scalar_lea.sflag [#allocation4], 1
    %6035 = vsyncpa %s6034, 1

// kernel: _conv_lstm_forward_impl.3
$region0: #{_conv_lstm_forward_impl.3}
  #allocation0 [shape = 'u32[]', space=smem, size = 0x4, offset = 0x4, fixed_abs, tag = 'smem constant byte address 0x4 - core index']
  #allocation1 [shape = 'u32[72,128]{1,0:T(1,128)}', space=vmem, size = 0x9000, scoped, tag = 'internal scratch']
  #allocation2 [shape = 'bf16[18,18,32]{2,1,0:T(8,128)(2,1)}', space=vmem, size = 0x1b000, scoped, tag = 'scratch operand']
  %s0 = inlined_call_operand.vmem [shape: f32[2,8,1,1], index: 0, kind: input, shape index: {}]
  %s1 = inlined_call_operand.vmem [shape: bf16[2,8,18,18,32], index: 1, kind: input, shape index: {}]
  %s2 = inlined_call_operand.vmem [shape: bf16[576,128], index: 2, kind: input, shape index: {}]
  %s3 = inlined_call_operand.vmem [shape: f32[1,128], index: 3, kind: input, shape index: {}]
  %s4 = inlined_call_operand.vmem [shape: f32[2,8,16,16,32], index: 4, kind: output, shape index: {0}]
  %s5 = inlined_call_operand.hbm [shape: f32[2,16,16,32], index: 5, kind: output, shape index: {1}]
  %6 = xla_tuple %s4, %s5
  %s7 = sld [smem:[#allocation0]]
  $region61: #{_conv_lstm_forward_impl.3} parent=0
    _
  %s9 = ssub.s32 1, %s7
  %s10 = scalar_select 0, %s9, %s7
  $region1: #{_conv_lstm_forward_impl.3} parent=0
    #allocation3 [shape = 'u8[262144]{0}', space=vmem, size = 0x40000, scoped, tag = 'output window, operand 1']
    #allocation4 [shape = 's32[2]{0}', space=sflag, size = 0x8, scoped, tag = 'scoped memory for _conv_lstm_forward_impl.3']
    %11 = vsyncpa [#allocation4], 0
    %s12 = scalar_lea.sflag [#allocation4], 1
    %13 = vsyncpa %s12, 0
    loop: start=0, step=1, limit=18
    $region2: #{_conv_lstm_forward_impl.3} parent=1 // loop_pre_header
      _
    $region3: #{_conv_lstm_forward_impl.3} parent=1 // loop_header
      %s15 = sphi 0, %s19
      %p16 = scmp.ge.s32.totalorder %s15, 18
      %s22 = sphi 0, %s34
      %s23 = sphi 0, %s30
      %s24 = sphi 0, %s22
      %s25 = sphi 0, %s23
      %s26 = sphi 0, %s24
      %s27 = sphi 0, %s25
      %s39 = sphi 0, %s41
      %s42 = sphi 0, %s39
      %s43 = sphi 0, %s42
      %s59 = sphi 0, %s43
      %s67 = sphi 0, %s69
      %s70 = sphi 0, %s67
      %s71 = sphi 0, %s70
      %s87 = sphi 0, %s71
      %s91 = sphi 0, %s91
      %s93 = sphi 0, %s91
      %s94 = sphi 0, %s93
      %s108 = sphi 0, %s94
      %s112 = sphi 0, %s112
      %s114 = sphi 0, %s112
      %s115 = sphi 0, %s114
      %s129 = sphi 0, %s115
      %s137 = sphi 0, %s139
      %s140 = sphi 0, %s137
      %s141 = sphi 0, %s140
      %s157 = sphi 0, %s141
      %s163 = sphi 0, %s165
      %s166 = sphi 0, %s163
      %s167 = sphi 0, %s166
      %s183 = sphi 0, %s167
    $region4: #{_conv_lstm_forward_impl.3} parent=1 // loop_header_branch
      %18 = sbr.rel (%p16) target = $region8
    $region5: #{_conv_lstm_forward_impl.3} parent=1 // loop_body
      %s20 = ssub.s32 %s15, 1
      %s21 = ssub.s32 %s15, 2
      %s28 = sadd.s32 1, %s23
      %p29 = scmp.ge.s32.totalorder %s28, 8
      %s30 = scalar_select %p29, 0, %s28
      %s31 = sadd.s32 1, %s22
      %s32 = scalar_select %p29, %s31, %s22
      %p33 = scmp.ge.s32.totalorder %s32, 2
      %s34 = scalar_select %p33, 0, %s32
      %s35 = ssub.s32 %s22, %s34
      %s36 = ssub.s32 %s23, %s30
      %s37 = sor.u32 %s35, %s36
      %p38 = scmp.eq.s32.totalorder %s37, 0
      %s40 = sadd.s32 %s39, 1
      %s41 = scalar_select %p38, %s39, %s40
      %p44 = pneg %p38
      %p45 = scmp.eq.s32.totalorder %s15, 15
      %p46 = por %p44, %p45
      %p47 = scmp.ne.s32.totalorder %s39, %s42
      %p48 = scmp.eq.s32.totalorder %s15, 0
      %p49 = por %p47, %p48
      %p50 = scmp.ne.s32.totalorder %s39, %s42
      %p51 = scmp.eq.s32.totalorder %s20, 15
      %p52 = por %p50, %p51
      %p53 = scmp.ne.s32.totalorder %s42, %s43
      %p54 = scmp.eq.s32.totalorder %s20, 0
      %p55 = por %p53, %p54
      %p56 = scmp.ne.s32.totalorder %s42, %s43
      %p57 = scmp.eq.s32.totalorder %s21, 15
      %p58 = por %p56, %p57
      %p60 = scmp.ne.s32.totalorder %s43, %s59
      %p61 = scmp.eq.s32.totalorder %s21, 0
      %p62 = por %p60, %p61
      %s63 = ssub.s32 %s22, %s34
      %s64 = ssub.s32 %s23, %s30
      %s65 = sor.u32 %s63, %s64
      %p66 = scmp.eq.s32.totalorder %s65, 0
      %s68 = sadd.s32 %s67, 1
      %s69 = scalar_select %p66, %s67, %s68
      %p72 = pneg %p66
      %p73 = scmp.eq.s32.totalorder %s15, 15
      %p74 = por %p72, %p73
      %p75 = scmp.ne.s32.totalorder %s67, %s70
      %p76 = scmp.eq.s32.totalorder %s15, 0
      %p77 = por %p75, %p76
      %p78 = scmp.ne.s32.totalorder %s67, %s70
      %p79 = scmp.eq.s32.totalorder %s20, 15
      %p80 = por %p78, %p79
      %p81 = scmp.ne.s32.totalorder %s70, %s71
      %p82 = scmp.eq.s32.totalorder %s20, 0
      %p83 = por %p81, %p82
      %p84 = scmp.ne.s32.totalorder %s70, %s71
      %p85 = scmp.eq.s32.totalorder %s21, 15
      %p86 = por %p84, %p85
      %p88 = scmp.ne.s32.totalorder %s71, %s87
      %p89 = scmp.eq.s32.totalorder %s21, 0
      %p90 = por %p88, %p89
      %s92 = sadd.s32 %s91, 1
      %p95 = scmp.eq.s32.totalorder %s15, 15
      %p96 = scmp.ne.s32.totalorder %s91, %s93
      %p97 = scmp.eq.s32.totalorder %s15, 0
      %p98 = por %p96, %p97
      %p99 = scmp.ne.s32.totalorder %s91, %s93
      %p100 = scmp.eq.s32.totalorder %s20, 15
      %p101 = por %p99, %p100
      %p102 = scmp.ne.s32.totalorder %s93, %s94
      %p103 = scmp.eq.s32.totalorder %s20, 0
      %p104 = por %p102, %p103
      %p105 = scmp.ne.s32.totalorder %s93, %s94
      %p106 = scmp.eq.s32.totalorder %s21, 15
      %p107 = por %p105, %p106
      %p109 = scmp.ne.s32.totalorder %s94, %s108
      %p110 = scmp.eq.s32.totalorder %s21, 0
      %p111 = por %p109, %p110
      %s113 = sadd.s32 %s112, 1
      %p116 = scmp.eq.s32.totalorder %s15, 15
      %p117 = scmp.ne.s32.totalorder %s112, %s114
      %p118 = scmp.eq.s32.totalorder %s15, 0
      %p119 = por %p117, %p118
      %p120 = scmp.ne.s32.totalorder %s112, %s114
      %p121 = scmp.eq.s32.totalorder %s20, 15
      %p122 = por %p120, %p121
      %p123 = scmp.ne.s32.totalorder %s114, %s115
      %p124 = scmp.eq.s32.totalorder %s20, 0
      %p125 = por %p123, %p124
      %p126 = scmp.ne.s32.totalorder %s114, %s115
      %p127 = scmp.eq.s32.totalorder %s21, 15
      %p128 = por %p126, %p127
      %p130 = scmp.ne.s32.totalorder %s115, %s129
      %p131 = scmp.eq.s32.totalorder %s21, 0
      %p132 = por %p130, %p131
      %s133 = ssub.s32 %s22, %s34
      %s134 = ssub.s32 %s23, %s30
      %s135 = sor.u32 %s133, %s134
      %p136 = scmp.eq.s32.totalorder %s135, 0
      %s138 = sadd.s32 %s137, 1
      %s139 = scalar_select %p136, %s137, %s138
      %p142 = pneg %p136
      %p143 = scmp.eq.s32.totalorder %s15, 15
      %p144 = por %p142, %p143
      %p145 = scmp.ne.s32.totalorder %s137, %s140
      %p146 = scmp.eq.s32.totalorder %s15, 0
      %p147 = por %p145, %p146
      %p148 = scmp.ne.s32.totalorder %s137, %s140
      %p149 = scmp.eq.s32.totalorder %s20, 15
      %p150 = por %p148, %p149
      %p151 = scmp.ne.s32.totalorder %s140, %s141
      %p152 = scmp.eq.s32.totalorder %s20, 0
      %p153 = por %p151, %p152
      %p154 = scmp.ne.s32.totalorder %s140, %s141
      %p155 = scmp.eq.s32.totalorder %s21, 15
      %p156 = por %p154, %p155
      %p158 = scmp.ne.s32.totalorder %s141, %s157
      %p159 = scmp.eq.s32.totalorder %s21, 0
      %p160 = por %p158, %p159
      %s161 = ssub.s32 %s22, %s34
      %p162 = scmp.eq.s32.totalorder %s161, 0
      %s164 = sadd.s32 %s163, 1
      %s165 = scalar_select %p162, %s163, %s164
      %p168 = pneg %p162
      %p169 = scmp.eq.s32.totalorder %s15, 15
      %p170 = por %p168, %p169
      %p171 = scmp.ne.s32.totalorder %s163, %s166
      %p172 = scmp.eq.s32.totalorder %s15, 0
      %p173 = por %p171, %p172
      %p174 = scmp.ne.s32.totalorder %s163, %s166
      %p175 = scmp.eq.s32.totalorder %s20, 15
      %p176 = por %p174, %p175
      %p177 = scmp.ne.s32.totalorder %s166, %s167
      %p178 = scmp.eq.s32.totalorder %s20, 0
      %p179 = por %p177, %p178
      %p180 = scmp.ne.s32.totalorder %s166, %s167
      %p181 = scmp.eq.s32.totalorder %s21, 15
      %p182 = por %p180, %p181
      %p184 = scmp.ne.s32.totalorder %s167, %s183
      %p185 = scmp.eq.s32.totalorder %s21, 0
      %p186 = por %p184, %p185
      %p187 = scmp.le.s32.totalorder 1, %s15
      %p188 = scmp.lt.s32.totalorder %s15, 17
      %p189 = pnand %p187, %p188
      %p190 = pneg %p189
      // Predicated region
      $region9: #{_conv_lstm_forward_impl.3} parent=5 // pred_check
        _
      $region10: #{_conv_lstm_forward_impl.3} parent=5 // pred_check_branch
        %192 = sbr.rel (%p189) target = $region12
      $region11: #{_conv_lstm_forward_impl.3} parent=5 // pred_region
        %s193 = ssub.s32 %s15, 1
        // Predicated region
        $region13: #{_conv_lstm_forward_impl.3} parent=11 // pred_check
          %p194 = pneg %p104
        $region14: #{_conv_lstm_forward_impl.3} parent=11 // pred_check_branch
          %196 = sbr.rel (%p194) target = $region16
        $region15: #{_conv_lstm_forward_impl.3} parent=11 // pred_region
          _
        $region16: #{_conv_lstm_forward_impl.3} parent=11 // pred_fallthru
          _
        // Predicated region
        $region17: #{_conv_lstm_forward_impl.3} parent=11 // pred_check
          %p197 = pneg %p125
        $region18: #{_conv_lstm_forward_impl.3} parent=11 // pred_check_branch
          %199 = sbr.rel (%p197) target = $region20
        $region19: #{_conv_lstm_forward_impl.3} parent=11 // pred_region
          _
        $region20: #{_conv_lstm_forward_impl.3} parent=11 // pred_fallthru
          _
      $region12: #{_conv_lstm_forward_impl.3} parent=5 // pred_fallthru
        _
      %p200 = scmp.lt.s32.totalorder %s15, 16
      // Predicated region
      $region21: #{_conv_lstm_forward_impl.3} parent=5 // pred_check
        %p201 = pneg %p200
      $region22: #{_conv_lstm_forward_impl.3} parent=5 // pred_check_branch
        %203 = sbr.rel (%p201) target = $region24
      $region23: #{_conv_lstm_forward_impl.3} parent=5 // pred_region
        // Predicated region
        $region25: #{_conv_lstm_forward_impl.3} parent=23 // pred_check
          %p204 = pneg %p49
        $region26: #{_conv_lstm_forward_impl.3} parent=23 // pred_check_branch
          %206 = sbr.rel (%p204) target = $region28
        $region27: #{_conv_lstm_forward_impl.3} parent=23 // pred_region
          %p207 = scmp.lt.s32.totalorder %s22, 1
          %s208 = scalar_select %p207, %s22, 1
          %p209 = scmp.lt.s32.totalorder %s23, 7
          %s210 = scalar_select %p209, %s23, 7
          %s211 = smul.addr %s208, 8
          %s212 = sadd.s32 %s210, %s211
          %s213 = scalar_lea.vmem %s0, %s212
        $region28: #{_conv_lstm_forward_impl.3} parent=23 // pred_fallthru
          _
        // Predicated region
        $region29: #{_conv_lstm_forward_impl.3} parent=23 // pred_check
          %p214 = pneg %p77
        $region30: #{_conv_lstm_forward_impl.3} parent=23 // pred_check_branch
          %216 = sbr.rel (%p214) target = $region32
        $region31: #{_conv_lstm_forward_impl.3} parent=23 // pred_region
          %p217 = scmp.lt.s32.totalorder %s22, 1
          %s218 = scalar_select %p217, %s22, 1
          %p219 = scmp.lt.s32.totalorder %s23, 7
          %s220 = scalar_select %p219, %s23, 7
          %s221 = smul.addr %s220, 54
          %s222 = smul.addr %s218, 432
          %s223 = sadd.s32 %s221, %s222
          %s224 = smul.addr %s223, 4
          %s225 = scalar_lea.vmem %s1, %s224
        $region32: #{_conv_lstm_forward_impl.3} parent=23 // pred_fallthru
          _
      $region24: #{_conv_lstm_forward_impl.3} parent=5 // pred_fallthru
        _
      %p226 = scmp.le.s32.totalorder 1, %s15
      %p227 = scmp.lt.s32.totalorder %s15, 17
      %p228 = pnand %p226, %p227
      %p229 = pneg %p228
      // Predicated region
      $region33: #{_conv_lstm_forward_impl.3} parent=5 // pred_check
        _
      $region34: #{_conv_lstm_forward_impl.3} parent=5 // pred_check_branch
        %231 = sbr.rel (%p228) target = $region36
      $region35: #{_conv_lstm_forward_impl.3} parent=5 // pred_region
        %s232 = ssub.s32 %s15, 1
        %p233 = scmp.lt.s32.totalorder %s24, 1
        %s234 = scalar_select %p233, %s24, 1
        %p235 = scmp.lt.s32.totalorder %s25, 7
        %s236 = scalar_select %p235, %s25, 7
        %s237 = smul.addr %s234, 8
        %s238 = sadd.s32 %s236, %s237
        %s239 = scalar_lea.vmem %s0, %s238
        %p240 = pneg %p55
        %p241 = pneg %p52
        %p242 = scmp.lt.s32.totalorder %s24, 1
        %s243 = scalar_select %p242, %s24, 1
        %p244 = scmp.lt.s32.totalorder %s25, 7
        %s245 = scalar_select %p244, %s25, 7
        %s246 = smul.addr %s245, 54
        %s247 = smul.addr %s243, 432
        %s248 = sadd.s32 %s246, %s247
        %s249 = smul.addr %s248, 4
        %s250 = scalar_lea.vmem %s1, %s249
        %p251 = pneg %p83
        %p252 = pneg %p80
        %p253 = pneg %p104
        %p254 = pneg %p101
        %p255 = pneg %p125
        %p256 = pneg %p122
        %p257 = pneg %p153
        %p258 = pneg %p150
        %p259 = scmp.lt.s32.totalorder %s24, 1
        %s260 = scalar_select %p259, %s24, 1
        %p261 = scmp.lt.s32.totalorder %s25, 7
        %s262 = scalar_select %p261, %s25, 7
        %s263 = smul.addr %s262, 32
        %s264 = smul.addr %s260, 256
        %s265 = sadd.s32 %s263, %s264
        %s266 = smul.addr %s265, 8
        %s267 = scalar_lea.vmem %s4, %s266
        %p268 = pneg %p179
        %p269 = pneg %p176
        %s270 = sand.u32 %s166, 1
        %s271 = scalar_lea.sflag [#allocation4], %s270
        %s272 = sand.u32 %s166, 1
        %s273 = smul.addr %s272, 256
        %s274 = scalar_lea.vmem [#allocation3], %s273
        %p275 = scmp.lt.s32.totalorder %s24, 1
        %s276 = scalar_select %p275, %s24, 1
        %p277 = scmp.lt.s32.totalorder %s25, 7
        %s278 = scalar_select %p277, %s25, 7
        %s279 = smul.addr %s276, 8
        %s280 = sadd.s32 %s278, %s279
        %s281 = scalar_lea.vmem %s0, %s280
        %p282 = scmp.lt.s32.totalorder %s24, 1
        %s283 = scalar_select %p282, %s24, 1
        %p284 = scmp.lt.s32.totalorder %s25, 7
        %s285 = scalar_select %p284, %s25, 7
        %s286 = smul.addr %s285, 54
        %s287 = smul.addr %s283, 432
        %s288 = sadd.s32 %s286, %s287
        %s289 = smul.addr %s288, 4
        %s290 = scalar_lea.vmem %s1, %s289
        %p291 = scmp.lt.s32.totalorder %s24, 1
        %s292 = scalar_select %p291, %s24, 1
        %p293 = scmp.lt.s32.totalorder %s25, 7
        %s294 = scalar_select %p293, %s25, 7
        %s295 = smul.addr %s294, 32
        %s296 = smul.addr %s292, 256
        %s297 = sadd.s32 %s295, %s296
        %s298 = smul.addr %s297, 8
        %s299 = scalar_lea.vmem %s4, %s298
        %p301 = scmp.eq.s32.totalorder %s25, 0
        // Predicated region
        $region37: #{_conv_lstm_forward_impl.3} parent=35 // pred_check
          %p302 = pneg %p301
        $region38: #{_conv_lstm_forward_impl.3} parent=35 // pred_check_branch
          %304 = sbr.rel (%p302) target = $region40
        $region39: #{_conv_lstm_forward_impl.3} parent=35 // pred_region
          %vm305 = vcmask 257024
          %306 = vst.msk [vmem:[#allocation2] sm:$0xf] %vm305, 0
          %307 = vst.msk [vmem:[#allocation2 + $0x4] sm:$0xf] %vm305, 0
          %vm308 = vcmask 253952
          %309 = vst.msk [vmem:[#allocation2 + $0x8] sm:$0x1] %vm308, 0
          %310 = vst.msk [vmem:[#allocation2 + $0xc] sm:$0xf] %vm305, 0
          %311 = vst.msk [vmem:[#allocation2 + $0x10] sm:$0xf] %vm305, 0
          %312 = vst.msk [vmem:[#allocation2 + $0x14] sm:$0x1] %vm308, 0
          %313 = vst.msk [vmem:[#allocation2 + $0x18] sm:$0xf] %vm305, 0
          %314 = vst.msk [vmem:[#allocation2 + $0x1c] sm:$0xf] %vm305, 0
          %315 = vst.msk [vmem:[#allocation2 + $0x20] sm:$0x1] %vm308, 0
          %316 = vst.msk [vmem:[#allocation2 + $0x24] sm:$0xf] %vm305, 0
          %317 = vst.msk [vmem:[#allocation2 + $0x28] sm:$0xf] %vm305, 0
          %318 = vst.msk [vmem:[#allocation2 + $0x2c] sm:$0x1] %vm308, 0
          %319 = vst.msk [vmem:[#allocation2 + $0x30] sm:$0xf] %vm305, 0
          %320 = vst.msk [vmem:[#allocation2 + $0x34] sm:$0xf] %vm305, 0
          %321 = vst.msk [vmem:[#allocation2 + $0x38] sm:$0x1] %vm308, 0
          %322 = vst.msk [vmem:[#allocation2 + $0x3c] sm:$0xf] %vm305, 0
          %323 = vst.msk [vmem:[#allocation2 + $0x40] sm:$0xf] %vm305, 0
          %324 = vst.msk [vmem:[#allocation2 + $0x44] sm:$0x1] %vm308, 0
          %325 = vst.msk [vmem:[#allocation2 + $0x48] sm:$0xf] %vm305, 0
          %326 = vst.msk [vmem:[#allocation2 + $0x4c] sm:$0xf] %vm305, 0
          %327 = vst.msk [vmem:[#allocation2 + $0x50] sm:$0x1] %vm308, 0
          %328 = vst.msk [vmem:[#allocation2 + $0x54] sm:$0xf] %vm305, 0
          %329 = vst.msk [vmem:[#allocation2 + $0x58] sm:$0xf] %vm305, 0
          %330 = vst.msk [vmem:[#allocation2 + $0x5c] sm:$0x1] %vm308, 0
          %331 = vst.msk [vmem:[#allocation2 + $0x60] sm:$0xf] %vm305, 0
          %332 = vst.msk [vmem:[#allocation2 + $0x64] sm:$0xf] %vm305, 0
          %333 = vst.msk [vmem:[#allocation2 + $0x68] sm:$0x1] %vm308, 0
          %334 = vst.msk [vmem:[#allocation2 + $0x6c] sm:$0xf] %vm305, 0
          %335 = vst.msk [vmem:[#allocation2 + $0x70] sm:$0xf] %vm305, 0
          %336 = vst.msk [vmem:[#allocation2 + $0x74] sm:$0x1] %vm308, 0
          %337 = vst.msk [vmem:[#allocation2 + $0x78] sm:$0xf] %vm305, 0
          %338 = vst.msk [vmem:[#allocation2 + $0x7c] sm:$0xf] %vm305, 0
          %339 = vst.msk [vmem:[#allocation2 + $0x80] sm:$0x1] %vm308, 0
          %340 = vst.msk [vmem:[#allocation2 + $0x84] sm:$0xf] %vm305, 0
          %341 = vst.msk [vmem:[#allocation2 + $0x88] sm:$0xf] %vm305, 0
          %342 = vst.msk [vmem:[#allocation2 + $0x8c] sm:$0x1] %vm308, 0
          %343 = vst.msk [vmem:[#allocation2 + $0x90] sm:$0xf] %vm305, 0
          %344 = vst.msk [vmem:[#allocation2 + $0x94] sm:$0xf] %vm305, 0
          %345 = vst.msk [vmem:[#allocation2 + $0x98] sm:$0x1] %vm308, 0
          %346 = vst.msk [vmem:[#allocation2 + $0x9c] sm:$0xf] %vm305, 0
          %347 = vst.msk [vmem:[#allocation2 + $0xa0] sm:$0xf] %vm305, 0
          %348 = vst.msk [vmem:[#allocation2 + $0xa4] sm:$0x1] %vm308, 0
          %349 = vst.msk [vmem:[#allocation2 + $0xa8] sm:$0xf] %vm305, 0
          %350 = vst.msk [vmem:[#allocation2 + $0xac] sm:$0xf] %vm305, 0
          %351 = vst.msk [vmem:[#allocation2 + $0xb0] sm:$0x1] %vm308, 0
          %352 = vst.msk [vmem:[#allocation2 + $0xb4] sm:$0xf] %vm305, 0
          %353 = vst.msk [vmem:[#allocation2 + $0xb8] sm:$0xf] %vm305, 0
          %354 = vst.msk [vmem:[#allocation2 + $0xbc] sm:$0x1] %vm308, 0
          %355 = vst.msk [vmem:[#allocation2 + $0xc0] sm:$0xf] %vm305, 0
          %356 = vst.msk [vmem:[#allocation2 + $0xc4] sm:$0xf] %vm305, 0
          %357 = vst.msk [vmem:[#allocation2 + $0xc8] sm:$0x1] %vm308, 0
          %358 = vst.msk [vmem:[#allocation2 + $0xcc] sm:$0xf] %vm305, 0
          %359 = vst.msk [vmem:[#allocation2 + $0xd0] sm:$0xf] %vm305, 0
          %360 = vst.msk [vmem:[#allocation2 + $0xd4] sm:$0x1] %vm308, 0
          %vm361 = vcmask 261120
          %362 = vst.msk [vmem:[%s274] sm:$0xff] %vm361, 0.0
          %363 = vst.msk [vmem:[%s274 + $0x8] sm:$0xff] %vm361, 0.0
          %364 = vst.msk [vmem:[%s274 + $0x10] sm:$0xff] %vm361, 0.0
          %365 = vst.msk [vmem:[%s274 + $0x18] sm:$0xff] %vm361, 0.0
          %366 = vst.msk [vmem:[%s274 + $0x20] sm:$0xff] %vm361, 0.0
          %367 = vst.msk [vmem:[%s274 + $0x28] sm:$0xff] %vm361, 0.0
          %368 = vst.msk [vmem:[%s274 + $0x30] sm:$0xff] %vm361, 0.0
          %369 = vst.msk [vmem:[%s274 + $0x38] sm:$0xff] %vm361, 0.0
          %370 = vst.msk [vmem:[%s274 + $0x40] sm:$0xff] %vm361, 0.0
          %371 = vst.msk [vmem:[%s274 + $0x48] sm:$0xff] %vm361, 0.0
          %372 = vst.msk [vmem:[%s274 + $0x50] sm:$0xff] %vm361, 0.0
          %373 = vst.msk [vmem:[%s274 + $0x58] sm:$0xff] %vm361, 0.0
          %374 = vst.msk [vmem:[%s274 + $0x60] sm:$0xff] %vm361, 0.0
          %375 = vst.msk [vmem:[%s274 + $0x68] sm:$0xff] %vm361, 0.0
          %376 = vst.msk [vmem:[%s274 + $0x70] sm:$0xff] %vm361, 0.0
          %377 = vst.msk [vmem:[%s274 + $0x78] sm:$0xff] %vm361, 0.0
          %378 = vst.msk [vmem:[%s274 + $0x80] sm:$0xff] %vm361, 0.0
          %379 = vst.msk [vmem:[%s274 + $0x88] sm:$0xff] %vm361, 0.0
          %380 = vst.msk [vmem:[%s274 + $0x90] sm:$0xff] %vm361, 0.0
          %381 = vst.msk [vmem:[%s274 + $0x98] sm:$0xff] %vm361, 0.0
          %382 = vst.msk [vmem:[%s274 + $0xa0] sm:$0xff] %vm361, 0.0
          %383 = vst.msk [vmem:[%s274 + $0xa8] sm:$0xff] %vm361, 0.0
          %384 = vst.msk [vmem:[%s274 + $0xb0] sm:$0xff] %vm361, 0.0
          %385 = vst.msk [vmem:[%s274 + $0xb8] sm:$0xff] %vm361, 0.0
          %386 = vst.msk [vmem:[%s274 + $0xc0] sm:$0xff] %vm361, 0.0
          %387 = vst.msk [vmem:[%s274 + $0xc8] sm:$0xff] %vm361, 0.0
          %388 = vst.msk [vmem:[%s274 + $0xd0] sm:$0xff] %vm361, 0.0
          %389 = vst.msk [vmem:[%s274 + $0xd8] sm:$0xff] %vm361, 0.0
          %390 = vst.msk [vmem:[%s274 + $0xe0] sm:$0xff] %vm361, 0.0
          %391 = vst.msk [vmem:[%s274 + $0xe8] sm:$0xff] %vm361, 0.0
          %392 = vst.msk [vmem:[%s274 + $0xf0] sm:$0xff] %vm361, 0.0
          %393 = vst.msk [vmem:[%s274 + $0xf8] sm:$0xff] %vm361, 0.0
        $region40: #{_conv_lstm_forward_impl.3} parent=35 // pred_fallthru
          _
        %v394 = vld [vmem:[%s290] sm:$0xf]
        %v395 = vld [vmem:[%s290 + $0x4] sm:$0xf]
        %v396 = vld [vmem:[%s290 + $0x8] sm:$0x1]
        %v397 = vld [vmem:[%s290 + $0xc] sm:$0xf]
        %v398 = vld [vmem:[%s290 + $0x10] sm:$0xf]
        %v399 = vld [vmem:[%s290 + $0x14] sm:$0x1]
        %v400 = vld [vmem:[%s290 + $0x18] sm:$0xf]
        %v401 = vld [vmem:[%s290 + $0x1c] sm:$0xf]
        %v402 = vld [vmem:[%s290 + $0x20] sm:$0x1]
        %v403 = vld [vmem:[%s290 + $0x24] sm:$0xf]
        %v404 = vld [vmem:[%s290 + $0x28] sm:$0xf]
        %v405 = vld [vmem:[%s290 + $0x2c] sm:$0x1]
        %v406 = vld [vmem:[%s290 + $0x30] sm:$0xf]
        %v407 = vld [vmem:[%s290 + $0x34] sm:$0xf]
        %v408 = vld [vmem:[%s290 + $0x38] sm:$0x1]
        %v409 = vld [vmem:[%s290 + $0x3c] sm:$0xf]
        %v410 = vld [vmem:[%s290 + $0x40] sm:$0xf]
        %v411 = vld [vmem:[%s290 + $0x44] sm:$0x1]
        %v412 = vld [vmem:[%s290 + $0x48] sm:$0xf]
        %v413 = vld [vmem:[%s290 + $0x4c] sm:$0xf]
        %v414 = vld [vmem:[%s290 + $0x50] sm:$0x1]
        %v415 = vld [vmem:[%s290 + $0x54] sm:$0xf]
        %v416 = vld [vmem:[%s290 + $0x58] sm:$0xf]
        %v417 = vld [vmem:[%s290 + $0x5c] sm:$0x1]
        %v418 = vld [vmem:[%s290 + $0x60] sm:$0xf]
        %v419 = vld [vmem:[%s290 + $0x64] sm:$0xf]
        %v420 = vld [vmem:[%s290 + $0x68] sm:$0x1]
        %v421 = vld [vmem:[%s290 + $0x6c] sm:$0xf]
        %v422 = vld [vmem:[%s290 + $0x70] sm:$0xf]
        %v423 = vld [vmem:[%s290 + $0x74] sm:$0x1]
        %v424 = vld [vmem:[%s290 + $0x78] sm:$0xf]
        %v425 = vld [vmem:[%s290 + $0x7c] sm:$0xf]
        %v426 = vld [vmem:[%s290 + $0x80] sm:$0x1]
        %v427 = vld [vmem:[%s290 + $0x84] sm:$0xf]
        %v428 = vld [vmem:[%s290 + $0x88] sm:$0xf]
        %v429 = vld [vmem:[%s290 + $0x8c] sm:$0x1]
        %v430 = vld [vmem:[%s290 + $0x90] sm:$0xf]
        %v431 = vld [vmem:[%s290 + $0x94] sm:$0xf]
        %v432 = vld [vmem:[%s290 + $0x98] sm:$0x1]
        %v433 = vld [vmem:[%s290 + $0x9c] sm:$0xf]
        %v434 = vld [vmem:[%s290 + $0xa0] sm:$0xf]
        %v435 = vld [vmem:[%s290 + $0xa4] sm:$0x1]
        %v436 = vld [vmem:[%s290 + $0xa8] sm:$0xf]
        %v437 = vld [vmem:[%s290 + $0xac] sm:$0xf]
        %v438 = vld [vmem:[%s290 + $0xb0] sm:$0x1]
        %v439 = vld [vmem:[%s290 + $0xb4] sm:$0xf]
        %v440 = vld [vmem:[%s290 + $0xb8] sm:$0xf]
        %v441 = vld [vmem:[%s290 + $0xbc] sm:$0x1]
        %v442 = vld [vmem:[%s290 + $0xc0] sm:$0xf]
        %v443 = vld [vmem:[%s290 + $0xc4] sm:$0xf]
        %v444 = vld [vmem:[%s290 + $0xc8] sm:$0x1]
        %v445 = vld [vmem:[%s290 + $0xcc] sm:$0xf]
        %v446 = vld [vmem:[%s290 + $0xd0] sm:$0xf]
        %v447 = vld [vmem:[%s290 + $0xd4] sm:$0x1]
        %v448 = vld [vmem:[#allocation2] sm:$0xf]
        %v449 = vld [vmem:[#allocation2 + $0x4] sm:$0xf]
        %v450 = vld [vmem:[#allocation2 + $0x8] sm:$0x1]
        %v451 = vld [vmem:[#allocation2 + $0xc] sm:$0xf]
        %v452 = vld [vmem:[#allocation2 + $0x10] sm:$0xf]
        %v453 = vld [vmem:[#allocation2 + $0x14] sm:$0x1]
        %v454 = vld [vmem:[#allocation2 + $0x18] sm:$0xf]
        %v455 = vld [vmem:[#allocation2 + $0x1c] sm:$0xf]
        %v456 = vld [vmem:[#allocation2 + $0x20] sm:$0x1]
        %v457 = vld [vmem:[#allocation2 + $0x24] sm:$0xf]
        %v458 = vld [vmem:[#allocation2 + $0x28] sm:$0xf]
        %v459 = vld [vmem:[#allocation2 + $0x2c] sm:$0x1]
        %v460 = vld [vmem:[#allocation2 + $0x30] sm:$0xf]
        %v461 = vld [vmem:[#allocation2 + $0x34] sm:$0xf]
        %v462 = vld [vmem:[#allocation2 + $0x38] sm:$0x1]
        %v463 = vld [vmem:[#allocation2 + $0x3c] sm:$0xf]
        %v464 = vld [vmem:[#allocation2 + $0x40] sm:$0xf]
        %v465 = vld [vmem:[#allocation2 + $0x44] sm:$0x1]
        %v466 = vld [vmem:[#allocation2 + $0x48] sm:$0xf]
        %v467 = vld [vmem:[#allocation2 + $0x4c] sm:$0xf]
        %v468 = vld [vmem:[#allocation2 + $0x50] sm:$0x1]
        %v469 = vld [vmem:[#allocation2 + $0x54] sm:$0xf]
        %v470 = vld [vmem:[#allocation2 + $0x58] sm:$0xf]
        %v471 = vld [vmem:[#allocation2 + $0x5c] sm:$0x1]
        %v472 = vld [vmem:[#allocation2 + $0x60] sm:$0xf]
        %v473 = vld [vmem:[#allocation2 + $0x64] sm:$0xf]
        %v474 = vld [vmem:[#allocation2 + $0x68] sm:$0x1]
        %v475 = vld [vmem:[#allocation2 + $0x6c] sm:$0xf]
        %v476 = vld [vmem:[#allocation2 + $0x70] sm:$0xf]
        %v477 = vld [vmem:[#allocation2 + $0x74] sm:$0x1]
        %v478 = vld [vmem:[#allocation2 + $0x78] sm:$0xf]
        %v479 = vld [vmem:[#allocation2 + $0x7c] sm:$0xf]
        %v480 = vld [vmem:[#allocation2 + $0x80] sm:$0x1]
        %v481 = vld [vmem:[#allocation2 + $0x84] sm:$0xf]
        %v482 = vld [vmem:[#allocation2 + $0x88] sm:$0xf]
        %v483 = vld [vmem:[#allocation2 + $0x8c] sm:$0x1]
        %v484 = vld [vmem:[#allocation2 + $0x90] sm:$0xf]
        %v485 = vld [vmem:[#allocation2 + $0x94] sm:$0xf]
        %v486 = vld [vmem:[#allocation2 + $0x98] sm:$0x1]
        %v487 = vld [vmem:[#allocation2 + $0x9c] sm:$0xf]
        %v488 = vld [vmem:[#allocation2 + $0xa0] sm:$0xf]
        %v489 = vld [vmem:[#allocation2 + $0xa4] sm:$0x1]
        %v490 = vld [vmem:[#allocation2 + $0xa8] sm:$0xf]
        %v491 = vld [vmem:[#allocation2 + $0xac] sm:$0xf]
        %v492 = vld [vmem:[#allocation2 + $0xb0] sm:$0x1]
        %v493 = vld [vmem:[#allocation2 + $0xb4] sm:$0xf]
        %v494 = vld [vmem:[#allocation2 + $0xb8] sm:$0xf]
        %v495 = vld [vmem:[#allocation2 + $0xbc] sm:$0x1]
        %v496 = vld [vmem:[#allocation2 + $0xc0] sm:$0xf]
        %v497 = vld [vmem:[#allocation2 + $0xc4] sm:$0xf]
        %v498 = vld [vmem:[#allocation2 + $0xc8] sm:$0x1]
        %v499 = vld [vmem:[#allocation2 + $0xcc] sm:$0xf]
        %v500 = vld [vmem:[#allocation2 + $0xd0] sm:$0xf]
        %v501 = vld [vmem:[#allocation2 + $0xd4] sm:$0x1]
        %vm502 = vsmask.f32 3328
        %vm503 = vsmask.f32 7440
        %vm504 = vmor %vm502, %vm503
        %v506 = vshrl.u32 %v394, 16
        %v508 = vrot.slane %v506, 4
        %v509 = vshll.u32 %v394, 16
        %v511 = vrot.slane %v509, 5
        %v512 = vor.u32 %v508, %v511
        %v513 = vrot.slane %v512, 4
        %v515 = vshll.u32 %v395, 16
        %v517 = vrot.slane %v515, 5
        %v518 = vsel %vm504, %v513, %v517
        %v519 = vshrl.u32 %v395, 16
        %v521 = vrot.slane %v519, 4
        %v522 = vor.u32 %v521, %v517
        %v523 = vrot.slane %v522, 4
        %v525 = vshll.u32 %v396, 16
        %v527 = vrot.slane %v525, 5
        %v528 = vsel %vm504, %v523, %v527
        %v530 = vshrl.u32 %v397, 16
        %v532 = vrot.slane %v530, 4
        %v533 = vshll.u32 %v397, 16
        %v535 = vrot.slane %v533, 5
        %v536 = vor.u32 %v532, %v535
        %v537 = vrot.slane %v536, 4
        %v539 = vshll.u32 %v398, 16
        %v541 = vrot.slane %v539, 5
        %v542 = vsel %vm504, %v537, %v541
        %v543 = vshrl.u32 %v398, 16
        %v545 = vrot.slane %v543, 4
        %v546 = vor.u32 %v545, %v541
        %v547 = vrot.slane %v546, 4
        %v549 = vshll.u32 %v399, 16
        %v551 = vrot.slane %v549, 5
        %v552 = vsel %vm504, %v547, %v551
        %v554 = vshrl.u32 %v400, 16
        %v556 = vrot.slane %v554, 4
        %v557 = vshll.u32 %v400, 16
        %v559 = vrot.slane %v557, 5
        %v560 = vor.u32 %v556, %v559
        %v561 = vrot.slane %v560, 4
        %v563 = vshll.u32 %v401, 16
        %v565 = vrot.slane %v563, 5
        %v566 = vsel %vm504, %v561, %v565
        %v567 = vshrl.u32 %v401, 16
        %v569 = vrot.slane %v567, 4
        %v570 = vor.u32 %v569, %v565
        %v571 = vrot.slane %v570, 4
        %v573 = vshll.u32 %v402, 16
        %v575 = vrot.slane %v573, 5
        %v576 = vsel %vm504, %v571, %v575
        %v578 = vshrl.u32 %v403, 16
        %v580 = vrot.slane %v578, 4
        %v581 = vshll.u32 %v403, 16
        %v583 = vrot.slane %v581, 5
        %v584 = vor.u32 %v580, %v583
        %v585 = vrot.slane %v584, 4
        %v587 = vshll.u32 %v404, 16
        %v589 = vrot.slane %v587, 5
        %v590 = vsel %vm504, %v585, %v589
        %v591 = vshrl.u32 %v404, 16
        %v593 = vrot.slane %v591, 4
        %v594 = vor.u32 %v593, %v589
        %v595 = vrot.slane %v594, 4
        %v597 = vshll.u32 %v405, 16
        %v599 = vrot.slane %v597, 5
        %v600 = vsel %vm504, %v595, %v599
        %v602 = vshrl.u32 %v406, 16
        %v604 = vrot.slane %v602, 4
        %v605 = vshll.u32 %v406, 16
        %v607 = vrot.slane %v605, 5
        %v608 = vor.u32 %v604, %v607
        %v609 = vrot.slane %v608, 4
        %v611 = vshll.u32 %v407, 16
        %v613 = vrot.slane %v611, 5
        %v614 = vsel %vm504, %v609, %v613
        %v615 = vshrl.u32 %v407, 16
        %v617 = vrot.slane %v615, 4
        %v618 = vor.u32 %v617, %v613
        %v619 = vrot.slane %v618, 4
        %v621 = vshll.u32 %v408, 16
        %v623 = vrot.slane %v621, 5
        %v624 = vsel %vm504, %v619, %v623
        %v626 = vshrl.u32 %v409, 16
        %v628 = vrot.slane %v626, 4
        %v629 = vshll.u32 %v409, 16
        %v631 = vrot.slane %v629, 5
        %v632 = vor.u32 %v628, %v631
        %v633 = vrot.slane %v632, 4
        %v635 = vshll.u32 %v410, 16
        %v637 = vrot.slane %v635, 5
        %v638 = vsel %vm504, %v633, %v637
        %v639 = vshrl.u32 %v410, 16
        %v641 = vrot.slane %v639, 4
        %v642 = vor.u32 %v641, %v637
        %v643 = vrot.slane %v642, 4
        %v645 = vshll.u32 %v411, 16
        %v647 = vrot.slane %v645, 5
        %v648 = vsel %vm504, %v643, %v647
        %v650 = vshrl.u32 %v412, 16
        %v652 = vrot.slane %v650, 4
        %v653 = vshll.u32 %v412, 16
        %v655 = vrot.slane %v653, 5
        %v656 = vor.u32 %v652, %v655
        %v657 = vrot.slane %v656, 4
        %v659 = vshll.u32 %v413, 16
        %v661 = vrot.slane %v659, 5
        %v662 = vsel %vm504, %v657, %v661
        %v663 = vshrl.u32 %v413, 16
        %v665 = vrot.slane %v663, 4
        %v666 = vor.u32 %v665, %v661
        %v667 = vrot.slane %v666, 4
        %v669 = vshll.u32 %v414, 16
        %v671 = vrot.slane %v669, 5
        %v672 = vsel %vm504, %v667, %v671
        %v674 = vshrl.u32 %v415, 16
        %v676 = vrot.slane %v674, 4
        %v677 = vshll.u32 %v415, 16
        %v679 = vrot.slane %v677, 5
        %v680 = vor.u32 %v676, %v679
        %v681 = vrot.slane %v680, 4
        %v683 = vshll.u32 %v416, 16
        %v685 = vrot.slane %v683, 5
        %v686 = vsel %vm504, %v681, %v685
        %v687 = vshrl.u32 %v416, 16
        %v689 = vrot.slane %v687, 4
        %v690 = vor.u32 %v689, %v685
        %v691 = vrot.slane %v690, 4
        %v693 = vshll.u32 %v417, 16
        %v695 = vrot.slane %v693, 5
        %v696 = vsel %vm504, %v691, %v695
        %v698 = vshrl.u32 %v418, 16
        %v700 = vrot.slane %v698, 4
        %v701 = vshll.u32 %v418, 16
        %v703 = vrot.slane %v701, 5
        %v704 = vor.u32 %v700, %v703
        %v705 = vrot.slane %v704, 4
        %v707 = vshll.u32 %v419, 16
        %v709 = vrot.slane %v707, 5
        %v710 = vsel %vm504, %v705, %v709
        %v711 = vshrl.u32 %v419, 16
        %v713 = vrot.slane %v711, 4
        %v714 = vor.u32 %v713, %v709
        %v715 = vrot.slane %v714, 4
        %v717 = vshll.u32 %v420, 16
        %v719 = vrot.slane %v717, 5
        %v720 = vsel %vm504, %v715, %v719
        %v722 = vshrl.u32 %v421, 16
        %v724 = vrot.slane %v722, 4
        %v725 = vshll.u32 %v421, 16
        %v727 = vrot.slane %v725, 5
        %v728 = vor.u32 %v724, %v727
        %v729 = vrot.slane %v728, 4
        %v731 = vshll.u32 %v422, 16
        %v733 = vrot.slane %v731, 5
        %v734 = vsel %vm504, %v729, %v733
        %v735 = vshrl.u32 %v422, 16
        %v737 = vrot.slane %v735, 4
        %v738 = vor.u32 %v737, %v733
        %v739 = vrot.slane %v738, 4
        %v741 = vshll.u32 %v423, 16
        %v743 = vrot.slane %v741, 5
        %v744 = vsel %vm504, %v739, %v743
        %v746 = vshrl.u32 %v424, 16
        %v748 = vrot.slane %v746, 4
        %v749 = vshll.u32 %v424, 16
        %v751 = vrot.slane %v749, 5
        %v752 = vor.u32 %v748, %v751
        %v753 = vrot.slane %v752, 4
        %v755 = vshll.u32 %v425, 16
        %v757 = vrot.slane %v755, 5
        %v758 = vsel %vm504, %v753, %v757
        %v759 = vshrl.u32 %v425, 16
        %v761 = vrot.slane %v759, 4
        %v762 = vor.u32 %v761, %v757
        %v763 = vrot.slane %v762, 4
        %v765 = vshll.u32 %v426, 16
        %v767 = vrot.slane %v765, 5
        %v768 = vsel %vm504, %v763, %v767
        %v770 = vshrl.u32 %v427, 16
        %v772 = vrot.slane %v770, 4
        %v773 = vshll.u32 %v427, 16
        %v775 = vrot.slane %v773, 5
        %v776 = vor.u32 %v772, %v775
        %v777 = vrot.slane %v776, 4
        %v779 = vshll.u32 %v428, 16
        %v781 = vrot.slane %v779, 5
        %v782 = vsel %vm504, %v777, %v781
        %v783 = vshrl.u32 %v428, 16
        %v785 = vrot.slane %v783, 4
        %v786 = vor.u32 %v785, %v781
        %v787 = vrot.slane %v786, 4
        %v789 = vshll.u32 %v429, 16
        %v791 = vrot.slane %v789, 5
        %v792 = vsel %vm504, %v787, %v791
        %v794 = vshrl.u32 %v430, 16
        %v796 = vrot.slane %v794, 4
        %v797 = vshll.u32 %v430, 16
        %v799 = vrot.slane %v797, 5
        %v800 = vor.u32 %v796, %v799
        %v801 = vrot.slane %v800, 4
        %v803 = vshll.u32 %v431, 16
        %v805 = vrot.slane %v803, 5
        %v806 = vsel %vm504, %v801, %v805
        %v807 = vshrl.u32 %v431, 16
        %v809 = vrot.slane %v807, 4
        %v810 = vor.u32 %v809, %v805
        %v811 = vrot.slane %v810, 4
        %v813 = vshll.u32 %v432, 16
        %v815 = vrot.slane %v813, 5
        %v816 = vsel %vm504, %v811, %v815
        %v818 = vshrl.u32 %v433, 16
        %v820 = vrot.slane %v818, 4
        %v821 = vshll.u32 %v433, 16
        %v823 = vrot.slane %v821, 5
        %v824 = vor.u32 %v820, %v823
        %v825 = vrot.slane %v824, 4
        %v827 = vshll.u32 %v434, 16
        %v829 = vrot.slane %v827, 5
        %v830 = vsel %vm504, %v825, %v829
        %v831 = vshrl.u32 %v434, 16
        %v833 = vrot.slane %v831, 4
        %v834 = vor.u32 %v833, %v829
        %v835 = vrot.slane %v834, 4
        %v837 = vshll.u32 %v435, 16
        %v839 = vrot.slane %v837, 5
        %v840 = vsel %vm504, %v835, %v839
        %v842 = vshrl.u32 %v436, 16
        %v844 = vrot.slane %v842, 4
        %v845 = vshll.u32 %v436, 16
        %v847 = vrot.slane %v845, 5
        %v848 = vor.u32 %v844, %v847
        %v849 = vrot.slane %v848, 4
        %v851 = vshll.u32 %v437, 16
        %v853 = vrot.slane %v851, 5
        %v854 = vsel %vm504, %v849, %v853
        %v855 = vshrl.u32 %v437, 16
        %v857 = vrot.slane %v855, 4
        %v858 = vor.u32 %v857, %v853
        %v859 = vrot.slane %v858, 4
        %v861 = vshll.u32 %v438, 16
        %v863 = vrot.slane %v861, 5
        %v864 = vsel %vm504, %v859, %v863
        %v866 = vshrl.u32 %v439, 16
        %v868 = vrot.slane %v866, 4
        %v869 = vshll.u32 %v439, 16
        %v871 = vrot.slane %v869, 5
        %v872 = vor.u32 %v868, %v871
        %v873 = vrot.slane %v872, 4
        %v875 = vshll.u32 %v440, 16
        %v877 = vrot.slane %v875, 5
        %v878 = vsel %vm504, %v873, %v877
        %v879 = vshrl.u32 %v440, 16
        %v881 = vrot.slane %v879, 4
        %v882 = vor.u32 %v881, %v877
        %v883 = vrot.slane %v882, 4
        %v885 = vshll.u32 %v441, 16
        %v887 = vrot.slane %v885, 5
        %v888 = vsel %vm504, %v883, %v887
        %vm937 = vcmask 1042432
        %vm938 = vcmask 1046532
        %vm939 = vmor %vm937, %vm938
        %v940 = vrot.slane %v394, 5
        %v941 = vrot.slane %v940, 4
        %v942 = vrot.slane %v395, 5
        %v943 = vsel %vm939, %v941, %v942
        %v944 = vrot.slane %v942, 4
        %v945 = vrot.slane %v396, 5
        %v946 = vsel %vm939, %v944, %v945
        %v947 = vrot.slane %v397, 5
        %v948 = vrot.slane %v947, 4
        %v949 = vrot.slane %v398, 5
        %v950 = vsel %vm939, %v948, %v949
        %v951 = vrot.slane %v949, 4
        %v952 = vrot.slane %v399, 5
        %v953 = vsel %vm939, %v951, %v952
        %v954 = vrot.slane %v400, 5
        %v955 = vrot.slane %v954, 4
        %v956 = vrot.slane %v401, 5
        %v957 = vsel %vm939, %v955, %v956
        %v958 = vrot.slane %v956, 4
        %v959 = vrot.slane %v402, 5
        %v960 = vsel %vm939, %v958, %v959
        %v961 = vrot.slane %v403, 5
        %v962 = vrot.slane %v961, 4
        %v963 = vrot.slane %v404, 5
        %v964 = vsel %vm939, %v962, %v963
        %v965 = vrot.slane %v963, 4
        %v966 = vrot.slane %v405, 5
        %v967 = vsel %vm939, %v965, %v966
        %v968 = vrot.slane %v406, 5
        %v969 = vrot.slane %v968, 4
        %v970 = vrot.slane %v407, 5
        %v971 = vsel %vm939, %v969, %v970
        %v972 = vrot.slane %v970, 4
        %v973 = vrot.slane %v408, 5
        %v974 = vsel %vm939, %v972, %v973
        %v975 = vrot.slane %v409, 5
        %v976 = vrot.slane %v975, 4
        %v977 = vrot.slane %v410, 5
        %v978 = vsel %vm939, %v976, %v977
        %v979 = vrot.slane %v977, 4
        %v980 = vrot.slane %v411, 5
        %v981 = vsel %vm939, %v979, %v980
        %v982 = vrot.slane %v412, 5
        %v983 = vrot.slane %v982, 4
        %v984 = vrot.slane %v413, 5
        %v985 = vsel %vm939, %v983, %v984
        %v986 = vrot.slane %v984, 4
        %v987 = vrot.slane %v414, 5
        %v988 = vsel %vm939, %v986, %v987
        %v989 = vrot.slane %v415, 5
        %v990 = vrot.slane %v989, 4
        %v991 = vrot.slane %v416, 5
        %v992 = vsel %vm939, %v990, %v991
        %v993 = vrot.slane %v991, 4
        %v994 = vrot.slane %v417, 5
        %v995 = vsel %vm939, %v993, %v994
        %v996 = vrot.slane %v418, 5
        %v997 = vrot.slane %v996, 4
        %v998 = vrot.slane %v419, 5
        %v999 = vsel %vm939, %v997, %v998
        %v1000 = vrot.slane %v998, 4
        %v1001 = vrot.slane %v420, 5
        %v1002 = vsel %vm939, %v1000, %v1001
        %v1003 = vrot.slane %v421, 5
        %v1004 = vrot.slane %v1003, 4
        %v1005 = vrot.slane %v422, 5
        %v1006 = vsel %vm939, %v1004, %v1005
        %v1007 = vrot.slane %v1005, 4
        %v1008 = vrot.slane %v423, 5
        %v1009 = vsel %vm939, %v1007, %v1008
        %v1010 = vrot.slane %v424, 5
        %v1011 = vrot.slane %v1010, 4
        %v1012 = vrot.slane %v425, 5
        %v1013 = vsel %vm939, %v1011, %v1012
        %v1014 = vrot.slane %v1012, 4
        %v1015 = vrot.slane %v426, 5
        %v1016 = vsel %vm939, %v1014, %v1015
        %v1017 = vrot.slane %v427, 5
        %v1018 = vrot.slane %v1017, 4
        %v1019 = vrot.slane %v428, 5
        %v1020 = vsel %vm939, %v1018, %v1019
        %v1021 = vrot.slane %v1019, 4
        %v1022 = vrot.slane %v429, 5
        %v1023 = vsel %vm939, %v1021, %v1022
        %v1024 = vrot.slane %v430, 5
        %v1025 = vrot.slane %v1024, 4
        %v1026 = vrot.slane %v431, 5
        %v1027 = vsel %vm939, %v1025, %v1026
        %v1028 = vrot.slane %v1026, 4
        %v1029 = vrot.slane %v432, 5
        %v1030 = vsel %vm939, %v1028, %v1029
        %v1031 = vrot.slane %v433, 5
        %v1032 = vrot.slane %v1031, 4
        %v1033 = vrot.slane %v434, 5
        %v1034 = vsel %vm939, %v1032, %v1033
        %v1035 = vrot.slane %v1033, 4
        %v1036 = vrot.slane %v435, 5
        %v1037 = vsel %vm939, %v1035, %v1036
        %v1038 = vrot.slane %v436, 5
        %v1039 = vrot.slane %v1038, 4
        %v1040 = vrot.slane %v437, 5
        %v1041 = vsel %vm939, %v1039, %v1040
        %v1042 = vrot.slane %v1040, 4
        %v1043 = vrot.slane %v438, 5
        %v1044 = vsel %vm939, %v1042, %v1043
        %v1045 = vrot.slane %v439, 5
        %v1046 = vrot.slane %v1045, 4
        %v1047 = vrot.slane %v440, 5
        %v1048 = vsel %vm939, %v1046, %v1047
        %v1049 = vrot.slane %v1047, 4
        %v1050 = vrot.slane %v441, 5
        %v1051 = vsel %vm939, %v1049, %v1050
        %v1053 = vshrl.u32 %v442, 16
        %v1055 = vrot.slane %v1053, 4
        %v1056 = vshll.u32 %v442, 16
        %v1058 = vrot.slane %v1056, 5
        %v1059 = vor.u32 %v1055, %v1058
        %v1060 = vrot.slane %v1059, 4
        %v1062 = vshll.u32 %v443, 16
        %v1064 = vrot.slane %v1062, 5
        %v1065 = vsel %vm504, %v1060, %v1064
        %v1066 = vshrl.u32 %v443, 16
        %v1068 = vrot.slane %v1066, 4
        %v1069 = vor.u32 %v1068, %v1064
        %v1070 = vrot.slane %v1069, 4
        %v1072 = vshll.u32 %v444, 16
        %v1074 = vrot.slane %v1072, 5
        %v1075 = vsel %vm504, %v1070, %v1074
        %v1079 = vrot.slane %v442, 5
        %v1080 = vrot.slane %v1079, 4
        %v1081 = vrot.slane %v443, 5
        %v1082 = vsel %vm939, %v1080, %v1081
        %v1083 = vrot.slane %v1081, 4
        %v1084 = vrot.slane %v444, 5
        %v1085 = vsel %vm939, %v1083, %v1084
        %v1087 = vshrl.u32 %v445, 16
        %v1089 = vrot.slane %v1087, 4
        %v1090 = vshll.u32 %v445, 16
        %v1092 = vrot.slane %v1090, 5
        %v1093 = vor.u32 %v1089, %v1092
        %v1094 = vrot.slane %v1093, 4
        %v1096 = vshll.u32 %v446, 16
        %v1098 = vrot.slane %v1096, 5
        %v1099 = vsel %vm504, %v1094, %v1098
        %v1100 = vshrl.u32 %v446, 16
        %v1102 = vrot.slane %v1100, 4
        %v1103 = vor.u32 %v1102, %v1098
        %v1104 = vrot.slane %v1103, 4
        %v1106 = vshll.u32 %v447, 16
        %v1108 = vrot.slane %v1106, 5
        %v1109 = vsel %vm504, %v1104, %v1108
        %v1113 = vrot.slane %v445, 5
        %v1114 = vrot.slane %v1113, 4
        %v1115 = vrot.slane %v446, 5
        %v1116 = vsel %vm939, %v1114, %v1115
        %v1117 = vrot.slane %v1115, 4
        %v1118 = vrot.slane %v447, 5
        %v1119 = vsel %vm939, %v1117, %v1118
        %v1121 = vshrl.u32 %v448, 16
        %v1123 = vrot.slane %v1121, 4
        %v1124 = vshll.u32 %v448, 16
        %v1126 = vrot.slane %v1124, 5
        %v1127 = vor.u32 %v1123, %v1126
        %v1128 = vrot.slane %v1127, 4
        %v1130 = vshll.u32 %v449, 16
        %v1132 = vrot.slane %v1130, 5
        %v1133 = vsel %vm504, %v1128, %v1132
        %v1134 = vshrl.u32 %v449, 16
        %v1136 = vrot.slane %v1134, 4
        %v1137 = vor.u32 %v1136, %v1132
        %v1138 = vrot.slane %v1137, 4
        %v1140 = vshll.u32 %v450, 16
        %v1142 = vrot.slane %v1140, 5
        %v1143 = vsel %vm504, %v1138, %v1142
        %v1145 = vshrl.u32 %v451, 16
        %v1147 = vrot.slane %v1145, 4
        %v1148 = vshll.u32 %v451, 16
        %v1150 = vrot.slane %v1148, 5
        %v1151 = vor.u32 %v1147, %v1150
        %v1152 = vrot.slane %v1151, 4
        %v1154 = vshll.u32 %v452, 16
        %v1156 = vrot.slane %v1154, 5
        %v1157 = vsel %vm504, %v1152, %v1156
        %v1158 = vshrl.u32 %v452, 16
        %v1160 = vrot.slane %v1158, 4
        %v1161 = vor.u32 %v1160, %v1156
        %v1162 = vrot.slane %v1161, 4
        %v1164 = vshll.u32 %v453, 16
        %v1166 = vrot.slane %v1164, 5
        %v1167 = vsel %vm504, %v1162, %v1166
        %v1169 = vshrl.u32 %v454, 16
        %v1171 = vrot.slane %v1169, 4
        %v1172 = vshll.u32 %v454, 16
        %v1174 = vrot.slane %v1172, 5
        %v1175 = vor.u32 %v1171, %v1174
        %v1176 = vrot.slane %v1175, 4
        %v1178 = vshll.u32 %v455, 16
        %v1180 = vrot.slane %v1178, 5
        %v1181 = vsel %vm504, %v1176, %v1180
        %v1182 = vshrl.u32 %v455, 16
        %v1184 = vrot.slane %v1182, 4
        %v1185 = vor.u32 %v1184, %v1180
        %v1186 = vrot.slane %v1185, 4
        %v1188 = vshll.u32 %v456, 16
        %v1190 = vrot.slane %v1188, 5
        %v1191 = vsel %vm504, %v1186, %v1190
        %v1193 = vshrl.u32 %v457, 16
        %v1195 = vrot.slane %v1193, 4
        %v1196 = vshll.u32 %v457, 16
        %v1198 = vrot.slane %v1196, 5
        %v1199 = vor.u32 %v1195, %v1198
        %v1200 = vrot.slane %v1199, 4
        %v1202 = vshll.u32 %v458, 16
        %v1204 = vrot.slane %v1202, 5
        %v1205 = vsel %vm504, %v1200, %v1204
        %v1206 = vshrl.u32 %v458, 16
        %v1208 = vrot.slane %v1206, 4
        %v1209 = vor.u32 %v1208, %v1204
        %v1210 = vrot.slane %v1209, 4
        %v1212 = vshll.u32 %v459, 16
        %v1214 = vrot.slane %v1212, 5
        %v1215 = vsel %vm504, %v1210, %v1214
        %v1217 = vshrl.u32 %v460, 16
        %v1219 = vrot.slane %v1217, 4
        %v1220 = vshll.u32 %v460, 16
        %v1222 = vrot.slane %v1220, 5
        %v1223 = vor.u32 %v1219, %v1222
        %v1224 = vrot.slane %v1223, 4
        %v1226 = vshll.u32 %v461, 16
        %v1228 = vrot.slane %v1226, 5
        %v1229 = vsel %vm504, %v1224, %v1228
        %v1230 = vshrl.u32 %v461, 16
        %v1232 = vrot.slane %v1230, 4
        %v1233 = vor.u32 %v1232, %v1228
        %v1234 = vrot.slane %v1233, 4
        %v1236 = vshll.u32 %v462, 16
        %v1238 = vrot.slane %v1236, 5
        %v1239 = vsel %vm504, %v1234, %v1238
        %v1241 = vshrl.u32 %v463, 16
        %v1243 = vrot.slane %v1241, 4
        %v1244 = vshll.u32 %v463, 16
        %v1246 = vrot.slane %v1244, 5
        %v1247 = vor.u32 %v1243, %v1246
        %v1248 = vrot.slane %v1247, 4
        %v1250 = vshll.u32 %v464, 16
        %v1252 = vrot.slane %v1250, 5
        %v1253 = vsel %vm504, %v1248, %v1252
        %v1254 = vshrl.u32 %v464, 16
        %v1256 = vrot.slane %v1254, 4
        %v1257 = vor.u32 %v1256, %v1252
        %v1258 = vrot.slane %v1257, 4
        %v1260 = vshll.u32 %v465, 16
        %v1262 = vrot.slane %v1260, 5
        %v1263 = vsel %vm504, %v1258, %v1262
        %v1265 = vshrl.u32 %v466, 16
        %v1267 = vrot.slane %v1265, 4
        %v1268 = vshll.u32 %v466, 16
        %v1270 = vrot.slane %v1268, 5
        %v1271 = vor.u32 %v1267, %v1270
        %v1272 = vrot.slane %v1271, 4
        %v1274 = vshll.u32 %v467, 16
        %v1276 = vrot.slane %v1274, 5
        %v1277 = vsel %vm504, %v1272, %v1276
        %v1278 = vshrl.u32 %v467, 16
        %v1280 = vrot.slane %v1278, 4
        %v1281 = vor.u32 %v1280, %v1276
        %v1282 = vrot.slane %v1281, 4
        %v1284 = vshll.u32 %v468, 16
        %v1286 = vrot.slane %v1284, 5
        %v1287 = vsel %vm504, %v1282, %v1286
        %v1289 = vshrl.u32 %v469, 16
        %v1291 = vrot.slane %v1289, 4
        %v1292 = vshll.u32 %v469, 16
        %v1294 = vrot.slane %v1292, 5
        %v1295 = vor.u32 %v1291, %v1294
        %v1296 = vrot.slane %v1295, 4
        %v1298 = vshll.u32 %v470, 16
        %v1300 = vrot.slane %v1298, 5
        %v1301 = vsel %vm504, %v1296, %v1300
        %v1302 = vshrl.u32 %v470, 16
        %v1304 = vrot.slane %v1302, 4
        %v1305 = vor.u32 %v1304, %v1300
        %v1306 = vrot.slane %v1305, 4
        %v1308 = vshll.u32 %v471, 16
        %v1310 = vrot.slane %v1308, 5
        %v1311 = vsel %vm504, %v1306, %v1310
        %v1313 = vshrl.u32 %v472, 16
        %v1315 = vrot.slane %v1313, 4
        %v1316 = vshll.u32 %v472, 16
        %v1318 = vrot.slane %v1316, 5
        %v1319 = vor.u32 %v1315, %v1318
        %v1320 = vrot.slane %v1319, 4
        %v1322 = vshll.u32 %v473, 16
        %v1324 = vrot.slane %v1322, 5
        %v1325 = vsel %vm504, %v1320, %v1324
        %v1326 = vshrl.u32 %v473, 16
        %v1328 = vrot.slane %v1326, 4
        %v1329 = vor.u32 %v1328, %v1324
        %v1330 = vrot.slane %v1329, 4
        %v1332 = vshll.u32 %v474, 16
        %v1334 = vrot.slane %v1332, 5
        %v1335 = vsel %vm504, %v1330, %v1334
        %v1337 = vshrl.u32 %v475, 16
        %v1339 = vrot.slane %v1337, 4
        %v1340 = vshll.u32 %v475, 16
        %v1342 = vrot.slane %v1340, 5
        %v1343 = vor.u32 %v1339, %v1342
        %v1344 = vrot.slane %v1343, 4
        %v1346 = vshll.u32 %v476, 16
        %v1348 = vrot.slane %v1346, 5
        %v1349 = vsel %vm504, %v1344, %v1348
        %v1350 = vshrl.u32 %v476, 16
        %v1352 = vrot.slane %v1350, 4
        %v1353 = vor.u32 %v1352, %v1348
        %v1354 = vrot.slane %v1353, 4
        %v1356 = vshll.u32 %v477, 16
        %v1358 = vrot.slane %v1356, 5
        %v1359 = vsel %vm504, %v1354, %v1358
        %v1361 = vshrl.u32 %v478, 16
        %v1363 = vrot.slane %v1361, 4
        %v1364 = vshll.u32 %v478, 16
        %v1366 = vrot.slane %v1364, 5
        %v1367 = vor.u32 %v1363, %v1366
        %v1368 = vrot.slane %v1367, 4
        %v1370 = vshll.u32 %v479, 16
        %v1372 = vrot.slane %v1370, 5
        %v1373 = vsel %vm504, %v1368, %v1372
        %v1374 = vshrl.u32 %v479, 16
        %v1376 = vrot.slane %v1374, 4
        %v1377 = vor.u32 %v1376, %v1372
        %v1378 = vrot.slane %v1377, 4
        %v1380 = vshll.u32 %v480, 16
        %v1382 = vrot.slane %v1380, 5
        %v1383 = vsel %vm504, %v1378, %v1382
        %v1385 = vshrl.u32 %v481, 16
        %v1387 = vrot.slane %v1385, 4
        %v1388 = vshll.u32 %v481, 16
        %v1390 = vrot.slane %v1388, 5
        %v1391 = vor.u32 %v1387, %v1390
        %v1392 = vrot.slane %v1391, 4
        %v1394 = vshll.u32 %v482, 16
        %v1396 = vrot.slane %v1394, 5
        %v1397 = vsel %vm504, %v1392, %v1396
        %v1398 = vshrl.u32 %v482, 16
        %v1400 = vrot.slane %v1398, 4
        %v1401 = vor.u32 %v1400, %v1396
        %v1402 = vrot.slane %v1401, 4
        %v1404 = vshll.u32 %v483, 16
        %v1406 = vrot.slane %v1404, 5
        %v1407 = vsel %vm504, %v1402, %v1406
        %v1409 = vshrl.u32 %v484, 16
        %v1411 = vrot.slane %v1409, 4
        %v1412 = vshll.u32 %v484, 16
        %v1414 = vrot.slane %v1412, 5
        %v1415 = vor.u32 %v1411, %v1414
        %v1416 = vrot.slane %v1415, 4
        %v1418 = vshll.u32 %v485, 16
        %v1420 = vrot.slane %v1418, 5
        %v1421 = vsel %vm504, %v1416, %v1420
        %v1422 = vshrl.u32 %v485, 16
        %v1424 = vrot.slane %v1422, 4
        %v1425 = vor.u32 %v1424, %v1420
        %v1426 = vrot.slane %v1425, 4
        %v1428 = vshll.u32 %v486, 16
        %v1430 = vrot.slane %v1428, 5
        %v1431 = vsel %vm504, %v1426, %v1430
        %v1433 = vshrl.u32 %v487, 16
        %v1435 = vrot.slane %v1433, 4
        %v1436 = vshll.u32 %v487, 16
        %v1438 = vrot.slane %v1436, 5
        %v1439 = vor.u32 %v1435, %v1438
        %v1440 = vrot.slane %v1439, 4
        %v1442 = vshll.u32 %v488, 16
        %v1444 = vrot.slane %v1442, 5
        %v1445 = vsel %vm504, %v1440, %v1444
        %v1446 = vshrl.u32 %v488, 16
        %v1448 = vrot.slane %v1446, 4
        %v1449 = vor.u32 %v1448, %v1444
        %v1450 = vrot.slane %v1449, 4
        %v1452 = vshll.u32 %v489, 16
        %v1454 = vrot.slane %v1452, 5
        %v1455 = vsel %vm504, %v1450, %v1454
        %v1457 = vshrl.u32 %v490, 16
        %v1459 = vrot.slane %v1457, 4
        %v1460 = vshll.u32 %v490, 16
        %v1462 = vrot.slane %v1460, 5
        %v1463 = vor.u32 %v1459, %v1462
        %v1464 = vrot.slane %v1463, 4
        %v1466 = vshll.u32 %v491, 16
        %v1468 = vrot.slane %v1466, 5
        %v1469 = vsel %vm504, %v1464, %v1468
        %v1470 = vshrl.u32 %v491, 16
        %v1472 = vrot.slane %v1470, 4
        %v1473 = vor.u32 %v1472, %v1468
        %v1474 = vrot.slane %v1473, 4
        %v1476 = vshll.u32 %v492, 16
        %v1478 = vrot.slane %v1476, 5
        %v1479 = vsel %vm504, %v1474, %v1478
        %v1481 = vshrl.u32 %v493, 16
        %v1483 = vrot.slane %v1481, 4
        %v1484 = vshll.u32 %v493, 16
        %v1486 = vrot.slane %v1484, 5
        %v1487 = vor.u32 %v1483, %v1486
        %v1488 = vrot.slane %v1487, 4
        %v1490 = vshll.u32 %v494, 16
        %v1492 = vrot.slane %v1490, 5
        %v1493 = vsel %vm504, %v1488, %v1492
        %v1494 = vshrl.u32 %v494, 16
        %v1496 = vrot.slane %v1494, 4
        %v1497 = vor.u32 %v1496, %v1492
        %v1498 = vrot.slane %v1497, 4
        %v1500 = vshll.u32 %v495, 16
        %v1502 = vrot.slane %v1500, 5
        %v1503 = vsel %vm504, %v1498, %v1502
        %v1552 = vrot.slane %v448, 5
        %v1553 = vrot.slane %v1552, 4
        %v1554 = vrot.slane %v449, 5
        %v1555 = vsel %vm939, %v1553, %v1554
        %v1556 = vrot.slane %v1554, 4
        %v1557 = vrot.slane %v450, 5
        %v1558 = vsel %vm939, %v1556, %v1557
        %v1559 = vrot.slane %v451, 5
        %v1560 = vrot.slane %v1559, 4
        %v1561 = vrot.slane %v452, 5
        %v1562 = vsel %vm939, %v1560, %v1561
        %v1563 = vrot.slane %v1561, 4
        %v1564 = vrot.slane %v453, 5
        %v1565 = vsel %vm939, %v1563, %v1564
        %v1566 = vrot.slane %v454, 5
        %v1567 = vrot.slane %v1566, 4
        %v1568 = vrot.slane %v455, 5
        %v1569 = vsel %vm939, %v1567, %v1568
        %v1570 = vrot.slane %v1568, 4
        %v1571 = vrot.slane %v456, 5
        %v1572 = vsel %vm939, %v1570, %v1571
        %v1573 = vrot.slane %v457, 5
        %v1574 = vrot.slane %v1573, 4
        %v1575 = vrot.slane %v458, 5
        %v1576 = vsel %vm939, %v1574, %v1575
        %v1577 = vrot.slane %v1575, 4
        %v1578 = vrot.slane %v459, 5
        %v1579 = vsel %vm939, %v1577, %v1578
        %v1580 = vrot.slane %v460, 5
        %v1581 = vrot.slane %v1580, 4
        %v1582 = vrot.slane %v461, 5
        %v1583 = vsel %vm939, %v1581, %v1582
        %v1584 = vrot.slane %v1582, 4
        %v1585 = vrot.slane %v462, 5
        %v1586 = vsel %vm939, %v1584, %v1585
        %v1587 = vrot.slane %v463, 5
        %v1588 = vrot.slane %v1587, 4
        %v1589 = vrot.slane %v464, 5
        %v1590 = vsel %vm939, %v1588, %v1589
        %v1591 = vrot.slane %v1589, 4
        %v1592 = vrot.slane %v465, 5
        %v1593 = vsel %vm939, %v1591, %v1592
        %v1594 = vrot.slane %v466, 5
        %v1595 = vrot.slane %v1594, 4
        %v1596 = vrot.slane %v467, 5
        %v1597 = vsel %vm939, %v1595, %v1596
        %v1598 = vrot.slane %v1596, 4
        %v1599 = vrot.slane %v468, 5
        %v1600 = vsel %vm939, %v1598, %v1599
        %v1601 = vrot.slane %v469, 5
        %v1602 = vrot.slane %v1601, 4
        %v1603 = vrot.slane %v470, 5
        %v1604 = vsel %vm939, %v1602, %v1603
        %v1605 = vrot.slane %v1603, 4
        %v1606 = vrot.slane %v471, 5
        %v1607 = vsel %vm939, %v1605, %v1606
        %v1608 = vrot.slane %v472, 5
        %v1609 = vrot.slane %v1608, 4
        %v1610 = vrot.slane %v473, 5
        %v1611 = vsel %vm939, %v1609, %v1610
        %v1612 = vrot.slane %v1610, 4
        %v1613 = vrot.slane %v474, 5
        %v1614 = vsel %vm939, %v1612, %v1613
        %v1615 = vrot.slane %v475, 5
        %v1616 = vrot.slane %v1615, 4
        %v1617 = vrot.slane %v476, 5
        %v1618 = vsel %vm939, %v1616, %v1617
        %v1619 = vrot.slane %v1617, 4
        %v1620 = vrot.slane %v477, 5
        %v1621 = vsel %vm939, %v1619, %v1620
        %v1622 = vrot.slane %v478, 5
        %v1623 = vrot.slane %v1622, 4
        %v1624 = vrot.slane %v479, 5
        %v1625 = vsel %vm939, %v1623, %v1624
        %v1626 = vrot.slane %v1624, 4
        %v1627 = vrot.slane %v480, 5
        %v1628 = vsel %vm939, %v1626, %v1627
        %v1629 = vrot.slane %v481, 5
        %v1630 = vrot.slane %v1629, 4
        %v1631 = vrot.slane %v482, 5
        %v1632 = vsel %vm939, %v1630, %v1631
        %v1633 = vrot.slane %v1631, 4
        %v1634 = vrot.slane %v483, 5
        %v1635 = vsel %vm939, %v1633, %v1634
        %v1636 = vrot.slane %v484, 5
        %v1637 = vrot.slane %v1636, 4
        %v1638 = vrot.slane %v485, 5
        %v1639 = vsel %vm939, %v1637, %v1638
        %v1640 = vrot.slane %v1638, 4
        %v1641 = vrot.slane %v486, 5
        %v1642 = vsel %vm939, %v1640, %v1641
        %v1643 = vrot.slane %v487, 5
        %v1644 = vrot.slane %v1643, 4
        %v1645 = vrot.slane %v488, 5
        %v1646 = vsel %vm939, %v1644, %v1645
        %v1647 = vrot.slane %v1645, 4
        %v1648 = vrot.slane %v489, 5
        %v1649 = vsel %vm939, %v1647, %v1648
        %v1650 = vrot.slane %v490, 5
        %v1651 = vrot.slane %v1650, 4
        %v1652 = vrot.slane %v491, 5
        %v1653 = vsel %vm939, %v1651, %v1652
        %v1654 = vrot.slane %v1652, 4
        %v1655 = vrot.slane %v492, 5
        %v1656 = vsel %vm939, %v1654, %v1655
        %v1657 = vrot.slane %v493, 5
        %v1658 = vrot.slane %v1657, 4
        %v1659 = vrot.slane %v494, 5
        %v1660 = vsel %vm939, %v1658, %v1659
        %v1661 = vrot.slane %v1659, 4
        %v1662 = vrot.slane %v495, 5
        %v1663 = vsel %vm939, %v1661, %v1662
        %v1665 = vshrl.u32 %v496, 16
        %v1667 = vrot.slane %v1665, 4
        %v1668 = vshll.u32 %v496, 16
        %v1670 = vrot.slane %v1668, 5
        %v1671 = vor.u32 %v1667, %v1670
        %v1672 = vrot.slane %v1671, 4
        %v1674 = vshll.u32 %v497, 16
        %v1676 = vrot.slane %v1674, 5
        %v1677 = vsel %vm504, %v1672, %v1676
        %v1678 = vshrl.u32 %v497, 16
        %v1680 = vrot.slane %v1678, 4
        %v1681 = vor.u32 %v1680, %v1676
        %v1682 = vrot.slane %v1681, 4
        %v1684 = vshll.u32 %v498, 16
        %v1686 = vrot.slane %v1684, 5
        %v1687 = vsel %vm504, %v1682, %v1686
        %v1691 = vrot.slane %v496, 5
        %v1692 = vrot.slane %v1691, 4
        %v1693 = vrot.slane %v497, 5
        %v1694 = vsel %vm939, %v1692, %v1693
        %v1695 = vrot.slane %v1693, 4
        %v1696 = vrot.slane %v498, 5
        %v1697 = vsel %vm939, %v1695, %v1696
        %v1699 = vshrl.u32 %v499, 16
        %v1701 = vrot.slane %v1699, 4
        %v1702 = vshll.u32 %v499, 16
        %v1704 = vrot.slane %v1702, 5
        %v1705 = vor.u32 %v1701, %v1704
        %v1706 = vrot.slane %v1705, 4
        %v1708 = vshll.u32 %v500, 16
        %v1710 = vrot.slane %v1708, 5
        %v1711 = vsel %vm504, %v1706, %v1710
        %v1712 = vshrl.u32 %v500, 16
        %v1714 = vrot.slane %v1712, 4
        %v1715 = vor.u32 %v1714, %v1710
        %v1716 = vrot.slane %v1715, 4
        %v1718 = vshll.u32 %v501, 16
        %v1720 = vrot.slane %v1718, 5
        %v1721 = vsel %vm504, %v1716, %v1720
        %v1725 = vrot.slane %v499, 5
        %v1726 = vrot.slane %v1725, 4
        %v1727 = vrot.slane %v500, 5
        %v1728 = vsel %vm939, %v1726, %v1727
        %v1729 = vrot.slane %v1727, 4
        %v1730 = vrot.slane %v501, 5
        %v1731 = vsel %vm939, %v1729, %v1730
        %v1732 = vunpack.c.l.b16 %v394
        %v1733 = vunpack.c.l.b16 %v395
        %v1734 = vunpack.c.l.b16 %v397
        %v1735 = vunpack.c.l.b16 %v398
        %v1736 = vunpack.c.l.b16 %v400
        %v1737 = vunpack.c.l.b16 %v401
        %v1738 = vunpack.c.l.b16 %v403
        %v1739 = vunpack.c.l.b16 %v404
        %v1740 = vunpack.c.l.b16 %v406
        %v1741 = vunpack.c.l.b16 %v407
        %v1742 = vunpack.c.l.b16 %v409
        %v1743 = vunpack.c.l.b16 %v410
        %v1744 = vunpack.c.l.b16 %v412
        %v1745 = vunpack.c.l.b16 %v413
        %v1746 = vunpack.c.l.b16 %v415
        %v1747 = vunpack.c.l.b16 %v416
        %v1748 = vunpack.c.l.b16 %v418
        %v1749 = vunpack.c.l.b16 %v419
        %v1750 = vunpack.c.l.b16 %v421
        %v1751 = vunpack.c.l.b16 %v422
        %v1752 = vunpack.c.l.b16 %v424
        %v1753 = vunpack.c.l.b16 %v425
        %v1754 = vunpack.c.l.b16 %v427
        %v1755 = vunpack.c.l.b16 %v428
        %v1756 = vunpack.c.l.b16 %v430
        %v1757 = vunpack.c.l.b16 %v431
        %v1758 = vunpack.c.l.b16 %v433
        %v1759 = vunpack.c.l.b16 %v434
        %v1760 = vunpack.c.l.b16 %v436
        %v1761 = vunpack.c.l.b16 %v437
        %v1762 = vunpack.c.l.b16 %v439
        %v1763 = vunpack.c.l.b16 %v440
        %v1764 = vpack.c.b16 %v1733, %v1732
        %v1765 = vpack.c.b16 %v1735, %v1734
        %v1766 = vpack.c.b16 %v1737, %v1736
        %v1767 = vpack.c.b16 %v1739, %v1738
        %v1768 = vpack.c.b16 %v1741, %v1740
        %v1769 = vpack.c.b16 %v1743, %v1742
        %v1770 = vpack.c.b16 %v1745, %v1744
        %v1771 = vpack.c.b16 %v1747, %v1746
        %v1772 = vpack.c.b16 %v1749, %v1748
        %v1773 = vpack.c.b16 %v1751, %v1750
        %v1774 = vpack.c.b16 %v1753, %v1752
        %v1775 = vpack.c.b16 %v1755, %v1754
        %v1776 = vpack.c.b16 %v1757, %v1756
        %v1777 = vpack.c.b16 %v1759, %v1758
        %v1778 = vpack.c.b16 %v1761, %v1760
        %v1779 = vpack.c.b16 %v1763, %v1762
        %v1780 = vunpack.c.l.b16 %v518
        %v1781 = vunpack.c.l.b16 %v528
        %v1782 = vunpack.c.l.b16 %v542
        %v1783 = vunpack.c.l.b16 %v552
        %v1784 = vunpack.c.l.b16 %v566
        %v1785 = vunpack.c.l.b16 %v576
        %v1786 = vunpack.c.l.b16 %v590
        %v1787 = vunpack.c.l.b16 %v600
        %v1788 = vunpack.c.l.b16 %v614
        %v1789 = vunpack.c.l.b16 %v624
        %v1790 = vunpack.c.l.b16 %v638
        %v1791 = vunpack.c.l.b16 %v648
        %v1792 = vunpack.c.l.b16 %v662
        %v1793 = vunpack.c.l.b16 %v672
        %v1794 = vunpack.c.l.b16 %v686
        %v1795 = vunpack.c.l.b16 %v696
        %v1796 = vunpack.c.l.b16 %v710
        %v1797 = vunpack.c.l.b16 %v720
        %v1798 = vunpack.c.l.b16 %v734
        %v1799 = vunpack.c.l.b16 %v744
        %v1800 = vunpack.c.l.b16 %v758
        %v1801 = vunpack.c.l.b16 %v768
        %v1802 = vunpack.c.l.b16 %v782
        %v1803 = vunpack.c.l.b16 %v792
        %v1804 = vunpack.c.l.b16 %v806
        %v1805 = vunpack.c.l.b16 %v816
        %v1806 = vunpack.c.l.b16 %v830
        %v1807 = vunpack.c.l.b16 %v840
        %v1808 = vunpack.c.l.b16 %v854
        %v1809 = vunpack.c.l.b16 %v864
        %v1810 = vunpack.c.l.b16 %v878
        %v1811 = vunpack.c.l.b16 %v888
        %v1812 = vpack.c.b16 %v1781, %v1780
        %v1813 = vpack.c.b16 %v1783, %v1782
        %v1814 = vpack.c.b16 %v1785, %v1784
        %v1815 = vpack.c.b16 %v1787, %v1786
        %v1816 = vpack.c.b16 %v1789, %v1788
        %v1817 = vpack.c.b16 %v1791, %v1790
        %v1818 = vpack.c.b16 %v1793, %v1792
        %v1819 = vpack.c.b16 %v1795, %v1794
        %v1820 = vpack.c.b16 %v1797, %v1796
        %v1821 = vpack.c.b16 %v1799, %v1798
        %v1822 = vpack.c.b16 %v1801, %v1800
        %v1823 = vpack.c.b16 %v1803, %v1802
        %v1824 = vpack.c.b16 %v1805, %v1804
        %v1825 = vpack.c.b16 %v1807, %v1806
        %v1826 = vpack.c.b16 %v1809, %v1808
        %v1827 = vpack.c.b16 %v1811, %v1810
        %1828 = vrot.lane.b32.xlu0 %v1812, 32
        %v1829 = vpop.permute.xlu0 %1828
        %1830 = vrot.lane.b32.xlu0 %v1813, 32
        %v1831 = vpop.permute.xlu0 %1830
        %1832 = vrot.lane.b32.xlu0 %v1814, 32
        %v1833 = vpop.permute.xlu0 %1832
        %1834 = vrot.lane.b32.xlu0 %v1815, 32
        %v1835 = vpop.permute.xlu0 %1834
        %1836 = vrot.lane.b32.xlu0 %v1816, 32
        %v1837 = vpop.permute.xlu0 %1836
        %1838 = vrot.lane.b32.xlu0 %v1817, 32
        %v1839 = vpop.permute.xlu0 %1838
        %1840 = vrot.lane.b32.xlu0 %v1818, 32
        %v1841 = vpop.permute.xlu0 %1840
        %1842 = vrot.lane.b32.xlu0 %v1819, 32
        %v1843 = vpop.permute.xlu0 %1842
        %1844 = vrot.lane.b32.xlu0 %v1820, 32
        %v1845 = vpop.permute.xlu0 %1844
        %1846 = vrot.lane.b32.xlu0 %v1821, 32
        %v1847 = vpop.permute.xlu0 %1846
        %1848 = vrot.lane.b32.xlu0 %v1822, 32
        %v1849 = vpop.permute.xlu0 %1848
        %1850 = vrot.lane.b32.xlu0 %v1823, 32
        %v1851 = vpop.permute.xlu0 %1850
        %1852 = vrot.lane.b32.xlu0 %v1824, 32
        %v1853 = vpop.permute.xlu0 %1852
        %1854 = vrot.lane.b32.xlu0 %v1825, 32
        %v1855 = vpop.permute.xlu0 %1854
        %1856 = vrot.lane.b32.xlu0 %v1826, 32
        %v1857 = vpop.permute.xlu0 %1856
        %1858 = vrot.lane.b32.xlu0 %v1827, 32
        %v1859 = vpop.permute.xlu0 %1858
        %v1860 = vunpack.c.l.b16 %v943
        %v1861 = vunpack.c.l.b16 %v946
        %v1862 = vunpack.c.l.b16 %v950
        %v1863 = vunpack.c.l.b16 %v953
        %v1864 = vunpack.c.l.b16 %v957
        %v1865 = vunpack.c.l.b16 %v960
        %v1866 = vunpack.c.l.b16 %v964
        %v1867 = vunpack.c.l.b16 %v967
        %v1868 = vunpack.c.l.b16 %v971
        %v1869 = vunpack.c.l.b16 %v974
        %v1870 = vunpack.c.l.b16 %v978
        %v1871 = vunpack.c.l.b16 %v981
        %v1872 = vunpack.c.l.b16 %v985
        %v1873 = vunpack.c.l.b16 %v988
        %v1874 = vunpack.c.l.b16 %v992
        %v1875 = vunpack.c.l.b16 %v995
        %v1876 = vunpack.c.l.b16 %v999
        %v1877 = vunpack.c.l.b16 %v1002
        %v1878 = vunpack.c.l.b16 %v1006
        %v1879 = vunpack.c.l.b16 %v1009
        %v1880 = vunpack.c.l.b16 %v1013
        %v1881 = vunpack.c.l.b16 %v1016
        %v1882 = vunpack.c.l.b16 %v1020
        %v1883 = vunpack.c.l.b16 %v1023
        %v1884 = vunpack.c.l.b16 %v1027
        %v1885 = vunpack.c.l.b16 %v1030
        %v1886 = vunpack.c.l.b16 %v1034
        %v1887 = vunpack.c.l.b16 %v1037
        %v1888 = vunpack.c.l.b16 %v1041
        %v1889 = vunpack.c.l.b16 %v1044
        %v1890 = vunpack.c.l.b16 %v1048
        %v1891 = vunpack.c.l.b16 %v1051
        %v1892 = vpack.c.b16 %v1861, %v1860
        %v1893 = vpack.c.b16 %v1863, %v1862
        %v1894 = vpack.c.b16 %v1865, %v1864
        %v1895 = vpack.c.b16 %v1867, %v1866
        %v1896 = vpack.c.b16 %v1869, %v1868
        %v1897 = vpack.c.b16 %v1871, %v1870
        %v1898 = vpack.c.b16 %v1873, %v1872
        %v1899 = vpack.c.b16 %v1875, %v1874
        %v1900 = vpack.c.b16 %v1877, %v1876
        %v1901 = vpack.c.b16 %v1879, %v1878
        %v1902 = vpack.c.b16 %v1881, %v1880
        %v1903 = vpack.c.b16 %v1883, %v1882
        %v1904 = vpack.c.b16 %v1885, %v1884
        %v1905 = vpack.c.b16 %v1887, %v1886
        %v1906 = vpack.c.b16 %v1889, %v1888
        %v1907 = vpack.c.b16 %v1891, %v1890
        %1908 = vrot.lane.b32.xlu0 %v1892, 64
        %v1909 = vpop.permute.xlu0 %1908
        %1910 = vrot.lane.b32.xlu0 %v1893, 64
        %v1911 = vpop.permute.xlu0 %1910
        %1912 = vrot.lane.b32.xlu0 %v1894, 64
        %v1913 = vpop.permute.xlu0 %1912
        %1914 = vrot.lane.b32.xlu0 %v1895, 64
        %v1915 = vpop.permute.xlu0 %1914
        %1916 = vrot.lane.b32.xlu0 %v1896, 64
        %v1917 = vpop.permute.xlu0 %1916
        %1918 = vrot.lane.b32.xlu0 %v1897, 64
        %v1919 = vpop.permute.xlu0 %1918
        %1920 = vrot.lane.b32.xlu0 %v1898, 64
        %v1921 = vpop.permute.xlu0 %1920
        %1922 = vrot.lane.b32.xlu0 %v1899, 64
        %v1923 = vpop.permute.xlu0 %1922
        %1924 = vrot.lane.b32.xlu0 %v1900, 64
        %v1925 = vpop.permute.xlu0 %1924
        %1926 = vrot.lane.b32.xlu0 %v1901, 64
        %v1927 = vpop.permute.xlu0 %1926
        %1928 = vrot.lane.b32.xlu0 %v1902, 64
        %v1929 = vpop.permute.xlu0 %1928
        %1930 = vrot.lane.b32.xlu0 %v1903, 64
        %v1931 = vpop.permute.xlu0 %1930
        %1932 = vrot.lane.b32.xlu0 %v1904, 64
        %v1933 = vpop.permute.xlu0 %1932
        %1934 = vrot.lane.b32.xlu0 %v1905, 64
        %v1935 = vpop.permute.xlu0 %1934
        %1936 = vrot.lane.b32.xlu0 %v1906, 64
        %v1937 = vpop.permute.xlu0 %1936
        %1938 = vrot.lane.b32.xlu0 %v1907, 64
        %v1939 = vpop.permute.xlu0 %1938
        %v1940 = vunpack.c.l.b16 %v442
        %v1941 = vunpack.c.l.b16 %v443
        %v1942 = vpack.c.b16 %v1941, %v1940
        %1943 = vrot.lane.b32.xlu0 %v1765, 96
        %v1944 = vpop.permute.xlu0 %1943
        %1945 = vrot.lane.b32.xlu0 %v1766, 96
        %v1946 = vpop.permute.xlu0 %1945
        %1947 = vrot.lane.b32.xlu0 %v1767, 96
        %v1948 = vpop.permute.xlu0 %1947
        %1949 = vrot.lane.b32.xlu0 %v1768, 96
        %v1950 = vpop.permute.xlu0 %1949
        %1951 = vrot.lane.b32.xlu0 %v1769, 96
        %v1952 = vpop.permute.xlu0 %1951
        %1953 = vrot.lane.b32.xlu0 %v1770, 96
        %v1954 = vpop.permute.xlu0 %1953
        %1955 = vrot.lane.b32.xlu0 %v1771, 96
        %v1956 = vpop.permute.xlu0 %1955
        %1957 = vrot.lane.b32.xlu0 %v1772, 96
        %v1958 = vpop.permute.xlu0 %1957
        %1959 = vrot.lane.b32.xlu0 %v1773, 96
        %v1960 = vpop.permute.xlu0 %1959
        %1961 = vrot.lane.b32.xlu0 %v1774, 96
        %v1962 = vpop.permute.xlu0 %1961
        %1963 = vrot.lane.b32.xlu0 %v1775, 96
        %v1964 = vpop.permute.xlu0 %1963
        %1965 = vrot.lane.b32.xlu0 %v1776, 96
        %v1966 = vpop.permute.xlu0 %1965
        %1967 = vrot.lane.b32.xlu0 %v1777, 96
        %v1968 = vpop.permute.xlu0 %1967
        %1969 = vrot.lane.b32.xlu0 %v1778, 96
        %v1970 = vpop.permute.xlu0 %1969
        %1971 = vrot.lane.b32.xlu0 %v1779, 96
        %v1972 = vpop.permute.xlu0 %1971
        %1973 = vrot.lane.b32.xlu0 %v1942, 96
        %v1974 = vpop.permute.xlu0 %1973
        %v1975 = vunpack.c.l.b16 %v1065
        %v1976 = vunpack.c.l.b16 %v1075
        %v1977 = vpack.c.b16 %v1976, %v1975
        %v1978 = vunpack.c.l.b16 %v1082
        %v1979 = vunpack.c.l.b16 %v1085
        %v1980 = vpack.c.b16 %v1979, %v1978
        %1981 = vrot.lane.b32.xlu0 %v1893, 32
        %v1982 = vpop.permute.xlu0 %1981
        %1983 = vrot.lane.b32.xlu0 %v1894, 32
        %v1984 = vpop.permute.xlu0 %1983
        %1985 = vrot.lane.b32.xlu0 %v1895, 32
        %v1986 = vpop.permute.xlu0 %1985
        %1987 = vrot.lane.b32.xlu0 %v1896, 32
        %v1988 = vpop.permute.xlu0 %1987
        %1989 = vrot.lane.b32.xlu0 %v1897, 32
        %v1990 = vpop.permute.xlu0 %1989
        %1991 = vrot.lane.b32.xlu0 %v1898, 32
        %v1992 = vpop.permute.xlu0 %1991
        %1993 = vrot.lane.b32.xlu0 %v1899, 32
        %v1994 = vpop.permute.xlu0 %1993
        %1995 = vrot.lane.b32.xlu0 %v1900, 32
        %v1996 = vpop.permute.xlu0 %1995
        %1997 = vrot.lane.b32.xlu0 %v1901, 32
        %v1998 = vpop.permute.xlu0 %1997
        %1999 = vrot.lane.b32.xlu0 %v1902, 32
        %v2000 = vpop.permute.xlu0 %1999
        %2001 = vrot.lane.b32.xlu0 %v1903, 32
        %v2002 = vpop.permute.xlu0 %2001
        %2003 = vrot.lane.b32.xlu0 %v1904, 32
        %v2004 = vpop.permute.xlu0 %2003
        %2005 = vrot.lane.b32.xlu0 %v1905, 32
        %v2006 = vpop.permute.xlu0 %2005
        %2007 = vrot.lane.b32.xlu0 %v1906, 32
        %v2008 = vpop.permute.xlu0 %2007
        %2009 = vrot.lane.b32.xlu0 %v1907, 32
        %v2010 = vpop.permute.xlu0 %2009
        %2011 = vrot.lane.b32.xlu0 %v1980, 32
        %v2012 = vpop.permute.xlu0 %2011
        %v2013 = vunpack.c.l.b16 %v445
        %v2014 = vunpack.c.l.b16 %v446
        %v2015 = vpack.c.b16 %v2014, %v2013
        %2016 = vrot.lane.b32.xlu0 %v1766, 64
        %v2017 = vpop.permute.xlu0 %2016
        %2018 = vrot.lane.b32.xlu0 %v1767, 64
        %v2019 = vpop.permute.xlu0 %2018
        %2020 = vrot.lane.b32.xlu0 %v1768, 64
        %v2021 = vpop.permute.xlu0 %2020
        %2022 = vrot.lane.b32.xlu0 %v1769, 64
        %v2023 = vpop.permute.xlu0 %2022
        %2024 = vrot.lane.b32.xlu0 %v1770, 64
        %v2025 = vpop.permute.xlu0 %2024
        %2026 = vrot.lane.b32.xlu0 %v1771, 64
        %v2027 = vpop.permute.xlu0 %2026
        %2028 = vrot.lane.b32.xlu0 %v1772, 64
        %v2029 = vpop.permute.xlu0 %2028
        %2030 = vrot.lane.b32.xlu0 %v1773, 64
        %v2031 = vpop.permute.xlu0 %2030
        %2032 = vrot.lane.b32.xlu0 %v1774, 64
        %v2033 = vpop.permute.xlu0 %2032
        %2034 = vrot.lane.b32.xlu0 %v1775, 64
        %v2035 = vpop.permute.xlu0 %2034
        %2036 = vrot.lane.b32.xlu0 %v1776, 64
        %v2037 = vpop.permute.xlu0 %2036
        %2038 = vrot.lane.b32.xlu0 %v1777, 64
        %v2039 = vpop.permute.xlu0 %2038
        %2040 = vrot.lane.b32.xlu0 %v1778, 64
        %v2041 = vpop.permute.xlu0 %2040
        %2042 = vrot.lane.b32.xlu0 %v1779, 64
        %v2043 = vpop.permute.xlu0 %2042
        %2044 = vrot.lane.b32.xlu0 %v1942, 64
        %v2045 = vpop.permute.xlu0 %2044
        %2046 = vrot.lane.b32.xlu0 %v2015, 64
        %v2047 = vpop.permute.xlu0 %2046
        %v2048 = vunpack.c.l.b16 %v1099
        %v2049 = vunpack.c.l.b16 %v1109
        %v2050 = vpack.c.b16 %v2049, %v2048
        %2051 = vrot.lane.b32.xlu0 %v1814, 96
        %v2052 = vpop.permute.xlu0 %2051
        %2053 = vrot.lane.b32.xlu0 %v1815, 96
        %v2054 = vpop.permute.xlu0 %2053
        %2055 = vrot.lane.b32.xlu0 %v1816, 96
        %v2056 = vpop.permute.xlu0 %2055
        %2057 = vrot.lane.b32.xlu0 %v1817, 96
        %v2058 = vpop.permute.xlu0 %2057
        %2059 = vrot.lane.b32.xlu0 %v1818, 96
        %v2060 = vpop.permute.xlu0 %2059
        %2061 = vrot.lane.b32.xlu0 %v1819, 96
        %v2062 = vpop.permute.xlu0 %2061
        %2063 = vrot.lane.b32.xlu0 %v1820, 96
        %v2064 = vpop.permute.xlu0 %2063
        %2065 = vrot.lane.b32.xlu0 %v1821, 96
        %v2066 = vpop.permute.xlu0 %2065
        %2067 = vrot.lane.b32.xlu0 %v1822, 96
        %v2068 = vpop.permute.xlu0 %2067
        %2069 = vrot.lane.b32.xlu0 %v1823, 96
        %v2070 = vpop.permute.xlu0 %2069
        %2071 = vrot.lane.b32.xlu0 %v1824, 96
        %v2072 = vpop.permute.xlu0 %2071
        %2073 = vrot.lane.b32.xlu0 %v1825, 96
        %v2074 = vpop.permute.xlu0 %2073
        %2075 = vrot.lane.b32.xlu0 %v1826, 96
        %v2076 = vpop.permute.xlu0 %2075
        %2077 = vrot.lane.b32.xlu0 %v1827, 96
        %v2078 = vpop.permute.xlu0 %2077
        %2079 = vrot.lane.b32.xlu0 %v1977, 96
        %v2080 = vpop.permute.xlu0 %2079
        %2081 = vrot.lane.b32.xlu0 %v2050, 96
        %v2082 = vpop.permute.xlu0 %2081
        %v2083 = vunpack.c.l.b16 %v1116
        %v2084 = vunpack.c.l.b16 %v1119
        %v2085 = vpack.c.b16 %v2084, %v2083
        %v2086 = vunpack.c.l.b16 %v448
        %v2087 = vunpack.c.l.b16 %v449
        %v2088 = vunpack.c.l.b16 %v451
        %v2089 = vunpack.c.l.b16 %v452
        %v2090 = vunpack.c.l.b16 %v454
        %v2091 = vunpack.c.l.b16 %v455
        %v2092 = vunpack.c.l.b16 %v457
        %v2093 = vunpack.c.l.b16 %v458
        %v2094 = vunpack.c.l.b16 %v460
        %v2095 = vunpack.c.l.b16 %v461
        %v2096 = vunpack.c.l.b16 %v463
        %v2097 = vunpack.c.l.b16 %v464
        %v2098 = vunpack.c.l.b16 %v466
        %v2099 = vunpack.c.l.b16 %v467
        %v2100 = vunpack.c.l.b16 %v469
        %v2101 = vunpack.c.l.b16 %v470
        %v2102 = vunpack.c.l.b16 %v472
        %v2103 = vunpack.c.l.b16 %v473
        %v2104 = vunpack.c.l.b16 %v475
        %v2105 = vunpack.c.l.b16 %v476
        %v2106 = vunpack.c.l.b16 %v478
        %v2107 = vunpack.c.l.b16 %v479
        %v2108 = vunpack.c.l.b16 %v481
        %v2109 = vunpack.c.l.b16 %v482
        %v2110 = vunpack.c.l.b16 %v484
        %v2111 = vunpack.c.l.b16 %v485
        %v2112 = vunpack.c.l.b16 %v487
        %v2113 = vunpack.c.l.b16 %v488
        %v2114 = vunpack.c.l.b16 %v490
        %v2115 = vunpack.c.l.b16 %v491
        %v2116 = vunpack.c.l.b16 %v493
        %v2117 = vunpack.c.l.b16 %v494
        %v2118 = vpack.c.b16 %v2087, %v2086
        %v2119 = vpack.c.b16 %v2089, %v2088
        %v2120 = vpack.c.b16 %v2091, %v2090
        %v2121 = vpack.c.b16 %v2093, %v2092
        %v2122 = vpack.c.b16 %v2095, %v2094
        %v2123 = vpack.c.b16 %v2097, %v2096
        %v2124 = vpack.c.b16 %v2099, %v2098
        %v2125 = vpack.c.b16 %v2101, %v2100
        %v2126 = vpack.c.b16 %v2103, %v2102
        %v2127 = vpack.c.b16 %v2105, %v2104
        %v2128 = vpack.c.b16 %v2107, %v2106
        %v2129 = vpack.c.b16 %v2109, %v2108
        %v2130 = vpack.c.b16 %v2111, %v2110
        %v2131 = vpack.c.b16 %v2113, %v2112
        %v2132 = vpack.c.b16 %v2115, %v2114
        %v2133 = vpack.c.b16 %v2117, %v2116
        %2134 = vrot.lane.b32.xlu0 %v2118, 32
        %v2135 = vpop.permute.xlu0 %2134
        %2136 = vrot.lane.b32.xlu0 %v2119, 32
        %v2137 = vpop.permute.xlu0 %2136
        %2138 = vrot.lane.b32.xlu0 %v2120, 32
        %v2139 = vpop.permute.xlu0 %2138
        %2140 = vrot.lane.b32.xlu0 %v2121, 32
        %v2141 = vpop.permute.xlu0 %2140
        %2142 = vrot.lane.b32.xlu0 %v2122, 32
        %v2143 = vpop.permute.xlu0 %2142
        %2144 = vrot.lane.b32.xlu0 %v2123, 32
        %v2145 = vpop.permute.xlu0 %2144
        %2146 = vrot.lane.b32.xlu0 %v2124, 32
        %v2147 = vpop.permute.xlu0 %2146
        %2148 = vrot.lane.b32.xlu0 %v2125, 32
        %v2149 = vpop.permute.xlu0 %2148
        %2150 = vrot.lane.b32.xlu0 %v2126, 32
        %v2151 = vpop.permute.xlu0 %2150
        %2152 = vrot.lane.b32.xlu0 %v2127, 32
        %v2153 = vpop.permute.xlu0 %2152
        %2154 = vrot.lane.b32.xlu0 %v2128, 32
        %v2155 = vpop.permute.xlu0 %2154
        %2156 = vrot.lane.b32.xlu0 %v2129, 32
        %v2157 = vpop.permute.xlu0 %2156
        %2158 = vrot.lane.b32.xlu0 %v2130, 32
        %v2159 = vpop.permute.xlu0 %2158
        %2160 = vrot.lane.b32.xlu0 %v2131, 32
        %v2161 = vpop.permute.xlu0 %2160
        %2162 = vrot.lane.b32.xlu0 %v2132, 32
        %v2163 = vpop.permute.xlu0 %2162
        %2164 = vrot.lane.b32.xlu0 %v2133, 32
        %v2165 = vpop.permute.xlu0 %2164
        %v2166 = vunpack.c.l.b16 %v1133
        %v2167 = vunpack.c.l.b16 %v1143
        %v2168 = vunpack.c.l.b16 %v1157
        %v2169 = vunpack.c.l.b16 %v1167
        %v2170 = vunpack.c.l.b16 %v1181
        %v2171 = vunpack.c.l.b16 %v1191
        %v2172 = vunpack.c.l.b16 %v1205
        %v2173 = vunpack.c.l.b16 %v1215
        %v2174 = vunpack.c.l.b16 %v1229
        %v2175 = vunpack.c.l.b16 %v1239
        %v2176 = vunpack.c.l.b16 %v1253
        %v2177 = vunpack.c.l.b16 %v1263
        %v2178 = vunpack.c.l.b16 %v1277
        %v2179 = vunpack.c.l.b16 %v1287
        %v2180 = vunpack.c.l.b16 %v1301
        %v2181 = vunpack.c.l.b16 %v1311
        %v2182 = vunpack.c.l.b16 %v1325
        %v2183 = vunpack.c.l.b16 %v1335
        %v2184 = vunpack.c.l.b16 %v1349
        %v2185 = vunpack.c.l.b16 %v1359
        %v2186 = vunpack.c.l.b16 %v1373
        %v2187 = vunpack.c.l.b16 %v1383
        %v2188 = vunpack.c.l.b16 %v1397
        %v2189 = vunpack.c.l.b16 %v1407
        %v2190 = vunpack.c.l.b16 %v1421
        %v2191 = vunpack.c.l.b16 %v1431
        %v2192 = vunpack.c.l.b16 %v1445
        %v2193 = vunpack.c.l.b16 %v1455
        %v2194 = vunpack.c.l.b16 %v1469
        %v2195 = vunpack.c.l.b16 %v1479
        %v2196 = vunpack.c.l.b16 %v1493
        %v2197 = vunpack.c.l.b16 %v1503
        %v2198 = vpack.c.b16 %v2167, %v2166
        %v2199 = vpack.c.b16 %v2169, %v2168
        %v2200 = vpack.c.b16 %v2171, %v2170
        %v2201 = vpack.c.b16 %v2173, %v2172
        %v2202 = vpack.c.b16 %v2175, %v2174
        %v2203 = vpack.c.b16 %v2177, %v2176
        %v2204 = vpack.c.b16 %v2179, %v2178
        %v2205 = vpack.c.b16 %v2181, %v2180
        %v2206 = vpack.c.b16 %v2183, %v2182
        %v2207 = vpack.c.b16 %v2185, %v2184
        %v2208 = vpack.c.b16 %v2187, %v2186
        %v2209 = vpack.c.b16 %v2189, %v2188
        %v2210 = vpack.c.b16 %v2191, %v2190
        %v2211 = vpack.c.b16 %v2193, %v2192
        %v2212 = vpack.c.b16 %v2195, %v2194
        %v2213 = vpack.c.b16 %v2197, %v2196
        %2214 = vrot.lane.b32.xlu0 %v2198, 64
        %v2215 = vpop.permute.xlu0 %2214
        %2216 = vrot.lane.b32.xlu0 %v2199, 64
        %v2217 = vpop.permute.xlu0 %2216
        %2218 = vrot.lane.b32.xlu0 %v2200, 64
        %v2219 = vpop.permute.xlu0 %2218
        %2220 = vrot.lane.b32.xlu0 %v2201, 64
        %v2221 = vpop.permute.xlu0 %2220
        %2222 = vrot.lane.b32.xlu0 %v2202, 64
        %v2223 = vpop.permute.xlu0 %2222
        %2224 = vrot.lane.b32.xlu0 %v2203, 64
        %v2225 = vpop.permute.xlu0 %2224
        %2226 = vrot.lane.b32.xlu0 %v2204, 64
        %v2227 = vpop.permute.xlu0 %2226
        %2228 = vrot.lane.b32.xlu0 %v2205, 64
        %v2229 = vpop.permute.xlu0 %2228
        %2230 = vrot.lane.b32.xlu0 %v2206, 64
        %v2231 = vpop.permute.xlu0 %2230
        %2232 = vrot.lane.b32.xlu0 %v2207, 64
        %v2233 = vpop.permute.xlu0 %2232
        %2234 = vrot.lane.b32.xlu0 %v2208, 64
        %v2235 = vpop.permute.xlu0 %2234
        %2236 = vrot.lane.b32.xlu0 %v2209, 64
        %v2237 = vpop.permute.xlu0 %2236
        %2238 = vrot.lane.b32.xlu0 %v2210, 64
        %v2239 = vpop.permute.xlu0 %2238
        %2240 = vrot.lane.b32.xlu0 %v2211, 64
        %v2241 = vpop.permute.xlu0 %2240
        %2242 = vrot.lane.b32.xlu0 %v2212, 64
        %v2243 = vpop.permute.xlu0 %2242
        %2244 = vrot.lane.b32.xlu0 %v2213, 64
        %v2245 = vpop.permute.xlu0 %2244
        %v2246 = vunpack.c.l.b16 %v1555
        %v2247 = vunpack.c.l.b16 %v1558
        %v2248 = vunpack.c.l.b16 %v1562
        %v2249 = vunpack.c.l.b16 %v1565
        %v2250 = vunpack.c.l.b16 %v1569
        %v2251 = vunpack.c.l.b16 %v1572
        %v2252 = vunpack.c.l.b16 %v1576
        %v2253 = vunpack.c.l.b16 %v1579
        %v2254 = vunpack.c.l.b16 %v1583
        %v2255 = vunpack.c.l.b16 %v1586
        %v2256 = vunpack.c.l.b16 %v1590
        %v2257 = vunpack.c.l.b16 %v1593
        %v2258 = vunpack.c.l.b16 %v1597
        %v2259 = vunpack.c.l.b16 %v1600
        %v2260 = vunpack.c.l.b16 %v1604
        %v2261 = vunpack.c.l.b16 %v1607
        %v2262 = vunpack.c.l.b16 %v1611
        %v2263 = vunpack.c.l.b16 %v1614
        %v2264 = vunpack.c.l.b16 %v1618
        %v2265 = vunpack.c.l.b16 %v1621
        %v2266 = vunpack.c.l.b16 %v1625
        %v2267 = vunpack.c.l.b16 %v1628
        %v2268 = vunpack.c.l.b16 %v1632
        %v2269 = vunpack.c.l.b16 %v1635
        %v2270 = vunpack.c.l.b16 %v1639
        %v2271 = vunpack.c.l.b16 %v1642
        %v2272 = vunpack.c.l.b16 %v1646
        %v2273 = vunpack.c.l.b16 %v1649
        %v2274 = vunpack.c.l.b16 %v1653
        %v2275 = vunpack.c.l.b16 %v1656
        %v2276 = vunpack.c.l.b16 %v1660
        %v2277 = vunpack.c.l.b16 %v1663
        %v2278 = vpack.c.b16 %v2247, %v2246
        %v2279 = vpack.c.b16 %v2249, %v2248
        %v2280 = vpack.c.b16 %v2251, %v2250
        %v2281 = vpack.c.b16 %v2253, %v2252
        %v2282 = vpack.c.b16 %v2255, %v2254
        %v2283 = vpack.c.b16 %v2257, %v2256
        %v2284 = vpack.c.b16 %v2259, %v2258
        %v2285 = vpack.c.b16 %v2261, %v2260
        %v2286 = vpack.c.b16 %v2263, %v2262
        %v2287 = vpack.c.b16 %v2265, %v2264
        %v2288 = vpack.c.b16 %v2267, %v2266
        %v2289 = vpack.c.b16 %v2269, %v2268
        %v2290 = vpack.c.b16 %v2271, %v2270
        %v2291 = vpack.c.b16 %v2273, %v2272
        %v2292 = vpack.c.b16 %v2275, %v2274
        %v2293 = vpack.c.b16 %v2277, %v2276
        %2294 = vrot.lane.b32.xlu0 %v2278, 96
        %v2295 = vpop.permute.xlu0 %2294
        %2296 = vrot.lane.b32.xlu0 %v2279, 96
        %v2297 = vpop.permute.xlu0 %2296
        %2298 = vrot.lane.b32.xlu0 %v2280, 96
        %v2299 = vpop.permute.xlu0 %2298
        %2300 = vrot.lane.b32.xlu0 %v2281, 96
        %v2301 = vpop.permute.xlu0 %2300
        %2302 = vrot.lane.b32.xlu0 %v2282, 96
        %v2303 = vpop.permute.xlu0 %2302
        %2304 = vrot.lane.b32.xlu0 %v2283, 96
        %v2305 = vpop.permute.xlu0 %2304
        %2306 = vrot.lane.b32.xlu0 %v2284, 96
        %v2307 = vpop.permute.xlu0 %2306
        %2308 = vrot.lane.b32.xlu0 %v2285, 96
        %v2309 = vpop.permute.xlu0 %2308
        %2310 = vrot.lane.b32.xlu0 %v2286, 96
        %v2311 = vpop.permute.xlu0 %2310
        %2312 = vrot.lane.b32.xlu0 %v2287, 96
        %v2313 = vpop.permute.xlu0 %2312
        %2314 = vrot.lane.b32.xlu0 %v2288, 96
        %v2315 = vpop.permute.xlu0 %2314
        %2316 = vrot.lane.b32.xlu0 %v2289, 96
        %v2317 = vpop.permute.xlu0 %2316
        %2318 = vrot.lane.b32.xlu0 %v2290, 96
        %v2319 = vpop.permute.xlu0 %2318
        %2320 = vrot.lane.b32.xlu0 %v2291, 96
        %v2321 = vpop.permute.xlu0 %2320
        %2322 = vrot.lane.b32.xlu0 %v2292, 96
        %v2323 = vpop.permute.xlu0 %2322
        %2324 = vrot.lane.b32.xlu0 %v2293, 96
        %v2325 = vpop.permute.xlu0 %2324
        %v2326 = vunpack.c.l.b16 %v496
        %v2327 = vunpack.c.l.b16 %v497
        %v2328 = vpack.c.b16 %v2327, %v2326
        %v2329 = vunpack.c.l.b16 %v1677
        %v2330 = vunpack.c.l.b16 %v1687
        %v2331 = vpack.c.b16 %v2330, %v2329
        %2332 = vrot.lane.b32.xlu0 %v2199, 32
        %v2333 = vpop.permute.xlu0 %2332
        %2334 = vrot.lane.b32.xlu0 %v2200, 32
        %v2335 = vpop.permute.xlu0 %2334
        %2336 = vrot.lane.b32.xlu0 %v2201, 32
        %v2337 = vpop.permute.xlu0 %2336
        %2338 = vrot.lane.b32.xlu0 %v2202, 32
        %v2339 = vpop.permute.xlu0 %2338
        %2340 = vrot.lane.b32.xlu0 %v2203, 32
        %v2341 = vpop.permute.xlu0 %2340
        %2342 = vrot.lane.b32.xlu0 %v2204, 32
        %v2343 = vpop.permute.xlu0 %2342
        %2344 = vrot.lane.b32.xlu0 %v2205, 32
        %v2345 = vpop.permute.xlu0 %2344
        %2346 = vrot.lane.b32.xlu0 %v2206, 32
        %v2347 = vpop.permute.xlu0 %2346
        %2348 = vrot.lane.b32.xlu0 %v2207, 32
        %v2349 = vpop.permute.xlu0 %2348
        %2350 = vrot.lane.b32.xlu0 %v2208, 32
        %v2351 = vpop.permute.xlu0 %2350
        %2352 = vrot.lane.b32.xlu0 %v2209, 32
        %v2353 = vpop.permute.xlu0 %2352
        %2354 = vrot.lane.b32.xlu0 %v2210, 32
        %v2355 = vpop.permute.xlu0 %2354
        %2356 = vrot.lane.b32.xlu0 %v2211, 32
        %v2357 = vpop.permute.xlu0 %2356
        %2358 = vrot.lane.b32.xlu0 %v2212, 32
        %v2359 = vpop.permute.xlu0 %2358
        %2360 = vrot.lane.b32.xlu0 %v2213, 32
        %v2361 = vpop.permute.xlu0 %2360
        %2362 = vrot.lane.b32.xlu0 %v2331, 32
        %v2363 = vpop.permute.xlu0 %2362
        %v2364 = vunpack.c.l.b16 %v1694
        %v2365 = vunpack.c.l.b16 %v1697
        %v2366 = vpack.c.b16 %v2365, %v2364
        %2367 = vrot.lane.b32.xlu0 %v2279, 64
        %v2368 = vpop.permute.xlu0 %2367
        %2369 = vrot.lane.b32.xlu0 %v2280, 64
        %v2370 = vpop.permute.xlu0 %2369
        %2371 = vrot.lane.b32.xlu0 %v2281, 64
        %v2372 = vpop.permute.xlu0 %2371
        %2373 = vrot.lane.b32.xlu0 %v2282, 64
        %v2374 = vpop.permute.xlu0 %2373
        %2375 = vrot.lane.b32.xlu0 %v2283, 64
        %v2376 = vpop.permute.xlu0 %2375
        %2377 = vrot.lane.b32.xlu0 %v2284, 64
        %v2378 = vpop.permute.xlu0 %2377
        %2379 = vrot.lane.b32.xlu0 %v2285, 64
        %v2380 = vpop.permute.xlu0 %2379
        %2381 = vrot.lane.b32.xlu0 %v2286, 64
        %v2382 = vpop.permute.xlu0 %2381
        %2383 = vrot.lane.b32.xlu0 %v2287, 64
        %v2384 = vpop.permute.xlu0 %2383
        %2385 = vrot.lane.b32.xlu0 %v2288, 64
        %v2386 = vpop.permute.xlu0 %2385
        %2387 = vrot.lane.b32.xlu0 %v2289, 64
        %v2388 = vpop.permute.xlu0 %2387
        %2389 = vrot.lane.b32.xlu0 %v2290, 64
        %v2390 = vpop.permute.xlu0 %2389
        %2391 = vrot.lane.b32.xlu0 %v2291, 64
        %v2392 = vpop.permute.xlu0 %2391
        %2393 = vrot.lane.b32.xlu0 %v2292, 64
        %v2394 = vpop.permute.xlu0 %2393
        %2395 = vrot.lane.b32.xlu0 %v2293, 64
        %v2396 = vpop.permute.xlu0 %2395
        %2397 = vrot.lane.b32.xlu0 %v2366, 64
        %v2398 = vpop.permute.xlu0 %2397
        %v2399 = vunpack.c.l.b16 %v499
        %v2400 = vunpack.c.l.b16 %v500
        %v2401 = vpack.c.b16 %v2400, %v2399
        %2402 = vrot.lane.b32.xlu0 %v2120, 96
        %v2403 = vpop.permute.xlu0 %2402
        %2404 = vrot.lane.b32.xlu0 %v2121, 96
        %v2405 = vpop.permute.xlu0 %2404
        %2406 = vrot.lane.b32.xlu0 %v2122, 96
        %v2407 = vpop.permute.xlu0 %2406
        %2408 = vrot.lane.b32.xlu0 %v2123, 96
        %v2409 = vpop.permute.xlu0 %2408
        %2410 = vrot.lane.b32.xlu0 %v2124, 96
        %v2411 = vpop.permute.xlu0 %2410
        %2412 = vrot.lane.b32.xlu0 %v2125, 96
        %v2413 = vpop.permute.xlu0 %2412
        %2414 = vrot.lane.b32.xlu0 %v2126, 96
        %v2415 = vpop.permute.xlu0 %2414
        %2416 = vrot.lane.b32.xlu0 %v2127, 96
        %v2417 = vpop.permute.xlu0 %2416
        %2418 = vrot.lane.b32.xlu0 %v2128, 96
        %v2419 = vpop.permute.xlu0 %2418
        %2420 = vrot.lane.b32.xlu0 %v2129, 96
        %v2421 = vpop.permute.xlu0 %2420
        %2422 = vrot.lane.b32.xlu0 %v2130, 96
        %v2423 = vpop.permute.xlu0 %2422
        %2424 = vrot.lane.b32.xlu0 %v2131, 96
        %v2425 = vpop.permute.xlu0 %2424
        %2426 = vrot.lane.b32.xlu0 %v2132, 96
        %v2427 = vpop.permute.xlu0 %2426
        %2428 = vrot.lane.b32.xlu0 %v2133, 96
        %v2429 = vpop.permute.xlu0 %2428
        %2430 = vrot.lane.b32.xlu0 %v2328, 96
        %v2431 = vpop.permute.xlu0 %2430
        %2432 = vrot.lane.b32.xlu0 %v2401, 96
        %v2433 = vpop.permute.xlu0 %2432
        %vm2434 = vcmask 261120
        %v2437 = vsel %vm2434, %v1764, %v1829
        %v2440 = vsel %vm2434, %v1765, %v1831
        %v2443 = vsel %vm2434, %v1766, %v1833
        %v2446 = vsel %vm2434, %v1767, %v1835
        %v2449 = vsel %vm2434, %v1768, %v1837
        %v2452 = vsel %vm2434, %v1769, %v1839
        %v2455 = vsel %vm2434, %v1770, %v1841
        %v2458 = vsel %vm2434, %v1771, %v1843
        %v2461 = vsel %vm2434, %v1772, %v1845
        %v2464 = vsel %vm2434, %v1773, %v1847
        %v2467 = vsel %vm2434, %v1774, %v1849
        %v2470 = vsel %vm2434, %v1775, %v1851
        %v2473 = vsel %vm2434, %v1776, %v1853
        %v2476 = vsel %vm2434, %v1777, %v1855
        %v2479 = vsel %vm2434, %v1778, %v1857
        %v2482 = vsel %vm2434, %v1779, %v1859
        %vm2483 = vcmask 523264
        %v2485 = vsel %vm2483, %v2437, %v1909
        %v2487 = vsel %vm2483, %v2440, %v1911
        %v2489 = vsel %vm2483, %v2443, %v1913
        %v2491 = vsel %vm2483, %v2446, %v1915
        %v2493 = vsel %vm2483, %v2449, %v1917
        %v2495 = vsel %vm2483, %v2452, %v1919
        %v2497 = vsel %vm2483, %v2455, %v1921
        %v2499 = vsel %vm2483, %v2458, %v1923
        %v2501 = vsel %vm2483, %v2461, %v1925
        %v2503 = vsel %vm2483, %v2464, %v1927
        %v2505 = vsel %vm2483, %v2467, %v1929
        %v2507 = vsel %vm2483, %v2470, %v1931
        %v2509 = vsel %vm2483, %v2473, %v1933
        %v2511 = vsel %vm2483, %v2476, %v1935
        %v2513 = vsel %vm2483, %v2479, %v1937
        %v2515 = vsel %vm2483, %v2482, %v1939
        %vm2516 = vcmask 785408
        %v2518 = vsel %vm2516, %v2485, %v1944
        %v2521 = vsel %vm2516, %v2487, %v1946
        %v2524 = vsel %vm2516, %v2489, %v1948
        %v2527 = vsel %vm2516, %v2491, %v1950
        %v2530 = vsel %vm2516, %v2493, %v1952
        %v2533 = vsel %vm2516, %v2495, %v1954
        %v2536 = vsel %vm2516, %v2497, %v1956
        %v2539 = vsel %vm2516, %v2499, %v1958
        %v2542 = vsel %vm2516, %v2501, %v1960
        %v2545 = vsel %vm2516, %v2503, %v1962
        %v2548 = vsel %vm2516, %v2505, %v1964
        %v2551 = vsel %vm2516, %v2507, %v1966
        %v2554 = vsel %vm2516, %v2509, %v1968
        %v2557 = vsel %vm2516, %v2511, %v1970
        %v2560 = vsel %vm2516, %v2513, %v1972
        %v2563 = vsel %vm2516, %v2515, %v1974
        %v2567 = vsel %vm2434, %v1813, %v1982
        %v2570 = vsel %vm2434, %v1814, %v1984
        %v2573 = vsel %vm2434, %v1815, %v1986
        %v2576 = vsel %vm2434, %v1816, %v1988
        %v2579 = vsel %vm2434, %v1817, %v1990
        %v2582 = vsel %vm2434, %v1818, %v1992
        %v2585 = vsel %vm2434, %v1819, %v1994
        %v2588 = vsel %vm2434, %v1820, %v1996
        %v2591 = vsel %vm2434, %v1821, %v1998
        %v2594 = vsel %vm2434, %v1822, %v2000
        %v2597 = vsel %vm2434, %v1823, %v2002
        %v2600 = vsel %vm2434, %v1824, %v2004
        %v2603 = vsel %vm2434, %v1825, %v2006
        %v2606 = vsel %vm2434, %v1826, %v2008
        %v2609 = vsel %vm2434, %v1827, %v2010
        %v2612 = vsel %vm2434, %v1977, %v2012
        %v2614 = vsel %vm2483, %v2567, %v2017
        %v2616 = vsel %vm2483, %v2570, %v2019
        %v2618 = vsel %vm2483, %v2573, %v2021
        %v2620 = vsel %vm2483, %v2576, %v2023
        %v2622 = vsel %vm2483, %v2579, %v2025
        %v2624 = vsel %vm2483, %v2582, %v2027
        %v2626 = vsel %vm2483, %v2585, %v2029
        %v2628 = vsel %vm2483, %v2588, %v2031
        %v2630 = vsel %vm2483, %v2591, %v2033
        %v2632 = vsel %vm2483, %v2594, %v2035
        %v2634 = vsel %vm2483, %v2597, %v2037
        %v2636 = vsel %vm2483, %v2600, %v2039
        %v2638 = vsel %vm2483, %v2603, %v2041
        %v2640 = vsel %vm2483, %v2606, %v2043
        %v2642 = vsel %vm2483, %v2609, %v2045
        %v2644 = vsel %vm2483, %v2612, %v2047
        %v2646 = vsel %vm2516, %v2614, %v2052
        %v2649 = vsel %vm2516, %v2616, %v2054
        %v2652 = vsel %vm2516, %v2618, %v2056
        %v2655 = vsel %vm2516, %v2620, %v2058
        %v2658 = vsel %vm2516, %v2622, %v2060
        %v2661 = vsel %vm2516, %v2624, %v2062
        %v2664 = vsel %vm2516, %v2626, %v2064
        %v2667 = vsel %vm2516, %v2628, %v2066
        %v2670 = vsel %vm2516, %v2630, %v2068
        %v2673 = vsel %vm2516, %v2632, %v2070
        %v2676 = vsel %vm2516, %v2634, %v2072
        %v2679 = vsel %vm2516, %v2636, %v2074
        %v2682 = vsel %vm2516, %v2638, %v2076
        %v2685 = vsel %vm2516, %v2640, %v2078
        %v2688 = vsel %vm2516, %v2642, %v2080
        %v2691 = vsel %vm2516, %v2644, %v2082
        %v2695 = vsel %vm2434, %v1894, %v2135
        %v2698 = vsel %vm2434, %v1895, %v2137
        %v2701 = vsel %vm2434, %v1896, %v2139
        %v2704 = vsel %vm2434, %v1897, %v2141
        %v2707 = vsel %vm2434, %v1898, %v2143
        %v2710 = vsel %vm2434, %v1899, %v2145
        %v2713 = vsel %vm2434, %v1900, %v2147
        %v2716 = vsel %vm2434, %v1901, %v2149
        %v2719 = vsel %vm2434, %v1902, %v2151
        %v2722 = vsel %vm2434, %v1903, %v2153
        %v2725 = vsel %vm2434, %v1904, %v2155
        %v2728 = vsel %vm2434, %v1905, %v2157
        %v2731 = vsel %vm2434, %v1906, %v2159
        %v2734 = vsel %vm2434, %v1907, %v2161
        %v2737 = vsel %vm2434, %v1980, %v2163
        %v2740 = vsel %vm2434, %v2085, %v2165
        %v2742 = vsel %vm2483, %v2695, %v2215
        %v2744 = vsel %vm2483, %v2698, %v2217
        %v2746 = vsel %vm2483, %v2701, %v2219
        %v2748 = vsel %vm2483, %v2704, %v2221
        %v2750 = vsel %vm2483, %v2707, %v2223
        %v2752 = vsel %vm2483, %v2710, %v2225
        %v2754 = vsel %vm2483, %v2713, %v2227
        %v2756 = vsel %vm2483, %v2716, %v2229
        %v2758 = vsel %vm2483, %v2719, %v2231
        %v2760 = vsel %vm2483, %v2722, %v2233
        %v2762 = vsel %vm2483, %v2725, %v2235
        %v2764 = vsel %vm2483, %v2728, %v2237
        %v2766 = vsel %vm2483, %v2731, %v2239
        %v2768 = vsel %vm2483, %v2734, %v2241
        %v2770 = vsel %vm2483, %v2737, %v2243
        %v2772 = vsel %vm2483, %v2740, %v2245
        %v2774 = vsel %vm2516, %v2742, %v2295
        %v2777 = vsel %vm2516, %v2744, %v2297
        %v2780 = vsel %vm2516, %v2746, %v2299
        %v2783 = vsel %vm2516, %v2748, %v2301
        %v2786 = vsel %vm2516, %v2750, %v2303
        %v2789 = vsel %vm2516, %v2752, %v2305
        %v2792 = vsel %vm2516, %v2754, %v2307
        %v2795 = vsel %vm2516, %v2756, %v2309
        %v2798 = vsel %vm2516, %v2758, %v2311
        %v2801 = vsel %vm2516, %v2760, %v2313
        %v2804 = vsel %vm2516, %v2762, %v2315
        %v2807 = vsel %vm2516, %v2764, %v2317
        %v2810 = vsel %vm2516, %v2766, %v2319
        %v2813 = vsel %vm2516, %v2768, %v2321
        %v2816 = vsel %vm2516, %v2770, %v2323
        %v2819 = vsel %vm2516, %v2772, %v2325
        %v2823 = vsel %vm2434, %v2119, %v2333
        %v2826 = vsel %vm2434, %v2120, %v2335
        %v2829 = vsel %vm2434, %v2121, %v2337
        %v2832 = vsel %vm2434, %v2122, %v2339
        %v2835 = vsel %vm2434, %v2123, %v2341
        %v2838 = vsel %vm2434, %v2124, %v2343
        %v2841 = vsel %vm2434, %v2125, %v2345
        %v2844 = vsel %vm2434, %v2126, %v2347
        %v2847 = vsel %vm2434, %v2127, %v2349
        %v2850 = vsel %vm2434, %v2128, %v2351
        %v2853 = vsel %vm2434, %v2129, %v2353
        %v2856 = vsel %vm2434, %v2130, %v2355
        %v2859 = vsel %vm2434, %v2131, %v2357
        %v2862 = vsel %vm2434, %v2132, %v2359
        %v2865 = vsel %vm2434, %v2133, %v2361
        %v2868 = vsel %vm2434, %v2328, %v2363
        %v2870 = vsel %vm2483, %v2823, %v2368
        %v2872 = vsel %vm2483, %v2826, %v2370
        %v2874 = vsel %vm2483, %v2829, %v2372
        %v2876 = vsel %vm2483, %v2832, %v2374
        %v2878 = vsel %vm2483, %v2835, %v2376
        %v2880 = vsel %vm2483, %v2838, %v2378
        %v2882 = vsel %vm2483, %v2841, %v2380
        %v2884 = vsel %vm2483, %v2844, %v2382
        %v2886 = vsel %vm2483, %v2847, %v2384
        %v2888 = vsel %vm2483, %v2850, %v2386
        %v2890 = vsel %vm2483, %v2853, %v2388
        %v2892 = vsel %vm2483, %v2856, %v2390
        %v2894 = vsel %vm2483, %v2859, %v2392
        %v2896 = vsel %vm2483, %v2862, %v2394
        %v2898 = vsel %vm2483, %v2865, %v2396
        %v2900 = vsel %vm2483, %v2868, %v2398
        %v2902 = vsel %vm2516, %v2870, %v2403
        %v2905 = vsel %vm2516, %v2872, %v2405
        %v2908 = vsel %vm2516, %v2874, %v2407
        %v2911 = vsel %vm2516, %v2876, %v2409
        %v2914 = vsel %vm2516, %v2878, %v2411
        %v2917 = vsel %vm2516, %v2880, %v2413
        %v2920 = vsel %vm2516, %v2882, %v2415
        %v2923 = vsel %vm2516, %v2884, %v2417
        %v2926 = vsel %vm2516, %v2886, %v2419
        %v2929 = vsel %vm2516, %v2888, %v2421
        %v2932 = vsel %vm2516, %v2890, %v2423
        %v2935 = vsel %vm2516, %v2892, %v2425
        %v2938 = vsel %vm2516, %v2894, %v2427
        %v2941 = vsel %vm2516, %v2896, %v2429
        %v2944 = vsel %vm2516, %v2898, %v2431
        %v2947 = vsel %vm2516, %v2900, %v2433
        %v2949 = vunpack.c.l.b16 %v1711
        %v2950 = vunpack.c.l.b16 %v1721
        %v2951 = vpack.c.b16 %v2950, %v2949
        %v2952 = vunpack.c.l.b16 %v1728
        %v2953 = vunpack.c.l.b16 %v1731
        %v2954 = vpack.c.b16 %v2953, %v2952
        %2955 = vrot.lane.b32.xlu0 %v2280, 32
        %v2956 = vpop.permute.xlu0 %2955
        %2957 = vrot.lane.b32.xlu0 %v2281, 32
        %v2958 = vpop.permute.xlu0 %2957
        %2959 = vrot.lane.b32.xlu0 %v2282, 32
        %v2960 = vpop.permute.xlu0 %2959
        %2961 = vrot.lane.b32.xlu0 %v2283, 32
        %v2962 = vpop.permute.xlu0 %2961
        %2963 = vrot.lane.b32.xlu0 %v2284, 32
        %v2964 = vpop.permute.xlu0 %2963
        %2965 = vrot.lane.b32.xlu0 %v2285, 32
        %v2966 = vpop.permute.xlu0 %2965
        %2967 = vrot.lane.b32.xlu0 %v2286, 32
        %v2968 = vpop.permute.xlu0 %2967
        %2969 = vrot.lane.b32.xlu0 %v2287, 32
        %v2970 = vpop.permute.xlu0 %2969
        %2971 = vrot.lane.b32.xlu0 %v2288, 32
        %v2972 = vpop.permute.xlu0 %2971
        %2973 = vrot.lane.b32.xlu0 %v2289, 32
        %v2974 = vpop.permute.xlu0 %2973
        %2975 = vrot.lane.b32.xlu0 %v2290, 32
        %v2976 = vpop.permute.xlu0 %2975
        %2977 = vrot.lane.b32.xlu0 %v2291, 32
        %v2978 = vpop.permute.xlu0 %2977
        %2979 = vrot.lane.b32.xlu0 %v2292, 32
        %v2980 = vpop.permute.xlu0 %2979
        %2981 = vrot.lane.b32.xlu0 %v2293, 32
        %v2982 = vpop.permute.xlu0 %2981
        %2983 = vrot.lane.b32.xlu0 %v2366, 32
        %v2984 = vpop.permute.xlu0 %2983
        %2985 = vrot.lane.b32.xlu0 %v2954, 32
        %v2986 = vpop.permute.xlu0 %2985
        %v2989 = vsel %vm2434, %v2200, %v2956
        %v2992 = vsel %vm2434, %v2201, %v2958
        %v2995 = vsel %vm2434, %v2202, %v2960
        %v2998 = vsel %vm2434, %v2203, %v2962
        %v3001 = vsel %vm2434, %v2204, %v2964
        %v3004 = vsel %vm2434, %v2205, %v2966
        %v3007 = vsel %vm2434, %v2206, %v2968
        %v3010 = vsel %vm2434, %v2207, %v2970
        %v3013 = vsel %vm2434, %v2208, %v2972
        %v3016 = vsel %vm2434, %v2209, %v2974
        %v3019 = vsel %vm2434, %v2210, %v2976
        %v3022 = vsel %vm2434, %v2211, %v2978
        %v3025 = vsel %vm2434, %v2212, %v2980
        %v3028 = vsel %vm2434, %v2213, %v2982
        %v3031 = vsel %vm2434, %v2331, %v2984
        %v3034 = vsel %vm2434, %v2951, %v2986
        %v3035 = vld [vmem:[%s2] sm:$0xf]
        %v3036 = vld [vmem:[%s2 + $0x4] sm:$0xf]
        %v3037 = vld [vmem:[%s2 + $0x8] sm:$0xf]
        %v3038 = vld [vmem:[%s2 + $0xc] sm:$0xf]
        %v3039 = vld [vmem:[%s2 + $0x10] sm:$0xf]
        %v3040 = vld [vmem:[%s2 + $0x14] sm:$0xf]
        %v3041 = vld [vmem:[%s2 + $0x18] sm:$0xf]
        %v3042 = vld [vmem:[%s2 + $0x1c] sm:$0xf]
        %v3043 = vld [vmem:[%s2 + $0x20] sm:$0xf]
        %v3044 = vld [vmem:[%s2 + $0x24] sm:$0xf]
        %v3045 = vld [vmem:[%s2 + $0x28] sm:$0xf]
        %v3046 = vld [vmem:[%s2 + $0x2c] sm:$0xf]
        %v3047 = vld [vmem:[%s2 + $0x30] sm:$0xf]
        %v3048 = vld [vmem:[%s2 + $0x34] sm:$0xf]
        %v3049 = vld [vmem:[%s2 + $0x38] sm:$0xf]
        %v3050 = vld [vmem:[%s2 + $0x3c] sm:$0xf]
        %v3051 = vld [vmem:[%s2 + $0x40] sm:$0xf]
        %v3052 = vld [vmem:[%s2 + $0x44] sm:$0xf]
        %v3053 = vld [vmem:[%s2 + $0x48] sm:$0xf]
        %v3054 = vld [vmem:[%s2 + $0x4c] sm:$0xf]
        %v3055 = vld [vmem:[%s2 + $0x50] sm:$0xf]
        %v3056 = vld [vmem:[%s2 + $0x54] sm:$0xf]
        %v3057 = vld [vmem:[%s2 + $0x58] sm:$0xf]
        %v3058 = vld [vmem:[%s2 + $0x5c] sm:$0xf]
        %v3059 = vld [vmem:[%s2 + $0x60] sm:$0xf]
        %v3060 = vld [vmem:[%s2 + $0x64] sm:$0xf]
        %v3061 = vld [vmem:[%s2 + $0x68] sm:$0xf]
        %v3062 = vld [vmem:[%s2 + $0x6c] sm:$0xf]
        %v3063 = vld [vmem:[%s2 + $0x70] sm:$0xf]
        %v3064 = vld [vmem:[%s2 + $0x74] sm:$0xf]
        %v3065 = vld [vmem:[%s2 + $0x78] sm:$0xf]
        %v3066 = vld [vmem:[%s2 + $0x7c] sm:$0xf]
        %v3067 = vld [vmem:[%s2 + $0x80] sm:$0xf]
        %v3068 = vld [vmem:[%s2 + $0x84] sm:$0xf]
        %v3069 = vld [vmem:[%s2 + $0x88] sm:$0xf]
        %v3070 = vld [vmem:[%s2 + $0x8c] sm:$0xf]
        %v3071 = vld [vmem:[%s2 + $0x90] sm:$0xf]
        %v3072 = vld [vmem:[%s2 + $0x94] sm:$0xf]
        %v3073 = vld [vmem:[%s2 + $0x98] sm:$0xf]
        %v3074 = vld [vmem:[%s2 + $0x9c] sm:$0xf]
        %v3075 = vld [vmem:[%s2 + $0xa0] sm:$0xf]
        %v3076 = vld [vmem:[%s2 + $0xa4] sm:$0xf]
        %v3077 = vld [vmem:[%s2 + $0xa8] sm:$0xf]
        %v3078 = vld [vmem:[%s2 + $0xac] sm:$0xf]
        %v3079 = vld [vmem:[%s2 + $0xb0] sm:$0xf]
        %v3080 = vld [vmem:[%s2 + $0xb4] sm:$0xf]
        %v3081 = vld [vmem:[%s2 + $0xb8] sm:$0xf]
        %v3082 = vld [vmem:[%s2 + $0xbc] sm:$0xf]
        %v3083 = vld [vmem:[%s2 + $0xc0] sm:$0xf]
        %v3084 = vld [vmem:[%s2 + $0xc4] sm:$0xf]
        %v3085 = vld [vmem:[%s2 + $0xc8] sm:$0xf]
        %v3086 = vld [vmem:[%s2 + $0xcc] sm:$0xf]
        %v3087 = vld [vmem:[%s2 + $0xd0] sm:$0xf]
        %v3088 = vld [vmem:[%s2 + $0xd4] sm:$0xf]
        %v3089 = vld [vmem:[%s2 + $0xd8] sm:$0xf]
        %v3090 = vld [vmem:[%s2 + $0xdc] sm:$0xf]
        %v3091 = vld [vmem:[%s2 + $0xe0] sm:$0xf]
        %v3092 = vld [vmem:[%s2 + $0xe4] sm:$0xf]
        %v3093 = vld [vmem:[%s2 + $0xe8] sm:$0xf]
        %v3094 = vld [vmem:[%s2 + $0xec] sm:$0xf]
        %v3095 = vld [vmem:[%s2 + $0xf0] sm:$0xf]
        %v3096 = vld [vmem:[%s2 + $0xf4] sm:$0xf]
        %v3097 = vld [vmem:[%s2 + $0xf8] sm:$0xf]
        %v3098 = vld [vmem:[%s2 + $0xfc] sm:$0xf]
        %v3099 = vld [vmem:[%s2 + $0x100] sm:$0xf]
        %v3100 = vld [vmem:[%s2 + $0x104] sm:$0xf]
        %v3101 = vld [vmem:[%s2 + $0x108] sm:$0xf]
        %v3102 = vld [vmem:[%s2 + $0x10c] sm:$0xf]
        %v3103 = vld [vmem:[%s2 + $0x110] sm:$0xf]
        %v3104 = vld [vmem:[%s2 + $0x114] sm:$0xf]
        %v3105 = vld [vmem:[%s2 + $0x118] sm:$0xf]
        %v3106 = vld [vmem:[%s2 + $0x11c] sm:$0xf]
        %v3107 = vld [vmem:[%s3] sm:$0x1]
        %v3109 = vperm.slane %v3107, 0
        %v3183 = vunpack.c.l.b16 %v3035
        %v3184 = vunpack.c.l.b16 %v3036
        %v3185 = vunpack.c.l.b16 %v3037
        %v3186 = vunpack.c.l.b16 %v3038
        %v3187 = vunpack.c.l.b16 %v3039
        %v3188 = vunpack.c.l.b16 %v3040
        %v3189 = vunpack.c.l.b16 %v3041
        %v3190 = vunpack.c.l.b16 %v3042
        %v3191 = vunpack.c.l.b16 %v3043
        %v3192 = vunpack.c.l.b16 %v3044
        %v3193 = vunpack.c.l.b16 %v3045
        %v3194 = vunpack.c.l.b16 %v3046
        %v3195 = vunpack.c.l.b16 %v3047
        %v3196 = vunpack.c.l.b16 %v3048
        %v3197 = vunpack.c.l.b16 %v3049
        %v3198 = vunpack.c.l.b16 %v3050
        %v3199 = vunpack.c.l.b16 %v3051
        %v3200 = vunpack.c.l.b16 %v3052
        %v3201 = vunpack.c.l.b16 %v3053
        %v3202 = vunpack.c.l.b16 %v3054
        %v3203 = vunpack.c.l.b16 %v3055
        %v3204 = vunpack.c.l.b16 %v3056
        %v3205 = vunpack.c.l.b16 %v3057
        %v3206 = vunpack.c.l.b16 %v3058
        %v3207 = vunpack.c.l.b16 %v3059
        %v3208 = vunpack.c.l.b16 %v3060
        %v3209 = vunpack.c.l.b16 %v3061
        %v3210 = vunpack.c.l.b16 %v3062
        %v3211 = vunpack.c.l.b16 %v3063
        %v3212 = vunpack.c.l.b16 %v3064
        %v3213 = vunpack.c.l.b16 %v3065
        %v3214 = vunpack.c.l.b16 %v3066
        %v3215 = vunpack.c.l.b16 %v3067
        %v3216 = vunpack.c.l.b16 %v3068
        %v3217 = vunpack.c.l.b16 %v3069
        %v3218 = vunpack.c.l.b16 %v3070
        %v3219 = vunpack.c.l.b16 %v3071
        %v3220 = vunpack.c.l.b16 %v3072
        %v3221 = vunpack.c.l.b16 %v3073
        %v3222 = vunpack.c.l.b16 %v3074
        %v3223 = vunpack.c.l.b16 %v3075
        %v3224 = vunpack.c.l.b16 %v3076
        %v3225 = vunpack.c.l.b16 %v3077
        %v3226 = vunpack.c.l.b16 %v3078
        %v3227 = vunpack.c.l.b16 %v3079
        %v3228 = vunpack.c.l.b16 %v3080
        %v3229 = vunpack.c.l.b16 %v3081
        %v3230 = vunpack.c.l.b16 %v3082
        %v3231 = vunpack.c.l.b16 %v3083
        %v3232 = vunpack.c.l.b16 %v3084
        %v3233 = vunpack.c.l.b16 %v3085
        %v3234 = vunpack.c.l.b16 %v3086
        %v3235 = vunpack.c.l.b16 %v3087
        %v3236 = vunpack.c.l.b16 %v3088
        %v3237 = vunpack.c.l.b16 %v3089
        %v3238 = vunpack.c.l.b16 %v3090
        %v3239 = vunpack.c.l.b16 %v3091
        %v3240 = vunpack.c.l.b16 %v3092
        %v3241 = vunpack.c.l.b16 %v3093
        %v3242 = vunpack.c.l.b16 %v3094
        %v3243 = vunpack.c.l.b16 %v3095
        %v3244 = vunpack.c.l.b16 %v3096
        %v3245 = vunpack.c.l.b16 %v3097
        %v3246 = vunpack.c.l.b16 %v3098
        %v3247 = vunpack.c.l.b16 %v3099
        %v3248 = vunpack.c.l.b16 %v3100
        %v3249 = vunpack.c.l.b16 %v3101
        %v3250 = vunpack.c.l.b16 %v3102
        %v3251 = vunpack.c.l.b16 %v3103
        %v3252 = vunpack.c.l.b16 %v3104
        %v3253 = vunpack.c.l.b16 %v3105
        %v3254 = vunpack.c.l.b16 %v3106
        %v3255 = vpack.c.b16 %v3184, %v3183
        %v3256 = vpack.c.b16 %v3186, %v3185
        %v3257 = vpack.c.b16 %v3188, %v3187
        %v3258 = vpack.c.b16 %v3190, %v3189
        %v3259 = vpack.c.b16 %v3192, %v3191
        %v3260 = vpack.c.b16 %v3194, %v3193
        %v3261 = vpack.c.b16 %v3196, %v3195
        %v3262 = vpack.c.b16 %v3198, %v3197
        %v3263 = vpack.c.b16 %v3200, %v3199
        %v3264 = vpack.c.b16 %v3202, %v3201
        %v3265 = vpack.c.b16 %v3204, %v3203
        %v3266 = vpack.c.b16 %v3206, %v3205
        %v3267 = vpack.c.b16 %v3208, %v3207
        %v3268 = vpack.c.b16 %v3210, %v3209
        %v3269 = vpack.c.b16 %v3212, %v3211
        %v3270 = vpack.c.b16 %v3214, %v3213
        %v3271 = vpack.c.b16 %v3216, %v3215
        %v3272 = vpack.c.b16 %v3218, %v3217
        %v3273 = vpack.c.b16 %v3220, %v3219
        %v3274 = vpack.c.b16 %v3222, %v3221
        %v3275 = vpack.c.b16 %v3224, %v3223
        %v3276 = vpack.c.b16 %v3226, %v3225
        %v3277 = vpack.c.b16 %v3228, %v3227
        %v3278 = vpack.c.b16 %v3230, %v3229
        %v3279 = vpack.c.b16 %v3232, %v3231
        %v3280 = vpack.c.b16 %v3234, %v3233
        %v3281 = vpack.c.b16 %v3236, %v3235
        %v3282 = vpack.c.b16 %v3238, %v3237
        %v3283 = vpack.c.b16 %v3240, %v3239
        %v3284 = vpack.c.b16 %v3242, %v3241
        %v3285 = vpack.c.b16 %v3244, %v3243
        %v3286 = vpack.c.b16 %v3246, %v3245
        %v3287 = vpack.c.b16 %v3248, %v3247
        %v3288 = vpack.c.b16 %v3250, %v3249
        %v3289 = vpack.c.b16 %v3252, %v3251
        %v3290 = vpack.c.b16 %v3254, %v3253
        %v3327 = vsel %vm2483, %v2989, 0
        %v3329 = vsel %vm2483, %v2992, 0
        %v3331 = vsel %vm2483, %v2995, 0
        %v3333 = vsel %vm2483, %v2998, 0
        %v3335 = vsel %vm2483, %v3001, 0
        %v3337 = vsel %vm2483, %v3004, 0
        %v3339 = vsel %vm2483, %v3007, 0
        %v3341 = vsel %vm2483, %v3010, 0
        %v3343 = vsel %vm2483, %v3013, 0
        %v3345 = vsel %vm2483, %v3016, 0
        %v3347 = vsel %vm2483, %v3019, 0
        %v3349 = vsel %vm2483, %v3022, 0
        %v3351 = vsel %vm2483, %v3025, 0
        %v3353 = vsel %vm2483, %v3028, 0
        %v3355 = vsel %vm2483, %v3031, 0
        %v3357 = vsel %vm2483, %v3034, 0
        %3359 = vmatpush.bf16.msra.mxu0 %v3262
        %3360 = vmatpush.bf16.msra.mxu0 %v3261
        %3361 = vmatpush.bf16.msra.mxu0 %v3260
        %3362 = vmatpush.bf16.msra.mxu0 %v3259
        %3363 = vmatpush.bf16.msra.mxu0 %v3258
        %3364 = vmatpush.bf16.msra.mxu0 %v3257
        %3365 = vmatpush.bf16.msra.mxu0 %v3256
        %3366 = vmatpush.bf16.msra.mxu0 %v3255
        %3367 = vmatmul.bf16.gmra.mxu0 %v2518
        %v3368 = vpop.f32.mrf.mxu0
        %v3369 = vadd.f32 %v3109, %v3368
        %v3370 = vpop.f32.mrf.mxu0
        %v3371 = vadd.f32 %v3109, %v3370
        %3372 = vmatmul.bf16.gmra.mxu0 %v2521
        %v3373 = vpop.f32.mrf.mxu0
        %v3374 = vadd.f32 %v3109, %v3373
        %v3375 = vpop.f32.mrf.mxu0
        %v3376 = vadd.f32 %v3109, %v3375
        %3377 = vmatmul.bf16.gmra.mxu0 %v2524
        %v3378 = vpop.f32.mrf.mxu0
        %v3379 = vadd.f32 %v3109, %v3378
        %v3380 = vpop.f32.mrf.mxu0
        %v3381 = vadd.f32 %v3109, %v3380
        %3382 = vmatmul.bf16.gmra.mxu0 %v2527
        %v3383 = vpop.f32.mrf.mxu0
        %v3384 = vadd.f32 %v3109, %v3383
        %v3385 = vpop.f32.mrf.mxu0
        %v3386 = vadd.f32 %v3109, %v3385
        %3387 = vmatmul.bf16.gmra.mxu0 %v2530
        %v3388 = vpop.f32.mrf.mxu0
        %v3389 = vadd.f32 %v3109, %v3388
        %v3390 = vpop.f32.mrf.mxu0
        %v3391 = vadd.f32 %v3109, %v3390
        %3392 = vmatmul.bf16.gmra.mxu0 %v2533
        %v3393 = vpop.f32.mrf.mxu0
        %v3394 = vadd.f32 %v3109, %v3393
        %v3395 = vpop.f32.mrf.mxu0
        %v3396 = vadd.f32 %v3109, %v3395
        %3397 = vmatmul.bf16.gmra.mxu0 %v2536
        %v3398 = vpop.f32.mrf.mxu0
        %v3399 = vadd.f32 %v3109, %v3398
        %v3400 = vpop.f32.mrf.mxu0
        %v3401 = vadd.f32 %v3109, %v3400
        %3402 = vmatmul.bf16.gmra.mxu0 %v2539
        %v3403 = vpop.f32.mrf.mxu0
        %v3404 = vadd.f32 %v3109, %v3403
        %v3405 = vpop.f32.mrf.mxu0
        %v3406 = vadd.f32 %v3109, %v3405
        %3407 = vmatmul.bf16.gmra.mxu0 %v2542
        %v3408 = vpop.f32.mrf.mxu0
        %v3409 = vadd.f32 %v3109, %v3408
        %v3410 = vpop.f32.mrf.mxu0
        %v3411 = vadd.f32 %v3109, %v3410
        %3412 = vmatmul.bf16.gmra.mxu0 %v2545
        %v3413 = vpop.f32.mrf.mxu0
        %v3414 = vadd.f32 %v3109, %v3413
        %v3415 = vpop.f32.mrf.mxu0
        %v3416 = vadd.f32 %v3109, %v3415
        %3417 = vmatmul.bf16.gmra.mxu0 %v2548
        %v3418 = vpop.f32.mrf.mxu0
        %v3419 = vadd.f32 %v3109, %v3418
        %v3420 = vpop.f32.mrf.mxu0
        %v3421 = vadd.f32 %v3109, %v3420
        %3422 = vmatmul.bf16.gmra.mxu0 %v2551
        %v3423 = vpop.f32.mrf.mxu0
        %v3424 = vadd.f32 %v3109, %v3423
        %v3425 = vpop.f32.mrf.mxu0
        %v3426 = vadd.f32 %v3109, %v3425
        %3427 = vmatmul.bf16.gmra.mxu0 %v2554
        %v3428 = vpop.f32.mrf.mxu0
        %v3429 = vadd.f32 %v3109, %v3428
        %v3430 = vpop.f32.mrf.mxu0
        %v3431 = vadd.f32 %v3109, %v3430
        %3432 = vmatmul.bf16.gmra.mxu0 %v2557
        %v3433 = vpop.f32.mrf.mxu0
        %v3434 = vadd.f32 %v3109, %v3433
        %v3435 = vpop.f32.mrf.mxu0
        %v3436 = vadd.f32 %v3109, %v3435
        %3437 = vmatmul.bf16.gmra.mxu0 %v2560
        %v3438 = vpop.f32.mrf.mxu0
        %v3439 = vadd.f32 %v3109, %v3438
        %v3440 = vpop.f32.mrf.mxu0
        %v3441 = vadd.f32 %v3109, %v3440
        %3442 = vmatmul.bf16.gmra.mxu0 %v2563
        %v3443 = vpop.f32.mrf.mxu0
        %v3444 = vadd.f32 %v3109, %v3443
        %v3445 = vpop.f32.mrf.mxu0
        %v3446 = vadd.f32 %v3109, %v3445
        %3447 = vdwg.mxu0
        %3448 = vmatpush.bf16.msra.mxu0 %v3270
        %3449 = vmatpush.bf16.msra.mxu0 %v3269
        %3450 = vmatpush.bf16.msra.mxu0 %v3268
        %3451 = vmatpush.bf16.msra.mxu0 %v3267
        %3452 = vmatpush.bf16.msra.mxu0 %v3266
        %3453 = vmatpush.bf16.msra.mxu0 %v3265
        %3454 = vmatpush.bf16.msra.mxu0 %v3264
        %3455 = vmatpush.bf16.msra.mxu0 %v3263
        %3456 = vmatmul.bf16.gmra.mxu0 %v2646
        %v3457 = vpop.f32.mrf.mxu0
        %v3458 = vadd.f32 %v3369, %v3457
        %v3459 = vpop.f32.mrf.mxu0
        %v3460 = vadd.f32 %v3371, %v3459
        %3461 = vmatmul.bf16.gmra.mxu0 %v2649
        %v3462 = vpop.f32.mrf.mxu0
        %v3463 = vadd.f32 %v3374, %v3462
        %v3464 = vpop.f32.mrf.mxu0
        %v3465 = vadd.f32 %v3376, %v3464
        %3466 = vmatmul.bf16.gmra.mxu0 %v2652
        %v3467 = vpop.f32.mrf.mxu0
        %v3468 = vadd.f32 %v3379, %v3467
        %v3469 = vpop.f32.mrf.mxu0
        %v3470 = vadd.f32 %v3381, %v3469
        %3471 = vmatmul.bf16.gmra.mxu0 %v2655
        %v3472 = vpop.f32.mrf.mxu0
        %v3473 = vadd.f32 %v3384, %v3472
        %v3474 = vpop.f32.mrf.mxu0
        %v3475 = vadd.f32 %v3386, %v3474
        %3476 = vmatmul.bf16.gmra.mxu0 %v2658
        %v3477 = vpop.f32.mrf.mxu0
        %v3478 = vadd.f32 %v3389, %v3477
        %v3479 = vpop.f32.mrf.mxu0
        %v3480 = vadd.f32 %v3391, %v3479
        %3481 = vmatmul.bf16.gmra.mxu0 %v2661
        %v3482 = vpop.f32.mrf.mxu0
        %v3483 = vadd.f32 %v3394, %v3482
        %v3484 = vpop.f32.mrf.mxu0
        %v3485 = vadd.f32 %v3396, %v3484
        %3486 = vmatmul.bf16.gmra.mxu0 %v2664
        %v3487 = vpop.f32.mrf.mxu0
        %v3488 = vadd.f32 %v3399, %v3487
        %v3489 = vpop.f32.mrf.mxu0
        %v3490 = vadd.f32 %v3401, %v3489
        %3491 = vmatmul.bf16.gmra.mxu0 %v2667
        %v3492 = vpop.f32.mrf.mxu0
        %v3493 = vadd.f32 %v3404, %v3492
        %v3494 = vpop.f32.mrf.mxu0
        %v3495 = vadd.f32 %v3406, %v3494
        %3496 = vmatmul.bf16.gmra.mxu0 %v2670
        %v3497 = vpop.f32.mrf.mxu0
        %v3498 = vadd.f32 %v3409, %v3497
        %v3499 = vpop.f32.mrf.mxu0
        %v3500 = vadd.f32 %v3411, %v3499
        %3501 = vmatmul.bf16.gmra.mxu0 %v2673
        %v3502 = vpop.f32.mrf.mxu0
        %v3503 = vadd.f32 %v3414, %v3502
        %v3504 = vpop.f32.mrf.mxu0
        %v3505 = vadd.f32 %v3416, %v3504
        %3506 = vmatmul.bf16.gmra.mxu0 %v2676
        %v3507 = vpop.f32.mrf.mxu0
        %v3508 = vadd.f32 %v3419, %v3507
        %v3509 = vpop.f32.mrf.mxu0
        %v3510 = vadd.f32 %v3421, %v3509
        %3511 = vmatmul.bf16.gmra.mxu0 %v2679
        %v3512 = vpop.f32.mrf.mxu0
        %v3513 = vadd.f32 %v3424, %v3512
        %v3514 = vpop.f32.mrf.mxu0
        %v3515 = vadd.f32 %v3426, %v3514
        %3516 = vmatmul.bf16.gmra.mxu0 %v2682
        %v3517 = vpop.f32.mrf.mxu0
        %v3518 = vadd.f32 %v3429, %v3517
        %v3519 = vpop.f32.mrf.mxu0
        %v3520 = vadd.f32 %v3431, %v3519
        %3521 = vmatmul.bf16.gmra.mxu0 %v2685
        %v3522 = vpop.f32.mrf.mxu0
        %v3523 = vadd.f32 %v3434, %v3522
        %v3524 = vpop.f32.mrf.mxu0
        %v3525 = vadd.f32 %v3436, %v3524
        %3526 = vmatmul.bf16.gmra.mxu0 %v2688
        %v3527 = vpop.f32.mrf.mxu0
        %v3528 = vadd.f32 %v3439, %v3527
        %v3529 = vpop.f32.mrf.mxu0
        %v3530 = vadd.f32 %v3441, %v3529
        %3531 = vmatmul.bf16.gmra.mxu0 %v2691
        %v3532 = vpop.f32.mrf.mxu0
        %v3533 = vadd.f32 %v3444, %v3532
        %v3534 = vpop.f32.mrf.mxu0
        %v3535 = vadd.f32 %v3446, %v3534
        %3536 = vdwg.mxu0
        %3537 = vmatpush.bf16.msra.mxu0 %v3278
        %3538 = vmatpush.bf16.msra.mxu0 %v3277
        %3539 = vmatpush.bf16.msra.mxu0 %v3276
        %3540 = vmatpush.bf16.msra.mxu0 %v3275
        %3541 = vmatpush.bf16.msra.mxu0 %v3274
        %3542 = vmatpush.bf16.msra.mxu0 %v3273
        %3543 = vmatpush.bf16.msra.mxu0 %v3272
        %3544 = vmatpush.bf16.msra.mxu0 %v3271
        %3545 = vmatmul.bf16.gmra.mxu0 %v2774
        %v3546 = vpop.f32.mrf.mxu0
        %v3547 = vadd.f32 %v3458, %v3546
        %v3548 = vpop.f32.mrf.mxu0
        %v3549 = vadd.f32 %v3460, %v3548
        %3550 = vmatmul.bf16.gmra.mxu0 %v2777
        %v3551 = vpop.f32.mrf.mxu0
        %v3552 = vadd.f32 %v3463, %v3551
        %v3553 = vpop.f32.mrf.mxu0
        %v3554 = vadd.f32 %v3465, %v3553
        %3555 = vmatmul.bf16.gmra.mxu0 %v2780
        %v3556 = vpop.f32.mrf.mxu0
        %v3557 = vadd.f32 %v3468, %v3556
        %v3558 = vpop.f32.mrf.mxu0
        %v3559 = vadd.f32 %v3470, %v3558
        %3560 = vmatmul.bf16.gmra.mxu0 %v2783
        %v3561 = vpop.f32.mrf.mxu0
        %v3562 = vadd.f32 %v3473, %v3561
        %v3563 = vpop.f32.mrf.mxu0
        %v3564 = vadd.f32 %v3475, %v3563
        %3565 = vmatmul.bf16.gmra.mxu0 %v2786
        %v3566 = vpop.f32.mrf.mxu0
        %v3567 = vadd.f32 %v3478, %v3566
        %v3568 = vpop.f32.mrf.mxu0
        %v3569 = vadd.f32 %v3480, %v3568
        %3570 = vmatmul.bf16.gmra.mxu0 %v2789
        %v3571 = vpop.f32.mrf.mxu0
        %v3572 = vadd.f32 %v3483, %v3571
        %v3573 = vpop.f32.mrf.mxu0
        %v3574 = vadd.f32 %v3485, %v3573
        %3575 = vmatmul.bf16.gmra.mxu0 %v2792
        %v3576 = vpop.f32.mrf.mxu0
        %v3577 = vadd.f32 %v3488, %v3576
        %v3578 = vpop.f32.mrf.mxu0
        %v3579 = vadd.f32 %v3490, %v3578
        %3580 = vmatmul.bf16.gmra.mxu0 %v2795
        %v3581 = vpop.f32.mrf.mxu0
        %v3582 = vadd.f32 %v3493, %v3581
        %v3583 = vpop.f32.mrf.mxu0
        %v3584 = vadd.f32 %v3495, %v3583
        %3585 = vmatmul.bf16.gmra.mxu0 %v2798
        %v3586 = vpop.f32.mrf.mxu0
        %v3587 = vadd.f32 %v3498, %v3586
        %v3588 = vpop.f32.mrf.mxu0
        %v3589 = vadd.f32 %v3500, %v3588
        %3590 = vmatmul.bf16.gmra.mxu0 %v2801
        %v3591 = vpop.f32.mrf.mxu0
        %v3592 = vadd.f32 %v3503, %v3591
        %v3593 = vpop.f32.mrf.mxu0
        %v3594 = vadd.f32 %v3505, %v3593
        %3595 = vmatmul.bf16.gmra.mxu0 %v2804
        %v3596 = vpop.f32.mrf.mxu0
        %v3597 = vadd.f32 %v3508, %v3596
        %v3598 = vpop.f32.mrf.mxu0
        %v3599 = vadd.f32 %v3510, %v3598
        %3600 = vmatmul.bf16.gmra.mxu0 %v2807
        %v3601 = vpop.f32.mrf.mxu0
        %v3602 = vadd.f32 %v3513, %v3601
        %v3603 = vpop.f32.mrf.mxu0
        %v3604 = vadd.f32 %v3515, %v3603
        %3605 = vmatmul.bf16.gmra.mxu0 %v2810
        %v3606 = vpop.f32.mrf.mxu0
        %v3607 = vadd.f32 %v3518, %v3606
        %v3608 = vpop.f32.mrf.mxu0
        %v3609 = vadd.f32 %v3520, %v3608
        %3610 = vmatmul.bf16.gmra.mxu0 %v2813
        %v3611 = vpop.f32.mrf.mxu0
        %v3612 = vadd.f32 %v3523, %v3611
        %v3613 = vpop.f32.mrf.mxu0
        %v3614 = vadd.f32 %v3525, %v3613
        %3615 = vmatmul.bf16.gmra.mxu0 %v2816
        %v3616 = vpop.f32.mrf.mxu0
        %v3617 = vadd.f32 %v3528, %v3616
        %v3618 = vpop.f32.mrf.mxu0
        %v3619 = vadd.f32 %v3530, %v3618
        %3620 = vmatmul.bf16.gmra.mxu0 %v2819
        %v3621 = vpop.f32.mrf.mxu0
        %v3622 = vadd.f32 %v3533, %v3621
        %v3623 = vpop.f32.mrf.mxu0
        %v3624 = vadd.f32 %v3535, %v3623
        %3625 = vdwg.mxu0
        %3626 = vmatpush.bf16.msra.mxu0 %v3286
        %3627 = vmatpush.bf16.msra.mxu0 %v3285
        %3628 = vmatpush.bf16.msra.mxu0 %v3284
        %3629 = vmatpush.bf16.msra.mxu0 %v3283
        %3630 = vmatpush.bf16.msra.mxu0 %v3282
        %3631 = vmatpush.bf16.msra.mxu0 %v3281
        %3632 = vmatpush.bf16.msra.mxu0 %v3280
        %3633 = vmatpush.bf16.msra.mxu0 %v3279
        %3634 = vmatmul.bf16.gmra.mxu0 %v2902
        %v3635 = vpop.f32.mrf.mxu0
        %v3636 = vadd.f32 %v3547, %v3635
        %v3637 = vpop.f32.mrf.mxu0
        %v3638 = vadd.f32 %v3549, %v3637
        %3639 = vmatmul.bf16.gmra.mxu0 %v2905
        %v3640 = vpop.f32.mrf.mxu0
        %v3641 = vadd.f32 %v3552, %v3640
        %v3642 = vpop.f32.mrf.mxu0
        %v3643 = vadd.f32 %v3554, %v3642
        %3644 = vmatmul.bf16.gmra.mxu0 %v2908
        %v3645 = vpop.f32.mrf.mxu0
        %v3646 = vadd.f32 %v3557, %v3645
        %v3647 = vpop.f32.mrf.mxu0
        %v3648 = vadd.f32 %v3559, %v3647
        %3649 = vmatmul.bf16.gmra.mxu0 %v2911
        %v3650 = vpop.f32.mrf.mxu0
        %v3651 = vadd.f32 %v3562, %v3650
        %v3652 = vpop.f32.mrf.mxu0
        %v3653 = vadd.f32 %v3564, %v3652
        %3654 = vmatmul.bf16.gmra.mxu0 %v2914
        %v3655 = vpop.f32.mrf.mxu0
        %v3656 = vadd.f32 %v3567, %v3655
        %v3657 = vpop.f32.mrf.mxu0
        %v3658 = vadd.f32 %v3569, %v3657
        %3659 = vmatmul.bf16.gmra.mxu0 %v2917
        %v3660 = vpop.f32.mrf.mxu0
        %v3661 = vadd.f32 %v3572, %v3660
        %v3662 = vpop.f32.mrf.mxu0
        %v3663 = vadd.f32 %v3574, %v3662
        %3664 = vmatmul.bf16.gmra.mxu0 %v2920
        %v3665 = vpop.f32.mrf.mxu0
        %v3666 = vadd.f32 %v3577, %v3665
        %v3667 = vpop.f32.mrf.mxu0
        %v3668 = vadd.f32 %v3579, %v3667
        %3669 = vmatmul.bf16.gmra.mxu0 %v2923
        %v3670 = vpop.f32.mrf.mxu0
        %v3671 = vadd.f32 %v3582, %v3670
        %v3672 = vpop.f32.mrf.mxu0
        %v3673 = vadd.f32 %v3584, %v3672
        %3674 = vmatmul.bf16.gmra.mxu0 %v2926
        %v3675 = vpop.f32.mrf.mxu0
        %v3676 = vadd.f32 %v3587, %v3675
        %v3677 = vpop.f32.mrf.mxu0
        %v3678 = vadd.f32 %v3589, %v3677
        %3679 = vmatmul.bf16.gmra.mxu0 %v2929
        %v3680 = vpop.f32.mrf.mxu0
        %v3681 = vadd.f32 %v3592, %v3680
        %v3682 = vpop.f32.mrf.mxu0
        %v3683 = vadd.f32 %v3594, %v3682
        %3684 = vmatmul.bf16.gmra.mxu0 %v2932
        %v3685 = vpop.f32.mrf.mxu0
        %v3686 = vadd.f32 %v3597, %v3685
        %v3687 = vpop.f32.mrf.mxu0
        %v3688 = vadd.f32 %v3599, %v3687
        %3689 = vmatmul.bf16.gmra.mxu0 %v2935
        %v3690 = vpop.f32.mrf.mxu0
        %v3691 = vadd.f32 %v3602, %v3690
        %v3692 = vpop.f32.mrf.mxu0
        %v3693 = vadd.f32 %v3604, %v3692
        %3694 = vmatmul.bf16.gmra.mxu0 %v2938
        %v3695 = vpop.f32.mrf.mxu0
        %v3696 = vadd.f32 %v3607, %v3695
        %v3697 = vpop.f32.mrf.mxu0
        %v3698 = vadd.f32 %v3609, %v3697
        %3699 = vmatmul.bf16.gmra.mxu0 %v2941
        %v3700 = vpop.f32.mrf.mxu0
        %v3701 = vadd.f32 %v3612, %v3700
        %v3702 = vpop.f32.mrf.mxu0
        %v3703 = vadd.f32 %v3614, %v3702
        %3704 = vmatmul.bf16.gmra.mxu0 %v2944
        %v3705 = vpop.f32.mrf.mxu0
        %v3706 = vadd.f32 %v3617, %v3705
        %v3707 = vpop.f32.mrf.mxu0
        %v3708 = vadd.f32 %v3619, %v3707
        %3709 = vmatmul.bf16.gmra.mxu0 %v2947
        %v3710 = vpop.f32.mrf.mxu0
        %v3711 = vadd.f32 %v3622, %v3710
        %v3712 = vpop.f32.mrf.mxu0
        %v3713 = vadd.f32 %v3624, %v3712
        %3714 = vdwg.mxu0
        %3715 = vmatpush.bf16.msra.mxu0 0
        %3716 = vmatpush.bf16.msra.mxu0 0
        %3717 = vmatpush.bf16.msra.mxu0 0
        %3718 = vmatpush.bf16.msra.mxu0 0
        %3719 = vmatpush.bf16.msra.mxu0 %v3290
        %3720 = vmatpush.bf16.msra.mxu0 %v3289
        %3721 = vmatpush.bf16.msra.mxu0 %v3288
        %3722 = vmatpush.bf16.msra.mxu0 %v3287
        %3723 = vmatmul.bf16.gmra.mxu0 %v3327
        %v3724 = vpop.f32.mrf.mxu0
        %v3725 = vadd.f32 %v3636, %v3724
        %v3726 = vpop.f32.mrf.mxu0
        %v3727 = vadd.f32 %v3638, %v3726
        %3728 = vmatmul.bf16.gmra.mxu0 %v3329
        %v3729 = vpop.f32.mrf.mxu0
        %v3730 = vadd.f32 %v3641, %v3729
        %v3731 = vpop.f32.mrf.mxu0
        %v3732 = vadd.f32 %v3643, %v3731
        %3733 = vmatmul.bf16.gmra.mxu0 %v3331
        %v3734 = vpop.f32.mrf.mxu0
        %v3735 = vadd.f32 %v3646, %v3734
        %v3736 = vpop.f32.mrf.mxu0
        %v3737 = vadd.f32 %v3648, %v3736
        %3738 = vmatmul.bf16.gmra.mxu0 %v3333
        %v3739 = vpop.f32.mrf.mxu0
        %v3740 = vadd.f32 %v3651, %v3739
        %v3741 = vpop.f32.mrf.mxu0
        %v3742 = vadd.f32 %v3653, %v3741
        %3743 = vmatmul.bf16.gmra.mxu0 %v3335
        %v3744 = vpop.f32.mrf.mxu0
        %v3745 = vadd.f32 %v3656, %v3744
        %v3746 = vpop.f32.mrf.mxu0
        %v3747 = vadd.f32 %v3658, %v3746
        %3748 = vmatmul.bf16.gmra.mxu0 %v3337
        %v3749 = vpop.f32.mrf.mxu0
        %v3750 = vadd.f32 %v3661, %v3749
        %v3751 = vpop.f32.mrf.mxu0
        %v3752 = vadd.f32 %v3663, %v3751
        %3753 = vmatmul.bf16.gmra.mxu0 %v3339
        %v3754 = vpop.f32.mrf.mxu0
        %v3755 = vadd.f32 %v3666, %v3754
        %v3756 = vpop.f32.mrf.mxu0
        %v3757 = vadd.f32 %v3668, %v3756
        %3758 = vmatmul.bf16.gmra.mxu0 %v3341
        %v3759 = vpop.f32.mrf.mxu0
        %v3760 = vadd.f32 %v3671, %v3759
        %v3761 = vpop.f32.mrf.mxu0
        %v3762 = vadd.f32 %v3673, %v3761
        %3763 = vmatmul.bf16.gmra.mxu0 %v3343
        %v3764 = vpop.f32.mrf.mxu0
        %v3765 = vadd.f32 %v3676, %v3764
        %v3766 = vpop.f32.mrf.mxu0
        %v3767 = vadd.f32 %v3678, %v3766
        %3768 = vmatmul.bf16.gmra.mxu0 %v3345
        %v3769 = vpop.f32.mrf.mxu0
        %v3770 = vadd.f32 %v3681, %v3769
        %v3771 = vpop.f32.mrf.mxu0
        %v3772 = vadd.f32 %v3683, %v3771
        %3773 = vmatmul.bf16.gmra.mxu0 %v3347
        %v3774 = vpop.f32.mrf.mxu0
        %v3775 = vadd.f32 %v3686, %v3774
        %v3776 = vpop.f32.mrf.mxu0
        %v3777 = vadd.f32 %v3688, %v3776
        %3778 = vmatmul.bf16.gmra.mxu0 %v3349
        %v3779 = vpop.f32.mrf.mxu0
        %v3780 = vadd.f32 %v3691, %v3779
        %v3781 = vpop.f32.mrf.mxu0
        %v3782 = vadd.f32 %v3693, %v3781
        %3783 = vmatmul.bf16.gmra.mxu0 %v3351
        %v3784 = vpop.f32.mrf.mxu0
        %v3785 = vadd.f32 %v3696, %v3784
        %v3786 = vpop.f32.mrf.mxu0
        %v3787 = vadd.f32 %v3698, %v3786
        %3788 = vmatmul.bf16.gmra.mxu0 %v3353
        %v3789 = vpop.f32.mrf.mxu0
        %v3790 = vadd.f32 %v3701, %v3789
        %v3791 = vpop.f32.mrf.mxu0
        %v3792 = vadd.f32 %v3703, %v3791
        %3793 = vmatmul.bf16.gmra.mxu0 %v3355
        %v3794 = vpop.f32.mrf.mxu0
        %v3795 = vadd.f32 %v3706, %v3794
        %v3796 = vpop.f32.mrf.mxu0
        %v3797 = vadd.f32 %v3708, %v3796
        %3798 = vmatmul.bf16.gmra.mxu0 %v3357
        %v3799 = vpop.f32.mrf.mxu0
        %v3800 = vadd.f32 %v3711, %v3799
        %v3801 = vpop.f32.mrf.mxu0
        %v3802 = vadd.f32 %v3713, %v3801
        %3803 = vdwg.mxu0
        %v3804 = vxor.u32 %v3725, 2147483648
        %v3805 = vxor.u32 %v3727, 2147483648
        %v3806 = vxor.u32 %v3730, 2147483648
        %v3807 = vxor.u32 %v3732, 2147483648
        %v3808 = vxor.u32 %v3735, 2147483648
        %v3809 = vxor.u32 %v3737, 2147483648
        %v3810 = vxor.u32 %v3740, 2147483648
        %v3811 = vxor.u32 %v3742, 2147483648
        %v3812 = vxor.u32 %v3745, 2147483648
        %v3813 = vxor.u32 %v3747, 2147483648
        %v3814 = vxor.u32 %v3750, 2147483648
        %v3815 = vxor.u32 %v3752, 2147483648
        %v3816 = vxor.u32 %v3755, 2147483648
        %v3817 = vxor.u32 %v3757, 2147483648
        %v3818 = vxor.u32 %v3760, 2147483648
        %v3819 = vxor.u32 %v3762, 2147483648
        %v3820 = vxor.u32 %v3765, 2147483648
        %v3821 = vxor.u32 %v3767, 2147483648
        %v3822 = vxor.u32 %v3770, 2147483648
        %v3823 = vxor.u32 %v3772, 2147483648
        %v3824 = vxor.u32 %v3775, 2147483648
        %v3825 = vxor.u32 %v3777, 2147483648
        %v3826 = vxor.u32 %v3780, 2147483648
        %v3827 = vxor.u32 %v3782, 2147483648
        %v3828 = vxor.u32 %v3785, 2147483648
        %v3829 = vxor.u32 %v3787, 2147483648
        %v3830 = vxor.u32 %v3790, 2147483648
        %v3831 = vxor.u32 %v3792, 2147483648
        %v3832 = vxor.u32 %v3795, 2147483648
        %v3833 = vxor.u32 %v3797, 2147483648
        %v3834 = vxor.u32 %v3800, 2147483648
        %v3835 = vxor.u32 %v3802, 2147483648
        %v3836 = vmul.f32 %v3804, 1.442695
        %v3837 = vpow.pop %v3836
        %v3838 = vmul.f32 %v3805, 1.442695
        %v3839 = vpow.pop %v3838
        %v3840 = vmul.f32 %v3806, 1.442695
        %v3841 = vpow.pop %v3840
        %v3842 = vmul.f32 %v3807, 1.442695
        %v3843 = vpow.pop %v3842
        %v3844 = vmul.f32 %v3808, 1.442695
        %v3845 = vpow.pop %v3844
        %v3846 = vmul.f32 %v3809, 1.442695
        %v3847 = vpow.pop %v3846
        %v3848 = vmul.f32 %v3810, 1.442695
        %v3849 = vpow.pop %v3848
        %v3850 = vmul.f32 %v3811, 1.442695
        %v3851 = vpow.pop %v3850
        %v3852 = vmul.f32 %v3812, 1.442695
        %v3853 = vpow.pop %v3852
        %v3854 = vmul.f32 %v3813, 1.442695
        %v3855 = vpow.pop %v3854
        %v3856 = vmul.f32 %v3814, 1.442695
        %v3857 = vpow.pop %v3856
        %v3858 = vmul.f32 %v3815, 1.442695
        %v3859 = vpow.pop %v3858
        %v3860 = vmul.f32 %v3816, 1.442695
        %v3861 = vpow.pop %v3860
        %v3862 = vmul.f32 %v3817, 1.442695
        %v3863 = vpow.pop %v3862
        %v3864 = vmul.f32 %v3818, 1.442695
        %v3865 = vpow.pop %v3864
        %v3866 = vmul.f32 %v3819, 1.442695
        %v3867 = vpow.pop %v3866
        %v3868 = vmul.f32 %v3820, 1.442695
        %v3869 = vpow.pop %v3868
        %v3870 = vmul.f32 %v3821, 1.442695
        %v3871 = vpow.pop %v3870
        %v3872 = vmul.f32 %v3822, 1.442695
        %v3873 = vpow.pop %v3872
        %v3874 = vmul.f32 %v3823, 1.442695
        %v3875 = vpow.pop %v3874
        %v3876 = vmul.f32 %v3824, 1.442695
        %v3877 = vpow.pop %v3876
        %v3878 = vmul.f32 %v3825, 1.442695
        %v3879 = vpow.pop %v3878
        %v3880 = vmul.f32 %v3826, 1.442695
        %v3881 = vpow.pop %v3880
        %v3882 = vmul.f32 %v3827, 1.442695
        %v3883 = vpow.pop %v3882
        %v3884 = vmul.f32 %v3828, 1.442695
        %v3885 = vpow.pop %v3884
        %v3886 = vmul.f32 %v3829, 1.442695
        %v3887 = vpow.pop %v3886
        %v3888 = vmul.f32 %v3830, 1.442695
        %v3889 = vpow.pop %v3888
        %v3890 = vmul.f32 %v3831, 1.442695
        %v3891 = vpow.pop %v3890
        %v3892 = vmul.f32 %v3832, 1.442695
        %v3893 = vpow.pop %v3892
        %v3894 = vmul.f32 %v3833, 1.442695
        %v3895 = vpow.pop %v3894
        %v3896 = vmul.f32 %v3834, 1.442695
        %v3897 = vpow.pop %v3896
        %v3898 = vmul.f32 %v3835, 1.442695
        %v3899 = vpow.pop %v3898
        %v3900 = vadd.f32 %v3837, 1.0
        %v3901 = vadd.f32 %v3839, 1.0
        %v3902 = vadd.f32 %v3841, 1.0
        %v3903 = vadd.f32 %v3843, 1.0
        %v3904 = vadd.f32 %v3845, 1.0
        %v3905 = vadd.f32 %v3847, 1.0
        %v3906 = vadd.f32 %v3849, 1.0
        %v3907 = vadd.f32 %v3851, 1.0
        %v3908 = vadd.f32 %v3853, 1.0
        %v3909 = vadd.f32 %v3855, 1.0
        %v3910 = vadd.f32 %v3857, 1.0
        %v3911 = vadd.f32 %v3859, 1.0
        %v3912 = vadd.f32 %v3861, 1.0
        %v3913 = vadd.f32 %v3863, 1.0
        %v3914 = vadd.f32 %v3865, 1.0
        %v3915 = vadd.f32 %v3867, 1.0
        %v3916 = vadd.f32 %v3869, 1.0
        %v3917 = vadd.f32 %v3871, 1.0
        %v3918 = vadd.f32 %v3873, 1.0
        %v3919 = vadd.f32 %v3875, 1.0
        %v3920 = vadd.f32 %v3877, 1.0
        %v3921 = vadd.f32 %v3879, 1.0
        %v3922 = vadd.f32 %v3881, 1.0
        %v3923 = vadd.f32 %v3883, 1.0
        %v3924 = vadd.f32 %v3885, 1.0
        %v3925 = vadd.f32 %v3887, 1.0
        %v3926 = vadd.f32 %v3889, 1.0
        %v3927 = vadd.f32 %v3891, 1.0
        %v3928 = vadd.f32 %v3893, 1.0
        %v3929 = vadd.f32 %v3895, 1.0
        %v3930 = vadd.f32 %v3897, 1.0
        %v3931 = vadd.f32 %v3899, 1.0
        %v3932 = vrcp.pop %v3900
        %v3933 = vmul.f32 %v3900, %v3932
        %v3934 = vsub.f32 1.0, %v3933
        %v3935 = vmul.f32 %v3932, %v3934
        %v3936 = vadd.f32 %v3932, %v3935
        %vm3937 = vweird.f32 %v3900
        %vm3938 = vweird.f32 %v3932
        %vm3939 = vmor %vm3937, %vm3938
        %v3940 = vsel %vm3939, %v3932, %v3936
        %v3941 = vand.u32 2147483647, %v3900
        %vm3942 = vcmp.eq.f32.partialorder %v3941, 8.507059e+37
        %v3943 = vand.u32 %v3900, 2147483648
        %v3944 = vor.u32 1.1754944e-38, %v3943
        %v3945 = vsel %vm3942, %v3944, %v3940
        %v3946 = vmul.f32 1.0, %v3945
        %v3947 = vrcp.pop %v3901
        %v3948 = vmul.f32 %v3901, %v3947
        %v3949 = vsub.f32 1.0, %v3948
        %v3950 = vmul.f32 %v3947, %v3949
        %v3951 = vadd.f32 %v3947, %v3950
        %vm3952 = vweird.f32 %v3901
        %vm3953 = vweird.f32 %v3947
        %vm3954 = vmor %vm3952, %vm3953
        %v3955 = vsel %vm3954, %v3947, %v3951
        %v3956 = vand.u32 2147483647, %v3901
        %vm3957 = vcmp.eq.f32.partialorder %v3956, 8.507059e+37
        %v3958 = vand.u32 %v3901, 2147483648
        %v3959 = vor.u32 1.1754944e-38, %v3958
        %v3960 = vsel %vm3957, %v3959, %v3955
        %v3961 = vmul.f32 1.0, %v3960
        %v3962 = vrcp.pop %v3902
        %v3963 = vmul.f32 %v3902, %v3962
        %v3964 = vsub.f32 1.0, %v3963
        %v3965 = vmul.f32 %v3962, %v3964
        %v3966 = vadd.f32 %v3962, %v3965
        %vm3967 = vweird.f32 %v3902
        %vm3968 = vweird.f32 %v3962
        %vm3969 = vmor %vm3967, %vm3968
        %v3970 = vsel %vm3969, %v3962, %v3966
        %v3971 = vand.u32 2147483647, %v3902
        %vm3972 = vcmp.eq.f32.partialorder %v3971, 8.507059e+37
        %v3973 = vand.u32 %v3902, 2147483648
        %v3974 = vor.u32 1.1754944e-38, %v3973
        %v3975 = vsel %vm3972, %v3974, %v3970
        %v3976 = vmul.f32 1.0, %v3975
        %v3977 = vrcp.pop %v3903
        %v3978 = vmul.f32 %v3903, %v3977
        %v3979 = vsub.f32 1.0, %v3978
        %v3980 = vmul.f32 %v3977, %v3979
        %v3981 = vadd.f32 %v3977, %v3980
        %vm3982 = vweird.f32 %v3903
        %vm3983 = vweird.f32 %v3977
        %vm3984 = vmor %vm3982, %vm3983
        %v3985 = vsel %vm3984, %v3977, %v3981
        %v3986 = vand.u32 2147483647, %v3903
        %vm3987 = vcmp.eq.f32.partialorder %v3986, 8.507059e+37
        %v3988 = vand.u32 %v3903, 2147483648
        %v3989 = vor.u32 1.1754944e-38, %v3988
        %v3990 = vsel %vm3987, %v3989, %v3985
        %v3991 = vmul.f32 1.0, %v3990
        %v3992 = vrcp.pop %v3904
        %v3993 = vmul.f32 %v3904, %v3992
        %v3994 = vsub.f32 1.0, %v3993
        %v3995 = vmul.f32 %v3992, %v3994
        %v3996 = vadd.f32 %v3992, %v3995
        %vm3997 = vweird.f32 %v3904
        %vm3998 = vweird.f32 %v3992
        %vm3999 = vmor %vm3997, %vm3998
        %v4000 = vsel %vm3999, %v3992, %v3996
        %v4001 = vand.u32 2147483647, %v3904
        %vm4002 = vcmp.eq.f32.partialorder %v4001, 8.507059e+37
        %v4003 = vand.u32 %v3904, 2147483648
        %v4004 = vor.u32 1.1754944e-38, %v4003
        %v4005 = vsel %vm4002, %v4004, %v4000
        %v4006 = vmul.f32 1.0, %v4005
        %v4007 = vrcp.pop %v3905
        %v4008 = vmul.f32 %v3905, %v4007
        %v4009 = vsub.f32 1.0, %v4008
        %v4010 = vmul.f32 %v4007, %v4009
        %v4011 = vadd.f32 %v4007, %v4010
        %vm4012 = vweird.f32 %v3905
        %vm4013 = vweird.f32 %v4007
        %vm4014 = vmor %vm4012, %vm4013
        %v4015 = vsel %vm4014, %v4007, %v4011
        %v4016 = vand.u32 2147483647, %v3905
        %vm4017 = vcmp.eq.f32.partialorder %v4016, 8.507059e+37
        %v4018 = vand.u32 %v3905, 2147483648
        %v4019 = vor.u32 1.1754944e-38, %v4018
        %v4020 = vsel %vm4017, %v4019, %v4015
        %v4021 = vmul.f32 1.0, %v4020
        %v4022 = vrcp.pop %v3906
        %v4023 = vmul.f32 %v3906, %v4022
        %v4024 = vsub.f32 1.0, %v4023
        %v4025 = vmul.f32 %v4022, %v4024
        %v4026 = vadd.f32 %v4022, %v4025
        %vm4027 = vweird.f32 %v3906
        %vm4028 = vweird.f32 %v4022
        %vm4029 = vmor %vm4027, %vm4028
        %v4030 = vsel %vm4029, %v4022, %v4026
        %v4031 = vand.u32 2147483647, %v3906
        %vm4032 = vcmp.eq.f32.partialorder %v4031, 8.507059e+37
        %v4033 = vand.u32 %v3906, 2147483648
        %v4034 = vor.u32 1.1754944e-38, %v4033
        %v4035 = vsel %vm4032, %v4034, %v4030
        %v4036 = vmul.f32 1.0, %v4035
        %v4037 = vrcp.pop %v3907
        %v4038 = vmul.f32 %v3907, %v4037
        %v4039 = vsub.f32 1.0, %v4038
        %v4040 = vmul.f32 %v4037, %v4039
        %v4041 = vadd.f32 %v4037, %v4040
        %vm4042 = vweird.f32 %v3907
        %vm4043 = vweird.f32 %v4037
        %vm4044 = vmor %vm4042, %vm4043
        %v4045 = vsel %vm4044, %v4037, %v4041
        %v4046 = vand.u32 2147483647, %v3907
        %vm4047 = vcmp.eq.f32.partialorder %v4046, 8.507059e+37
        %v4048 = vand.u32 %v3907, 2147483648
        %v4049 = vor.u32 1.1754944e-38, %v4048
        %v4050 = vsel %vm4047, %v4049, %v4045
        %v4051 = vmul.f32 1.0, %v4050
        %v4052 = vrcp.pop %v3908
        %v4053 = vmul.f32 %v3908, %v4052
        %v4054 = vsub.f32 1.0, %v4053
        %v4055 = vmul.f32 %v4052, %v4054
        %v4056 = vadd.f32 %v4052, %v4055
        %vm4057 = vweird.f32 %v3908
        %vm4058 = vweird.f32 %v4052
        %vm4059 = vmor %vm4057, %vm4058
        %v4060 = vsel %vm4059, %v4052, %v4056
        %v4061 = vand.u32 2147483647, %v3908
        %vm4062 = vcmp.eq.f32.partialorder %v4061, 8.507059e+37
        %v4063 = vand.u32 %v3908, 2147483648
        %v4064 = vor.u32 1.1754944e-38, %v4063
        %v4065 = vsel %vm4062, %v4064, %v4060
        %v4066 = vmul.f32 1.0, %v4065
        %v4067 = vrcp.pop %v3909
        %v4068 = vmul.f32 %v3909, %v4067
        %v4069 = vsub.f32 1.0, %v4068
        %v4070 = vmul.f32 %v4067, %v4069
        %v4071 = vadd.f32 %v4067, %v4070
        %vm4072 = vweird.f32 %v3909
        %vm4073 = vweird.f32 %v4067
        %vm4074 = vmor %vm4072, %vm4073
        %v4075 = vsel %vm4074, %v4067, %v4071
        %v4076 = vand.u32 2147483647, %v3909
        %vm4077 = vcmp.eq.f32.partialorder %v4076, 8.507059e+37
        %v4078 = vand.u32 %v3909, 2147483648
        %v4079 = vor.u32 1.1754944e-38, %v4078
        %v4080 = vsel %vm4077, %v4079, %v4075
        %v4081 = vmul.f32 1.0, %v4080
        %v4082 = vrcp.pop %v3910
        %v4083 = vmul.f32 %v3910, %v4082
        %v4084 = vsub.f32 1.0, %v4083
        %v4085 = vmul.f32 %v4082, %v4084
        %v4086 = vadd.f32 %v4082, %v4085
        %vm4087 = vweird.f32 %v3910
        %vm4088 = vweird.f32 %v4082
        %vm4089 = vmor %vm4087, %vm4088
        %v4090 = vsel %vm4089, %v4082, %v4086
        %v4091 = vand.u32 2147483647, %v3910
        %vm4092 = vcmp.eq.f32.partialorder %v4091, 8.507059e+37
        %v4093 = vand.u32 %v3910, 2147483648
        %v4094 = vor.u32 1.1754944e-38, %v4093
        %v4095 = vsel %vm4092, %v4094, %v4090
        %v4096 = vmul.f32 1.0, %v4095
        %v4097 = vrcp.pop %v3911
        %v4098 = vmul.f32 %v3911, %v4097
        %v4099 = vsub.f32 1.0, %v4098
        %v4100 = vmul.f32 %v4097, %v4099
        %v4101 = vadd.f32 %v4097, %v4100
        %vm4102 = vweird.f32 %v3911
        %vm4103 = vweird.f32 %v4097
        %vm4104 = vmor %vm4102, %vm4103
        %v4105 = vsel %vm4104, %v4097, %v4101
        %v4106 = vand.u32 2147483647, %v3911
        %vm4107 = vcmp.eq.f32.partialorder %v4106, 8.507059e+37
        %v4108 = vand.u32 %v3911, 2147483648
        %v4109 = vor.u32 1.1754944e-38, %v4108
        %v4110 = vsel %vm4107, %v4109, %v4105
        %v4111 = vmul.f32 1.0, %v4110
        %v4112 = vrcp.pop %v3912
        %v4113 = vmul.f32 %v3912, %v4112
        %v4114 = vsub.f32 1.0, %v4113
        %v4115 = vmul.f32 %v4112, %v4114
        %v4116 = vadd.f32 %v4112, %v4115
        %vm4117 = vweird.f32 %v3912
        %vm4118 = vweird.f32 %v4112
        %vm4119 = vmor %vm4117, %vm4118
        %v4120 = vsel %vm4119, %v4112, %v4116
        %v4121 = vand.u32 2147483647, %v3912
        %vm4122 = vcmp.eq.f32.partialorder %v4121, 8.507059e+37
        %v4123 = vand.u32 %v3912, 2147483648
        %v4124 = vor.u32 1.1754944e-38, %v4123
        %v4125 = vsel %vm4122, %v4124, %v4120
        %v4126 = vmul.f32 1.0, %v4125
        %v4127 = vrcp.pop %v3913
        %v4128 = vmul.f32 %v3913, %v4127
        %v4129 = vsub.f32 1.0, %v4128
        %v4130 = vmul.f32 %v4127, %v4129
        %v4131 = vadd.f32 %v4127, %v4130
        %vm4132 = vweird.f32 %v3913
        %vm4133 = vweird.f32 %v4127
        %vm4134 = vmor %vm4132, %vm4133
        %v4135 = vsel %vm4134, %v4127, %v4131
        %v4136 = vand.u32 2147483647, %v3913
        %vm4137 = vcmp.eq.f32.partialorder %v4136, 8.507059e+37
        %v4138 = vand.u32 %v3913, 2147483648
        %v4139 = vor.u32 1.1754944e-38, %v4138
        %v4140 = vsel %vm4137, %v4139, %v4135
        %v4141 = vmul.f32 1.0, %v4140
        %v4142 = vrcp.pop %v3914
        %v4143 = vmul.f32 %v3914, %v4142
        %v4144 = vsub.f32 1.0, %v4143
        %v4145 = vmul.f32 %v4142, %v4144
        %v4146 = vadd.f32 %v4142, %v4145
        %vm4147 = vweird.f32 %v3914
        %vm4148 = vweird.f32 %v4142
        %vm4149 = vmor %vm4147, %vm4148
        %v4150 = vsel %vm4149, %v4142, %v4146
        %v4151 = vand.u32 2147483647, %v3914
        %vm4152 = vcmp.eq.f32.partialorder %v4151, 8.507059e+37
        %v4153 = vand.u32 %v3914, 2147483648
        %v4154 = vor.u32 1.1754944e-38, %v4153
        %v4155 = vsel %vm4152, %v4154, %v4150
        %v4156 = vmul.f32 1.0, %v4155
        %v4157 = vrcp.pop %v3915
        %v4158 = vmul.f32 %v3915, %v4157
        %v4159 = vsub.f32 1.0, %v4158
        %v4160 = vmul.f32 %v4157, %v4159
        %v4161 = vadd.f32 %v4157, %v4160
        %vm4162 = vweird.f32 %v3915
        %vm4163 = vweird.f32 %v4157
        %vm4164 = vmor %vm4162, %vm4163
        %v4165 = vsel %vm4164, %v4157, %v4161
        %v4166 = vand.u32 2147483647, %v3915
        %vm4167 = vcmp.eq.f32.partialorder %v4166, 8.507059e+37
        %v4168 = vand.u32 %v3915, 2147483648
        %v4169 = vor.u32 1.1754944e-38, %v4168
        %v4170 = vsel %vm4167, %v4169, %v4165
        %v4171 = vmul.f32 1.0, %v4170
        %v4172 = vrcp.pop %v3916
        %v4173 = vmul.f32 %v3916, %v4172
        %v4174 = vsub.f32 1.0, %v4173
        %v4175 = vmul.f32 %v4172, %v4174
        %v4176 = vadd.f32 %v4172, %v4175
        %vm4177 = vweird.f32 %v3916
        %vm4178 = vweird.f32 %v4172
        %vm4179 = vmor %vm4177, %vm4178
        %v4180 = vsel %vm4179, %v4172, %v4176
        %v4181 = vand.u32 2147483647, %v3916
        %vm4182 = vcmp.eq.f32.partialorder %v4181, 8.507059e+37
        %v4183 = vand.u32 %v3916, 2147483648
        %v4184 = vor.u32 1.1754944e-38, %v4183
        %v4185 = vsel %vm4182, %v4184, %v4180
        %v4186 = vmul.f32 1.0, %v4185
        %v4187 = vrcp.pop %v3917
        %v4188 = vmul.f32 %v3917, %v4187
        %v4189 = vsub.f32 1.0, %v4188
        %v4190 = vmul.f32 %v4187, %v4189
        %v4191 = vadd.f32 %v4187, %v4190
        %vm4192 = vweird.f32 %v3917
        %vm4193 = vweird.f32 %v4187
        %vm4194 = vmor %vm4192, %vm4193
        %v4195 = vsel %vm4194, %v4187, %v4191
        %v4196 = vand.u32 2147483647, %v3917
        %vm4197 = vcmp.eq.f32.partialorder %v4196, 8.507059e+37
        %v4198 = vand.u32 %v3917, 2147483648
        %v4199 = vor.u32 1.1754944e-38, %v4198
        %v4200 = vsel %vm4197, %v4199, %v4195
        %v4201 = vmul.f32 1.0, %v4200
        %v4202 = vrcp.pop %v3918
        %v4203 = vmul.f32 %v3918, %v4202
        %v4204 = vsub.f32 1.0, %v4203
        %v4205 = vmul.f32 %v4202, %v4204
        %v4206 = vadd.f32 %v4202, %v4205
        %vm4207 = vweird.f32 %v3918
        %vm4208 = vweird.f32 %v4202
        %vm4209 = vmor %vm4207, %vm4208
        %v4210 = vsel %vm4209, %v4202, %v4206
        %v4211 = vand.u32 2147483647, %v3918
        %vm4212 = vcmp.eq.f32.partialorder %v4211, 8.507059e+37
        %v4213 = vand.u32 %v3918, 2147483648
        %v4214 = vor.u32 1.1754944e-38, %v4213
        %v4215 = vsel %vm4212, %v4214, %v4210
        %v4216 = vmul.f32 1.0, %v4215
        %v4217 = vrcp.pop %v3919
        %v4218 = vmul.f32 %v3919, %v4217
        %v4219 = vsub.f32 1.0, %v4218
        %v4220 = vmul.f32 %v4217, %v4219
        %v4221 = vadd.f32 %v4217, %v4220
        %vm4222 = vweird.f32 %v3919
        %vm4223 = vweird.f32 %v4217
        %vm4224 = vmor %vm4222, %vm4223
        %v4225 = vsel %vm4224, %v4217, %v4221
        %v4226 = vand.u32 2147483647, %v3919
        %vm4227 = vcmp.eq.f32.partialorder %v4226, 8.507059e+37
        %v4228 = vand.u32 %v3919, 2147483648
        %v4229 = vor.u32 1.1754944e-38, %v4228
        %v4230 = vsel %vm4227, %v4229, %v4225
        %v4231 = vmul.f32 1.0, %v4230
        %v4232 = vrcp.pop %v3920
        %v4233 = vmul.f32 %v3920, %v4232
        %v4234 = vsub.f32 1.0, %v4233
        %v4235 = vmul.f32 %v4232, %v4234
        %v4236 = vadd.f32 %v4232, %v4235
        %vm4237 = vweird.f32 %v3920
        %vm4238 = vweird.f32 %v4232
        %vm4239 = vmor %vm4237, %vm4238
        %v4240 = vsel %vm4239, %v4232, %v4236
        %v4241 = vand.u32 2147483647, %v3920
        %vm4242 = vcmp.eq.f32.partialorder %v4241, 8.507059e+37
        %v4243 = vand.u32 %v3920, 2147483648
        %v4244 = vor.u32 1.1754944e-38, %v4243
        %v4245 = vsel %vm4242, %v4244, %v4240
        %v4246 = vmul.f32 1.0, %v4245
        %v4247 = vrcp.pop %v3921
        %v4248 = vmul.f32 %v3921, %v4247
        %v4249 = vsub.f32 1.0, %v4248
        %v4250 = vmul.f32 %v4247, %v4249
        %v4251 = vadd.f32 %v4247, %v4250
        %vm4252 = vweird.f32 %v3921
        %vm4253 = vweird.f32 %v4247
        %vm4254 = vmor %vm4252, %vm4253
        %v4255 = vsel %vm4254, %v4247, %v4251
        %v4256 = vand.u32 2147483647, %v3921
        %vm4257 = vcmp.eq.f32.partialorder %v4256, 8.507059e+37
        %v4258 = vand.u32 %v3921, 2147483648
        %v4259 = vor.u32 1.1754944e-38, %v4258
        %v4260 = vsel %vm4257, %v4259, %v4255
        %v4261 = vmul.f32 1.0, %v4260
        %v4262 = vrcp.pop %v3922
        %v4263 = vmul.f32 %v3922, %v4262
        %v4264 = vsub.f32 1.0, %v4263
        %v4265 = vmul.f32 %v4262, %v4264
        %v4266 = vadd.f32 %v4262, %v4265
        %vm4267 = vweird.f32 %v3922
        %vm4268 = vweird.f32 %v4262
        %vm4269 = vmor %vm4267, %vm4268
        %v4270 = vsel %vm4269, %v4262, %v4266
        %v4271 = vand.u32 2147483647, %v3922
        %vm4272 = vcmp.eq.f32.partialorder %v4271, 8.507059e+37
        %v4273 = vand.u32 %v3922, 2147483648
        %v4274 = vor.u32 1.1754944e-38, %v4273
        %v4275 = vsel %vm4272, %v4274, %v4270
        %v4276 = vmul.f32 1.0, %v4275
        %v4277 = vrcp.pop %v3923
        %v4278 = vmul.f32 %v3923, %v4277
        %v4279 = vsub.f32 1.0, %v4278
        %v4280 = vmul.f32 %v4277, %v4279
        %v4281 = vadd.f32 %v4277, %v4280
        %vm4282 = vweird.f32 %v3923
        %vm4283 = vweird.f32 %v4277
        %vm4284 = vmor %vm4282, %vm4283
        %v4285 = vsel %vm4284, %v4277, %v4281
        %v4286 = vand.u32 2147483647, %v3923
        %vm4287 = vcmp.eq.f32.partialorder %v4286, 8.507059e+37
        %v4288 = vand.u32 %v3923, 2147483648
        %v4289 = vor.u32 1.1754944e-38, %v4288
        %v4290 = vsel %vm4287, %v4289, %v4285
        %v4291 = vmul.f32 1.0, %v4290
        %v4292 = vrcp.pop %v3924
        %v4293 = vmul.f32 %v3924, %v4292
        %v4294 = vsub.f32 1.0, %v4293
        %v4295 = vmul.f32 %v4292, %v4294
        %v4296 = vadd.f32 %v4292, %v4295
        %vm4297 = vweird.f32 %v3924
        %vm4298 = vweird.f32 %v4292
        %vm4299 = vmor %vm4297, %vm4298
        %v4300 = vsel %vm4299, %v4292, %v4296
        %v4301 = vand.u32 2147483647, %v3924
        %vm4302 = vcmp.eq.f32.partialorder %v4301, 8.507059e+37
        %v4303 = vand.u32 %v3924, 2147483648
        %v4304 = vor.u32 1.1754944e-38, %v4303
        %v4305 = vsel %vm4302, %v4304, %v4300
        %v4306 = vmul.f32 1.0, %v4305
        %v4307 = vrcp.pop %v3925
        %v4308 = vmul.f32 %v3925, %v4307
        %v4309 = vsub.f32 1.0, %v4308
        %v4310 = vmul.f32 %v4307, %v4309
        %v4311 = vadd.f32 %v4307, %v4310
        %vm4312 = vweird.f32 %v3925
        %vm4313 = vweird.f32 %v4307
        %vm4314 = vmor %vm4312, %vm4313
        %v4315 = vsel %vm4314, %v4307, %v4311
        %v4316 = vand.u32 2147483647, %v3925
        %vm4317 = vcmp.eq.f32.partialorder %v4316, 8.507059e+37
        %v4318 = vand.u32 %v3925, 2147483648
        %v4319 = vor.u32 1.1754944e-38, %v4318
        %v4320 = vsel %vm4317, %v4319, %v4315
        %v4321 = vmul.f32 1.0, %v4320
        %v4322 = vrcp.pop %v3926
        %v4323 = vmul.f32 %v3926, %v4322
        %v4324 = vsub.f32 1.0, %v4323
        %v4325 = vmul.f32 %v4322, %v4324
        %v4326 = vadd.f32 %v4322, %v4325
        %vm4327 = vweird.f32 %v3926
        %vm4328 = vweird.f32 %v4322
        %vm4329 = vmor %vm4327, %vm4328
        %v4330 = vsel %vm4329, %v4322, %v4326
        %v4331 = vand.u32 2147483647, %v3926
        %vm4332 = vcmp.eq.f32.partialorder %v4331, 8.507059e+37
        %v4333 = vand.u32 %v3926, 2147483648
        %v4334 = vor.u32 1.1754944e-38, %v4333
        %v4335 = vsel %vm4332, %v4334, %v4330
        %v4336 = vmul.f32 1.0, %v4335
        %v4337 = vrcp.pop %v3927
        %v4338 = vmul.f32 %v3927, %v4337
        %v4339 = vsub.f32 1.0, %v4338
        %v4340 = vmul.f32 %v4337, %v4339
        %v4341 = vadd.f32 %v4337, %v4340
        %vm4342 = vweird.f32 %v3927
        %vm4343 = vweird.f32 %v4337
        %vm4344 = vmor %vm4342, %vm4343
        %v4345 = vsel %vm4344, %v4337, %v4341
        %v4346 = vand.u32 2147483647, %v3927
        %vm4347 = vcmp.eq.f32.partialorder %v4346, 8.507059e+37
        %v4348 = vand.u32 %v3927, 2147483648
        %v4349 = vor.u32 1.1754944e-38, %v4348
        %v4350 = vsel %vm4347, %v4349, %v4345
        %v4351 = vmul.f32 1.0, %v4350
        %v4352 = vrcp.pop %v3928
        %v4353 = vmul.f32 %v3928, %v4352
        %v4354 = vsub.f32 1.0, %v4353
        %v4355 = vmul.f32 %v4352, %v4354
        %v4356 = vadd.f32 %v4352, %v4355
        %vm4357 = vweird.f32 %v3928
        %vm4358 = vweird.f32 %v4352
        %vm4359 = vmor %vm4357, %vm4358
        %v4360 = vsel %vm4359, %v4352, %v4356
        %v4361 = vand.u32 2147483647, %v3928
        %vm4362 = vcmp.eq.f32.partialorder %v4361, 8.507059e+37
        %v4363 = vand.u32 %v3928, 2147483648
        %v4364 = vor.u32 1.1754944e-38, %v4363
        %v4365 = vsel %vm4362, %v4364, %v4360
        %v4366 = vmul.f32 1.0, %v4365
        %v4367 = vrcp.pop %v3929
        %v4368 = vmul.f32 %v3929, %v4367
        %v4369 = vsub.f32 1.0, %v4368
        %v4370 = vmul.f32 %v4367, %v4369
        %v4371 = vadd.f32 %v4367, %v4370
        %vm4372 = vweird.f32 %v3929
        %vm4373 = vweird.f32 %v4367
        %vm4374 = vmor %vm4372, %vm4373
        %v4375 = vsel %vm4374, %v4367, %v4371
        %v4376 = vand.u32 2147483647, %v3929
        %vm4377 = vcmp.eq.f32.partialorder %v4376, 8.507059e+37
        %v4378 = vand.u32 %v3929, 2147483648
        %v4379 = vor.u32 1.1754944e-38, %v4378
        %v4380 = vsel %vm4377, %v4379, %v4375
        %v4381 = vmul.f32 1.0, %v4380
        %v4382 = vrcp.pop %v3930
        %v4383 = vmul.f32 %v3930, %v4382
        %v4384 = vsub.f32 1.0, %v4383
        %v4385 = vmul.f32 %v4382, %v4384
        %v4386 = vadd.f32 %v4382, %v4385
        %vm4387 = vweird.f32 %v3930
        %vm4388 = vweird.f32 %v4382
        %vm4389 = vmor %vm4387, %vm4388
        %v4390 = vsel %vm4389, %v4382, %v4386
        %v4391 = vand.u32 2147483647, %v3930
        %vm4392 = vcmp.eq.f32.partialorder %v4391, 8.507059e+37
        %v4393 = vand.u32 %v3930, 2147483648
        %v4394 = vor.u32 1.1754944e-38, %v4393
        %v4395 = vsel %vm4392, %v4394, %v4390
        %v4396 = vmul.f32 1.0, %v4395
        %v4397 = vrcp.pop %v3931
        %v4398 = vmul.f32 %v3931, %v4397
        %v4399 = vsub.f32 1.0, %v4398
        %v4400 = vmul.f32 %v4397, %v4399
        %v4401 = vadd.f32 %v4397, %v4400
        %vm4402 = vweird.f32 %v3931
        %vm4403 = vweird.f32 %v4397
        %vm4404 = vmor %vm4402, %vm4403
        %v4405 = vsel %vm4404, %v4397, %v4401
        %v4406 = vand.u32 2147483647, %v3931
        %vm4407 = vcmp.eq.f32.partialorder %v4406, 8.507059e+37
        %v4408 = vand.u32 %v3931, 2147483648
        %v4409 = vor.u32 1.1754944e-38, %v4408
        %v4410 = vsel %vm4407, %v4409, %v4405
        %v4411 = vmul.f32 1.0, %v4410
        %v4412 = vmul.f32 %v3946, 2.0
        %v4413 = vmul.f32 %v3961, 2.0
        %v4414 = vmul.f32 %v3976, 2.0
        %v4415 = vmul.f32 %v3991, 2.0
        %v4416 = vmul.f32 %v4006, 2.0
        %v4417 = vmul.f32 %v4021, 2.0
        %v4418 = vmul.f32 %v4036, 2.0
        %v4419 = vmul.f32 %v4051, 2.0
        %v4420 = vmul.f32 %v4066, 2.0
        %v4421 = vmul.f32 %v4081, 2.0
        %v4422 = vmul.f32 %v4096, 2.0
        %v4423 = vmul.f32 %v4111, 2.0
        %v4424 = vmul.f32 %v4126, 2.0
        %v4425 = vmul.f32 %v4141, 2.0
        %v4426 = vmul.f32 %v4156, 2.0
        %v4427 = vmul.f32 %v4171, 2.0
        %v4428 = vmul.f32 %v4186, 2.0
        %v4429 = vmul.f32 %v4201, 2.0
        %v4430 = vmul.f32 %v4216, 2.0
        %v4431 = vmul.f32 %v4231, 2.0
        %v4432 = vmul.f32 %v4246, 2.0
        %v4433 = vmul.f32 %v4261, 2.0
        %v4434 = vmul.f32 %v4276, 2.0
        %v4435 = vmul.f32 %v4291, 2.0
        %v4436 = vmul.f32 %v4306, 2.0
        %v4437 = vmul.f32 %v4321, 2.0
        %v4438 = vmul.f32 %v4336, 2.0
        %v4439 = vmul.f32 %v4351, 2.0
        %v4440 = vmul.f32 %v4366, 2.0
        %v4441 = vmul.f32 %v4381, 2.0
        %v4442 = vmul.f32 %v4396, 2.0
        %v4443 = vmul.f32 %v4411, 2.0
        %v4444 = vsub.f32 %v4412, 1.0
        %v4445 = vsub.f32 %v4413, 1.0
        %v4446 = vsub.f32 %v4414, 1.0
        %v4447 = vsub.f32 %v4415, 1.0
        %v4448 = vsub.f32 %v4416, 1.0
        %v4449 = vsub.f32 %v4417, 1.0
        %v4450 = vsub.f32 %v4418, 1.0
        %v4451 = vsub.f32 %v4419, 1.0
        %v4452 = vsub.f32 %v4420, 1.0
        %v4453 = vsub.f32 %v4421, 1.0
        %v4454 = vsub.f32 %v4422, 1.0
        %v4455 = vsub.f32 %v4423, 1.0
        %v4456 = vsub.f32 %v4424, 1.0
        %v4457 = vsub.f32 %v4425, 1.0
        %v4458 = vsub.f32 %v4426, 1.0
        %v4459 = vsub.f32 %v4427, 1.0
        %v4460 = vsub.f32 %v4428, 1.0
        %v4461 = vsub.f32 %v4429, 1.0
        %v4462 = vsub.f32 %v4430, 1.0
        %v4463 = vsub.f32 %v4431, 1.0
        %v4464 = vsub.f32 %v4432, 1.0
        %v4465 = vsub.f32 %v4433, 1.0
        %v4466 = vsub.f32 %v4434, 1.0
        %v4467 = vsub.f32 %v4435, 1.0
        %v4468 = vsub.f32 %v4436, 1.0
        %v4469 = vsub.f32 %v4437, 1.0
        %v4470 = vsub.f32 %v4438, 1.0
        %v4471 = vsub.f32 %v4439, 1.0
        %v4472 = vsub.f32 %v4440, 1.0
        %v4473 = vsub.f32 %v4441, 1.0
        %v4474 = vsub.f32 %v4442, 1.0
        %v4475 = vsub.f32 %v4443, 1.0
        %v4476 = vld [vmem:[%s274] sm:$0xff]
        %v4477 = vld [vmem:[%s274 + $0x8] sm:$0xff]
        %v4478 = vld [vmem:[%s274 + $0x10] sm:$0xff]
        %v4479 = vld [vmem:[%s274 + $0x18] sm:$0xff]
        %v4480 = vld [vmem:[%s274 + $0x20] sm:$0xff]
        %v4481 = vld [vmem:[%s274 + $0x28] sm:$0xff]
        %v4482 = vld [vmem:[%s274 + $0x30] sm:$0xff]
        %v4483 = vld [vmem:[%s274 + $0x38] sm:$0xff]
        %v4484 = vld [vmem:[%s274 + $0x40] sm:$0xff]
        %v4485 = vld [vmem:[%s274 + $0x48] sm:$0xff]
        %v4486 = vld [vmem:[%s274 + $0x50] sm:$0xff]
        %v4487 = vld [vmem:[%s274 + $0x58] sm:$0xff]
        %v4488 = vld [vmem:[%s274 + $0x60] sm:$0xff]
        %v4489 = vld [vmem:[%s274 + $0x68] sm:$0xff]
        %v4490 = vld [vmem:[%s274 + $0x70] sm:$0xff]
        %v4491 = vld [vmem:[%s274 + $0x78] sm:$0xff]
        %v4492 = vld [vmem:[%s274 + $0x80] sm:$0xff]
        %v4493 = vld [vmem:[%s274 + $0x88] sm:$0xff]
        %v4494 = vld [vmem:[%s274 + $0x90] sm:$0xff]
        %v4495 = vld [vmem:[%s274 + $0x98] sm:$0xff]
        %v4496 = vld [vmem:[%s274 + $0xa0] sm:$0xff]
        %v4497 = vld [vmem:[%s274 + $0xa8] sm:$0xff]
        %v4498 = vld [vmem:[%s274 + $0xb0] sm:$0xff]
        %v4499 = vld [vmem:[%s274 + $0xb8] sm:$0xff]
        %v4500 = vld [vmem:[%s274 + $0xc0] sm:$0xff]
        %v4501 = vld [vmem:[%s274 + $0xc8] sm:$0xff]
        %v4502 = vld [vmem:[%s274 + $0xd0] sm:$0xff]
        %v4503 = vld [vmem:[%s274 + $0xd8] sm:$0xff]
        %v4504 = vld [vmem:[%s274 + $0xe0] sm:$0xff]
        %v4505 = vld [vmem:[%s274 + $0xe8] sm:$0xff]
        %v4506 = vld [vmem:[%s274 + $0xf0] sm:$0xff]
        %v4507 = vld [vmem:[%s274 + $0xf8] sm:$0xff]
        %4540 = vrot.lane.b32.xlu0 %v4476, 32
        %v4541 = vpop.permute.xlu0 %4540
        %4542 = vrot.lane.b32.xlu0 %v4477, 32
        %v4543 = vpop.permute.xlu0 %4542
        %4544 = vrot.lane.b32.xlu0 %v4478, 32
        %v4545 = vpop.permute.xlu0 %4544
        %4546 = vrot.lane.b32.xlu0 %v4479, 32
        %v4547 = vpop.permute.xlu0 %4546
        %4548 = vrot.lane.b32.xlu0 %v4480, 32
        %v4549 = vpop.permute.xlu0 %4548
        %4550 = vrot.lane.b32.xlu0 %v4481, 32
        %v4551 = vpop.permute.xlu0 %4550
        %4552 = vrot.lane.b32.xlu0 %v4482, 32
        %v4553 = vpop.permute.xlu0 %4552
        %4554 = vrot.lane.b32.xlu0 %v4483, 32
        %v4555 = vpop.permute.xlu0 %4554
        %4556 = vrot.lane.b32.xlu0 %v4484, 32
        %v4557 = vpop.permute.xlu0 %4556
        %4558 = vrot.lane.b32.xlu0 %v4485, 32
        %v4559 = vpop.permute.xlu0 %4558
        %4560 = vrot.lane.b32.xlu0 %v4486, 32
        %v4561 = vpop.permute.xlu0 %4560
        %4562 = vrot.lane.b32.xlu0 %v4487, 32
        %v4563 = vpop.permute.xlu0 %4562
        %4564 = vrot.lane.b32.xlu0 %v4488, 32
        %v4565 = vpop.permute.xlu0 %4564
        %4566 = vrot.lane.b32.xlu0 %v4489, 32
        %v4567 = vpop.permute.xlu0 %4566
        %4568 = vrot.lane.b32.xlu0 %v4490, 32
        %v4569 = vpop.permute.xlu0 %4568
        %4570 = vrot.lane.b32.xlu0 %v4491, 32
        %v4571 = vpop.permute.xlu0 %4570
        %4572 = vrot.lane.b32.xlu0 %v4492, 32
        %v4573 = vpop.permute.xlu0 %4572
        %4574 = vrot.lane.b32.xlu0 %v4493, 32
        %v4575 = vpop.permute.xlu0 %4574
        %4576 = vrot.lane.b32.xlu0 %v4494, 32
        %v4577 = vpop.permute.xlu0 %4576
        %4578 = vrot.lane.b32.xlu0 %v4495, 32
        %v4579 = vpop.permute.xlu0 %4578
        %4580 = vrot.lane.b32.xlu0 %v4496, 32
        %v4581 = vpop.permute.xlu0 %4580
        %4582 = vrot.lane.b32.xlu0 %v4497, 32
        %v4583 = vpop.permute.xlu0 %4582
        %4584 = vrot.lane.b32.xlu0 %v4498, 32
        %v4585 = vpop.permute.xlu0 %4584
        %4586 = vrot.lane.b32.xlu0 %v4499, 32
        %v4587 = vpop.permute.xlu0 %4586
        %4588 = vrot.lane.b32.xlu0 %v4500, 32
        %v4589 = vpop.permute.xlu0 %4588
        %4590 = vrot.lane.b32.xlu0 %v4501, 32
        %v4591 = vpop.permute.xlu0 %4590
        %4592 = vrot.lane.b32.xlu0 %v4502, 32
        %v4593 = vpop.permute.xlu0 %4592
        %4594 = vrot.lane.b32.xlu0 %v4503, 32
        %v4595 = vpop.permute.xlu0 %4594
        %4596 = vrot.lane.b32.xlu0 %v4504, 32
        %v4597 = vpop.permute.xlu0 %4596
        %4598 = vrot.lane.b32.xlu0 %v4505, 32
        %v4599 = vpop.permute.xlu0 %4598
        %4600 = vrot.lane.b32.xlu0 %v4506, 32
        %v4601 = vpop.permute.xlu0 %4600
        %4602 = vrot.lane.b32.xlu0 %v4507, 32
        %v4603 = vpop.permute.xlu0 %4602
        %v4636 = vmul.f32 %v3946, %v4541
        %v4637 = vmul.f32 %v3961, %v4543
        %v4638 = vmul.f32 %v3976, %v4545
        %v4639 = vmul.f32 %v3991, %v4547
        %v4640 = vmul.f32 %v4006, %v4549
        %v4641 = vmul.f32 %v4021, %v4551
        %v4642 = vmul.f32 %v4036, %v4553
        %v4643 = vmul.f32 %v4051, %v4555
        %v4644 = vmul.f32 %v4066, %v4557
        %v4645 = vmul.f32 %v4081, %v4559
        %v4646 = vmul.f32 %v4096, %v4561
        %v4647 = vmul.f32 %v4111, %v4563
        %v4648 = vmul.f32 %v4126, %v4565
        %v4649 = vmul.f32 %v4141, %v4567
        %v4650 = vmul.f32 %v4156, %v4569
        %v4651 = vmul.f32 %v4171, %v4571
        %v4652 = vmul.f32 %v4186, %v4573
        %v4653 = vmul.f32 %v4201, %v4575
        %v4654 = vmul.f32 %v4216, %v4577
        %v4655 = vmul.f32 %v4231, %v4579
        %v4656 = vmul.f32 %v4246, %v4581
        %v4657 = vmul.f32 %v4261, %v4583
        %v4658 = vmul.f32 %v4276, %v4585
        %v4659 = vmul.f32 %v4291, %v4587
        %v4660 = vmul.f32 %v4306, %v4589
        %v4661 = vmul.f32 %v4321, %v4591
        %v4662 = vmul.f32 %v4336, %v4593
        %v4663 = vmul.f32 %v4351, %v4595
        %v4664 = vmul.f32 %v4366, %v4597
        %v4665 = vmul.f32 %v4381, %v4599
        %v4666 = vmul.f32 %v4396, %v4601
        %v4667 = vmul.f32 %v4411, %v4603
        %4700 = vrot.lane.b32.xlu0 %v4444, 32
        %v4701 = vpop.permute.xlu0 %4700
        %4702 = vrot.lane.b32.xlu0 %v4445, 32
        %v4703 = vpop.permute.xlu0 %4702
        %4704 = vrot.lane.b32.xlu0 %v4446, 32
        %v4705 = vpop.permute.xlu0 %4704
        %4706 = vrot.lane.b32.xlu0 %v4447, 32
        %v4707 = vpop.permute.xlu0 %4706
        %4708 = vrot.lane.b32.xlu0 %v4448, 32
        %v4709 = vpop.permute.xlu0 %4708
        %4710 = vrot.lane.b32.xlu0 %v4449, 32
        %v4711 = vpop.permute.xlu0 %4710
        %4712 = vrot.lane.b32.xlu0 %v4450, 32
        %v4713 = vpop.permute.xlu0 %4712
        %4714 = vrot.lane.b32.xlu0 %v4451, 32
        %v4715 = vpop.permute.xlu0 %4714
        %4716 = vrot.lane.b32.xlu0 %v4452, 32
        %v4717 = vpop.permute.xlu0 %4716
        %4718 = vrot.lane.b32.xlu0 %v4453, 32
        %v4719 = vpop.permute.xlu0 %4718
        %4720 = vrot.lane.b32.xlu0 %v4454, 32
        %v4721 = vpop.permute.xlu0 %4720
        %4722 = vrot.lane.b32.xlu0 %v4455, 32
        %v4723 = vpop.permute.xlu0 %4722
        %4724 = vrot.lane.b32.xlu0 %v4456, 32
        %v4725 = vpop.permute.xlu0 %4724
        %4726 = vrot.lane.b32.xlu0 %v4457, 32
        %v4727 = vpop.permute.xlu0 %4726
        %4728 = vrot.lane.b32.xlu0 %v4458, 32
        %v4729 = vpop.permute.xlu0 %4728
        %4730 = vrot.lane.b32.xlu0 %v4459, 32
        %v4731 = vpop.permute.xlu0 %4730
        %4732 = vrot.lane.b32.xlu0 %v4460, 32
        %v4733 = vpop.permute.xlu0 %4732
        %4734 = vrot.lane.b32.xlu0 %v4461, 32
        %v4735 = vpop.permute.xlu0 %4734
        %4736 = vrot.lane.b32.xlu0 %v4462, 32
        %v4737 = vpop.permute.xlu0 %4736
        %4738 = vrot.lane.b32.xlu0 %v4463, 32
        %v4739 = vpop.permute.xlu0 %4738
        %4740 = vrot.lane.b32.xlu0 %v4464, 32
        %v4741 = vpop.permute.xlu0 %4740
        %4742 = vrot.lane.b32.xlu0 %v4465, 32
        %v4743 = vpop.permute.xlu0 %4742
        %4744 = vrot.lane.b32.xlu0 %v4466, 32
        %v4745 = vpop.permute.xlu0 %4744
        %4746 = vrot.lane.b32.xlu0 %v4467, 32
        %v4747 = vpop.permute.xlu0 %4746
        %4748 = vrot.lane.b32.xlu0 %v4468, 32
        %v4749 = vpop.permute.xlu0 %4748
        %4750 = vrot.lane.b32.xlu0 %v4469, 32
        %v4751 = vpop.permute.xlu0 %4750
        %4752 = vrot.lane.b32.xlu0 %v4470, 32
        %v4753 = vpop.permute.xlu0 %4752
        %4754 = vrot.lane.b32.xlu0 %v4471, 32
        %v4755 = vpop.permute.xlu0 %4754
        %4756 = vrot.lane.b32.xlu0 %v4472, 32
        %v4757 = vpop.permute.xlu0 %4756
        %4758 = vrot.lane.b32.xlu0 %v4473, 32
        %v4759 = vpop.permute.xlu0 %4758
        %4760 = vrot.lane.b32.xlu0 %v4474, 32
        %v4761 = vpop.permute.xlu0 %4760
        %4762 = vrot.lane.b32.xlu0 %v4475, 32
        %v4763 = vpop.permute.xlu0 %4762
        %v4796 = vmul.f32 %v3946, %v4701
        %v4797 = vmul.f32 %v3961, %v4703
        %v4798 = vmul.f32 %v3976, %v4705
        %v4799 = vmul.f32 %v3991, %v4707
        %v4800 = vmul.f32 %v4006, %v4709
        %v4801 = vmul.f32 %v4021, %v4711
        %v4802 = vmul.f32 %v4036, %v4713
        %v4803 = vmul.f32 %v4051, %v4715
        %v4804 = vmul.f32 %v4066, %v4717
        %v4805 = vmul.f32 %v4081, %v4719
        %v4806 = vmul.f32 %v4096, %v4721
        %v4807 = vmul.f32 %v4111, %v4723
        %v4808 = vmul.f32 %v4126, %v4725
        %v4809 = vmul.f32 %v4141, %v4727
        %v4810 = vmul.f32 %v4156, %v4729
        %v4811 = vmul.f32 %v4171, %v4731
        %v4812 = vmul.f32 %v4186, %v4733
        %v4813 = vmul.f32 %v4201, %v4735
        %v4814 = vmul.f32 %v4216, %v4737
        %v4815 = vmul.f32 %v4231, %v4739
        %v4816 = vmul.f32 %v4246, %v4741
        %v4817 = vmul.f32 %v4261, %v4743
        %v4818 = vmul.f32 %v4276, %v4745
        %v4819 = vmul.f32 %v4291, %v4747
        %v4820 = vmul.f32 %v4306, %v4749
        %v4821 = vmul.f32 %v4321, %v4751
        %v4822 = vmul.f32 %v4336, %v4753
        %v4823 = vmul.f32 %v4351, %v4755
        %v4824 = vmul.f32 %v4366, %v4757
        %v4825 = vmul.f32 %v4381, %v4759
        %v4826 = vmul.f32 %v4396, %v4761
        %v4827 = vmul.f32 %v4411, %v4763
        %4860 = vrot.lane.b32.xlu0 %v4796, 32
        %v4861 = vpop.permute.xlu0 %4860
        %4862 = vrot.lane.b32.xlu0 %v4797, 32
        %v4863 = vpop.permute.xlu0 %4862
        %4864 = vrot.lane.b32.xlu0 %v4798, 32
        %v4865 = vpop.permute.xlu0 %4864
        %4866 = vrot.lane.b32.xlu0 %v4799, 32
        %v4867 = vpop.permute.xlu0 %4866
        %4868 = vrot.lane.b32.xlu0 %v4800, 32
        %v4869 = vpop.permute.xlu0 %4868
        %4870 = vrot.lane.b32.xlu0 %v4801, 32
        %v4871 = vpop.permute.xlu0 %4870
        %4872 = vrot.lane.b32.xlu0 %v4802, 32
        %v4873 = vpop.permute.xlu0 %4872
        %4874 = vrot.lane.b32.xlu0 %v4803, 32
        %v4875 = vpop.permute.xlu0 %4874
        %4876 = vrot.lane.b32.xlu0 %v4804, 32
        %v4877 = vpop.permute.xlu0 %4876
        %4878 = vrot.lane.b32.xlu0 %v4805, 32
        %v4879 = vpop.permute.xlu0 %4878
        %4880 = vrot.lane.b32.xlu0 %v4806, 32
        %v4881 = vpop.permute.xlu0 %4880
        %4882 = vrot.lane.b32.xlu0 %v4807, 32
        %v4883 = vpop.permute.xlu0 %4882
        %4884 = vrot.lane.b32.xlu0 %v4808, 32
        %v4885 = vpop.permute.xlu0 %4884
        %4886 = vrot.lane.b32.xlu0 %v4809, 32
        %v4887 = vpop.permute.xlu0 %4886
        %4888 = vrot.lane.b32.xlu0 %v4810, 32
        %v4889 = vpop.permute.xlu0 %4888
        %4890 = vrot.lane.b32.xlu0 %v4811, 32
        %v4891 = vpop.permute.xlu0 %4890
        %4892 = vrot.lane.b32.xlu0 %v4812, 32
        %v4893 = vpop.permute.xlu0 %4892
        %4894 = vrot.lane.b32.xlu0 %v4813, 32
        %v4895 = vpop.permute.xlu0 %4894
        %4896 = vrot.lane.b32.xlu0 %v4814, 32
        %v4897 = vpop.permute.xlu0 %4896
        %4898 = vrot.lane.b32.xlu0 %v4815, 32
        %v4899 = vpop.permute.xlu0 %4898
        %4900 = vrot.lane.b32.xlu0 %v4816, 32
        %v4901 = vpop.permute.xlu0 %4900
        %4902 = vrot.lane.b32.xlu0 %v4817, 32
        %v4903 = vpop.permute.xlu0 %4902
        %4904 = vrot.lane.b32.xlu0 %v4818, 32
        %v4905 = vpop.permute.xlu0 %4904
        %4906 = vrot.lane.b32.xlu0 %v4819, 32
        %v4907 = vpop.permute.xlu0 %4906
        %4908 = vrot.lane.b32.xlu0 %v4820, 32
        %v4909 = vpop.permute.xlu0 %4908
        %4910 = vrot.lane.b32.xlu0 %v4821, 32
        %v4911 = vpop.permute.xlu0 %4910
        %4912 = vrot.lane.b32.xlu0 %v4822, 32
        %v4913 = vpop.permute.xlu0 %4912
        %4914 = vrot.lane.b32.xlu0 %v4823, 32
        %v4915 = vpop.permute.xlu0 %4914
        %4916 = vrot.lane.b32.xlu0 %v4824, 32
        %v4917 = vpop.permute.xlu0 %4916
        %4918 = vrot.lane.b32.xlu0 %v4825, 32
        %v4919 = vpop.permute.xlu0 %4918
        %4920 = vrot.lane.b32.xlu0 %v4826, 32
        %v4921 = vpop.permute.xlu0 %4920
        %4922 = vrot.lane.b32.xlu0 %v4827, 32
        %v4923 = vpop.permute.xlu0 %4922
        %v4956 = vadd.f32 %v4636, %v4861
        %v4957 = vadd.f32 %v4637, %v4863
        %v4958 = vadd.f32 %v4638, %v4865
        %v4959 = vadd.f32 %v4639, %v4867
        %v4960 = vadd.f32 %v4640, %v4869
        %v4961 = vadd.f32 %v4641, %v4871
        %v4962 = vadd.f32 %v4642, %v4873
        %v4963 = vadd.f32 %v4643, %v4875
        %v4964 = vadd.f32 %v4644, %v4877
        %v4965 = vadd.f32 %v4645, %v4879
        %v4966 = vadd.f32 %v4646, %v4881
        %v4967 = vadd.f32 %v4647, %v4883
        %v4968 = vadd.f32 %v4648, %v4885
        %v4969 = vadd.f32 %v4649, %v4887
        %v4970 = vadd.f32 %v4650, %v4889
        %v4971 = vadd.f32 %v4651, %v4891
        %v4972 = vadd.f32 %v4652, %v4893
        %v4973 = vadd.f32 %v4653, %v4895
        %v4974 = vadd.f32 %v4654, %v4897
        %v4975 = vadd.f32 %v4655, %v4899
        %v4976 = vadd.f32 %v4656, %v4901
        %v4977 = vadd.f32 %v4657, %v4903
        %v4978 = vadd.f32 %v4658, %v4905
        %v4979 = vadd.f32 %v4659, %v4907
        %v4980 = vadd.f32 %v4660, %v4909
        %v4981 = vadd.f32 %v4661, %v4911
        %v4982 = vadd.f32 %v4662, %v4913
        %v4983 = vadd.f32 %v4663, %v4915
        %v4984 = vadd.f32 %v4664, %v4917
        %v4985 = vadd.f32 %v4665, %v4919
        %v4986 = vadd.f32 %v4666, %v4921
        %v4987 = vadd.f32 %v4667, %v4923
        %v4988 = vtanh.pop %v4956
        %v4989 = vtanh.pop %v4957
        %v4990 = vtanh.pop %v4958
        %v4991 = vtanh.pop %v4959
        %v4992 = vtanh.pop %v4960
        %v4993 = vtanh.pop %v4961
        %v4994 = vtanh.pop %v4962
        %v4995 = vtanh.pop %v4963
        %v4996 = vtanh.pop %v4964
        %v4997 = vtanh.pop %v4965
        %v4998 = vtanh.pop %v4966
        %v4999 = vtanh.pop %v4967
        %v5000 = vtanh.pop %v4968
        %v5001 = vtanh.pop %v4969
        %v5002 = vtanh.pop %v4970
        %v5003 = vtanh.pop %v4971
        %v5004 = vtanh.pop %v4972
        %v5005 = vtanh.pop %v4973
        %v5006 = vtanh.pop %v4974
        %v5007 = vtanh.pop %v4975
        %v5008 = vtanh.pop %v4976
        %v5009 = vtanh.pop %v4977
        %v5010 = vtanh.pop %v4978
        %v5011 = vtanh.pop %v4979
        %v5012 = vtanh.pop %v4980
        %v5013 = vtanh.pop %v4981
        %v5014 = vtanh.pop %v4982
        %v5015 = vtanh.pop %v4983
        %v5016 = vtanh.pop %v4984
        %v5017 = vtanh.pop %v4985
        %v5018 = vtanh.pop %v4986
        %v5019 = vtanh.pop %v4987
        %5052 = vrot.lane.b32.xlu0 %v4988, 32
        %v5053 = vpop.permute.xlu0 %5052
        %5054 = vrot.lane.b32.xlu0 %v4989, 32
        %v5055 = vpop.permute.xlu0 %5054
        %5056 = vrot.lane.b32.xlu0 %v4990, 32
        %v5057 = vpop.permute.xlu0 %5056
        %5058 = vrot.lane.b32.xlu0 %v4991, 32
        %v5059 = vpop.permute.xlu0 %5058
        %5060 = vrot.lane.b32.xlu0 %v4992, 32
        %v5061 = vpop.permute.xlu0 %5060
        %5062 = vrot.lane.b32.xlu0 %v4993, 32
        %v5063 = vpop.permute.xlu0 %5062
        %5064 = vrot.lane.b32.xlu0 %v4994, 32
        %v5065 = vpop.permute.xlu0 %5064
        %5066 = vrot.lane.b32.xlu0 %v4995, 32
        %v5067 = vpop.permute.xlu0 %5066
        %5068 = vrot.lane.b32.xlu0 %v4996, 32
        %v5069 = vpop.permute.xlu0 %5068
        %5070 = vrot.lane.b32.xlu0 %v4997, 32
        %v5071 = vpop.permute.xlu0 %5070
        %5072 = vrot.lane.b32.xlu0 %v4998, 32
        %v5073 = vpop.permute.xlu0 %5072
        %5074 = vrot.lane.b32.xlu0 %v4999, 32
        %v5075 = vpop.permute.xlu0 %5074
        %5076 = vrot.lane.b32.xlu0 %v5000, 32
        %v5077 = vpop.permute.xlu0 %5076
        %5078 = vrot.lane.b32.xlu0 %v5001, 32
        %v5079 = vpop.permute.xlu0 %5078
        %5080 = vrot.lane.b32.xlu0 %v5002, 32
        %v5081 = vpop.permute.xlu0 %5080
        %5082 = vrot.lane.b32.xlu0 %v5003, 32
        %v5083 = vpop.permute.xlu0 %5082
        %5084 = vrot.lane.b32.xlu0 %v5004, 32
        %v5085 = vpop.permute.xlu0 %5084
        %5086 = vrot.lane.b32.xlu0 %v5005, 32
        %v5087 = vpop.permute.xlu0 %5086
        %5088 = vrot.lane.b32.xlu0 %v5006, 32
        %v5089 = vpop.permute.xlu0 %5088
        %5090 = vrot.lane.b32.xlu0 %v5007, 32
        %v5091 = vpop.permute.xlu0 %5090
        %5092 = vrot.lane.b32.xlu0 %v5008, 32
        %v5093 = vpop.permute.xlu0 %5092
        %5094 = vrot.lane.b32.xlu0 %v5009, 32
        %v5095 = vpop.permute.xlu0 %5094
        %5096 = vrot.lane.b32.xlu0 %v5010, 32
        %v5097 = vpop.permute.xlu0 %5096
        %5098 = vrot.lane.b32.xlu0 %v5011, 32
        %v5099 = vpop.permute.xlu0 %5098
        %5100 = vrot.lane.b32.xlu0 %v5012, 32
        %v5101 = vpop.permute.xlu0 %5100
        %5102 = vrot.lane.b32.xlu0 %v5013, 32
        %v5103 = vpop.permute.xlu0 %5102
        %5104 = vrot.lane.b32.xlu0 %v5014, 32
        %v5105 = vpop.permute.xlu0 %5104
        %5106 = vrot.lane.b32.xlu0 %v5015, 32
        %v5107 = vpop.permute.xlu0 %5106
        %5108 = vrot.lane.b32.xlu0 %v5016, 32
        %v5109 = vpop.permute.xlu0 %5108
        %5110 = vrot.lane.b32.xlu0 %v5017, 32
        %v5111 = vpop.permute.xlu0 %5110
        %5112 = vrot.lane.b32.xlu0 %v5018, 32
        %v5113 = vpop.permute.xlu0 %5112
        %5114 = vrot.lane.b32.xlu0 %v5019, 32
        %v5115 = vpop.permute.xlu0 %5114
        %v5148 = vmul.f32 %v3946, %v5053
        %v5149 = vmul.f32 %v3961, %v5055
        %v5150 = vmul.f32 %v3976, %v5057
        %v5151 = vmul.f32 %v3991, %v5059
        %v5152 = vmul.f32 %v4006, %v5061
        %v5153 = vmul.f32 %v4021, %v5063
        %v5154 = vmul.f32 %v4036, %v5065
        %v5155 = vmul.f32 %v4051, %v5067
        %v5156 = vmul.f32 %v4066, %v5069
        %v5157 = vmul.f32 %v4081, %v5071
        %v5158 = vmul.f32 %v4096, %v5073
        %v5159 = vmul.f32 %v4111, %v5075
        %v5160 = vmul.f32 %v4126, %v5077
        %v5161 = vmul.f32 %v4141, %v5079
        %v5162 = vmul.f32 %v4156, %v5081
        %v5163 = vmul.f32 %v4171, %v5083
        %v5164 = vmul.f32 %v4186, %v5085
        %v5165 = vmul.f32 %v4201, %v5087
        %v5166 = vmul.f32 %v4216, %v5089
        %v5167 = vmul.f32 %v4231, %v5091
        %v5168 = vmul.f32 %v4246, %v5093
        %v5169 = vmul.f32 %v4261, %v5095
        %v5170 = vmul.f32 %v4276, %v5097
        %v5171 = vmul.f32 %v4291, %v5099
        %v5172 = vmul.f32 %v4306, %v5101
        %v5173 = vmul.f32 %v4321, %v5103
        %v5174 = vmul.f32 %v4336, %v5105
        %v5175 = vmul.f32 %v4351, %v5107
        %v5176 = vmul.f32 %v4366, %v5109
        %v5177 = vmul.f32 %v4381, %v5111
        %v5178 = vmul.f32 %v4396, %v5113
        %v5179 = vmul.f32 %v4411, %v5115
        %5212 = vrot.lane.b32.xlu0 %v4956, 96
        %v5213 = vpop.permute.xlu0 %5212
        %5214 = vrot.lane.b32.xlu0 %v4957, 96
        %v5215 = vpop.permute.xlu0 %5214
        %5216 = vrot.lane.b32.xlu0 %v4958, 96
        %v5217 = vpop.permute.xlu0 %5216
        %5218 = vrot.lane.b32.xlu0 %v4959, 96
        %v5219 = vpop.permute.xlu0 %5218
        %5220 = vrot.lane.b32.xlu0 %v4960, 96
        %v5221 = vpop.permute.xlu0 %5220
        %5222 = vrot.lane.b32.xlu0 %v4961, 96
        %v5223 = vpop.permute.xlu0 %5222
        %5224 = vrot.lane.b32.xlu0 %v4962, 96
        %v5225 = vpop.permute.xlu0 %5224
        %5226 = vrot.lane.b32.xlu0 %v4963, 96
        %v5227 = vpop.permute.xlu0 %5226
        %5228 = vrot.lane.b32.xlu0 %v4964, 96
        %v5229 = vpop.permute.xlu0 %5228
        %5230 = vrot.lane.b32.xlu0 %v4965, 96
        %v5231 = vpop.permute.xlu0 %5230
        %5232 = vrot.lane.b32.xlu0 %v4966, 96
        %v5233 = vpop.permute.xlu0 %5232
        %5234 = vrot.lane.b32.xlu0 %v4967, 96
        %v5235 = vpop.permute.xlu0 %5234
        %5236 = vrot.lane.b32.xlu0 %v4968, 96
        %v5237 = vpop.permute.xlu0 %5236
        %5238 = vrot.lane.b32.xlu0 %v4969, 96
        %v5239 = vpop.permute.xlu0 %5238
        %5240 = vrot.lane.b32.xlu0 %v4970, 96
        %v5241 = vpop.permute.xlu0 %5240
        %5242 = vrot.lane.b32.xlu0 %v4971, 96
        %v5243 = vpop.permute.xlu0 %5242
        %5244 = vrot.lane.b32.xlu0 %v4972, 96
        %v5245 = vpop.permute.xlu0 %5244
        %5246 = vrot.lane.b32.xlu0 %v4973, 96
        %v5247 = vpop.permute.xlu0 %5246
        %5248 = vrot.lane.b32.xlu0 %v4974, 96
        %v5249 = vpop.permute.xlu0 %5248
        %5250 = vrot.lane.b32.xlu0 %v4975, 96
        %v5251 = vpop.permute.xlu0 %5250
        %5252 = vrot.lane.b32.xlu0 %v4976, 96
        %v5253 = vpop.permute.xlu0 %5252
        %5254 = vrot.lane.b32.xlu0 %v4977, 96
        %v5255 = vpop.permute.xlu0 %5254
        %5256 = vrot.lane.b32.xlu0 %v4978, 96
        %v5257 = vpop.permute.xlu0 %5256
        %5258 = vrot.lane.b32.xlu0 %v4979, 96
        %v5259 = vpop.permute.xlu0 %5258
        %5260 = vrot.lane.b32.xlu0 %v4980, 96
        %v5261 = vpop.permute.xlu0 %5260
        %5262 = vrot.lane.b32.xlu0 %v4981, 96
        %v5263 = vpop.permute.xlu0 %5262
        %5264 = vrot.lane.b32.xlu0 %v4982, 96
        %v5265 = vpop.permute.xlu0 %5264
        %5266 = vrot.lane.b32.xlu0 %v4983, 96
        %v5267 = vpop.permute.xlu0 %5266
        %5268 = vrot.lane.b32.xlu0 %v4984, 96
        %v5269 = vpop.permute.xlu0 %5268
        %5270 = vrot.lane.b32.xlu0 %v4985, 96
        %v5271 = vpop.permute.xlu0 %5270
        %5272 = vrot.lane.b32.xlu0 %v4986, 96
        %v5273 = vpop.permute.xlu0 %5272
        %5274 = vrot.lane.b32.xlu0 %v4987, 96
        %v5275 = vpop.permute.xlu0 %5274
        %5308 = vst.msk [vmem:[%s274] sm:$0xff] %vm2434, %v5213
        %5309 = vst.msk [vmem:[%s274 + $0x8] sm:$0xff] %vm2434, %v5215
        %5310 = vst.msk [vmem:[%s274 + $0x10] sm:$0xff] %vm2434, %v5217
        %5311 = vst.msk [vmem:[%s274 + $0x18] sm:$0xff] %vm2434, %v5219
        %5312 = vst.msk [vmem:[%s274 + $0x20] sm:$0xff] %vm2434, %v5221
        %5313 = vst.msk [vmem:[%s274 + $0x28] sm:$0xff] %vm2434, %v5223
        %5314 = vst.msk [vmem:[%s274 + $0x30] sm:$0xff] %vm2434, %v5225
        %5315 = vst.msk [vmem:[%s274 + $0x38] sm:$0xff] %vm2434, %v5227
        %5316 = vst.msk [vmem:[%s274 + $0x40] sm:$0xff] %vm2434, %v5229
        %5317 = vst.msk [vmem:[%s274 + $0x48] sm:$0xff] %vm2434, %v5231
        %5318 = vst.msk [vmem:[%s274 + $0x50] sm:$0xff] %vm2434, %v5233
        %5319 = vst.msk [vmem:[%s274 + $0x58] sm:$0xff] %vm2434, %v5235
        %5320 = vst.msk [vmem:[%s274 + $0x60] sm:$0xff] %vm2434, %v5237
        %5321 = vst.msk [vmem:[%s274 + $0x68] sm:$0xff] %vm2434, %v5239
        %5322 = vst.msk [vmem:[%s274 + $0x70] sm:$0xff] %vm2434, %v5241
        %5323 = vst.msk [vmem:[%s274 + $0x78] sm:$0xff] %vm2434, %v5243
        %5324 = vst.msk [vmem:[%s274 + $0x80] sm:$0xff] %vm2434, %v5245
        %5325 = vst.msk [vmem:[%s274 + $0x88] sm:$0xff] %vm2434, %v5247
        %5326 = vst.msk [vmem:[%s274 + $0x90] sm:$0xff] %vm2434, %v5249
        %5327 = vst.msk [vmem:[%s274 + $0x98] sm:$0xff] %vm2434, %v5251
        %5328 = vst.msk [vmem:[%s274 + $0xa0] sm:$0xff] %vm2434, %v5253
        %5329 = vst.msk [vmem:[%s274 + $0xa8] sm:$0xff] %vm2434, %v5255
        %5330 = vst.msk [vmem:[%s274 + $0xb0] sm:$0xff] %vm2434, %v5257
        %5331 = vst.msk [vmem:[%s274 + $0xb8] sm:$0xff] %vm2434, %v5259
        %5332 = vst.msk [vmem:[%s274 + $0xc0] sm:$0xff] %vm2434, %v5261
        %5333 = vst.msk [vmem:[%s274 + $0xc8] sm:$0xff] %vm2434, %v5263
        %5334 = vst.msk [vmem:[%s274 + $0xd0] sm:$0xff] %vm2434, %v5265
        %5335 = vst.msk [vmem:[%s274 + $0xd8] sm:$0xff] %vm2434, %v5267
        %5336 = vst.msk [vmem:[%s274 + $0xe0] sm:$0xff] %vm2434, %v5269
        %5337 = vst.msk [vmem:[%s274 + $0xe8] sm:$0xff] %vm2434, %v5271
        %5338 = vst.msk [vmem:[%s274 + $0xf0] sm:$0xff] %vm2434, %v5273
        %5339 = vst.msk [vmem:[%s274 + $0xf8] sm:$0xff] %vm2434, %v5275
        %5372 = vrot.lane.b32.xlu0 %v5148, 64
        %v5373 = vpop.permute.xlu0 %5372
        %5374 = vrot.lane.b32.xlu0 %v5149, 64
        %v5375 = vpop.permute.xlu0 %5374
        %5376 = vrot.lane.b32.xlu0 %v5150, 64
        %v5377 = vpop.permute.xlu0 %5376
        %5378 = vrot.lane.b32.xlu0 %v5151, 64
        %v5379 = vpop.permute.xlu0 %5378
        %5380 = vrot.lane.b32.xlu0 %v5152, 64
        %v5381 = vpop.permute.xlu0 %5380
        %5382 = vrot.lane.b32.xlu0 %v5153, 64
        %v5383 = vpop.permute.xlu0 %5382
        %5384 = vrot.lane.b32.xlu0 %v5154, 64
        %v5385 = vpop.permute.xlu0 %5384
        %5386 = vrot.lane.b32.xlu0 %v5155, 64
        %v5387 = vpop.permute.xlu0 %5386
        %5388 = vrot.lane.b32.xlu0 %v5156, 64
        %v5389 = vpop.permute.xlu0 %5388
        %5390 = vrot.lane.b32.xlu0 %v5157, 64
        %v5391 = vpop.permute.xlu0 %5390
        %5392 = vrot.lane.b32.xlu0 %v5158, 64
        %v5393 = vpop.permute.xlu0 %5392
        %5394 = vrot.lane.b32.xlu0 %v5159, 64
        %v5395 = vpop.permute.xlu0 %5394
        %5396 = vrot.lane.b32.xlu0 %v5160, 64
        %v5397 = vpop.permute.xlu0 %5396
        %5398 = vrot.lane.b32.xlu0 %v5161, 64
        %v5399 = vpop.permute.xlu0 %5398
        %5400 = vrot.lane.b32.xlu0 %v5162, 64
        %v5401 = vpop.permute.xlu0 %5400
        %5402 = vrot.lane.b32.xlu0 %v5163, 64
        %v5403 = vpop.permute.xlu0 %5402
        %5404 = vrot.lane.b32.xlu0 %v5164, 64
        %v5405 = vpop.permute.xlu0 %5404
        %5406 = vrot.lane.b32.xlu0 %v5165, 64
        %v5407 = vpop.permute.xlu0 %5406
        %5408 = vrot.lane.b32.xlu0 %v5166, 64
        %v5409 = vpop.permute.xlu0 %5408
        %5410 = vrot.lane.b32.xlu0 %v5167, 64
        %v5411 = vpop.permute.xlu0 %5410
        %5412 = vrot.lane.b32.xlu0 %v5168, 64
        %v5413 = vpop.permute.xlu0 %5412
        %5414 = vrot.lane.b32.xlu0 %v5169, 64
        %v5415 = vpop.permute.xlu0 %5414
        %5416 = vrot.lane.b32.xlu0 %v5170, 64
        %v5417 = vpop.permute.xlu0 %5416
        %5418 = vrot.lane.b32.xlu0 %v5171, 64
        %v5419 = vpop.permute.xlu0 %5418
        %5420 = vrot.lane.b32.xlu0 %v5172, 64
        %v5421 = vpop.permute.xlu0 %5420
        %5422 = vrot.lane.b32.xlu0 %v5173, 64
        %v5423 = vpop.permute.xlu0 %5422
        %5424 = vrot.lane.b32.xlu0 %v5174, 64
        %v5425 = vpop.permute.xlu0 %5424
        %5426 = vrot.lane.b32.xlu0 %v5175, 64
        %v5427 = vpop.permute.xlu0 %5426
        %5428 = vrot.lane.b32.xlu0 %v5176, 64
        %v5429 = vpop.permute.xlu0 %5428
        %5430 = vrot.lane.b32.xlu0 %v5177, 64
        %v5431 = vpop.permute.xlu0 %5430
        %5432 = vrot.lane.b32.xlu0 %v5178, 64
        %v5433 = vpop.permute.xlu0 %5432
        %5434 = vrot.lane.b32.xlu0 %v5179, 64
        %v5435 = vpop.permute.xlu0 %5434
        %5468 = vst.msk [vmem:[%s299] sm:$0xff] %vm2434, %v5373
        %5469 = vst.msk [vmem:[%s299 + $0x8] sm:$0xff] %vm2434, %v5375
        %5470 = vst.msk [vmem:[%s299 + $0x10] sm:$0xff] %vm2434, %v5377
        %5471 = vst.msk [vmem:[%s299 + $0x18] sm:$0xff] %vm2434, %v5379
        %5472 = vst.msk [vmem:[%s299 + $0x20] sm:$0xff] %vm2434, %v5381
        %5473 = vst.msk [vmem:[%s299 + $0x28] sm:$0xff] %vm2434, %v5383
        %5474 = vst.msk [vmem:[%s299 + $0x30] sm:$0xff] %vm2434, %v5385
        %5475 = vst.msk [vmem:[%s299 + $0x38] sm:$0xff] %vm2434, %v5387
        %5476 = vst.msk [vmem:[%s299 + $0x40] sm:$0xff] %vm2434, %v5389
        %5477 = vst.msk [vmem:[%s299 + $0x48] sm:$0xff] %vm2434, %v5391
        %5478 = vst.msk [vmem:[%s299 + $0x50] sm:$0xff] %vm2434, %v5393
        %5479 = vst.msk [vmem:[%s299 + $0x58] sm:$0xff] %vm2434, %v5395
        %5480 = vst.msk [vmem:[%s299 + $0x60] sm:$0xff] %vm2434, %v5397
        %5481 = vst.msk [vmem:[%s299 + $0x68] sm:$0xff] %vm2434, %v5399
        %5482 = vst.msk [vmem:[%s299 + $0x70] sm:$0xff] %vm2434, %v5401
        %5483 = vst.msk [vmem:[%s299 + $0x78] sm:$0xff] %vm2434, %v5403
        %5484 = vst.msk [vmem:[%s299 + $0x80] sm:$0xff] %vm2434, %v5405
        %5485 = vst.msk [vmem:[%s299 + $0x88] sm:$0xff] %vm2434, %v5407
        %5486 = vst.msk [vmem:[%s299 + $0x90] sm:$0xff] %vm2434, %v5409
        %5487 = vst.msk [vmem:[%s299 + $0x98] sm:$0xff] %vm2434, %v5411
        %5488 = vst.msk [vmem:[%s299 + $0xa0] sm:$0xff] %vm2434, %v5413
        %5489 = vst.msk [vmem:[%s299 + $0xa8] sm:$0xff] %vm2434, %v5415
        %5490 = vst.msk [vmem:[%s299 + $0xb0] sm:$0xff] %vm2434, %v5417
        %5491 = vst.msk [vmem:[%s299 + $0xb8] sm:$0xff] %vm2434, %v5419
        %5492 = vst.msk [vmem:[%s299 + $0xc0] sm:$0xff] %vm2434, %v5421
        %5493 = vst.msk [vmem:[%s299 + $0xc8] sm:$0xff] %vm2434, %v5423
        %5494 = vst.msk [vmem:[%s299 + $0xd0] sm:$0xff] %vm2434, %v5425
        %5495 = vst.msk [vmem:[%s299 + $0xd8] sm:$0xff] %vm2434, %v5427
        %5496 = vst.msk [vmem:[%s299 + $0xe0] sm:$0xff] %vm2434, %v5429
        %5497 = vst.msk [vmem:[%s299 + $0xe8] sm:$0xff] %vm2434, %v5431
        %5498 = vst.msk [vmem:[%s299 + $0xf0] sm:$0xff] %vm2434, %v5433
        %5499 = vst.msk [vmem:[%s299 + $0xf8] sm:$0xff] %vm2434, %v5435
        %v5500 = vpack.c.bf16 %v5148, %v5148
        %v5501 = vpack.c.bf16 %v5149, %v5149
        %v5502 = vpack.c.bf16 %v5150, %v5150
        %v5503 = vpack.c.bf16 %v5151, %v5151
        %v5504 = vpack.c.bf16 %v5152, %v5152
        %v5505 = vpack.c.bf16 %v5153, %v5153
        %v5506 = vpack.c.bf16 %v5154, %v5154
        %v5507 = vpack.c.bf16 %v5155, %v5155
        %v5508 = vpack.c.bf16 %v5156, %v5156
        %v5509 = vpack.c.bf16 %v5157, %v5157
        %v5510 = vpack.c.bf16 %v5158, %v5158
        %v5511 = vpack.c.bf16 %v5159, %v5159
        %v5512 = vpack.c.bf16 %v5160, %v5160
        %v5513 = vpack.c.bf16 %v5161, %v5161
        %v5514 = vpack.c.bf16 %v5162, %v5162
        %v5515 = vpack.c.bf16 %v5163, %v5163
        %v5516 = vpack.c.bf16 %v5164, %v5164
        %v5517 = vpack.c.bf16 %v5165, %v5165
        %v5518 = vpack.c.bf16 %v5166, %v5166
        %v5519 = vpack.c.bf16 %v5167, %v5167
        %v5520 = vpack.c.bf16 %v5168, %v5168
        %v5521 = vpack.c.bf16 %v5169, %v5169
        %v5522 = vpack.c.bf16 %v5170, %v5170
        %v5523 = vpack.c.bf16 %v5171, %v5171
        %v5524 = vpack.c.bf16 %v5172, %v5172
        %v5525 = vpack.c.bf16 %v5173, %v5173
        %v5526 = vpack.c.bf16 %v5174, %v5174
        %v5527 = vpack.c.bf16 %v5175, %v5175
        %v5528 = vpack.c.bf16 %v5176, %v5176
        %v5529 = vpack.c.bf16 %v5177, %v5177
        %v5530 = vpack.c.bf16 %v5178, %v5178
        %v5531 = vpack.c.bf16 %v5179, %v5179
        %vm5532 = vsmask.f32 256
        %vm5533 = vsmask.f32 4368
        %vm5534 = vmor %vm5532, %vm5533
        %v5536 = vshrl.u32 %v5500, 16
        %v5538 = vrot.slane %v5536, 7
        %v5539 = vshll.u32 %v5500, 16
        %v5541 = vor.u32 %v5538, %v5539
        %v5542 = vrot.slane %v5538, 4
        %v5544 = vshrl.u32 %v5501, 16
        %v5546 = vrot.slane %v5544, 7
        %v5547 = vshll.u32 %v5501, 16
        %v5549 = vor.u32 %v5546, %v5547
        %v5550 = vsel %vm5534, %v5542, %v5549
        %v5551 = vrot.slane %v5546, 4
        %v5553 = vshrl.u32 %v5502, 16
        %v5555 = vrot.slane %v5553, 7
        %v5556 = vshll.u32 %v5502, 16
        %v5558 = vor.u32 %v5555, %v5556
        %v5559 = vrot.slane %v5555, 4
        %v5561 = vshrl.u32 %v5503, 16
        %v5563 = vrot.slane %v5561, 7
        %v5564 = vshll.u32 %v5503, 16
        %v5566 = vor.u32 %v5563, %v5564
        %v5567 = vsel %vm5534, %v5559, %v5566
        %v5568 = vrot.slane %v5563, 4
        %v5570 = vshrl.u32 %v5504, 16
        %v5572 = vrot.slane %v5570, 7
        %v5573 = vshll.u32 %v5504, 16
        %v5575 = vor.u32 %v5572, %v5573
        %v5576 = vrot.slane %v5572, 4
        %v5578 = vshrl.u32 %v5505, 16
        %v5580 = vrot.slane %v5578, 7
        %v5581 = vshll.u32 %v5505, 16
        %v5583 = vor.u32 %v5580, %v5581
        %v5584 = vsel %vm5534, %v5576, %v5583
        %v5585 = vrot.slane %v5580, 4
        %v5587 = vshrl.u32 %v5506, 16
        %v5589 = vrot.slane %v5587, 7
        %v5590 = vshll.u32 %v5506, 16
        %v5592 = vor.u32 %v5589, %v5590
        %v5593 = vrot.slane %v5589, 4
        %v5595 = vshrl.u32 %v5507, 16
        %v5597 = vrot.slane %v5595, 7
        %v5598 = vshll.u32 %v5507, 16
        %v5600 = vor.u32 %v5597, %v5598
        %v5601 = vsel %vm5534, %v5593, %v5600
        %v5602 = vrot.slane %v5597, 4
        %v5604 = vshrl.u32 %v5508, 16
        %v5606 = vrot.slane %v5604, 7
        %v5607 = vshll.u32 %v5508, 16
        %v5609 = vor.u32 %v5606, %v5607
        %v5610 = vrot.slane %v5606, 4
        %v5612 = vshrl.u32 %v5509, 16
        %v5614 = vrot.slane %v5612, 7
        %v5615 = vshll.u32 %v5509, 16
        %v5617 = vor.u32 %v5614, %v5615
        %v5618 = vsel %vm5534, %v5610, %v5617
        %v5619 = vrot.slane %v5614, 4
        %v5621 = vshrl.u32 %v5510, 16
        %v5623 = vrot.slane %v5621, 7
        %v5624 = vshll.u32 %v5510, 16
        %v5626 = vor.u32 %v5623, %v5624
        %v5627 = vrot.slane %v5623, 4
        %v5629 = vshrl.u32 %v5511, 16
        %v5631 = vrot.slane %v5629, 7
        %v5632 = vshll.u32 %v5511, 16
        %v5634 = vor.u32 %v5631, %v5632
        %v5635 = vsel %vm5534, %v5627, %v5634
        %v5636 = vrot.slane %v5631, 4
        %v5638 = vshrl.u32 %v5512, 16
        %v5640 = vrot.slane %v5638, 7
        %v5641 = vshll.u32 %v5512, 16
        %v5643 = vor.u32 %v5640, %v5641
        %v5644 = vrot.slane %v5640, 4
        %v5646 = vshrl.u32 %v5513, 16
        %v5648 = vrot.slane %v5646, 7
        %v5649 = vshll.u32 %v5513, 16
        %v5651 = vor.u32 %v5648, %v5649
        %v5652 = vsel %vm5534, %v5644, %v5651
        %v5653 = vrot.slane %v5648, 4
        %v5655 = vshrl.u32 %v5514, 16
        %v5657 = vrot.slane %v5655, 7
        %v5658 = vshll.u32 %v5514, 16
        %v5660 = vor.u32 %v5657, %v5658
        %v5661 = vrot.slane %v5657, 4
        %v5663 = vshrl.u32 %v5515, 16
        %v5665 = vrot.slane %v5663, 7
        %v5666 = vshll.u32 %v5515, 16
        %v5668 = vor.u32 %v5665, %v5666
        %v5669 = vsel %vm5534, %v5661, %v5668
        %v5670 = vrot.slane %v5665, 4
        %v5672 = vshrl.u32 %v5516, 16
        %v5674 = vrot.slane %v5672, 7
        %v5675 = vshll.u32 %v5516, 16
        %v5677 = vor.u32 %v5674, %v5675
        %v5678 = vrot.slane %v5674, 4
        %v5680 = vshrl.u32 %v5517, 16
        %v5682 = vrot.slane %v5680, 7
        %v5683 = vshll.u32 %v5517, 16
        %v5685 = vor.u32 %v5682, %v5683
        %v5686 = vsel %vm5534, %v5678, %v5685
        %v5687 = vrot.slane %v5682, 4
        %v5689 = vshrl.u32 %v5518, 16
        %v5691 = vrot.slane %v5689, 7
        %v5692 = vshll.u32 %v5518, 16
        %v5694 = vor.u32 %v5691, %v5692
        %v5695 = vrot.slane %v5691, 4
        %v5697 = vshrl.u32 %v5519, 16
        %v5699 = vrot.slane %v5697, 7
        %v5700 = vshll.u32 %v5519, 16
        %v5702 = vor.u32 %v5699, %v5700
        %v5703 = vsel %vm5534, %v5695, %v5702
        %v5704 = vrot.slane %v5699, 4
        %v5706 = vshrl.u32 %v5520, 16
        %v5708 = vrot.slane %v5706, 7
        %v5709 = vshll.u32 %v5520, 16
        %v5711 = vor.u32 %v5708, %v5709
        %v5712 = vrot.slane %v5708, 4
        %v5714 = vshrl.u32 %v5521, 16
        %v5716 = vrot.slane %v5714, 7
        %v5717 = vshll.u32 %v5521, 16
        %v5719 = vor.u32 %v5716, %v5717
        %v5720 = vsel %vm5534, %v5712, %v5719
        %v5721 = vrot.slane %v5716, 4
        %v5723 = vshrl.u32 %v5522, 16
        %v5725 = vrot.slane %v5723, 7
        %v5726 = vshll.u32 %v5522, 16
        %v5728 = vor.u32 %v5725, %v5726
        %v5729 = vrot.slane %v5725, 4
        %v5731 = vshrl.u32 %v5523, 16
        %v5733 = vrot.slane %v5731, 7
        %v5734 = vshll.u32 %v5523, 16
        %v5736 = vor.u32 %v5733, %v5734
        %v5737 = vsel %vm5534, %v5729, %v5736
        %v5738 = vrot.slane %v5733, 4
        %v5740 = vshrl.u32 %v5524, 16
        %v5742 = vrot.slane %v5740, 7
        %v5743 = vshll.u32 %v5524, 16
        %v5745 = vor.u32 %v5742, %v5743
        %v5746 = vrot.slane %v5742, 4
        %v5748 = vshrl.u32 %v5525, 16
        %v5750 = vrot.slane %v5748, 7
        %v5751 = vshll.u32 %v5525, 16
        %v5753 = vor.u32 %v5750, %v5751
        %v5754 = vsel %vm5534, %v5746, %v5753
        %v5755 = vrot.slane %v5750, 4
        %v5757 = vshrl.u32 %v5526, 16
        %v5759 = vrot.slane %v5757, 7
        %v5760 = vshll.u32 %v5526, 16
        %v5762 = vor.u32 %v5759, %v5760
        %v5763 = vrot.slane %v5759, 4
        %v5765 = vshrl.u32 %v5527, 16
        %v5767 = vrot.slane %v5765, 7
        %v5768 = vshll.u32 %v5527, 16
        %v5770 = vor.u32 %v5767, %v5768
        %v5771 = vsel %vm5534, %v5763, %v5770
        %v5772 = vrot.slane %v5767, 4
        %v5774 = vshrl.u32 %v5528, 16
        %v5776 = vrot.slane %v5774, 7
        %v5777 = vshll.u32 %v5528, 16
        %v5779 = vor.u32 %v5776, %v5777
        %v5780 = vrot.slane %v5776, 4
        %v5782 = vshrl.u32 %v5529, 16
        %v5784 = vrot.slane %v5782, 7
        %v5785 = vshll.u32 %v5529, 16
        %v5787 = vor.u32 %v5784, %v5785
        %v5788 = vsel %vm5534, %v5780, %v5787
        %v5789 = vrot.slane %v5784, 4
        %v5791 = vshrl.u32 %v5530, 16
        %v5793 = vrot.slane %v5791, 7
        %v5794 = vshll.u32 %v5530, 16
        %v5796 = vor.u32 %v5793, %v5794
        %v5797 = vrot.slane %v5793, 4
        %v5799 = vshrl.u32 %v5531, 16
        %v5801 = vrot.slane %v5799, 7
        %v5802 = vshll.u32 %v5531, 16
        %v5804 = vor.u32 %v5801, %v5802
        %v5805 = vsel %vm5534, %v5797, %v5804
        %v5806 = vrot.slane %v5801, 4
        %5807 = vrot.lane.b32.xlu0 %v5541, 64
        %v5808 = vpop.permute.xlu0 %5807
        %5809 = vrot.lane.b32.xlu0 %v5550, 64
        %v5810 = vpop.permute.xlu0 %5809
        %5811 = vrot.lane.b32.xlu0 %v5551, 64
        %v5812 = vpop.permute.xlu0 %5811
        %5813 = vrot.lane.b32.xlu0 %v5558, 64
        %v5814 = vpop.permute.xlu0 %5813
        %5815 = vrot.lane.b32.xlu0 %v5567, 64
        %v5816 = vpop.permute.xlu0 %5815
        %5817 = vrot.lane.b32.xlu0 %v5568, 64
        %v5818 = vpop.permute.xlu0 %5817
        %5819 = vrot.lane.b32.xlu0 %v5575, 64
        %v5820 = vpop.permute.xlu0 %5819
        %5821 = vrot.lane.b32.xlu0 %v5584, 64
        %v5822 = vpop.permute.xlu0 %5821
        %5823 = vrot.lane.b32.xlu0 %v5585, 64
        %v5824 = vpop.permute.xlu0 %5823
        %5825 = vrot.lane.b32.xlu0 %v5592, 64
        %v5826 = vpop.permute.xlu0 %5825
        %5827 = vrot.lane.b32.xlu0 %v5601, 64
        %v5828 = vpop.permute.xlu0 %5827
        %5829 = vrot.lane.b32.xlu0 %v5602, 64
        %v5830 = vpop.permute.xlu0 %5829
        %5831 = vrot.lane.b32.xlu0 %v5609, 64
        %v5832 = vpop.permute.xlu0 %5831
        %5833 = vrot.lane.b32.xlu0 %v5618, 64
        %v5834 = vpop.permute.xlu0 %5833
        %5835 = vrot.lane.b32.xlu0 %v5619, 64
        %v5836 = vpop.permute.xlu0 %5835
        %5837 = vrot.lane.b32.xlu0 %v5626, 64
        %v5838 = vpop.permute.xlu0 %5837
        %5839 = vrot.lane.b32.xlu0 %v5635, 64
        %v5840 = vpop.permute.xlu0 %5839
        %5841 = vrot.lane.b32.xlu0 %v5636, 64
        %v5842 = vpop.permute.xlu0 %5841
        %5843 = vrot.lane.b32.xlu0 %v5643, 64
        %v5844 = vpop.permute.xlu0 %5843
        %5845 = vrot.lane.b32.xlu0 %v5652, 64
        %v5846 = vpop.permute.xlu0 %5845
        %5847 = vrot.lane.b32.xlu0 %v5653, 64
        %v5848 = vpop.permute.xlu0 %5847
        %5849 = vrot.lane.b32.xlu0 %v5660, 64
        %v5850 = vpop.permute.xlu0 %5849
        %5851 = vrot.lane.b32.xlu0 %v5669, 64
        %v5852 = vpop.permute.xlu0 %5851
        %5853 = vrot.lane.b32.xlu0 %v5670, 64
        %v5854 = vpop.permute.xlu0 %5853
        %5855 = vrot.lane.b32.xlu0 %v5677, 64
        %v5856 = vpop.permute.xlu0 %5855
        %5857 = vrot.lane.b32.xlu0 %v5686, 64
        %v5858 = vpop.permute.xlu0 %5857
        %5859 = vrot.lane.b32.xlu0 %v5687, 64
        %v5860 = vpop.permute.xlu0 %5859
        %5861 = vrot.lane.b32.xlu0 %v5694, 64
        %v5862 = vpop.permute.xlu0 %5861
        %5863 = vrot.lane.b32.xlu0 %v5703, 64
        %v5864 = vpop.permute.xlu0 %5863
        %5865 = vrot.lane.b32.xlu0 %v5704, 64
        %v5866 = vpop.permute.xlu0 %5865
        %5867 = vrot.lane.b32.xlu0 %v5711, 64
        %v5868 = vpop.permute.xlu0 %5867
        %5869 = vrot.lane.b32.xlu0 %v5720, 64
        %v5870 = vpop.permute.xlu0 %5869
        %5871 = vrot.lane.b32.xlu0 %v5721, 64
        %v5872 = vpop.permute.xlu0 %5871
        %5873 = vrot.lane.b32.xlu0 %v5728, 64
        %v5874 = vpop.permute.xlu0 %5873
        %5875 = vrot.lane.b32.xlu0 %v5737, 64
        %v5876 = vpop.permute.xlu0 %5875
        %5877 = vrot.lane.b32.xlu0 %v5738, 64
        %v5878 = vpop.permute.xlu0 %5877
        %5879 = vrot.lane.b32.xlu0 %v5745, 64
        %v5880 = vpop.permute.xlu0 %5879
        %5881 = vrot.lane.b32.xlu0 %v5754, 64
        %v5882 = vpop.permute.xlu0 %5881
        %5883 = vrot.lane.b32.xlu0 %v5755, 64
        %v5884 = vpop.permute.xlu0 %5883
        %5885 = vrot.lane.b32.xlu0 %v5762, 64
        %v5886 = vpop.permute.xlu0 %5885
        %5887 = vrot.lane.b32.xlu0 %v5771, 64
        %v5888 = vpop.permute.xlu0 %5887
        %5889 = vrot.lane.b32.xlu0 %v5772, 64
        %v5890 = vpop.permute.xlu0 %5889
        %5891 = vrot.lane.b32.xlu0 %v5779, 64
        %v5892 = vpop.permute.xlu0 %5891
        %5893 = vrot.lane.b32.xlu0 %v5788, 64
        %v5894 = vpop.permute.xlu0 %5893
        %5895 = vrot.lane.b32.xlu0 %v5789, 64
        %v5896 = vpop.permute.xlu0 %5895
        %5897 = vrot.lane.b32.xlu0 %v5796, 64
        %v5898 = vpop.permute.xlu0 %5897
        %5899 = vrot.lane.b32.xlu0 %v5805, 64
        %v5900 = vpop.permute.xlu0 %5899
        %5901 = vrot.lane.b32.xlu0 %v5806, 64
        %v5902 = vpop.permute.xlu0 %5901
        %s5951 = scalar_lea.vmem [#allocation2], 12
        %vm5952 = vcmask 257024
        %vm5953 = vsmask.f32 7938
        %vm5954 = vmand %vm5952, %vm5953
        %v5955 = vld [vmem:[%s5951] sm:$0xf]
        %v5956 = vsel %vm5954, %v5808, %v5955
        %5957 = vst [vmem:[%s5951] sm:$0xf] %v5956
        %vm5958 = vcmask 257024
        %5959 = vst.msk [vmem:[%s5951 + $0x4] sm:$0xf] %vm5958, %v5810
        %vm5960 = vcmask 253952
        %vm5961 = vmand %vm5960, %vm5532
        %v5962 = vld [vmem:[%s5951 + $0x8] sm:$0x1]
        %v5963 = vsel %vm5961, %v5812, %v5962
        %5964 = vst [vmem:[%s5951 + $0x8] sm:$0x1] %v5963
        %v5965 = vld [vmem:[%s5951 + $0xc] sm:$0xf]
        %v5966 = vsel %vm5954, %v5814, %v5965
        %5967 = vst [vmem:[%s5951 + $0xc] sm:$0xf] %v5966
        %5968 = vst.msk [vmem:[%s5951 + $0x10] sm:$0xf] %vm5958, %v5816
        %v5969 = vld [vmem:[%s5951 + $0x14] sm:$0x1]
        %v5970 = vsel %vm5961, %v5818, %v5969
        %5971 = vst [vmem:[%s5951 + $0x14] sm:$0x1] %v5970
        %v5972 = vld [vmem:[%s5951 + $0x18] sm:$0xf]
        %v5973 = vsel %vm5954, %v5820, %v5972
        %5974 = vst [vmem:[%s5951 + $0x18] sm:$0xf] %v5973
        %5975 = vst.msk [vmem:[%s5951 + $0x1c] sm:$0xf] %vm5958, %v5822
        %v5976 = vld [vmem:[%s5951 + $0x20] sm:$0x1]
        %v5977 = vsel %vm5961, %v5824, %v5976
        %5978 = vst [vmem:[%s5951 + $0x20] sm:$0x1] %v5977
        %v5979 = vld [vmem:[%s5951 + $0x24] sm:$0xf]
        %v5980 = vsel %vm5954, %v5826, %v5979
        %5981 = vst [vmem:[%s5951 + $0x24] sm:$0xf] %v5980
        %5982 = vst.msk [vmem:[%s5951 + $0x28] sm:$0xf] %vm5958, %v5828
        %v5983 = vld [vmem:[%s5951 + $0x2c] sm:$0x1]
        %v5984 = vsel %vm5961, %v5830, %v5983
        %5985 = vst [vmem:[%s5951 + $0x2c] sm:$0x1] %v5984
        %v5986 = vld [vmem:[%s5951 + $0x30] sm:$0xf]
        %v5987 = vsel %vm5954, %v5832, %v5986
        %5988 = vst [vmem:[%s5951 + $0x30] sm:$0xf] %v5987
        %5989 = vst.msk [vmem:[%s5951 + $0x34] sm:$0xf] %vm5958, %v5834
        %v5990 = vld [vmem:[%s5951 + $0x38] sm:$0x1]
        %v5991 = vsel %vm5961, %v5836, %v5990
        %5992 = vst [vmem:[%s5951 + $0x38] sm:$0x1] %v5991
        %v5993 = vld [vmem:[%s5951 + $0x3c] sm:$0xf]
        %v5994 = vsel %vm5954, %v5838, %v5993
        %5995 = vst [vmem:[%s5951 + $0x3c] sm:$0xf] %v5994
        %5996 = vst.msk [vmem:[%s5951 + $0x40] sm:$0xf] %vm5958, %v5840
        %v5997 = vld [vmem:[%s5951 + $0x44] sm:$0x1]
        %v5998 = vsel %vm5961, %v5842, %v5997
        %5999 = vst [vmem:[%s5951 + $0x44] sm:$0x1] %v5998
        %v6000 = vld [vmem:[%s5951 + $0x48] sm:$0xf]
        %v6001 = vsel %vm5954, %v5844, %v6000
        %6002 = vst [vmem:[%s5951 + $0x48] sm:$0xf] %v6001
        %6003 = vst.msk [vmem:[%s5951 + $0x4c] sm:$0xf] %vm5958, %v5846
        %v6004 = vld [vmem:[%s5951 + $0x50] sm:$0x1]
        %v6005 = vsel %vm5961, %v5848, %v6004
        %6006 = vst [vmem:[%s5951 + $0x50] sm:$0x1] %v6005
        %v6007 = vld [vmem:[%s5951 + $0x54] sm:$0xf]
        %v6008 = vsel %vm5954, %v5850, %v6007
        %6009 = vst [vmem:[%s5951 + $0x54] sm:$0xf] %v6008
        %6010 = vst.msk [vmem:[%s5951 + $0x58] sm:$0xf] %vm5958, %v5852
        %v6011 = vld [vmem:[%s5951 + $0x5c] sm:$0x1]
        %v6012 = vsel %vm5961, %v5854, %v6011
        %6013 = vst [vmem:[%s5951 + $0x5c] sm:$0x1] %v6012
        %v6014 = vld [vmem:[%s5951 + $0x60] sm:$0xf]
        %v6015 = vsel %vm5954, %v5856, %v6014
        %6016 = vst [vmem:[%s5951 + $0x60] sm:$0xf] %v6015
        %6017 = vst.msk [vmem:[%s5951 + $0x64] sm:$0xf] %vm5958, %v5858
        %v6018 = vld [vmem:[%s5951 + $0x68] sm:$0x1]
        %v6019 = vsel %vm5961, %v5860, %v6018
        %6020 = vst [vmem:[%s5951 + $0x68] sm:$0x1] %v6019
        %v6021 = vld [vmem:[%s5951 + $0x6c] sm:$0xf]
        %v6022 = vsel %vm5954, %v5862, %v6021
        %6023 = vst [vmem:[%s5951 + $0x6c] sm:$0xf] %v6022
        %6024 = vst.msk [vmem:[%s5951 + $0x70] sm:$0xf] %vm5958, %v5864
        %v6025 = vld [vmem:[%s5951 + $0x74] sm:$0x1]
        %v6026 = vsel %vm5961, %v5866, %v6025
        %6027 = vst [vmem:[%s5951 + $0x74] sm:$0x1] %v6026
        %v6028 = vld [vmem:[%s5951 + $0x78] sm:$0xf]
        %v6029 = vsel %vm5954, %v5868, %v6028
        %6030 = vst [vmem:[%s5951 + $0x78] sm:$0xf] %v6029
        %6031 = vst.msk [vmem:[%s5951 + $0x7c] sm:$0xf] %vm5958, %v5870
        %v6032 = vld [vmem:[%s5951 + $0x80] sm:$0x1]
        %v6033 = vsel %vm5961, %v5872, %v6032
        %6034 = vst [vmem:[%s5951 + $0x80] sm:$0x1] %v6033
        %v6035 = vld [vmem:[%s5951 + $0x84] sm:$0xf]
        %v6036 = vsel %vm5954, %v5874, %v6035
        %6037 = vst [vmem:[%s5951 + $0x84] sm:$0xf] %v6036
        %6038 = vst.msk [vmem:[%s5951 + $0x88] sm:$0xf] %vm5958, %v5876
        %v6039 = vld [vmem:[%s5951 + $0x8c] sm:$0x1]
        %v6040 = vsel %vm5961, %v5878, %v6039
        %6041 = vst [vmem:[%s5951 + $0x8c] sm:$0x1] %v6040
        %v6042 = vld [vmem:[%s5951 + $0x90] sm:$0xf]
        %v6043 = vsel %vm5954, %v5880, %v6042
        %6044 = vst [vmem:[%s5951 + $0x90] sm:$0xf] %v6043
        %6045 = vst.msk [vmem:[%s5951 + $0x94] sm:$0xf] %vm5958, %v5882
        %v6046 = vld [vmem:[%s5951 + $0x98] sm:$0x1]
        %v6047 = vsel %vm5961, %v5884, %v6046
        %6048 = vst [vmem:[%s5951 + $0x98] sm:$0x1] %v6047
        %v6049 = vld [vmem:[%s5951 + $0x9c] sm:$0xf]
        %v6050 = vsel %vm5954, %v5886, %v6049
        %6051 = vst [vmem:[%s5951 + $0x9c] sm:$0xf] %v6050
        %6052 = vst.msk [vmem:[%s5951 + $0xa0] sm:$0xf] %vm5958, %v5888
        %v6053 = vld [vmem:[%s5951 + $0xa4] sm:$0x1]
        %v6054 = vsel %vm5961, %v5890, %v6053
        %6055 = vst [vmem:[%s5951 + $0xa4] sm:$0x1] %v6054
        %v6056 = vld [vmem:[%s5951 + $0xa8] sm:$0xf]
        %v6057 = vsel %vm5954, %v5892, %v6056
        %6058 = vst [vmem:[%s5951 + $0xa8] sm:$0xf] %v6057
        %6059 = vst.msk [vmem:[%s5951 + $0xac] sm:$0xf] %vm5958, %v5894
        %v6060 = vld [vmem:[%s5951 + $0xb0] sm:$0x1]
        %v6061 = vsel %vm5961, %v5896, %v6060
        %6062 = vst [vmem:[%s5951 + $0xb0] sm:$0x1] %v6061
        %v6063 = vld [vmem:[%s5951 + $0xb4] sm:$0xf]
        %v6064 = vsel %vm5954, %v5898, %v6063
        %6065 = vst [vmem:[%s5951 + $0xb4] sm:$0xf] %v6064
        %6066 = vst.msk [vmem:[%s5951 + $0xb8] sm:$0xf] %vm5958, %v5900
        %v6067 = vld [vmem:[%s5951 + $0xbc] sm:$0x1]
        %v6068 = vsel %vm5961, %v5902, %v6067
        %6069 = vst [vmem:[%s5951 + $0xbc] sm:$0x1] %v6068
        %p6070 = scmp.lt.s32.totalorder %s24, 1
        %s6071 = scalar_select %p6070, %s24, 1
        %p6072 = scmp.lt.s32.totalorder %s25, 7
        %s6073 = scalar_select %p6072, %s25, 7
        %s6074 = smul.addr %s6073, 32
        %s6075 = smul.addr %s6071, 256
        %s6076 = sadd.s32 %s6074, %s6075
        %s6077 = smul.addr %s6076, 8
        %s6078 = scalar_lea.vmem %s4, %s6077
        %s6079 = sand.u32 %s166, 1
        %s6080 = scalar_lea.sflag [#allocation4], %s6079
        %s6081 = sand.u32 %s166, 1
        %s6082 = smul.addr %s6081, 256
        %s6083 = scalar_lea.vmem [#allocation3], %s6082
        // Predicated region
        $region41: #{_conv_lstm_forward_impl.3} parent=35 // pred_check
          %p6084 = pneg %p150
        $region42: #{_conv_lstm_forward_impl.3} parent=35 // pred_check_branch
          %6086 = sbr.rel (%p6084) target = $region44
        $region43: #{_conv_lstm_forward_impl.3} parent=35 // pred_region
          _
        $region44: #{_conv_lstm_forward_impl.3} parent=35 // pred_fallthru
          _
        // Predicated region
        $region45: #{_conv_lstm_forward_impl.3} parent=35 // pred_check
          %p6087 = pneg %p176
        $region46: #{_conv_lstm_forward_impl.3} parent=35 // pred_check_branch
          %6089 = sbr.rel (%p6087) target = $region48
        $region47: #{_conv_lstm_forward_impl.3} parent=35 // pred_region
          %6091 = vsyncadd %s6080, 0
          %s6092 = smul.addr %s24, 32
          %s6093 = smul.addr %s6092, 8
          %s6094 = scalar_lea.hbm %s5, %s6093
          %s6095 = sshll.u32 %s6083, 4
          %s6096 = int_to_ptr.vmem [resolvable:$true] %s6095
          %s6097 = sshll.u32 %s6094, 4
          %s6098 = int_to_ptr.hbm [resolvable:$true] %s6097
          %6103 = dma.vmem_to_hbm [thread:$0]  %s6096, 4096, %s6098, %s6080, 128, 128, 8
        $region48: #{_conv_lstm_forward_impl.3} parent=35 // pred_fallthru
          _
      $region36: #{_conv_lstm_forward_impl.3} parent=5 // pred_fallthru
        _
      %p6104 = scmp.le.s32.totalorder 2, %s15
      // Predicated region
      $region49: #{_conv_lstm_forward_impl.3} parent=5 // pred_check
        %p6105 = pneg %p6104
      $region50: #{_conv_lstm_forward_impl.3} parent=5 // pred_check_branch
        %6107 = sbr.rel (%p6105) target = $region52
      $region51: #{_conv_lstm_forward_impl.3} parent=5 // pred_region
        %s6108 = ssub.s32 %s15, 2
        // Predicated region
        $region53: #{_conv_lstm_forward_impl.3} parent=51 // pred_check
          %p6109 = pneg %p156
        $region54: #{_conv_lstm_forward_impl.3} parent=51 // pred_check_branch
          %6111 = sbr.rel (%p6109) target = $region56
        $region55: #{_conv_lstm_forward_impl.3} parent=51 // pred_region
          %p6112 = scmp.lt.s32.totalorder %s26, 1
          %s6113 = scalar_select %p6112, %s26, 1
          %p6114 = scmp.lt.s32.totalorder %s27, 7
          %s6115 = scalar_select %p6114, %s27, 7
          %s6116 = smul.addr %s6115, 32
          %s6117 = smul.addr %s6113, 256
          %s6118 = sadd.s32 %s6116, %s6117
          %s6119 = smul.addr %s6118, 8
          %s6120 = scalar_lea.vmem %s4, %s6119
        $region56: #{_conv_lstm_forward_impl.3} parent=51 // pred_fallthru
          _
        // Predicated region
        $region57: #{_conv_lstm_forward_impl.3} parent=51 // pred_check
          %p6121 = pneg %p182
        $region58: #{_conv_lstm_forward_impl.3} parent=51 // pred_check_branch
          %6123 = sbr.rel (%p6121) target = $region60
        $region59: #{_conv_lstm_forward_impl.3} parent=51 // pred_region
          %s6124 = sand.u32 %s167, 1
          %s6125 = scalar_lea.sflag [#allocation4], %s6124
          %s6126 = sand.u32 %s167, 1
          %s6127 = smul.addr %s6126, 256
          %s6128 = scalar_lea.vmem [#allocation3], %s6127
          %6130 = dma.done %s6125, 4096
        $region60: #{_conv_lstm_forward_impl.3} parent=51 // pred_fallthru
          _
      $region52: #{_conv_lstm_forward_impl.3} parent=5 // pred_fallthru
        _
    $region6: #{_conv_lstm_forward_impl.3} parent=1 // loop_footer
      %s19 = sadd.s32 1, %s15
    $region7: #{_conv_lstm_forward_impl.3} parent=1 // loop_footer_branch
      %14 = sbr.rel target = $region3
    $region8: #{_conv_lstm_forward_impl.3} parent=1 // loop_exit
      _
    %6131 = vsyncpa [#allocation4], 1
    %s6132 = scalar_lea.sflag [#allocation4], 1
    %6133 = vsyncpa %s6132, 1

</llo_original>
